<compile_context>
chip_gen: v6e
topology: v6e:2x2x1
jax: 0.10.0
libtpu: 0.0.40
codegen_flags: <defaults>
</compile_context>

<pallas_src>
import jax
import jax.numpy as jnp
import numpy as np
from jax.experimental import pallas as pl
from jax.experimental.pallas import tpu as pltpu

MATMUL_DTYPE = jnp.bfloat16            # MXU input dtype (accumulate in f32)
_VMEM_LIMIT = 32 * 1024 * 1024


def _gelu(x):
    # tanh-approximate GELU.
    # TODO(synk): torch F.gelu defaults to the exact erf form; the tanh
    # approximation differs by O(1e-3) but lowers cleanly to the EUP.
    c = 0.7978845608028654  # sqrt(2/pi)
    return 0.5 * x * (1.0 + jnp.tanh(c * (x + 0.044715 * x * x * x)))


# ---------------------------------------------------------------------------
# In-kernel conv + BN(shift) + GELU + 2x2 max-pool on (B_tile, H, W*Cin) slabs
# ---------------------------------------------------------------------------
def _conv_bn_gelu_pool(x_ref, t_ref, shift_ref, xp_ref):
    """Returns pooled activations of shape (B_tile, H//2, (W//2)*Cout).

    x_ref    : (B_tile, H, W*Cin)            input slab (f32)
    t_ref    : (5, (W+4)*Cin, W*Cout)        per-kh block-Toeplitz weights,
                                             BN scale folded, W-pool column
                                             permutation applied (bf16)
    shift_ref: (1, W*Cout)                   folded conv-bias/BN shift (f32)
    xp_ref   : VMEM (B_tile, H+4, (W+4)*Cin) padded-input scratch (bf16)
    """
    B, H, WCin = x_ref.shape
    HP4 = xp_ref.shape[1]
    WP4Cin = xp_ref.shape[2]
    Cin = (WP4Cin - WCin) // 4
    W = WCin // Cin
    WCout = t_ref.shape[2]
    Cout = WCout // W
    H2, W2 = H // 2, W // 2

    # 'same' padding in VMEM: re-zero only the 2-wide halo strips (interior is
    # fully overwritten every step, so no cross-step / cross-core hazard).
    zrow = jnp.zeros((B, 2, WP4Cin), xp_ref.dtype)
    xp_ref[:, 0:2, :] = zrow
    xp_ref[:, H + 2:H + 4, :] = zrow
    zcol = jnp.zeros((B, HP4, 2 * Cin), xp_ref.dtype)
    xp_ref[:, :, 0:2 * Cin] = zcol
    xp_ref[:, :, (W + 2) * Cin:(W + 4) * Cin] = zcol
    # Single bf16 cast of the interior (not 25 per-tap casts).
    xp_ref[:, 2:2 + H, 2 * Cin:(2 + W) * Cin] = x_ref[...].astype(xp_ref.dtype)

    # Conv5x5 as 5 lane-dense matmuls against block-Toeplitz weights: the
    # whole (kw, Cin) contraction lives in the MXU K dimension -> no im2col
    # patch buffer and no masked tap stores.
    M = B * H
    acc = jnp.zeros((M, WCout), jnp.float32)
    for kh in range(5):
        slab = xp_ref[:, kh:kh + H, :].reshape(M, WP4Cin)
        acc = acc + jnp.dot(slab, t_ref[kh],
                            preferred_element_type=jnp.float32)

    # Folded conv-bias + BatchNorm(eval) shift, then GELU (scale already in
    # the weights).
    act = _gelu(acc + shift_ref[...])

    # 2x2 / stride-2 max-pool entirely in registers.
    a = act.reshape(M // 2, 2, WCout)
    hmax = jnp.maximum(a[:, 0, :], a[:, 1, :])            # pool along H
    # Columns pre-permuted to (x parity, x//2, Cout): W-pool is one max of the
    # two lane halves, result already in (x//2, Cout) order.
    pooled = jnp.maximum(hmax[:, :W2 * Cout], hmax[:, W2 * Cout:])
    return pooled.reshape(B, H2, W2 * Cout)


def _conv_block_kernel(x_ref, t_ref, shift_ref, o_ref, xp_ref):
    o_ref[...] = _conv_bn_gelu_pool(x_ref, t_ref, shift_ref,
                                    xp_ref).astype(o_ref.dtype)


def _conv_head_kernel(x_ref, t_ref, shift_ref, w1_ref, b1_ref, w2_ref, b2_ref,
                      w3_ref, b3_ref, o_ref, xp_ref):
    # Last conv block + flatten + Linear-tanh-Linear-tanh-Linear, one kernel.
    pooled = _conv_bn_gelu_pool(x_ref, t_ref, shift_ref, xp_ref)
    B = pooled.shape[0]
    flat = pooled.reshape(B, pooled.shape[1] * pooled.shape[2])  # NHWC order
    h = jnp.tanh(jnp.dot(flat.astype(MATMUL_DTYPE), w1_ref[...],
                         preferred_element_type=jnp.float32) + b1_ref[...])
    # dropout_2 is identity at inference.
    h = jnp.tanh(jnp.dot(h.astype(MATMUL_DTYPE), w2_ref[...],
                         preferred_element_type=jnp.float32) + b2_ref[...])
    h = jnp.dot(h.astype(MATMUL_DTYPE), w3_ref[...],
                preferred_element_type=jnp.float32) + b3_ref[...]
    o_ref[...] = h.astype(o_ref.dtype)


# ---------------------------------------------------------------------------
# pallas_call wrappers
# ---------------------------------------------------------------------------
def _pick_batch_tile(n, h, w):
    # Fuse batch into matmul M until B_tile*H*W >= 256; keep N % B_tile == 0.
    # (With small batches this also keeps block 1 on >=2 grid tiles so both
    # v7x TensorCores get work.)
    bt = min(n, max(1, 256 // (h * w)))
    while n % bt:
        bt -= 1
    return bt


def _compiler_params():
    return pltpu.CompilerParams(dimension_semantics=("parallel",),
                                vmem_limit_bytes=_VMEM_LIMIT)


def conv_block_call(x, blk):
    n = x.shape[0]
    h, w, cin, cout = blk["H"], blk["W"], blk["Cin"], blk["Cout"]
    h2, w2 = h // 2, w // 2
    bt = _pick_batch_tile(n, h, w)
    return pl.pallas_call(
        _conv_block_kernel,
        out_shape=jax.ShapeDtypeStruct((n, h2, w2 * cout), jnp.float32),
        grid_spec=pltpu.PrefetchScalarGridSpec(
            num_scalar_prefetch=0,
            grid=(n // bt,),
            in_specs=[
                pl.BlockSpec((bt, h, w * cin), lambda i: (i, 0, 0)),
                pl.BlockSpec(blk["T"].shape, lambda i: (0, 0, 0)),
                pl.BlockSpec((1, w * cout), lambda i: (0, 0)),
            ],
            out_specs=pl.BlockSpec((bt, h2, w2 * cout), lambda i: (i, 0, 0)),
            scratch_shapes=[
                pltpu.VMEM((bt, h + 4, (w + 4) * cin), MATMUL_DTYPE)],
        ),
        compiler_params=_compiler_params(),
    )(x, blk["T"], blk["shift"])


def conv_head_call(x, blk, head):
    (w1, b1), (w2, b2), (w3, b3) = head
    n = x.shape[0]
    h, w, cin, cout = blk["H"], blk["W"], blk["Cin"], blk["Cout"]
    out_dim = w3.shape[1]
    bt = _pick_batch_tile(n, h, w)
    return pl.pallas_call(
        _conv_head_kernel,
        out_shape=jax.ShapeDtypeStruct((n, out_dim), jnp.float32),
        grid_spec=pltpu.PrefetchScalarGridSpec(
            num_scalar_prefetch=0,
            grid=(n // bt,),
            in_specs=[
                pl.BlockSpec((bt, h, w * cin), lambda i: (i, 0, 0)),
                pl.BlockSpec(blk["T"].shape, lambda i: (0, 0, 0)),
                pl.BlockSpec((1, w * cout), lambda i: (0, 0)),
                pl.BlockSpec(w1.shape, lambda i: (0, 0)),
                pl.BlockSpec(b1.shape, lambda i: (0, 0)),
                pl.BlockSpec(w2.shape, lambda i: (0, 0)),
                pl.BlockSpec(b2.shape, lambda i: (0, 0)),
                pl.BlockSpec(w3.shape, lambda i: (0, 0)),
                pl.BlockSpec(b3.shape, lambda i: (0, 0)),
            ],
            out_specs=pl.BlockSpec((bt, out_dim), lambda i: (i, 0)),
            scratch_shapes=[
                pltpu.VMEM((bt, h + 4, (w + 4) * cin), MATMUL_DTYPE)],
        ),
        compiler_params=_compiler_params(),
    )(x, blk["T"], blk["shift"], w1, b1, w2, b2, w3, b3)


# ---------------------------------------------------------------------------
# Forward pass (matches Advance_Model.forward, inference mode)
# ---------------------------------------------------------------------------
def advance_model_forward(x_nchw, folded):
    blocks, head = folded
    n = x_nchw.shape[0]
    x = jnp.transpose(x_nchw, (0, 2, 3, 1))                # NCHW -> NHWC
    x = x.reshape(n, x.shape[1], x.shape[2] * x.shape[3])  # lane-dense slab
    for blk in blocks[:-1]:
        x = conv_block_call(x, blk)
        # TODO(synk): training-mode Dropout (pltpu.prng_*) not implemented;
        # identity at inference.
    y = conv_head_call(x, blocks[-1], head)                # (N, output_class)
    assert y.shape[1] == 1, "x.view(len(x)) requires output_class == 1"
    return y.reshape(n)


# ---------------------------------------------------------------------------
# One-time parameter folding (outside jit): BN + conv-bias folding, per-kh
# block-Toeplitz weights, W-pool column permutation, NHWC-order w1 rows.
# ---------------------------------------------------------------------------
def fold_params(params, num_channel, input_dim, eps=1e-5):
    conv_blocks, fc_params = params
    h, w = input_dim
    cin = num_channel
    blocks = []
    for (wgt, b, gamma, beta, mean, var) in conv_blocks:
        cout = wgt.shape[-1]
        scale = gamma / jnp.sqrt(var + eps)
        shift = (b - mean) * scale + beta
        w_s = wgt * scale                                   # fold BN scale
        wp = w + 4
        # Selector: sel[kw, xw, xo] = 1 iff xw == xo + kw (padded columns).
        sel = np.zeros((5, wp, w), np.float32)
        for kw in range(5):
            for xo in range(w):
                sel[kw, xo + kw, xo] = 1.0
        # T[kh, xw, ci, xo, co] = w_s[kh, xw-xo, ci, co] inside the band.
        t = jnp.einsum("kwx,hkio->hwixo", jnp.asarray(sel), w_s)
        # Pre-permute output columns to (x parity, x//2, Cout) so the kernel's
        # W-pool is a single max of two lane halves.
        perm = np.concatenate([np.arange(0, w, 2), np.arange(1, w, 2)])
        t = t[:, :, :, perm, :].reshape(5, wp * cin, w * cout)
        blocks.append(dict(
            T=t.astype(MATMUL_DTYPE),
            shift=jnp.tile(shift, w).reshape(1, w * cout).astype(jnp.float32),
            H=h, W=w, Cin=cin, Cout=cout))
        cin = cout
        h, w = h // 2, w // 2

    (w1, b1), (w2, b2), (w3, b3) = fc_params
    # torch flattens NCHW; our slab flattens NHWC -> permute w1 rows once.
    w1p = jnp.transpose(w1.reshape(cin, h, w, w1.shape[1]), (1, 2, 0, 3))
    w1p = w1p.reshape(h * w * cin, w1.shape[1])
    head = ((w1p.astype(MATMUL_DTYPE), b1.reshape(1, -1).astype(jnp.float32)),
            (w2.astype(MATMUL_DTYPE), b2.reshape(1, -1).astype(jnp.float32)),
            (w3.astype(MATMUL_DTYPE), b3.reshape(1, -1).astype(jnp.float32)))
    return blocks, head


# ---------------------------------------------------------------------------
# Deterministic parameter init (shapes mirror Advance_Model.__init__)
# ---------------------------------------------------------------------------
def init_params(key, num_channel, input_dim, output_class):
    filters = [64, 32, 32, 16]
    linear = [128, 64]
    h, w = input_dim
    conv_blocks = []
    cin = num_channel
    for cout in filters:
        key, kw_, kb_ = jax.random.split(key, 3)
        bound = 1.0 / jnp.sqrt(5.0 * 5.0 * cin)
        wgt = jax.random.uniform(kw_, (5, 5, cin, cout), jnp.float32,
                                 -bound, bound)
        b = jax.random.uniform(kb_, (cout,), jnp.float32, -bound, bound)
        gamma = jnp.ones((cout,), jnp.float32)       # fresh BatchNorm2d state
        beta = jnp.zeros((cout,), jnp.float32)
        mean = jnp.zeros((cout,), jnp.float32)
        var = jnp.ones((cout,), jnp.float32)
        conv_blocks.append((wgt, b, gamma, beta, mean, var))
        cin = cout
        h, w = h // 2, w // 2

    flat = h * w * filters[-1]
    dims = [(flat, linear[0]), (linear[0], linear[1]),
            (linear[1], output_class)]
    fc_params = []
    for din, dout in dims:
        key, kw_, kb_ = jax.random.split(key, 3)
        bound = 1.0 / jnp.sqrt(float(din))
        wgt = jax.random.uniform(kw_, (din, dout), jnp.float32, -bound, bound)
        b = jax.random.uniform(kb_, (dout,), jnp.float32, -bound, bound)
        fc_params.append((wgt, b))
    return conv_blocks, tuple(fc_params)


if __name__ == "__main__":
    key = jax.random.PRNGKey(0)
    key, kx, kp = jax.random.split(key, 3)

    batch, num_channel, spatial = 2, 4, 16      # 16x16 -> 1x1 after 4 pools
    input_dim = [spatial, spatial]
    output_class = 1                            # required by x.view(len(x))

    x = jax.random.normal(kx, (batch, num_channel, spatial, spatial),
                          jnp.float32)
    params = init_params(kp, num_channel, input_dim, output_class)
    folded = fold_params(params, num_channel, (spatial, spatial))

    fwd = jax.jit(lambda inp: advance_model_forward(inp, folded))
    y = fwd(x)
    jax.block_until_ready(y)
    assert y.shape == (batch,), y.shape
    print("KERNEL_OK")
</pallas_src>

<mosaic_0001>
module attributes {stable_mosaic.version = 11 : i64} {
  func.func @_conv_block_kernel(%arg0: i32, %arg1: memref<1x16x64xf32, #tpu.memory_space<vmem>>, %arg2: memref<5x80x1024xbf16, #tpu.memory_space<vmem>>, %arg3: memref<1x1024xf32, #tpu.memory_space<vmem>>, %arg4: memref<1x8x512xf32, #tpu.memory_space<vmem>>, %arg5: memref<1x20x80xbf16, #tpu.memory_space<vmem>>) attributes {dimension_semantics = [#tpu.dimension_semantics<parallel>], iteration_bounds = array<i64: 2>, scalar_prefetch = 0 : i64, scratch_operands = 1 : i64, tpu.core_type = #tpu.core_type<tc>, window_params = [{transform_indices = @transform_0, window_bounds = array<i64: 1, 16, 64>}, {pipeline_mode = #tpu.pipeline_mode<synchronous>, transform_indices = @transform_1, window_bounds = array<i64: 5, 80, 1024>}, {pipeline_mode = #tpu.pipeline_mode<synchronous>, transform_indices = @transform_2, window_bounds = array<i64: 1, 1024>}, {transform_indices = @transform_3, window_bounds = array<i64: 1, 8, 512>}]} {
    %cst = arith.constant 0.000000e+00 : bf16
    %0 = vector.broadcast %cst : bf16 to vector<1x2x80xbf16>
    %c0 = arith.constant 0 : index
    %c0_0 = arith.constant 0 : index
    %c0_1 = arith.constant 0 : index
    %1 = vector.load %arg5[%c0, %c0_0, %c0_1] : memref<1x20x80xbf16, #tpu.memory_space<vmem>>, vector<1x2x80xbf16>
    tpu.vector_store %arg5[%c0, %c0_0, %c0_1], %0 {strides = array<i32>} : memref<1x20x80xbf16, #tpu.memory_space<vmem>>, vector<1x2x80xbf16>,
    %c0_2 = arith.constant 0 : index
    %c18 = arith.constant 18 : index
    %c0_3 = arith.constant 0 : index
    %2 = vector.load %arg5[%c0_2, %c18, %c0_3] : memref<1x20x80xbf16, #tpu.memory_space<vmem>>, vector<1x2x80xbf16>
    tpu.vector_store %arg5[%c0_2, %c18, %c0_3], %0 {strides = array<i32>} : memref<1x20x80xbf16, #tpu.memory_space<vmem>>, vector<1x2x80xbf16>,
    %cst_4 = arith.constant 0.000000e+00 : bf16
    %3 = vector.broadcast %cst_4 : bf16 to vector<1x20x8xbf16>
    %c0_5 = arith.constant 0 : index
    %c0_6 = arith.constant 0 : index
    %c0_7 = arith.constant 0 : index
    %4 = vector.load %arg5[%c0_5, %c0_6, %c0_7] : memref<1x20x80xbf16, #tpu.memory_space<vmem>>, vector<1x20x8xbf16>
    tpu.vector_store %arg5[%c0_5, %c0_6, %c0_7], %3 {strides = array<i32>} : memref<1x20x80xbf16, #tpu.memory_space<vmem>>, vector<1x20x8xbf16>,
    %c0_8 = arith.constant 0 : index
    %c0_9 = arith.constant 0 : index
    %c72 = arith.constant 72 : index
    %5 = vector.load %arg5[%c0_8, %c0_9, %c72] : memref<1x20x80xbf16, #tpu.memory_space<vmem>>, vector<1x20x8xbf16>
    tpu.vector_store %arg5[%c0_8, %c0_9, %c72], %3 {strides = array<i32>} : memref<1x20x80xbf16, #tpu.memory_space<vmem>>, vector<1x20x8xbf16>,
    %c0_10 = arith.constant 0 : index
    %c0_11 = arith.constant 0 : index
    %c0_12 = arith.constant 0 : index
    %6 = vector.load %arg1[%c0_10, %c0_11, %c0_12] : memref<1x16x64xf32, #tpu.memory_space<vmem>>, vector<1x16x64xf32>
    %7 = arith.truncf %6 : vector<1x16x64xf32> to vector<1x16x64xbf16>
    %c0_13 = arith.constant 0 : index
    %c2 = arith.constant 2 : index
    %c8 = arith.constant 8 : index
    %8 = vector.load %arg5[%c0_13, %c2, %c8] : memref<1x20x80xbf16, #tpu.memory_space<vmem>>, vector<1x16x64xbf16>
    tpu.vector_store %arg5[%c0_13, %c2, %c8], %7 {strides = array<i32>} : memref<1x20x80xbf16, #tpu.memory_space<vmem>>, vector<1x16x64xbf16>,
    %cst_14 = arith.constant 0.000000e+00 : f32
    %9 = vector.broadcast %cst_14 : f32 to vector<16x1024xf32>
    %c0_15 = arith.constant 0 : index
    %c0_16 = arith.constant 0 : index
    %c0_17 = arith.constant 0 : index
    %10 = vector.load %arg5[%c0_15, %c0_16, %c0_17] : memref<1x20x80xbf16, #tpu.memory_space<vmem>>, vector<1x16x80xbf16>
    %11 = vector.shape_cast %10 : vector<1x16x80xbf16> to vector<16x80xbf16>
    %c0_18 = arith.constant 0 : index
    %c0_19 = arith.constant 0 : index
    %c0_20 = arith.constant 0 : index
    %12 = vector.load %arg2[%c0_18, %c0_19, %c0_20] : memref<5x80x1024xbf16, #tpu.memory_space<vmem>>, vector<1x80x1024xbf16>
    %13 = vector.shape_cast %12 : vector<1x80x1024xbf16> to vector<80x1024xbf16>
    %cst_21 = arith.constant dense<0.000000e+00> : vector<16x1024xf32>
    %14 = tpu.matmul %11, %13, %cst_21 {dimension_numbers = #tpu.dot_dimension_numbers<[1], [0], [0], [1], [0, 0, 1, 1], [], []>} : vector<16x80xbf16>, vector<80x1024xbf16>, vector<16x1024xf32> -> vector<16x1024xf32>
    %15 = arith.addf %9, %14 : vector<16x1024xf32>
    %c0_22 = arith.constant 0 : index
    %c1 = arith.constant 1 : index
    %c0_23 = arith.constant 0 : index
    %16 = vector.load %arg5[%c0_22, %c1, %c0_23] : memref<1x20x80xbf16, #tpu.memory_space<vmem>>, vector<1x16x80xbf16>
    %17 = vector.shape_cast %16 : vector<1x16x80xbf16> to vector<16x80xbf16>
    %c1_24 = arith.constant 1 : index
    %c0_25 = arith.constant 0 : index
    %c0_26 = arith.constant 0 : index
    %18 = vector.load %arg2[%c1_24, %c0_25, %c0_26] : memref<5x80x1024xbf16, #tpu.memory_space<vmem>>, vector<1x80x1024xbf16>
    %19 = vector.shape_cast %18 : vector<1x80x1024xbf16> to vector<80x1024xbf16>
    %cst_27 = arith.constant dense<0.000000e+00> : vector<16x1024xf32>
    %20 = tpu.matmul %17, %19, %cst_27 {dimension_numbers = #tpu.dot_dimension_numbers<[1], [0], [0], [1], [0, 0, 1, 1], [], []>} : vector<16x80xbf16>, vector<80x1024xbf16>, vector<16x1024xf32> -> vector<16x1024xf32>
    %21 = arith.addf %15, %20 : vector<16x1024xf32>
    %c0_28 = arith.constant 0 : index
    %c2_29 = arith.constant 2 : index
    %c0_30 = arith.constant 0 : index
    %22 = vector.load %arg5[%c0_28, %c2_29, %c0_30] : memref<1x20x80xbf16, #tpu.memory_space<vmem>>, vector<1x16x80xbf16>
    %23 = vector.shape_cast %22 : vector<1x16x80xbf16> to vector<16x80xbf16>
    %c2_31 = arith.constant 2 : index
    %c0_32 = arith.constant 0 : index
    %c0_33 = arith.constant 0 : index
    %24 = vector.load %arg2[%c2_31, %c0_32, %c0_33] : memref<5x80x1024xbf16, #tpu.memory_space<vmem>>, vector<1x80x1024xbf16>
    %25 = vector.shape_cast %24 : vector<1x80x1024xbf16> to vector<80x1024xbf16>
    %cst_34 = arith.constant dense<0.000000e+00> : vector<16x1024xf32>
    %26 = tpu.matmul %23, %25, %cst_34 {dimension_numbers = #tpu.dot_dimension_numbers<[1], [0], [0], [1], [0, 0, 1, 1], [], []>} : vector<16x80xbf16>, vector<80x1024xbf16>, vector<16x1024xf32> -> vector<16x1024xf32>
    %27 = arith.addf %21, %26 : vector<16x1024xf32>
    %c0_35 = arith.constant 0 : index
    %c3 = arith.constant 3 : index
    %c0_36 = arith.constant 0 : index
    %28 = vector.load %arg5[%c0_35, %c3, %c0_36] : memref<1x20x80xbf16, #tpu.memory_space<vmem>>, vector<1x16x80xbf16>
    %29 = vector.shape_cast %28 : vector<1x16x80xbf16> to vector<16x80xbf16>
    %c3_37 = arith.constant 3 : index
    %c0_38 = arith.constant 0 : index
    %c0_39 = arith.constant 0 : index
    %30 = vector.load %arg2[%c3_37, %c0_38, %c0_39] : memref<5x80x1024xbf16, #tpu.memory_space<vmem>>, vector<1x80x1024xbf16>
    %31 = vector.shape_cast %30 : vector<1x80x1024xbf16> to vector<80x1024xbf16>
    %cst_40 = arith.constant dense<0.000000e+00> : vector<16x1024xf32>
    %32 = tpu.matmul %29, %31, %cst_40 {dimension_numbers = #tpu.dot_dimension_numbers<[1], [0], [0], [1], [0, 0, 1, 1], [], []>} : vector<16x80xbf16>, vector<80x1024xbf16>, vector<16x1024xf32> -> vector<16x1024xf32>
    %33 = arith.addf %27, %32 : vector<16x1024xf32>
    %c0_41 = arith.constant 0 : index
    %c4 = arith.constant 4 : index
    %c0_42 = arith.constant 0 : index
    %34 = vector.load %arg5[%c0_41, %c4, %c0_42] : memref<1x20x80xbf16, #tpu.memory_space<vmem>>, vector<1x16x80xbf16>
    %35 = vector.shape_cast %34 : vector<1x16x80xbf16> to vector<16x80xbf16>
    %c4_43 = arith.constant 4 : index
    %c0_44 = arith.constant 0 : index
    %c0_45 = arith.constant 0 : index
    %36 = vector.load %arg2[%c4_43, %c0_44, %c0_45] : memref<5x80x1024xbf16, #tpu.memory_space<vmem>>, vector<1x80x1024xbf16>
    %37 = vector.shape_cast %36 : vector<1x80x1024xbf16> to vector<80x1024xbf16>
    %cst_46 = arith.constant dense<0.000000e+00> : vector<16x1024xf32>
    %38 = tpu.matmul %35, %37, %cst_46 {dimension_numbers = #tpu.dot_dimension_numbers<[1], [0], [0], [1], [0, 0, 1, 1], [], []>} : vector<16x80xbf16>, vector<80x1024xbf16>, vector<16x1024xf32> -> vector<16x1024xf32>
    %39 = arith.addf %33, %38 : vector<16x1024xf32>
    %c0_47 = arith.constant 0 : index
    %c0_48 = arith.constant 0 : index
    %40 = vector.load %arg3[%c0_47, %c0_48] : memref<1x1024xf32, #tpu.memory_space<vmem>>, vector<1x1024xf32>
    %41 = vector.broadcast %40 : vector<1x1024xf32> to vector<16x1024xf32>
    %42 = arith.addf %39, %41 : vector<16x1024xf32>
    %cst_49 = arith.constant 5.000000e-01 : f32
    %43 = vector.broadcast %cst_49 : f32 to vector<16x1024xf32>
    %44 = arith.mulf %43, %42 : vector<16x1024xf32>
    %cst_50 = arith.constant 4.471500e-02 : f32
    %45 = vector.broadcast %cst_50 : f32 to vector<16x1024xf32>
    %46 = arith.mulf %45, %42 : vector<16x1024xf32>
    %47 = arith.mulf %46, %42 : vector<16x1024xf32>
    %48 = arith.mulf %47, %42 : vector<16x1024xf32>
    %49 = arith.addf %42, %48 : vector<16x1024xf32>
    %cst_51 = arith.constant 0.797884583 : f32
    %50 = vector.broadcast %cst_51 : f32 to vector<16x1024xf32>
    %51 = arith.mulf %50, %49 : vector<16x1024xf32>
    %52 = math.tanh %51 : vector<16x1024xf32>
    %cst_52 = arith.constant 1.000000e+00 : f32
    %53 = vector.broadcast %cst_52 : f32 to vector<16x1024xf32>
    %54 = arith.addf %53, %52 : vector<16x1024xf32>
    %55 = arith.mulf %44, %54 : vector<16x1024xf32>
    %56 = vector.shape_cast %55 : vector<16x1024xf32> to vector<8x2x1024xf32>
    %57 = vector.extract_strided_slice %56 {offsets = [0, 0, 0], sizes = [8, 1, 1024], strides = [1, 1, 1]} : vector<8x2x1024xf32> to vector<8x1x1024xf32>
    %58 = vector.shape_cast %57 : vector<8x1x1024xf32> to vector<8x1024xf32>
    %59 = vector.extract_strided_slice %56 {offsets = [0, 1, 0], sizes = [8, 1, 1024], strides = [1, 1, 1]} : vector<8x2x1024xf32> to vector<8x1x1024xf32>
    %60 = vector.shape_cast %59 : vector<8x1x1024xf32> to vector<8x1024xf32>
    %61 = arith.maximumf %58, %60 : vector<8x1024xf32>
    %62 = vector.extract_strided_slice %61 {offsets = [0, 0], sizes = [8, 512], strides = [1, 1]} : vector<8x1024xf32> to vector<8x512xf32>
    %63 = vector.extract_strided_slice %61 {offsets = [0, 512], sizes = [8, 512], strides = [1, 1]} : vector<8x1024xf32> to vector<8x512xf32>
    %64 = arith.maximumf %62, %63 : vector<8x512xf32>
    %65 = vector.shape_cast %64 : vector<8x512xf32> to vector<1x8x512xf32>
    %c0_53 = arith.constant 0 : index
    %c0_54 = arith.constant 0 : index
    %c0_55 = arith.constant 0 : index
    %66 = vector.load %arg4[%c0_53, %c0_54, %c0_55] : memref<1x8x512xf32, #tpu.memory_space<vmem>>, vector<1x8x512xf32>
    tpu.vector_store %arg4[%c0_53, %c0_54, %c0_55], %65 {strides = array<i32>} : memref<1x8x512xf32, #tpu.memory_space<vmem>>, vector<1x8x512xf32>,
    return
  }
  func.func @transform_0(%arg0: i32) -> (i32, i32, i32) {
    %c0_i32 = arith.constant 0 : i32
    %c0_i32_0 = arith.constant 0 : i32
    %c0_i32_1 = arith.constant 0 : i32
    return %arg0, %c0_i32, %c0_i32_0 : i32, i32, i32
  }
  func.func @transform_1(%arg0: i32) -> (i32, i32, i32) {
    %c0_i32 = arith.constant 0 : i32
    %c0_i32_0 = arith.constant 0 : i32
    %c0_i32_1 = arith.constant 0 : i32
    %c0_i32_2 = arith.constant 0 : i32
    return %c0_i32, %c0_i32_0, %c0_i32_1 : i32, i32, i32
  }
  func.func @transform_2(%arg0: i32) -> (i32, i32) {
    %c0_i32 = arith.constant 0 : i32
    %c0_i32_0 = arith.constant 0 : i32
    %c0_i32_1 = arith.constant 0 : i32
    return %c0_i32, %c0_i32_0 : i32, i32
  }
  func.func @transform_3(%arg0: i32) -> (i32, i32, i32) {
    %c0_i32 = arith.constant 0 : i32
    %c0_i32_0 = arith.constant 0 : i32
    %c0_i32_1 = arith.constant 0 : i32
    return %arg0, %c0_i32, %c0_i32_0 : i32, i32, i32
  }
}

module attributes {stable_mosaic.version = 11 : i64} {
  func.func @_conv_block_kernel(%arg0: i32, %arg1: memref<2x8x512xf32, #tpu.memory_space<vmem>>, %arg2: memref<5x768x256xbf16, #tpu.memory_space<vmem>>, %arg3: memref<1x256xf32, #tpu.memory_space<vmem>>, %arg4: memref<2x4x128xf32, #tpu.memory_space<vmem>>, %arg5: memref<2x12x768xbf16, #tpu.memory_space<vmem>>) attributes {dimension_semantics = [#tpu.dimension_semantics<parallel>], iteration_bounds = array<i64: 1>, scalar_prefetch = 0 : i64, scratch_operands = 1 : i64, tpu.core_type = #tpu.core_type<tc>, window_params = [{transform_indices = @transform_0, window_bounds = array<i64: 2, 8, 512>}, {pipeline_mode = #tpu.pipeline_mode<synchronous>, transform_indices = @transform_1, window_bounds = array<i64: 5, 768, 256>}, {pipeline_mode = #tpu.pipeline_mode<synchronous>, transform_indices = @transform_2, window_bounds = array<i64: 1, 256>}, {transform_indices = @transform_3, window_bounds = array<i64: 2, 4, 128>}]} {
    %cst = arith.constant 0.000000e+00 : bf16
    %0 = vector.broadcast %cst : bf16 to vector<2x2x768xbf16>
    %c0 = arith.constant 0 : index
    %c0_0 = arith.constant 0 : index
    %c0_1 = arith.constant 0 : index
    %1 = vector.load %arg5[%c0, %c0_0, %c0_1] : memref<2x12x768xbf16, #tpu.memory_space<vmem>>, vector<2x2x768xbf16>
    tpu.vector_store %arg5[%c0, %c0_0, %c0_1], %0 {strides = array<i32>} : memref<2x12x768xbf16, #tpu.memory_space<vmem>>, vector<2x2x768xbf16>,
    %c0_2 = arith.constant 0 : index
    %c10 = arith.constant 10 : index
    %c0_3 = arith.constant 0 : index
    %2 = vector.load %arg5[%c0_2, %c10, %c0_3] : memref<2x12x768xbf16, #tpu.memory_space<vmem>>, vector<2x2x768xbf16>
    tpu.vector_store %arg5[%c0_2, %c10, %c0_3], %0 {strides = array<i32>} : memref<2x12x768xbf16, #tpu.memory_space<vmem>>, vector<2x2x768xbf16>,
    %cst_4 = arith.constant 0.000000e+00 : bf16
    %3 = vector.broadcast %cst_4 : bf16 to vector<2x12x128xbf16>
    %c0_5 = arith.constant 0 : index
    %c0_6 = arith.constant 0 : index
    %c0_7 = arith.constant 0 : index
    %4 = vector.load %arg5[%c0_5, %c0_6, %c0_7] : memref<2x12x768xbf16, #tpu.memory_space<vmem>>, vector<2x12x128xbf16>
    tpu.vector_store %arg5[%c0_5, %c0_6, %c0_7], %3 {strides = array<i32>} : memref<2x12x768xbf16, #tpu.memory_space<vmem>>, vector<2x12x128xbf16>,
    %c0_8 = arith.constant 0 : index
    %c0_9 = arith.constant 0 : index
    %c640 = arith.constant 640 : index
    %5 = vector.load %arg5[%c0_8, %c0_9, %c640] : memref<2x12x768xbf16, #tpu.memory_space<vmem>>, vector<2x12x128xbf16>
    tpu.vector_store %arg5[%c0_8, %c0_9, %c640], %3 {strides = array<i32>} : memref<2x12x768xbf16, #tpu.memory_space<vmem>>, vector<2x12x128xbf16>,
    %c0_10 = arith.constant 0 : index
    %c0_11 = arith.constant 0 : index
    %c0_12 = arith.constant 0 : index
    %6 = vector.load %arg1[%c0_10, %c0_11, %c0_12] : memref<2x8x512xf32, #tpu.memory_space<vmem>>, vector<2x8x512xf32>
    %7 = arith.truncf %6 : vector<2x8x512xf32> to vector<2x8x512xbf16>
    %c0_13 = arith.constant 0 : index
    %c2 = arith.constant 2 : index
    %c128 = arith.constant 128 : index
    %8 = vector.load %arg5[%c0_13, %c2, %c128] : memref<2x12x768xbf16, #tpu.memory_space<vmem>>, vector<2x8x512xbf16>
    tpu.vector_store %arg5[%c0_13, %c2, %c128], %7 {strides = array<i32>} : memref<2x12x768xbf16, #tpu.memory_space<vmem>>, vector<2x8x512xbf16>,
    %cst_14 = arith.constant 0.000000e+00 : f32
    %9 = vector.broadcast %cst_14 : f32 to vector<16x256xf32>
    %c0_15 = arith.constant 0 : index
    %c0_16 = arith.constant 0 : index
    %c0_17 = arith.constant 0 : index
    %10 = vector.load %arg5[%c0_15, %c0_16, %c0_17] : memref<2x12x768xbf16, #tpu.memory_space<vmem>>, vector<2x8x768xbf16>
    %11 = vector.shape_cast %10 : vector<2x8x768xbf16> to vector<16x768xbf16>
    %c0_18 = arith.constant 0 : index
    %c0_19 = arith.constant 0 : index
    %c0_20 = arith.constant 0 : index
    %12 = vector.load %arg2[%c0_18, %c0_19, %c0_20] : memref<5x768x256xbf16, #tpu.memory_space<vmem>>, vector<1x768x256xbf16>
    %13 = vector.shape_cast %12 : vector<1x768x256xbf16> to vector<768x256xbf16>
    %cst_21 = arith.constant dense<0.000000e+00> : vector<16x256xf32>
    %14 = tpu.matmul %11, %13, %cst_21 {dimension_numbers = #tpu.dot_dimension_numbers<[1], [0], [0], [1], [0, 0, 1, 1], [], []>} : vector<16x768xbf16>, vector<768x256xbf16>, vector<16x256xf32> -> vector<16x256xf32>
    %15 = arith.addf %9, %14 : vector<16x256xf32>
    %c0_22 = arith.constant 0 : index
    %c1 = arith.constant 1 : index
    %c0_23 = arith.constant 0 : index
    %16 = vector.load %arg5[%c0_22, %c1, %c0_23] : memref<2x12x768xbf16, #tpu.memory_space<vmem>>, vector<2x8x768xbf16>
    %17 = vector.shape_cast %16 : vector<2x8x768xbf16> to vector<16x768xbf16>
    %c1_24 = arith.constant 1 : index
    %c0_25 = arith.constant 0 : index
    %c0_26 = arith.constant 0 : index
    %18 = vector.load %arg2[%c1_24, %c0_25, %c0_26] : memref<5x768x256xbf16, #tpu.memory_space<vmem>>, vector<1x768x256xbf16>
    %19 = vector.shape_cast %18 : vector<1x768x256xbf16> to vector<768x256xbf16>
    %cst_27 = arith.constant dense<0.000000e+00> : vector<16x256xf32>
    %20 = tpu.matmul %17, %19, %cst_27 {dimension_numbers = #tpu.dot_dimension_numbers<[1], [0], [0], [1], [0, 0, 1, 1], [], []>} : vector<16x768xbf16>, vector<768x256xbf16>, vector<16x256xf32> -> vector<16x256xf32>
    %21 = arith.addf %15, %20 : vector<16x256xf32>
    %c0_28 = arith.constant 0 : index
    %c2_29 = arith.constant 2 : index
    %c0_30 = arith.constant 0 : index
    %22 = vector.load %arg5[%c0_28, %c2_29, %c0_30] : memref<2x12x768xbf16, #tpu.memory_space<vmem>>, vector<2x8x768xbf16>
    %23 = vector.shape_cast %22 : vector<2x8x768xbf16> to vector<16x768xbf16>
    %c2_31 = arith.constant 2 : index
    %c0_32 = arith.constant 0 : index
    %c0_33 = arith.constant 0 : index
    %24 = vector.load %arg2[%c2_31, %c0_32, %c0_33] : memref<5x768x256xbf16, #tpu.memory_space<vmem>>, vector<1x768x256xbf16>
    %25 = vector.shape_cast %24 : vector<1x768x256xbf16> to vector<768x256xbf16>
    %cst_34 = arith.constant dense<0.000000e+00> : vector<16x256xf32>
    %26 = tpu.matmul %23, %25, %cst_34 {dimension_numbers = #tpu.dot_dimension_numbers<[1], [0], [0], [1], [0, 0, 1, 1], [], []>} : vector<16x768xbf16>, vector<768x256xbf16>, vector<16x256xf32> -> vector<16x256xf32>
    %27 = arith.addf %21, %26 : vector<16x256xf32>
    %c0_35 = arith.constant 0 : index
    %c3 = arith.constant 3 : index
    %c0_36 = arith.constant 0 : index
    %28 = vector.load %arg5[%c0_35, %c3, %c0_36] : memref<2x12x768xbf16, #tpu.memory_space<vmem>>, vector<2x8x768xbf16>
    %29 = vector.shape_cast %28 : vector<2x8x768xbf16> to vector<16x768xbf16>
    %c3_37 = arith.constant 3 : index
    %c0_38 = arith.constant 0 : index
    %c0_39 = arith.constant 0 : index
    %30 = vector.load %arg2[%c3_37, %c0_38, %c0_39] : memref<5x768x256xbf16, #tpu.memory_space<vmem>>, vector<1x768x256xbf16>
    %31 = vector.shape_cast %30 : vector<1x768x256xbf16> to vector<768x256xbf16>
    %cst_40 = arith.constant dense<0.000000e+00> : vector<16x256xf32>
    %32 = tpu.matmul %29, %31, %cst_40 {dimension_numbers = #tpu.dot_dimension_numbers<[1], [0], [0], [1], [0, 0, 1, 1], [], []>} : vector<16x768xbf16>, vector<768x256xbf16>, vector<16x256xf32> -> vector<16x256xf32>
    %33 = arith.addf %27, %32 : vector<16x256xf32>
    %c0_41 = arith.constant 0 : index
    %c4 = arith.constant 4 : index
    %c0_42 = arith.constant 0 : index
    %34 = vector.load %arg5[%c0_41, %c4, %c0_42] : memref<2x12x768xbf16, #tpu.memory_space<vmem>>, vector<2x8x768xbf16>
    %35 = vector.shape_cast %34 : vector<2x8x768xbf16> to vector<16x768xbf16>
    %c4_43 = arith.constant 4 : index
    %c0_44 = arith.constant 0 : index
    %c0_45 = arith.constant 0 : index
    %36 = vector.load %arg2[%c4_43, %c0_44, %c0_45] : memref<5x768x256xbf16, #tpu.memory_space<vmem>>, vector<1x768x256xbf16>
    %37 = vector.shape_cast %36 : vector<1x768x256xbf16> to vector<768x256xbf16>
    %cst_46 = arith.constant dense<0.000000e+00> : vector<16x256xf32>
    %38 = tpu.matmul %35, %37, %cst_46 {dimension_numbers = #tpu.dot_dimension_numbers<[1], [0], [0], [1], [0, 0, 1, 1], [], []>} : vector<16x768xbf16>, vector<768x256xbf16>, vector<16x256xf32> -> vector<16x256xf32>
    %39 = arith.addf %33, %38 : vector<16x256xf32>
    %c0_47 = arith.constant 0 : index
    %c0_48 = arith.constant 0 : index
    %40 = vector.load %arg3[%c0_47, %c0_48] : memref<1x256xf32, #tpu.memory_space<vmem>>, vector<1x256xf32>
    %41 = vector.broadcast %40 : vector<1x256xf32> to vector<16x256xf32>
    %42 = arith.addf %39, %41 : vector<16x256xf32>
    %cst_49 = arith.constant 5.000000e-01 : f32
    %43 = vector.broadcast %cst_49 : f32 to vector<16x256xf32>
    %44 = arith.mulf %43, %42 : vector<16x256xf32>
    %cst_50 = arith.constant 4.471500e-02 : f32
    %45 = vector.broadcast %cst_50 : f32 to vector<16x256xf32>
    %46 = arith.mulf %45, %42 : vector<16x256xf32>
    %47 = arith.mulf %46, %42 : vector<16x256xf32>
    %48 = arith.mulf %47, %42 : vector<16x256xf32>
    %49 = arith.addf %42, %48 : vector<16x256xf32>
    %cst_51 = arith.constant 0.797884583 : f32
    %50 = vector.broadcast %cst_51 : f32 to vector<16x256xf32>
    %51 = arith.mulf %50, %49 : vector<16x256xf32>
    %52 = math.tanh %51 : vector<16x256xf32>
    %cst_52 = arith.constant 1.000000e+00 : f32
    %53 = vector.broadcast %cst_52 : f32 to vector<16x256xf32>
    %54 = arith.addf %53, %52 : vector<16x256xf32>
    %55 = arith.mulf %44, %54 : vector<16x256xf32>
    %56 = vector.shape_cast %55 : vector<16x256xf32> to vector<8x2x256xf32>
    %57 = vector.extract_strided_slice %56 {offsets = [0, 0, 0], sizes = [8, 1, 256], strides = [1, 1, 1]} : vector<8x2x256xf32> to vector<8x1x256xf32>
    %58 = vector.shape_cast %57 : vector<8x1x256xf32> to vector<8x256xf32>
    %59 = vector.extract_strided_slice %56 {offsets = [0, 1, 0], sizes = [8, 1, 256], strides = [1, 1, 1]} : vector<8x2x256xf32> to vector<8x1x256xf32>
    %60 = vector.shape_cast %59 : vector<8x1x256xf32> to vector<8x256xf32>
    %61 = arith.maximumf %58, %60 : vector<8x256xf32>
    %62 = vector.extract_strided_slice %61 {offsets = [0, 0], sizes = [8, 128], strides = [1, 1]} : vector<8x256xf32> to vector<8x128xf32>
    %63 = vector.extract_strided_slice %61 {offsets = [0, 128], sizes = [8, 128], strides = [1, 1]} : vector<8x256xf32> to vector<8x128xf32>
    %64 = arith.maximumf %62, %63 : vector<8x128xf32>
    %65 = vector.shape_cast %64 : vector<8x128xf32> to vector<2x4x128xf32>
    %c0_53 = arith.constant 0 : index
    %c0_54 = arith.constant 0 : index
    %c0_55 = arith.constant 0 : index
    %66 = vector.load %arg4[%c0_53, %c0_54, %c0_55] : memref<2x4x128xf32, #tpu.memory_space<vmem>>, vector<2x4x128xf32>
    tpu.vector_store %arg4[%c0_53, %c0_54, %c0_55], %65 {strides = array<i32>} : memref<2x4x128xf32, #tpu.memory_space<vmem>>, vector<2x4x128xf32>,
    return
  }
  func.func @transform_0(%arg0: i32) -> (i32, i32, i32) {
    %c0_i32 = arith.constant 0 : i32
    %c0_i32_0 = arith.constant 0 : i32
    %c0_i32_1 = arith.constant 0 : i32
    return %arg0, %c0_i32, %c0_i32_0 : i32, i32, i32
  }
  func.func @transform_1(%arg0: i32) -> (i32, i32, i32) {
    %c0_i32 = arith.constant 0 : i32
    %c0_i32_0 = arith.constant 0 : i32
    %c0_i32_1 = arith.constant 0 : i32
    %c0_i32_2 = arith.constant 0 : i32
    return %c0_i32, %c0_i32_0, %c0_i32_1 : i32, i32, i32
  }
  func.func @transform_2(%arg0: i32) -> (i32, i32) {
    %c0_i32 = arith.constant 0 : i32
    %c0_i32_0 = arith.constant 0 : i32
    %c0_i32_1 = arith.constant 0 : i32
    return %c0_i32, %c0_i32_0 : i32, i32
  }
  func.func @transform_3(%arg0: i32) -> (i32, i32, i32) {
    %c0_i32 = arith.constant 0 : i32
    %c0_i32_0 = arith.constant 0 : i32
    %c0_i32_1 = arith.constant 0 : i32
    return %arg0, %c0_i32, %c0_i32_0 : i32, i32, i32
  }
}

module attributes {stable_mosaic.version = 11 : i64} {
  func.func @_conv_block_kernel(%arg0: i32, %arg1: memref<2x4x128xf32, #tpu.memory_space<vmem>>, %arg2: memref<5x256x128xbf16, #tpu.memory_space<vmem>>, %arg3: memref<1x128xf32, #tpu.memory_space<vmem>>, %arg4: memref<2x2x64xf32, #tpu.memory_space<vmem>>, %arg5: memref<2x8x256xbf16, #tpu.memory_space<vmem>>) attributes {dimension_semantics = [#tpu.dimension_semantics<parallel>], iteration_bounds = array<i64: 1>, scalar_prefetch = 0 : i64, scratch_operands = 1 : i64, tpu.core_type = #tpu.core_type<tc>, window_params = [{transform_indices = @transform_0, window_bounds = array<i64: 2, 4, 128>}, {pipeline_mode = #tpu.pipeline_mode<synchronous>, transform_indices = @transform_1, window_bounds = array<i64: 5, 256, 128>}, {pipeline_mode = #tpu.pipeline_mode<synchronous>, transform_indices = @transform_2, window_bounds = array<i64: 1, 128>}, {transform_indices = @transform_3, window_bounds = array<i64: 2, 2, 64>}]} {
    %cst = arith.constant 0.000000e+00 : bf16
    %0 = vector.broadcast %cst : bf16 to vector<2x2x256xbf16>
    %c0 = arith.constant 0 : index
    %c0_0 = arith.constant 0 : index
    %c0_1 = arith.constant 0 : index
    %1 = vector.load %arg5[%c0, %c0_0, %c0_1] : memref<2x8x256xbf16, #tpu.memory_space<vmem>>, vector<2x2x256xbf16>
    tpu.vector_store %arg5[%c0, %c0_0, %c0_1], %0 {strides = array<i32>} : memref<2x8x256xbf16, #tpu.memory_space<vmem>>, vector<2x2x256xbf16>,
    %c0_2 = arith.constant 0 : index
    %c6 = arith.constant 6 : index
    %c0_3 = arith.constant 0 : index
    %2 = vector.load %arg5[%c0_2, %c6, %c0_3] : memref<2x8x256xbf16, #tpu.memory_space<vmem>>, vector<2x2x256xbf16>
    tpu.vector_store %arg5[%c0_2, %c6, %c0_3], %0 {strides = array<i32>} : memref<2x8x256xbf16, #tpu.memory_space<vmem>>, vector<2x2x256xbf16>,
    %cst_4 = arith.constant 0.000000e+00 : bf16
    %3 = vector.broadcast %cst_4 : bf16 to vector<2x8x64xbf16>
    %c0_5 = arith.constant 0 : index
    %c0_6 = arith.constant 0 : index
    %c0_7 = arith.constant 0 : index
    %4 = vector.load %arg5[%c0_5, %c0_6, %c0_7] : memref<2x8x256xbf16, #tpu.memory_space<vmem>>, vector<2x8x64xbf16>
    tpu.vector_store %arg5[%c0_5, %c0_6, %c0_7], %3 {strides = array<i32>} : memref<2x8x256xbf16, #tpu.memory_space<vmem>>, vector<2x8x64xbf16>,
    %c0_8 = arith.constant 0 : index
    %c0_9 = arith.constant 0 : index
    %c192 = arith.constant 192 : index
    %5 = vector.load %arg5[%c0_8, %c0_9, %c192] : memref<2x8x256xbf16, #tpu.memory_space<vmem>>, vector<2x8x64xbf16>
    tpu.vector_store %arg5[%c0_8, %c0_9, %c192], %3 {strides = array<i32>} : memref<2x8x256xbf16, #tpu.memory_space<vmem>>, vector<2x8x64xbf16>,
    %c0_10 = arith.constant 0 : index
    %c0_11 = arith.constant 0 : index
    %c0_12 = arith.constant 0 : index
    %6 = vector.load %arg1[%c0_10, %c0_11, %c0_12] : memref<2x4x128xf32, #tpu.memory_space<vmem>>, vector<2x4x128xf32>
    %7 = arith.truncf %6 : vector<2x4x128xf32> to vector<2x4x128xbf16>
    %c0_13 = arith.constant 0 : index
    %c2 = arith.constant 2 : index
    %c64 = arith.constant 64 : index
    %8 = vector.load %arg5[%c0_13, %c2, %c64] : memref<2x8x256xbf16, #tpu.memory_space<vmem>>, vector<2x4x128xbf16>
    tpu.vector_store %arg5[%c0_13, %c2, %c64], %7 {strides = array<i32>} : memref<2x8x256xbf16, #tpu.memory_space<vmem>>, vector<2x4x128xbf16>,
    %cst_14 = arith.constant 0.000000e+00 : f32
    %9 = vector.broadcast %cst_14 : f32 to vector<8x128xf32>
    %c0_15 = arith.constant 0 : index
    %c0_16 = arith.constant 0 : index
    %c0_17 = arith.constant 0 : index
    %10 = vector.load %arg5[%c0_15, %c0_16, %c0_17] : memref<2x8x256xbf16, #tpu.memory_space<vmem>>, vector<2x4x256xbf16>
    %11 = vector.shape_cast %10 : vector<2x4x256xbf16> to vector<8x256xbf16>
    %c0_18 = arith.constant 0 : index
    %c0_19 = arith.constant 0 : index
    %c0_20 = arith.constant 0 : index
    %12 = vector.load %arg2[%c0_18, %c0_19, %c0_20] : memref<5x256x128xbf16, #tpu.memory_space<vmem>>, vector<1x256x128xbf16>
    %13 = vector.shape_cast %12 : vector<1x256x128xbf16> to vector<256x128xbf16>
    %cst_21 = arith.constant dense<0.000000e+00> : vector<8x128xf32>
    %14 = tpu.matmul %11, %13, %cst_21 {dimension_numbers = #tpu.dot_dimension_numbers<[1], [0], [0], [1], [0, 0, 1, 1], [], []>} : vector<8x256xbf16>, vector<256x128xbf16>, vector<8x128xf32> -> vector<8x128xf32>
    %15 = arith.addf %9, %14 : vector<8x128xf32>
    %c0_22 = arith.constant 0 : index
    %c1 = arith.constant 1 : index
    %c0_23 = arith.constant 0 : index
    %16 = vector.load %arg5[%c0_22, %c1, %c0_23] : memref<2x8x256xbf16, #tpu.memory_space<vmem>>, vector<2x4x256xbf16>
    %17 = vector.shape_cast %16 : vector<2x4x256xbf16> to vector<8x256xbf16>
    %c1_24 = arith.constant 1 : index
    %c0_25 = arith.constant 0 : index
    %c0_26 = arith.constant 0 : index
    %18 = vector.load %arg2[%c1_24, %c0_25, %c0_26] : memref<5x256x128xbf16, #tpu.memory_space<vmem>>, vector<1x256x128xbf16>
    %19 = vector.shape_cast %18 : vector<1x256x128xbf16> to vector<256x128xbf16>
    %cst_27 = arith.constant dense<0.000000e+00> : vector<8x128xf32>
    %20 = tpu.matmul %17, %19, %cst_27 {dimension_numbers = #tpu.dot_dimension_numbers<[1], [0], [0], [1], [0, 0, 1, 1], [], []>} : vector<8x256xbf16>, vector<256x128xbf16>, vector<8x128xf32> -> vector<8x128xf32>
    %21 = arith.addf %15, %20 : vector<8x128xf32>
    %c0_28 = arith.constant 0 : index
    %c2_29 = arith.constant 2 : index
    %c0_30 = arith.constant 0 : index
    %22 = vector.load %arg5[%c0_28, %c2_29, %c0_30] : memref<2x8x256xbf16, #tpu.memory_space<vmem>>, vector<2x4x256xbf16>
    %23 = vector.shape_cast %22 : vector<2x4x256xbf16> to vector<8x256xbf16>
    %c2_31 = arith.constant 2 : index
    %c0_32 = arith.constant 0 : index
    %c0_33 = arith.constant 0 : index
    %24 = vector.load %arg2[%c2_31, %c0_32, %c0_33] : memref<5x256x128xbf16, #tpu.memory_space<vmem>>, vector<1x256x128xbf16>
    %25 = vector.shape_cast %24 : vector<1x256x128xbf16> to vector<256x128xbf16>
    %cst_34 = arith.constant dense<0.000000e+00> : vector<8x128xf32>
    %26 = tpu.matmul %23, %25, %cst_34 {dimension_numbers = #tpu.dot_dimension_numbers<[1], [0], [0], [1], [0, 0, 1, 1], [], []>} : vector<8x256xbf16>, vector<256x128xbf16>, vector<8x128xf32> -> vector<8x128xf32>
    %27 = arith.addf %21, %26 : vector<8x128xf32>
    %c0_35 = arith.constant 0 : index
    %c3 = arith.constant 3 : index
    %c0_36 = arith.constant 0 : index
    %28 = vector.load %arg5[%c0_35, %c3, %c0_36] : memref<2x8x256xbf16, #tpu.memory_space<vmem>>, vector<2x4x256xbf16>
    %29 = vector.shape_cast %28 : vector<2x4x256xbf16> to vector<8x256xbf16>
    %c3_37 = arith.constant 3 : index
    %c0_38 = arith.constant 0 : index
    %c0_39 = arith.constant 0 : index
    %30 = vector.load %arg2[%c3_37, %c0_38, %c0_39] : memref<5x256x128xbf16, #tpu.memory_space<vmem>>, vector<1x256x128xbf16>
    %31 = vector.shape_cast %30 : vector<1x256x128xbf16> to vector<256x128xbf16>
    %cst_40 = arith.constant dense<0.000000e+00> : vector<8x128xf32>
    %32 = tpu.matmul %29, %31, %cst_40 {dimension_numbers = #tpu.dot_dimension_numbers<[1], [0], [0], [1], [0, 0, 1, 1], [], []>} : vector<8x256xbf16>, vector<256x128xbf16>, vector<8x128xf32> -> vector<8x128xf32>
    %33 = arith.addf %27, %32 : vector<8x128xf32>
    %c0_41 = arith.constant 0 : index
    %c4 = arith.constant 4 : index
    %c0_42 = arith.constant 0 : index
    %34 = vector.load %arg5[%c0_41, %c4, %c0_42] : memref<2x8x256xbf16, #tpu.memory_space<vmem>>, vector<2x4x256xbf16>
    %35 = vector.shape_cast %34 : vector<2x4x256xbf16> to vector<8x256xbf16>
    %c4_43 = arith.constant 4 : index
    %c0_44 = arith.constant 0 : index
    %c0_45 = arith.constant 0 : index
    %36 = vector.load %arg2[%c4_43, %c0_44, %c0_45] : memref<5x256x128xbf16, #tpu.memory_space<vmem>>, vector<1x256x128xbf16>
    %37 = vector.shape_cast %36 : vector<1x256x128xbf16> to vector<256x128xbf16>
    %cst_46 = arith.constant dense<0.000000e+00> : vector<8x128xf32>
    %38 = tpu.matmul %35, %37, %cst_46 {dimension_numbers = #tpu.dot_dimension_numbers<[1], [0], [0], [1], [0, 0, 1, 1], [], []>} : vector<8x256xbf16>, vector<256x128xbf16>, vector<8x128xf32> -> vector<8x128xf32>
    %39 = arith.addf %33, %38 : vector<8x128xf32>
    %c0_47 = arith.constant 0 : index
    %c0_48 = arith.constant 0 : index
    %40 = vector.load %arg3[%c0_47, %c0_48] : memref<1x128xf32, #tpu.memory_space<vmem>>, vector<1x128xf32>
    %41 = vector.broadcast %40 : vector<1x128xf32> to vector<8x128xf32>
    %42 = arith.addf %39, %41 : vector<8x128xf32>
    %cst_49 = arith.constant 5.000000e-01 : f32
    %43 = vector.broadcast %cst_49 : f32 to vector<8x128xf32>
    %44 = arith.mulf %43, %42 : vector<8x128xf32>
    %cst_50 = arith.constant 4.471500e-02 : f32
    %45 = vector.broadcast %cst_50 : f32 to vector<8x128xf32>
    %46 = arith.mulf %45, %42 : vector<8x128xf32>
    %47 = arith.mulf %46, %42 : vector<8x128xf32>
    %48 = arith.mulf %47, %42 : vector<8x128xf32>
    %49 = arith.addf %42, %48 : vector<8x128xf32>
    %cst_51 = arith.constant 0.797884583 : f32
    %50 = vector.broadcast %cst_51 : f32 to vector<8x128xf32>
    %51 = arith.mulf %50, %49 : vector<8x128xf32>
    %52 = math.tanh %51 : vector<8x128xf32>
    %cst_52 = arith.constant 1.000000e+00 : f32
    %53 = vector.broadcast %cst_52 : f32 to vector<8x128xf32>
    %54 = arith.addf %53, %52 : vector<8x128xf32>
    %55 = arith.mulf %44, %54 : vector<8x128xf32>
    %56 = vector.shape_cast %55 : vector<8x128xf32> to vector<4x2x128xf32>
    %57 = vector.extract_strided_slice %56 {offsets = [0, 0, 0], sizes = [4, 1, 128], strides = [1, 1, 1]} : vector<4x2x128xf32> to vector<4x1x128xf32>
    %58 = vector.shape_cast %57 : vector<4x1x128xf32> to vector<4x128xf32>
    %59 = vector.extract_strided_slice %56 {offsets = [0, 1, 0], sizes = [4, 1, 128], strides = [1, 1, 1]} : vector<4x2x128xf32> to vector<4x1x128xf32>
    %60 = vector.shape_cast %59 : vector<4x1x128xf32> to vector<4x128xf32>
    %61 = arith.maximumf %58, %60 : vector<4x128xf32>
    %62 = vector.extract_strided_slice %61 {offsets = [0, 0], sizes = [4, 64], strides = [1, 1]} : vector<4x128xf32> to vector<4x64xf32>
    %63 = vector.extract_strided_slice %61 {offsets = [0, 64], sizes = [4, 64], strides = [1, 1]} : vector<4x128xf32> to vector<4x64xf32>
    %64 = arith.maximumf %62, %63 : vector<4x64xf32>
    %65 = vector.shape_cast %64 : vector<4x64xf32> to vector<2x2x64xf32>
    %c0_53 = arith.constant 0 : index
    %c0_54 = arith.constant 0 : index
    %c0_55 = arith.constant 0 : index
    %66 = vector.load %arg4[%c0_53, %c0_54, %c0_55] : memref<2x2x64xf32, #tpu.memory_space<vmem>>, vector<2x2x64xf32>
    tpu.vector_store %arg4[%c0_53, %c0_54, %c0_55], %65 {strides = array<i32>} : memref<2x2x64xf32, #tpu.memory_space<vmem>>, vector<2x2x64xf32>,
    return
  }
  func.func @transform_0(%arg0: i32) -> (i32, i32, i32) {
    %c0_i32 = arith.constant 0 : i32
    %c0_i32_0 = arith.constant 0 : i32
    %c0_i32_1 = arith.constant 0 : i32
    return %arg0, %c0_i32, %c0_i32_0 : i32, i32, i32
  }
  func.func @transform_1(%arg0: i32) -> (i32, i32, i32) {
    %c0_i32 = arith.constant 0 : i32
    %c0_i32_0 = arith.constant 0 : i32
    %c0_i32_1 = arith.constant 0 : i32
    %c0_i32_2 = arith.constant 0 : i32
    return %c0_i32, %c0_i32_0, %c0_i32_1 : i32, i32, i32
  }
  func.func @transform_2(%arg0: i32) -> (i32, i32) {
    %c0_i32 = arith.constant 0 : i32
    %c0_i32_0 = arith.constant 0 : i32
    %c0_i32_1 = arith.constant 0 : i32
    return %c0_i32, %c0_i32_0 : i32, i32
  }
  func.func @transform_3(%arg0: i32) -> (i32, i32, i32) {
    %c0_i32 = arith.constant 0 : i32
    %c0_i32_0 = arith.constant 0 : i32
    %c0_i32_1 = arith.constant 0 : i32
    return %arg0, %c0_i32, %c0_i32_0 : i32, i32, i32
  }
}

module attributes {stable_mosaic.version = 11 : i64} {
  func.func @_conv_head_kernel(%arg0: i32, %arg1: memref<2x2x64xf32, #tpu.memory_space<vmem>>, %arg2: memref<5x192x32xbf16, #tpu.memory_space<vmem>>, %arg3: memref<1x32xf32, #tpu.memory_space<vmem>>, %arg4: memref<16x128xbf16, #tpu.memory_space<vmem>>, %arg5: memref<1x128xf32, #tpu.memory_space<vmem>>, %arg6: memref<128x64xbf16, #tpu.memory_space<vmem>>, %arg7: memref<1x64xf32, #tpu.memory_space<vmem>>, %arg8: memref<64x1xbf16, #tpu.memory_space<vmem>>, %arg9: memref<1x1xf32, #tpu.memory_space<vmem>>, %arg10: memref<2x1xf32, #tpu.memory_space<vmem>>, %arg11: memref<2x6x192xbf16, #tpu.memory_space<vmem>>) attributes {dimension_semantics = [#tpu.dimension_semantics<parallel>], iteration_bounds = array<i64: 1>, scalar_prefetch = 0 : i64, scratch_operands = 1 : i64, tpu.core_type = #tpu.core_type<tc>, window_params = [{transform_indices = @transform_0, window_bounds = array<i64: 2, 2, 64>}, {pipeline_mode = #tpu.pipeline_mode<synchronous>, transform_indices = @transform_1, window_bounds = array<i64: 5, 192, 32>}, {pipeline_mode = #tpu.pipeline_mode<synchronous>, transform_indices = @transform_2, window_bounds = array<i64: 1, 32>}, {pipeline_mode = #tpu.pipeline_mode<synchronous>, transform_indices = @transform_3, window_bounds = array<i64: 16, 128>}, {pipeline_mode = #tpu.pipeline_mode<synchronous>, transform_indices = @transform_4, window_bounds = array<i64: 1, 128>}, {pipeline_mode = #tpu.pipeline_mode<synchronous>, transform_indices = @transform_5, window_bounds = array<i64: 128, 64>}, {pipeline_mode = #tpu.pipeline_mode<synchronous>, transform_indices = @transform_6, window_bounds = array<i64: 1, 64>}, {pipeline_mode = #tpu.pipeline_mode<synchronous>, transform_indices = @transform_7, window_bounds = array<i64: 64, 1>}, {pipeline_mode = #tpu.pipeline_mode<synchronous>, transform_indices = @transform_8, window_bounds = array<i64: 1, 1>}, {transform_indices = @transform_9, window_bounds = array<i64: 2, 1>}]} {
    %cst = arith.constant 0.000000e+00 : bf16
    %0 = vector.broadcast %cst : bf16 to vector<2x2x192xbf16>
    %c0 = arith.constant 0 : index
    %c0_0 = arith.constant 0 : index
    %c0_1 = arith.constant 0 : index
    %1 = vector.load %arg11[%c0, %c0_0, %c0_1] : memref<2x6x192xbf16, #tpu.memory_space<vmem>>, vector<2x2x192xbf16>
    tpu.vector_store %arg11[%c0, %c0_0, %c0_1], %0 {strides = array<i32>} : memref<2x6x192xbf16, #tpu.memory_space<vmem>>, vector<2x2x192xbf16>,
    %c0_2 = arith.constant 0 : index
    %c4 = arith.constant 4 : index
    %c0_3 = arith.constant 0 : index
    %2 = vector.load %arg11[%c0_2, %c4, %c0_3] : memref<2x6x192xbf16, #tpu.memory_space<vmem>>, vector<2x2x192xbf16>
    tpu.vector_store %arg11[%c0_2, %c4, %c0_3], %0 {strides = array<i32>} : memref<2x6x192xbf16, #tpu.memory_space<vmem>>, vector<2x2x192xbf16>,
    %cst_4 = arith.constant 0.000000e+00 : bf16
    %3 = vector.broadcast %cst_4 : bf16 to vector<2x6x64xbf16>
    %c0_5 = arith.constant 0 : index
    %c0_6 = arith.constant 0 : index
    %c0_7 = arith.constant 0 : index
    %4 = vector.load %arg11[%c0_5, %c0_6, %c0_7] : memref<2x6x192xbf16, #tpu.memory_space<vmem>>, vector<2x6x64xbf16>
    tpu.vector_store %arg11[%c0_5, %c0_6, %c0_7], %3 {strides = array<i32>} : memref<2x6x192xbf16, #tpu.memory_space<vmem>>, vector<2x6x64xbf16>,
    %c0_8 = arith.constant 0 : index
    %c0_9 = arith.constant 0 : index
    %c128 = arith.constant 128 : index
    %5 = vector.load %arg11[%c0_8, %c0_9, %c128] : memref<2x6x192xbf16, #tpu.memory_space<vmem>>, vector<2x6x64xbf16>
    tpu.vector_store %arg11[%c0_8, %c0_9, %c128], %3 {strides = array<i32>} : memref<2x6x192xbf16, #tpu.memory_space<vmem>>, vector<2x6x64xbf16>,
    %c0_10 = arith.constant 0 : index
    %c0_11 = arith.constant 0 : index
    %c0_12 = arith.constant 0 : index
    %6 = vector.load %arg1[%c0_10, %c0_11, %c0_12] : memref<2x2x64xf32, #tpu.memory_space<vmem>>, vector<2x2x64xf32>
    %7 = arith.truncf %6 : vector<2x2x64xf32> to vector<2x2x64xbf16>
    %c0_13 = arith.constant 0 : index
    %c2 = arith.constant 2 : index
    %c64 = arith.constant 64 : index
    %8 = vector.load %arg11[%c0_13, %c2, %c64] : memref<2x6x192xbf16, #tpu.memory_space<vmem>>, vector<2x2x64xbf16>
    tpu.vector_store %arg11[%c0_13, %c2, %c64], %7 {strides = array<i32>} : memref<2x6x192xbf16, #tpu.memory_space<vmem>>, vector<2x2x64xbf16>,
    %cst_14 = arith.constant 0.000000e+00 : f32
    %9 = vector.broadcast %cst_14 : f32 to vector<4x32xf32>
    %c0_15 = arith.constant 0 : index
    %c0_16 = arith.constant 0 : index
    %c0_17 = arith.constant 0 : index
    %10 = vector.load %arg11[%c0_15, %c0_16, %c0_17] : memref<2x6x192xbf16, #tpu.memory_space<vmem>>, vector<2x2x192xbf16>
    %11 = vector.shape_cast %10 : vector<2x2x192xbf16> to vector<4x192xbf16>
    %c0_18 = arith.constant 0 : index
    %c0_19 = arith.constant 0 : index
    %c0_20 = arith.constant 0 : index
    %12 = vector.load %arg2[%c0_18, %c0_19, %c0_20] : memref<5x192x32xbf16, #tpu.memory_space<vmem>>, vector<1x192x32xbf16>
    %13 = vector.shape_cast %12 : vector<1x192x32xbf16> to vector<192x32xbf16>
    %cst_21 = arith.constant dense<0.000000e+00> : vector<4x32xf32>
    %14 = tpu.matmul %11, %13, %cst_21 {dimension_numbers = #tpu.dot_dimension_numbers<[1], [0], [0], [1], [0, 0, 1, 1], [], []>} : vector<4x192xbf16>, vector<192x32xbf16>, vector<4x32xf32> -> vector<4x32xf32>
    %15 = arith.addf %9, %14 : vector<4x32xf32>
    %c0_22 = arith.constant 0 : index
    %c1 = arith.constant 1 : index
    %c0_23 = arith.constant 0 : index
    %16 = vector.load %arg11[%c0_22, %c1, %c0_23] : memref<2x6x192xbf16, #tpu.memory_space<vmem>>, vector<2x2x192xbf16>
    %17 = vector.shape_cast %16 : vector<2x2x192xbf16> to vector<4x192xbf16>
    %c1_24 = arith.constant 1 : index
    %c0_25 = arith.constant 0 : index
    %c0_26 = arith.constant 0 : index
    %18 = vector.load %arg2[%c1_24, %c0_25, %c0_26] : memref<5x192x32xbf16, #tpu.memory_space<vmem>>, vector<1x192x32xbf16>
    %19 = vector.shape_cast %18 : vector<1x192x32xbf16> to vector<192x32xbf16>
    %cst_27 = arith.constant dense<0.000000e+00> : vector<4x32xf32>
    %20 = tpu.matmul %17, %19, %cst_27 {dimension_numbers = #tpu.dot_dimension_numbers<[1], [0], [0], [1], [0, 0, 1, 1], [], []>} : vector<4x192xbf16>, vector<192x32xbf16>, vector<4x32xf32> -> vector<4x32xf32>
    %21 = arith.addf %15, %20 : vector<4x32xf32>
    %c0_28 = arith.constant 0 : index
    %c2_29 = arith.constant 2 : index
    %c0_30 = arith.constant 0 : index
    %22 = vector.load %arg11[%c0_28, %c2_29, %c0_30] : memref<2x6x192xbf16, #tpu.memory_space<vmem>>, vector<2x2x192xbf16>
    %23 = vector.shape_cast %22 : vector<2x2x192xbf16> to vector<4x192xbf16>
    %c2_31 = arith.constant 2 : index
    %c0_32 = arith.constant 0 : index
    %c0_33 = arith.constant 0 : index
    %24 = vector.load %arg2[%c2_31, %c0_32, %c0_33] : memref<5x192x32xbf16, #tpu.memory_space<vmem>>, vector<1x192x32xbf16>
    %25 = vector.shape_cast %24 : vector<1x192x32xbf16> to vector<192x32xbf16>
    %cst_34 = arith.constant dense<0.000000e+00> : vector<4x32xf32>
    %26 = tpu.matmul %23, %25, %cst_34 {dimension_numbers = #tpu.dot_dimension_numbers<[1], [0], [0], [1], [0, 0, 1, 1], [], []>} : vector<4x192xbf16>, vector<192x32xbf16>, vector<4x32xf32> -> vector<4x32xf32>
    %27 = arith.addf %21, %26 : vector<4x32xf32>
    %c0_35 = arith.constant 0 : index
    %c3 = arith.constant 3 : index
    %c0_36 = arith.constant 0 : index
    %28 = vector.load %arg11[%c0_35, %c3, %c0_36] : memref<2x6x192xbf16, #tpu.memory_space<vmem>>, vector<2x2x192xbf16>
    %29 = vector.shape_cast %28 : vector<2x2x192xbf16> to vector<4x192xbf16>
    %c3_37 = arith.constant 3 : index
    %c0_38 = arith.constant 0 : index
    %c0_39 = arith.constant 0 : index
    %30 = vector.load %arg2[%c3_37, %c0_38, %c0_39] : memref<5x192x32xbf16, #tpu.memory_space<vmem>>, vector<1x192x32xbf16>
    %31 = vector.shape_cast %30 : vector<1x192x32xbf16> to vector<192x32xbf16>
    %cst_40 = arith.constant dense<0.000000e+00> : vector<4x32xf32>
    %32 = tpu.matmul %29, %31, %cst_40 {dimension_numbers = #tpu.dot_dimension_numbers<[1], [0], [0], [1], [0, 0, 1, 1], [], []>} : vector<4x192xbf16>, vector<192x32xbf16>, vector<4x32xf32> -> vector<4x32xf32>
    %33 = arith.addf %27, %32 : vector<4x32xf32>
    %c0_41 = arith.constant 0 : index
    %c4_42 = arith.constant 4 : index
    %c0_43 = arith.constant 0 : index
    %34 = vector.load %arg11[%c0_41, %c4_42, %c0_43] : memref<2x6x192xbf16, #tpu.memory_space<vmem>>, vector<2x2x192xbf16>
    %35 = vector.shape_cast %34 : vector<2x2x192xbf16> to vector<4x192xbf16>
    %c4_44 = arith.constant 4 : index
    %c0_45 = arith.constant 0 : index
    %c0_46 = arith.constant 0 : index
    %36 = vector.load %arg2[%c4_44, %c0_45, %c0_46] : memref<5x192x32xbf16, #tpu.memory_space<vmem>>, vector<1x192x32xbf16>
    %37 = vector.shape_cast %36 : vector<1x192x32xbf16> to vector<192x32xbf16>
    %cst_47 = arith.constant dense<0.000000e+00> : vector<4x32xf32>
    %38 = tpu.matmul %35, %37, %cst_47 {dimension_numbers = #tpu.dot_dimension_numbers<[1], [0], [0], [1], [0, 0, 1, 1], [], []>} : vector<4x192xbf16>, vector<192x32xbf16>, vector<4x32xf32> -> vector<4x32xf32>
    %39 = arith.addf %33, %38 : vector<4x32xf32>
    %c0_48 = arith.constant 0 : index
    %c0_49 = arith.constant 0 : index
    %40 = vector.load %arg3[%c0_48, %c0_49] : memref<1x32xf32, #tpu.memory_space<vmem>>, vector<1x32xf32>
    %41 = vector.broadcast %40 : vector<1x32xf32> to vector<4x32xf32>
    %42 = arith.addf %39, %41 : vector<4x32xf32>
    %cst_50 = arith.constant 5.000000e-01 : f32
    %43 = vector.broadcast %cst_50 : f32 to vector<4x32xf32>
    %44 = arith.mulf %43, %42 : vector<4x32xf32>
    %cst_51 = arith.constant 4.471500e-02 : f32
    %45 = vector.broadcast %cst_51 : f32 to vector<4x32xf32>
    %46 = arith.mulf %45, %42 : vector<4x32xf32>
    %47 = arith.mulf %46, %42 : vector<4x32xf32>
    %48 = arith.mulf %47, %42 : vector<4x32xf32>
    %49 = arith.addf %42, %48 : vector<4x32xf32>
    %cst_52 = arith.constant 0.797884583 : f32
    %50 = vector.broadcast %cst_52 : f32 to vector<4x32xf32>
    %51 = arith.mulf %50, %49 : vector<4x32xf32>
    %52 = math.tanh %51 : vector<4x32xf32>
    %cst_53 = arith.constant 1.000000e+00 : f32
    %53 = vector.broadcast %cst_53 : f32 to vector<4x32xf32>
    %54 = arith.addf %53, %52 : vector<4x32xf32>
    %55 = arith.mulf %44, %54 : vector<4x32xf32>
    %56 = vector.shape_cast %55 : vector<4x32xf32> to vector<2x2x32xf32>
    %57 = vector.extract_strided_slice %56 {offsets = [0, 0, 0], sizes = [2, 1, 32], strides = [1, 1, 1]} : vector<2x2x32xf32> to vector<2x1x32xf32>
    %58 = vector.shape_cast %57 : vector<2x1x32xf32> to vector<2x32xf32>
    %59 = vector.extract_strided_slice %56 {offsets = [0, 1, 0], sizes = [2, 1, 32], strides = [1, 1, 1]} : vector<2x2x32xf32> to vector<2x1x32xf32>
    %60 = vector.shape_cast %59 : vector<2x1x32xf32> to vector<2x32xf32>
    %61 = arith.maximumf %58, %60 : vector<2x32xf32>
    %62 = vector.extract_strided_slice %61 {offsets = [0, 0], sizes = [2, 16], strides = [1, 1]} : vector<2x32xf32> to vector<2x16xf32>
    %63 = vector.extract_strided_slice %61 {offsets = [0, 16], sizes = [2, 16], strides = [1, 1]} : vector<2x32xf32> to vector<2x16xf32>
    %64 = arith.maximumf %62, %63 : vector<2x16xf32>
    %65 = vector.shape_cast %64 : vector<2x16xf32> to vector<2x1x16xf32>
    %66 = vector.shape_cast %65 : vector<2x1x16xf32> to vector<2x16xf32>
    %67 = arith.truncf %66 : vector<2x16xf32> to vector<2x16xbf16>
    %c0_54 = arith.constant 0 : index
    %c0_55 = arith.constant 0 : index
    %68 = vector.load %arg4[%c0_54, %c0_55] : memref<16x128xbf16, #tpu.memory_space<vmem>>, vector<16x128xbf16>
    %cst_56 = arith.constant dense<0.000000e+00> : vector<2x128xf32>
    %69 = tpu.matmul %67, %68, %cst_56 {dimension_numbers = #tpu.dot_dimension_numbers<[1], [0], [0], [1], [0, 0, 1, 1], [], []>} : vector<2x16xbf16>, vector<16x128xbf16>, vector<2x128xf32> -> vector<2x128xf32>
    %c0_57 = arith.constant 0 : index
    %c0_58 = arith.constant 0 : index
    %70 = vector.load %arg5[%c0_57, %c0_58] : memref<1x128xf32, #tpu.memory_space<vmem>>, vector<1x128xf32>
    %71 = vector.broadcast %70 : vector<1x128xf32> to vector<2x128xf32>
    %72 = arith.addf %69, %71 : vector<2x128xf32>
    %73 = math.tanh %72 : vector<2x128xf32>
    %74 = arith.truncf %73 : vector<2x128xf32> to vector<2x128xbf16>
    %c0_59 = arith.constant 0 : index
    %c0_60 = arith.constant 0 : index
    %75 = vector.load %arg6[%c0_59, %c0_60] : memref<128x64xbf16, #tpu.memory_space<vmem>>, vector<128x64xbf16>
    %cst_61 = arith.constant dense<0.000000e+00> : vector<2x64xf32>
    %76 = tpu.matmul %74, %75, %cst_61 {dimension_numbers = #tpu.dot_dimension_numbers<[1], [0], [0], [1], [0, 0, 1, 1], [], []>} : vector<2x128xbf16>, vector<128x64xbf16>, vector<2x64xf32> -> vector<2x64xf32>
    %c0_62 = arith.constant 0 : index
    %c0_63 = arith.constant 0 : index
    %77 = vector.load %arg7[%c0_62, %c0_63] : memref<1x64xf32, #tpu.memory_space<vmem>>, vector<1x64xf32>
    %78 = vector.broadcast %77 : vector<1x64xf32> to vector<2x64xf32>
    %79 = arith.addf %76, %78 : vector<2x64xf32>
    %80 = math.tanh %79 : vector<2x64xf32>
    %81 = arith.truncf %80 : vector<2x64xf32> to vector<2x64xbf16>
    %c0_64 = arith.constant 0 : index
    %c0_65 = arith.constant 0 : index
    %82 = vector.load %arg8[%c0_64, %c0_65] : memref<64x1xbf16, #tpu.memory_space<vmem>>, vector<64x1xbf16>
    %cst_66 = arith.constant dense<0.000000e+00> : vector<2x1xf32>
    %83 = tpu.matmul %81, %82, %cst_66 {dimension_numbers = #tpu.dot_dimension_numbers<[1], [0], [0], [1], [0, 0, 1, 1], [], []>} : vector<2x64xbf16>, vector<64x1xbf16>, vector<2x1xf32> -> vector<2x1xf32>
    %c0_67 = arith.constant 0 : index
    %c0_68 = arith.constant 0 : index
    %84 = vector.load %arg9[%c0_67, %c0_68] : memref<1x1xf32, #tpu.memory_space<vmem>>, vector<1x1xf32>
    %85 = vector.broadcast %84 : vector<1x1xf32> to vector<2x1xf32>
    %86 = arith.addf %83, %85 : vector<2x1xf32>
    %c0_69 = arith.constant 0 : index
    %c0_70 = arith.constant 0 : index
    %87 = vector.load %arg10[%c0_69, %c0_70] : memref<2x1xf32, #tpu.memory_space<vmem>>, vector<2x1xf32>
    tpu.vector_store %arg10[%c0_69, %c0_70], %86 {strides = array<i32>} : memref<2x1xf32, #tpu.memory_space<vmem>>, vector<2x1xf32>,
    return
  }
  func.func @transform_0(%arg0: i32) -> (i32, i32, i32) {
    %c0_i32 = arith.constant 0 : i32
    %c0_i32_0 = arith.constant 0 : i32
    %c0_i32_1 = arith.constant 0 : i32
    return %arg0, %c0_i32, %c0_i32_0 : i32, i32, i32
  }
  func.func @transform_1(%arg0: i32) -> (i32, i32, i32) {
    %c0_i32 = arith.constant 0 : i32
    %c0_i32_0 = arith.constant 0 : i32
    %c0_i32_1 = arith.constant 0 : i32
    %c0_i32_2 = arith.constant 0 : i32
    return %c0_i32, %c0_i32_0, %c0_i32_1 : i32, i32, i32
  }
  func.func @transform_2(%arg0: i32) -> (i32, i32) {
    %c0_i32 = arith.constant 0 : i32
    %c0_i32_0 = arith.constant 0 : i32
    %c0_i32_1 = arith.constant 0 : i32
    return %c0_i32, %c0_i32_0 : i32, i32
  }
  func.func @transform_3(%arg0: i32) -> (i32, i32) {
    %c0_i32 = arith.constant 0 : i32
    %c0_i32_0 = arith.constant 0 : i32
    %c0_i32_1 = arith.constant 0 : i32
    return %c0_i32, %c0_i32_0 : i32, i32
  }
  func.func @transform_4(%arg0: i32) -> (i32, i32) {
    %c0_i32 = arith.constant 0 : i32
    %c0_i32_0 = arith.constant 0 : i32
    %c0_i32_1 = arith.constant 0 : i32
    return %c0_i32, %c0_i32_0 : i32, i32
  }
  func.func @transform_5(%arg0: i32) -> (i32, i32) {
    %c0_i32 = arith.constant 0 : i32
    %c0_i32_0 = arith.constant 0 : i32
    %c0_i32_1 = arith.constant 0 : i32
    return %c0_i32, %c0_i32_0 : i32, i32
  }
  func.func @transform_6(%arg0: i32) -> (i32, i32) {
    %c0_i32 = arith.constant 0 : i32
    %c0_i32_0 = arith.constant 0 : i32
    %c0_i32_1 = arith.constant 0 : i32
    return %c0_i32, %c0_i32_0 : i32, i32
  }
  func.func @transform_7(%arg0: i32) -> (i32, i32) {
    %c0_i32 = arith.constant 0 : i32
    %c0_i32_0 = arith.constant 0 : i32
    %c0_i32_1 = arith.constant 0 : i32
    return %c0_i32, %c0_i32_0 : i32, i32
  }
  func.func @transform_8(%arg0: i32) -> (i32, i32) {
    %c0_i32 = arith.constant 0 : i32
    %c0_i32_0 = arith.constant 0 : i32
    %c0_i32_1 = arith.constant 0 : i32
    return %c0_i32, %c0_i32_0 : i32, i32
  }
  func.func @transform_9(%arg0: i32) -> (i32, i32) {
    %c0_i32 = arith.constant 0 : i32
    %c0_i32_0 = arith.constant 0 : i32
    return %arg0, %c0_i32 : i32, i32
  }
}

</mosaic_0001>

<llo_original>
// kernel: _lambda_.6
$region0: #{_lambda_.6}
  #allocation0 [shape = 'u32[]', space=smem, size = 0x4, offset = 0x4, fixed_abs, tag = 'smem constant byte address 0x4 - core index']
  #allocation1 [shape = 'u32[144,128]{1,0:T(1,128)}', space=vmem, size = 0x12000, scoped, tag = 'internal scratch']
  #allocation2 [shape = 'bf16[2,8,256]{2,1,0:T(8,128)(2,1)}', space=vmem, size = 0x2000, scoped, tag = 'scratch operand']
  %s0 = inlined_call_operand.vmem [shape: f32[2,4,128], index: 0, kind: input, shape index: {}]
  %s1 = inlined_call_operand.vmem [shape: bf16[5,256,128], index: 1, kind: input, shape index: {}]
  %s2 = inlined_call_operand.vmem [shape: f32[1,128], index: 2, kind: input, shape index: {}]
  %s3 = inlined_call_operand.vmem [shape: f32[2,2,64], index: 3, kind: output, shape index: {}]
  %s4 = sld [smem:[#allocation0]]
  $region22: #{_lambda_.6} parent=0
    _
  %s6 = ssub.s32 1, %s4
  %s7 = scalar_select 0, %s6, %s4
  // Predicated region
  $region2: #{_lambda_.6} parent=0 // pred_check
    _
  $region3: #{_lambda_.6} parent=0 // pred_check_branch
    %9 = sbr.rel (0) target = $region5
  $region4: #{_lambda_.6} parent=0 // pred_region
    _
  $region5: #{_lambda_.6} parent=0 // pred_fallthru
    _
  // Predicated region
  $region6: #{_lambda_.6} parent=0 // pred_check
    _
  $region7: #{_lambda_.6} parent=0 // pred_check_branch
    %11 = sbr.rel (0) target = $region9
  $region8: #{_lambda_.6} parent=0 // pred_region
    _
  $region9: #{_lambda_.6} parent=0 // pred_fallthru
    _
  // Predicated region
  $region10: #{_lambda_.6} parent=0 // pred_check
    _
  $region11: #{_lambda_.6} parent=0 // pred_check_branch
    %13 = sbr.rel (0) target = $region13
  $region12: #{_lambda_.6} parent=0 // pred_region
    _
  $region13: #{_lambda_.6} parent=0 // pred_fallthru
    _
  %15 = vst [vmem:[#allocation2] sm:$0x11] 0
  %16 = vst [vmem:[#allocation2 + $0x8] sm:$0x11] 0
  %17 = vst [vmem:[#allocation2] sm:$0x88] 0
  %18 = vst [vmem:[#allocation2 + $0x8] sm:$0x88] 0
  %vm19 = vcmask 519168
  %20 = vst.msk [vmem:[#allocation2] sm:$0xf] %vm19, 0
  %21 = vst.msk [vmem:[#allocation2 + $0x8] sm:$0xf] %vm19, 0
  %vm22 = vcmask 1043968
  %23 = vst.msk [vmem:[#allocation2 + $0x4] sm:$0xf] %vm22, 0
  %24 = vst.msk [vmem:[#allocation2 + $0xc] sm:$0xf] %vm22, 0
  %v25 = vld [vmem:[%s0] sm:$0xf]
  %v26 = vld [vmem:[%s0 + $0x4] sm:$0xf]
  %v27 = vpack.c.bf16 %v25, %v25
  %v28 = vpack.c.bf16 %v26, %v26
  %v31 = vunpack.c.l.b16 %v27
  %v32 = vunpack.c.l.b16 %v28
  %v33 = vpack.c.b16 %v31, %v31
  %v34 = vpack.c.b16 %v32, %v32
  %v35 = vrot.slane %v33, 7
  %v36 = vrot.slane %v34, 7
  %37 = vrot.lane.b32.xlu0 %v35, 64
  %v38 = vpop.permute.xlu0 %37
  %39 = vrot.lane.b32.xlu0 %v36, 64
  %v40 = vpop.permute.xlu0 %39
  %v41 = vrot.slane %v38, 4
  %v42 = vrot.slane %v40, 4
  %vm43 = vcmask 523264
  %v44 = vsel %vm43, %v41, %v38
  %v45 = vsel %vm43, %v42, %v40
  %vm48 = vcmask 1042945
  %vm49 = vcmask 522245
  %vm50 = vmor %vm49, %vm48
  %51 = vst.msk [vmem:[#allocation2] sm:$0x66] %vm50, %v44
  %52 = vst.msk [vmem:[#allocation2 + $0x8] sm:$0x66] %vm50, %v45
  %v53 = vld [vmem:[#allocation2] sm:$0x33]
  %v54 = vld [vmem:[#allocation2 + $0x8] sm:$0x33]
  %v58 = vunpack.c.l.s4 1983009808
  %v59 = vunpack.c.0.s8 %v58
  %v60 = vlaneseq
  %v61 = vshrl.u32 %v60, 7
  %v62 = vsub.s32 %v59, %v61
  %v63 = vrot.slane %v53, %v62
  %v65 = vunpack.c.l.s4 1983009808
  %v66 = vunpack.c.0.s8 %v65
  %v67 = vlaneseq
  %v68 = vshrl.u32 %v67, 7
  %v69 = vsub.s32 %v66, %v68
  %v70 = vrot.slane %v54, %v69
  %v71 = vld [vmem:[%s1] sm:$0xf]
  %v72 = vld [vmem:[%s1 + $0x4] sm:$0xf]
  %v73 = vld [vmem:[%s1 + $0x8] sm:$0xf]
  %v74 = vld [vmem:[%s1 + $0xc] sm:$0xf]
  %v75 = vld [vmem:[%s1 + $0x10] sm:$0xf]
  %v76 = vld [vmem:[%s1 + $0x14] sm:$0xf]
  %v77 = vld [vmem:[%s1 + $0x18] sm:$0xf]
  %v78 = vld [vmem:[%s1 + $0x1c] sm:$0xf]
  %v79 = vld [vmem:[%s1 + $0x20] sm:$0xf]
  %v80 = vld [vmem:[%s1 + $0x24] sm:$0xf]
  %v81 = vld [vmem:[%s1 + $0x28] sm:$0xf]
  %v82 = vld [vmem:[%s1 + $0x2c] sm:$0xf]
  %v83 = vld [vmem:[%s1 + $0x30] sm:$0xf]
  %v84 = vld [vmem:[%s1 + $0x34] sm:$0xf]
  %v85 = vld [vmem:[%s1 + $0x38] sm:$0xf]
  %v86 = vld [vmem:[%s1 + $0x3c] sm:$0xf]
  %v87 = vld [vmem:[%s1 + $0x40] sm:$0xf]
  %v88 = vld [vmem:[%s1 + $0x44] sm:$0xf]
  %v89 = vld [vmem:[%s1 + $0x48] sm:$0xf]
  %v90 = vld [vmem:[%s1 + $0x4c] sm:$0xf]
  %v91 = vld [vmem:[%s1 + $0x50] sm:$0xf]
  %v92 = vld [vmem:[%s1 + $0x54] sm:$0xf]
  %v93 = vld [vmem:[%s1 + $0x58] sm:$0xf]
  %v94 = vld [vmem:[%s1 + $0x5c] sm:$0xf]
  %v95 = vld [vmem:[%s1 + $0x60] sm:$0xf]
  %v96 = vld [vmem:[%s1 + $0x64] sm:$0xf]
  %v97 = vld [vmem:[%s1 + $0x68] sm:$0xf]
  %v98 = vld [vmem:[%s1 + $0x6c] sm:$0xf]
  %v99 = vld [vmem:[%s1 + $0x70] sm:$0xf]
  %v100 = vld [vmem:[%s1 + $0x74] sm:$0xf]
  %v101 = vld [vmem:[%s1 + $0x78] sm:$0xf]
  %v102 = vld [vmem:[%s1 + $0x7c] sm:$0xf]
  %v103 = vld [vmem:[#allocation2] sm:$0x77]
  %v104 = vld [vmem:[#allocation2 + $0x8] sm:$0x77]
  %v108 = vunpack.c.l.s4 1983009808
  %v109 = vunpack.c.0.s8 %v108
  %v110 = vlaneseq
  %v111 = vshrl.u32 %v110, 7
  %v112 = vsub.s32 %v109, %v111
  %v113 = vrot.slane %v103, %v112
  %v114 = vcombine.high %v113, %v113
  %v116 = vunpack.c.l.s4 1983009808
  %v117 = vunpack.c.0.s8 %v116
  %v118 = vlaneseq
  %v119 = vshrl.u32 %v118, 7
  %v120 = vsub.s32 %v117, %v119
  %v121 = vrot.slane %v104, %v120
  %v122 = vcombine.high %v121, %v121
  %vm123 = vsmask.f32 1280
  %vm124 = vsmask.f32 3336
  %vm125 = vmor %vm123, %vm124
  %vm126 = vsmask.f32 5392
  %vm127 = vmor %vm125, %vm126
  %vm128 = vsmask.f32 7448
  %vm129 = vmor %vm127, %vm128
  %v131 = vshrl.u32 %v113, 16
  %v133 = vrot.slane %v131, 6
  %v134 = vshll.u32 %v113, 16
  %v136 = vrot.slane %v134, 7
  %v137 = vor.u32 %v133, %v136
  %v138 = vrot.slane %v137, 2
  %v140 = vshll.u32 %v114, 16
  %v142 = vrot.slane %v140, 7
  %v143 = vsel %vm129, %v138, %v142
  %v145 = vshrl.u32 %v121, 16
  %v147 = vrot.slane %v145, 6
  %v148 = vshll.u32 %v121, 16
  %v150 = vrot.slane %v148, 7
  %v151 = vor.u32 %v147, %v150
  %v152 = vrot.slane %v151, 2
  %v154 = vshll.u32 %v122, 16
  %v156 = vrot.slane %v154, 7
  %v157 = vsel %vm129, %v152, %v156
  %s158 = scalar_lea.vmem %s1, 128
  %v159 = vld [vmem:[%s158] sm:$0xf]
  %v160 = vld [vmem:[%s158 + $0x4] sm:$0xf]
  %v161 = vld [vmem:[%s158 + $0x8] sm:$0xf]
  %v162 = vld [vmem:[%s158 + $0xc] sm:$0xf]
  %v163 = vld [vmem:[%s158 + $0x10] sm:$0xf]
  %v164 = vld [vmem:[%s158 + $0x14] sm:$0xf]
  %v165 = vld [vmem:[%s158 + $0x18] sm:$0xf]
  %v166 = vld [vmem:[%s158 + $0x1c] sm:$0xf]
  %v167 = vld [vmem:[%s158 + $0x20] sm:$0xf]
  %v168 = vld [vmem:[%s158 + $0x24] sm:$0xf]
  %v169 = vld [vmem:[%s158 + $0x28] sm:$0xf]
  %v170 = vld [vmem:[%s158 + $0x2c] sm:$0xf]
  %v171 = vld [vmem:[%s158 + $0x30] sm:$0xf]
  %v172 = vld [vmem:[%s158 + $0x34] sm:$0xf]
  %v173 = vld [vmem:[%s158 + $0x38] sm:$0xf]
  %v174 = vld [vmem:[%s158 + $0x3c] sm:$0xf]
  %v175 = vld [vmem:[%s158 + $0x40] sm:$0xf]
  %v176 = vld [vmem:[%s158 + $0x44] sm:$0xf]
  %v177 = vld [vmem:[%s158 + $0x48] sm:$0xf]
  %v178 = vld [vmem:[%s158 + $0x4c] sm:$0xf]
  %v179 = vld [vmem:[%s158 + $0x50] sm:$0xf]
  %v180 = vld [vmem:[%s158 + $0x54] sm:$0xf]
  %v181 = vld [vmem:[%s158 + $0x58] sm:$0xf]
  %v182 = vld [vmem:[%s158 + $0x5c] sm:$0xf]
  %v183 = vld [vmem:[%s158 + $0x60] sm:$0xf]
  %v184 = vld [vmem:[%s158 + $0x64] sm:$0xf]
  %v185 = vld [vmem:[%s158 + $0x68] sm:$0xf]
  %v186 = vld [vmem:[%s158 + $0x6c] sm:$0xf]
  %v187 = vld [vmem:[%s158 + $0x70] sm:$0xf]
  %v188 = vld [vmem:[%s158 + $0x74] sm:$0xf]
  %v189 = vld [vmem:[%s158 + $0x78] sm:$0xf]
  %v190 = vld [vmem:[%s158 + $0x7c] sm:$0xf]
  %v191 = vcombine.low %v143, %v157
  %v193 = vunpack.c.l.s4 1983009808
  %v194 = vunpack.c.0.s8 %v193
  %v195 = vlaneseq
  %v196 = vshrl.u32 %v195, 7
  %v197 = vsub.s32 %v194, %v196
  %v198 = vrot.slane %v191, %v197
  %v199 = vcombine.high %v198, %v198
  %v234 = vunpack.c.l.b16 %v159
  %v235 = vunpack.c.l.b16 %v160
  %v236 = vunpack.c.l.b16 %v161
  %v237 = vunpack.c.l.b16 %v162
  %v238 = vunpack.c.l.b16 %v163
  %v239 = vunpack.c.l.b16 %v164
  %v240 = vunpack.c.l.b16 %v165
  %v241 = vunpack.c.l.b16 %v166
  %v242 = vunpack.c.l.b16 %v167
  %v243 = vunpack.c.l.b16 %v168
  %v244 = vunpack.c.l.b16 %v169
  %v245 = vunpack.c.l.b16 %v170
  %v246 = vunpack.c.l.b16 %v171
  %v247 = vunpack.c.l.b16 %v172
  %v248 = vunpack.c.l.b16 %v173
  %v249 = vunpack.c.l.b16 %v174
  %v250 = vunpack.c.l.b16 %v175
  %v251 = vunpack.c.l.b16 %v176
  %v252 = vunpack.c.l.b16 %v177
  %v253 = vunpack.c.l.b16 %v178
  %v254 = vunpack.c.l.b16 %v179
  %v255 = vunpack.c.l.b16 %v180
  %v256 = vunpack.c.l.b16 %v181
  %v257 = vunpack.c.l.b16 %v182
  %v258 = vunpack.c.l.b16 %v183
  %v259 = vunpack.c.l.b16 %v184
  %v260 = vunpack.c.l.b16 %v185
  %v261 = vunpack.c.l.b16 %v186
  %v262 = vunpack.c.l.b16 %v187
  %v263 = vunpack.c.l.b16 %v188
  %v264 = vunpack.c.l.b16 %v189
  %v265 = vunpack.c.l.b16 %v190
  %v266 = vpack.c.b16 %v235, %v234
  %v267 = vpack.c.b16 %v237, %v236
  %v268 = vpack.c.b16 %v239, %v238
  %v269 = vpack.c.b16 %v241, %v240
  %v270 = vpack.c.b16 %v243, %v242
  %v271 = vpack.c.b16 %v245, %v244
  %v272 = vpack.c.b16 %v247, %v246
  %v273 = vpack.c.b16 %v249, %v248
  %v274 = vpack.c.b16 %v251, %v250
  %v275 = vpack.c.b16 %v253, %v252
  %v276 = vpack.c.b16 %v255, %v254
  %v277 = vpack.c.b16 %v257, %v256
  %v278 = vpack.c.b16 %v259, %v258
  %v279 = vpack.c.b16 %v261, %v260
  %v280 = vpack.c.b16 %v263, %v262
  %v281 = vpack.c.b16 %v265, %v264
  %298 = vmatprep.subr.bf16.mxu0 0
  %299 = vmatpush1.bf16.msra.mxu0 %v273
  %300 = vmatprep.subr.bf16.mxu0 0
  %301 = vmatpush1.bf16.msra.mxu0 %v272
  %302 = vmatprep.subr.bf16.mxu0 0
  %303 = vmatpush1.bf16.msra.mxu0 %v271
  %304 = vmatprep.subr.bf16.mxu0 0
  %305 = vmatpush1.bf16.msra.mxu0 %v270
  %306 = vmatprep.subr.bf16.mxu0 0
  %307 = vmatpush1.bf16.msra.mxu0 %v269
  %308 = vmatprep.subr.bf16.mxu0 0
  %309 = vmatpush1.bf16.msra.mxu0 %v268
  %310 = vmatprep.subr.bf16.mxu0 0
  %311 = vmatpush1.bf16.msra.mxu0 %v267
  %312 = vmatprep.subr.bf16.mxu0 0
  %313 = vmatpush1.bf16.msra.mxu0 %v266
  %314 = vmatprep.subr.bf16.mxu0 0
  %315 = vmatpush2.bf16.msra.mxu0 %v281
  %316 = vmatprep.subr.bf16.mxu0 0
  %317 = vmatpush2.bf16.msra.mxu0 %v280
  %318 = vmatprep.subr.bf16.mxu0 0
  %319 = vmatpush2.bf16.msra.mxu0 %v279
  %320 = vmatprep.subr.bf16.mxu0 0
  %321 = vmatpush2.bf16.msra.mxu0 %v278
  %322 = vmatprep.subr.bf16.mxu0 0
  %323 = vmatpush2.bf16.msra.mxu0 %v277
  %324 = vmatprep.subr.bf16.mxu0 0
  %325 = vmatpush2.bf16.msra.mxu0 %v276
  %326 = vmatprep.subr.bf16.mxu0 0
  %327 = vmatpush2.bf16.msra.mxu0 %v275
  %328 = vmatprep.subr.bf16.mxu0 0
  %329 = vmatpush2.bf16.msra.mxu0 %v274
  %330 = vmatprep.mubr.bf16.mxu0 %v199
  %331 = vmatmul.mubr.bf16.gmra.mxu0 %v198
  %v332 = vpop.f32.mrf.mxu0
  %v333 = vadd.f32 0.0, %v332
  %v334 = vpop.f32.mrf.mxu0
  %v335 = vpop.f32.mrf.mxu0
  %v336 = vpop.f32.mrf.mxu0
  %337 = vdwg.mxu0
  %v338 = vcombine.low %v63, %v70
  %v340 = vunpack.c.l.s4 1983009808
  %v341 = vunpack.c.0.s8 %v340
  %v342 = vlaneseq
  %v343 = vshrl.u32 %v342, 7
  %v344 = vsub.s32 %v341, %v343
  %v345 = vrot.slane %v338, %v344
  %v346 = vcombine.high %v345, %v345
  %v381 = vunpack.c.l.b16 %v71
  %v382 = vunpack.c.l.b16 %v72
  %v383 = vunpack.c.l.b16 %v73
  %v384 = vunpack.c.l.b16 %v74
  %v385 = vunpack.c.l.b16 %v75
  %v386 = vunpack.c.l.b16 %v76
  %v387 = vunpack.c.l.b16 %v77
  %v388 = vunpack.c.l.b16 %v78
  %v389 = vunpack.c.l.b16 %v79
  %v390 = vunpack.c.l.b16 %v80
  %v391 = vunpack.c.l.b16 %v81
  %v392 = vunpack.c.l.b16 %v82
  %v393 = vunpack.c.l.b16 %v83
  %v394 = vunpack.c.l.b16 %v84
  %v395 = vunpack.c.l.b16 %v85
  %v396 = vunpack.c.l.b16 %v86
  %v397 = vunpack.c.l.b16 %v87
  %v398 = vunpack.c.l.b16 %v88
  %v399 = vunpack.c.l.b16 %v89
  %v400 = vunpack.c.l.b16 %v90
  %v401 = vunpack.c.l.b16 %v91
  %v402 = vunpack.c.l.b16 %v92
  %v403 = vunpack.c.l.b16 %v93
  %v404 = vunpack.c.l.b16 %v94
  %v405 = vunpack.c.l.b16 %v95
  %v406 = vunpack.c.l.b16 %v96
  %v407 = vunpack.c.l.b16 %v97
  %v408 = vunpack.c.l.b16 %v98
  %v409 = vunpack.c.l.b16 %v99
  %v410 = vunpack.c.l.b16 %v100
  %v411 = vunpack.c.l.b16 %v101
  %v412 = vunpack.c.l.b16 %v102
  %v413 = vpack.c.b16 %v382, %v381
  %v414 = vpack.c.b16 %v384, %v383
  %v415 = vpack.c.b16 %v386, %v385
  %v416 = vpack.c.b16 %v388, %v387
  %v417 = vpack.c.b16 %v390, %v389
  %v418 = vpack.c.b16 %v392, %v391
  %v419 = vpack.c.b16 %v394, %v393
  %v420 = vpack.c.b16 %v396, %v395
  %v421 = vpack.c.b16 %v398, %v397
  %v422 = vpack.c.b16 %v400, %v399
  %v423 = vpack.c.b16 %v402, %v401
  %v424 = vpack.c.b16 %v404, %v403
  %v425 = vpack.c.b16 %v406, %v405
  %v426 = vpack.c.b16 %v408, %v407
  %v427 = vpack.c.b16 %v410, %v409
  %v428 = vpack.c.b16 %v412, %v411
  %445 = vmatprep.subr.bf16.mxu0 0
  %446 = vmatpush1.bf16.msra.mxu0 %v420
  %447 = vmatprep.subr.bf16.mxu0 0
  %448 = vmatpush1.bf16.msra.mxu0 %v419
  %449 = vmatprep.subr.bf16.mxu0 0
  %450 = vmatpush1.bf16.msra.mxu0 %v418
  %451 = vmatprep.subr.bf16.mxu0 0
  %452 = vmatpush1.bf16.msra.mxu0 %v417
  %453 = vmatprep.subr.bf16.mxu0 0
  %454 = vmatpush1.bf16.msra.mxu0 %v416
  %455 = vmatprep.subr.bf16.mxu0 0
  %456 = vmatpush1.bf16.msra.mxu0 %v415
  %457 = vmatprep.subr.bf16.mxu0 0
  %458 = vmatpush1.bf16.msra.mxu0 %v414
  %459 = vmatprep.subr.bf16.mxu0 0
  %460 = vmatpush1.bf16.msra.mxu0 %v413
  %461 = vmatprep.subr.bf16.mxu0 0
  %462 = vmatpush2.bf16.msra.mxu0 %v428
  %463 = vmatprep.subr.bf16.mxu0 0
  %464 = vmatpush2.bf16.msra.mxu0 %v427
  %465 = vmatprep.subr.bf16.mxu0 0
  %466 = vmatpush2.bf16.msra.mxu0 %v426
  %467 = vmatprep.subr.bf16.mxu0 0
  %468 = vmatpush2.bf16.msra.mxu0 %v425
  %469 = vmatprep.subr.bf16.mxu0 0
  %470 = vmatpush2.bf16.msra.mxu0 %v424
  %471 = vmatprep.subr.bf16.mxu0 0
  %472 = vmatpush2.bf16.msra.mxu0 %v423
  %473 = vmatprep.subr.bf16.mxu0 0
  %474 = vmatpush2.bf16.msra.mxu0 %v422
  %475 = vmatprep.subr.bf16.mxu0 0
  %476 = vmatpush2.bf16.msra.mxu0 %v421
  %477 = vmatprep.mubr.bf16.mxu0 %v346
  %478 = vmatmul.mubr.bf16.gmra.mxu0 %v345
  %v479 = vpop.f32.mrf.mxu0
  %v480 = vadd.f32 %v333, %v479
  %v481 = vpop.f32.mrf.mxu0
  %v482 = vpop.f32.mrf.mxu0
  %v483 = vpop.f32.mrf.mxu0
  %484 = vdwg.mxu0
  %v485 = vld [vmem:[#allocation2] sm:$0x66]
  %v486 = vld [vmem:[#allocation2 + $0x8] sm:$0x66]
  %v490 = vunpack.c.l.s4 1983009808
  %v491 = vunpack.c.0.s8 %v490
  %v492 = vlaneseq
  %v493 = vshrl.u32 %v492, 7
  %v494 = vsub.s32 %v491, %v493
  %v495 = vrot.slane %v485, %v494
  %v496 = vcombine.high %v495, %v495
  %v498 = vunpack.c.l.s4 1983009808
  %v499 = vunpack.c.0.s8 %v498
  %v500 = vlaneseq
  %v501 = vshrl.u32 %v500, 7
  %v502 = vsub.s32 %v499, %v501
  %v503 = vrot.slane %v486, %v502
  %v504 = vcombine.high %v503, %v503
  %vm505 = vcmask 1040384
  %vm506 = vcmask 1042434
  %vm507 = vmor %vm505, %vm506
  %vm508 = vcmask 1044484
  %vm509 = vmor %vm507, %vm508
  %vm510 = vcmask 1046534
  %vm511 = vmor %vm509, %vm510
  %v512 = vrot.slane %v495, 7
  %v513 = vrot.slane %v512, 2
  %v514 = vrot.slane %v496, 7
  %v515 = vsel %vm511, %v513, %v514
  %v516 = vrot.slane %v503, 7
  %v517 = vrot.slane %v516, 2
  %v518 = vrot.slane %v504, 7
  %v519 = vsel %vm511, %v517, %v518
  %s520 = scalar_lea.vmem %s1, 256
  %v521 = vld [vmem:[%s520] sm:$0xf]
  %v522 = vld [vmem:[%s520 + $0x4] sm:$0xf]
  %v523 = vld [vmem:[%s520 + $0x8] sm:$0xf]
  %v524 = vld [vmem:[%s520 + $0xc] sm:$0xf]
  %v525 = vld [vmem:[%s520 + $0x10] sm:$0xf]
  %v526 = vld [vmem:[%s520 + $0x14] sm:$0xf]
  %v527 = vld [vmem:[%s520 + $0x18] sm:$0xf]
  %v528 = vld [vmem:[%s520 + $0x1c] sm:$0xf]
  %v529 = vld [vmem:[%s520 + $0x20] sm:$0xf]
  %v530 = vld [vmem:[%s520 + $0x24] sm:$0xf]
  %v531 = vld [vmem:[%s520 + $0x28] sm:$0xf]
  %v532 = vld [vmem:[%s520 + $0x2c] sm:$0xf]
  %v533 = vld [vmem:[%s520 + $0x30] sm:$0xf]
  %v534 = vld [vmem:[%s520 + $0x34] sm:$0xf]
  %v535 = vld [vmem:[%s520 + $0x38] sm:$0xf]
  %v536 = vld [vmem:[%s520 + $0x3c] sm:$0xf]
  %v537 = vld [vmem:[%s520 + $0x40] sm:$0xf]
  %v538 = vld [vmem:[%s520 + $0x44] sm:$0xf]
  %v539 = vld [vmem:[%s520 + $0x48] sm:$0xf]
  %v540 = vld [vmem:[%s520 + $0x4c] sm:$0xf]
  %v541 = vld [vmem:[%s520 + $0x50] sm:$0xf]
  %v542 = vld [vmem:[%s520 + $0x54] sm:$0xf]
  %v543 = vld [vmem:[%s520 + $0x58] sm:$0xf]
  %v544 = vld [vmem:[%s520 + $0x5c] sm:$0xf]
  %v545 = vld [vmem:[%s520 + $0x60] sm:$0xf]
  %v546 = vld [vmem:[%s520 + $0x64] sm:$0xf]
  %v547 = vld [vmem:[%s520 + $0x68] sm:$0xf]
  %v548 = vld [vmem:[%s520 + $0x6c] sm:$0xf]
  %v549 = vld [vmem:[%s520 + $0x70] sm:$0xf]
  %v550 = vld [vmem:[%s520 + $0x74] sm:$0xf]
  %v551 = vld [vmem:[%s520 + $0x78] sm:$0xf]
  %v552 = vld [vmem:[%s520 + $0x7c] sm:$0xf]
  %v553 = vcombine.low %v515, %v519
  %v555 = vunpack.c.l.s4 1983009808
  %v556 = vunpack.c.0.s8 %v555
  %v557 = vlaneseq
  %v558 = vshrl.u32 %v557, 7
  %v559 = vsub.s32 %v556, %v558
  %v560 = vrot.slane %v553, %v559
  %v561 = vcombine.high %v560, %v560
  %v596 = vunpack.c.l.b16 %v521
  %v597 = vunpack.c.l.b16 %v522
  %v598 = vunpack.c.l.b16 %v523
  %v599 = vunpack.c.l.b16 %v524
  %v600 = vunpack.c.l.b16 %v525
  %v601 = vunpack.c.l.b16 %v526
  %v602 = vunpack.c.l.b16 %v527
  %v603 = vunpack.c.l.b16 %v528
  %v604 = vunpack.c.l.b16 %v529
  %v605 = vunpack.c.l.b16 %v530
  %v606 = vunpack.c.l.b16 %v531
  %v607 = vunpack.c.l.b16 %v532
  %v608 = vunpack.c.l.b16 %v533
  %v609 = vunpack.c.l.b16 %v534
  %v610 = vunpack.c.l.b16 %v535
  %v611 = vunpack.c.l.b16 %v536
  %v612 = vunpack.c.l.b16 %v537
  %v613 = vunpack.c.l.b16 %v538
  %v614 = vunpack.c.l.b16 %v539
  %v615 = vunpack.c.l.b16 %v540
  %v616 = vunpack.c.l.b16 %v541
  %v617 = vunpack.c.l.b16 %v542
  %v618 = vunpack.c.l.b16 %v543
  %v619 = vunpack.c.l.b16 %v544
  %v620 = vunpack.c.l.b16 %v545
  %v621 = vunpack.c.l.b16 %v546
  %v622 = vunpack.c.l.b16 %v547
  %v623 = vunpack.c.l.b16 %v548
  %v624 = vunpack.c.l.b16 %v549
  %v625 = vunpack.c.l.b16 %v550
  %v626 = vunpack.c.l.b16 %v551
  %v627 = vunpack.c.l.b16 %v552
  %v628 = vpack.c.b16 %v597, %v596
  %v629 = vpack.c.b16 %v599, %v598
  %v630 = vpack.c.b16 %v601, %v600
  %v631 = vpack.c.b16 %v603, %v602
  %v632 = vpack.c.b16 %v605, %v604
  %v633 = vpack.c.b16 %v607, %v606
  %v634 = vpack.c.b16 %v609, %v608
  %v635 = vpack.c.b16 %v611, %v610
  %v636 = vpack.c.b16 %v613, %v612
  %v637 = vpack.c.b16 %v615, %v614
  %v638 = vpack.c.b16 %v617, %v616
  %v639 = vpack.c.b16 %v619, %v618
  %v640 = vpack.c.b16 %v621, %v620
  %v641 = vpack.c.b16 %v623, %v622
  %v642 = vpack.c.b16 %v625, %v624
  %v643 = vpack.c.b16 %v627, %v626
  %660 = vmatprep.subr.bf16.mxu0 0
  %661 = vmatpush1.bf16.msra.mxu0 %v635
  %662 = vmatprep.subr.bf16.mxu0 0
  %663 = vmatpush1.bf16.msra.mxu0 %v634
  %664 = vmatprep.subr.bf16.mxu0 0
  %665 = vmatpush1.bf16.msra.mxu0 %v633
  %666 = vmatprep.subr.bf16.mxu0 0
  %667 = vmatpush1.bf16.msra.mxu0 %v632
  %668 = vmatprep.subr.bf16.mxu0 0
  %669 = vmatpush1.bf16.msra.mxu0 %v631
  %670 = vmatprep.subr.bf16.mxu0 0
  %671 = vmatpush1.bf16.msra.mxu0 %v630
  %672 = vmatprep.subr.bf16.mxu0 0
  %673 = vmatpush1.bf16.msra.mxu0 %v629
  %674 = vmatprep.subr.bf16.mxu0 0
  %675 = vmatpush1.bf16.msra.mxu0 %v628
  %676 = vmatprep.subr.bf16.mxu0 0
  %677 = vmatpush2.bf16.msra.mxu0 %v643
  %678 = vmatprep.subr.bf16.mxu0 0
  %679 = vmatpush2.bf16.msra.mxu0 %v642
  %680 = vmatprep.subr.bf16.mxu0 0
  %681 = vmatpush2.bf16.msra.mxu0 %v641
  %682 = vmatprep.subr.bf16.mxu0 0
  %683 = vmatpush2.bf16.msra.mxu0 %v640
  %684 = vmatprep.subr.bf16.mxu0 0
  %685 = vmatpush2.bf16.msra.mxu0 %v639
  %686 = vmatprep.subr.bf16.mxu0 0
  %687 = vmatpush2.bf16.msra.mxu0 %v638
  %688 = vmatprep.subr.bf16.mxu0 0
  %689 = vmatpush2.bf16.msra.mxu0 %v637
  %690 = vmatprep.subr.bf16.mxu0 0
  %691 = vmatpush2.bf16.msra.mxu0 %v636
  %692 = vmatprep.mubr.bf16.mxu0 %v561
  %693 = vmatmul.mubr.bf16.gmra.mxu0 %v560
  %v694 = vpop.f32.mrf.mxu0
  %v695 = vadd.f32 0.0, %v694
  %v696 = vpop.f32.mrf.mxu0
  %v697 = vpop.f32.mrf.mxu0
  %v698 = vpop.f32.mrf.mxu0
  %699 = vdwg.mxu0
  %v700 = vadd.f32 %v480, %v695
  %v701 = vld [vmem:[#allocation2] sm:$0xee]
  %v702 = vld [vmem:[#allocation2 + $0x8] sm:$0xee]
  %v706 = vunpack.c.l.s4 1983009808
  %v707 = vunpack.c.0.s8 %v706
  %v708 = vlaneseq
  %v709 = vshrl.u32 %v708, 7
  %v710 = vsub.s32 %v707, %v709
  %v711 = vrot.slane %v701, %v710
  %v712 = vcombine.high %v711, %v711
  %v714 = vunpack.c.l.s4 1983009808
  %v715 = vunpack.c.0.s8 %v714
  %v716 = vlaneseq
  %v717 = vshrl.u32 %v716, 7
  %v718 = vsub.s32 %v715, %v717
  %v719 = vrot.slane %v702, %v718
  %v720 = vcombine.high %v719, %v719
  %vm721 = vsmask.f32 256
  %vm722 = vsmask.f32 2312
  %vm723 = vmor %vm721, %vm722
  %vm724 = vsmask.f32 4368
  %vm725 = vmor %vm723, %vm724
  %vm726 = vsmask.f32 6424
  %vm727 = vmor %vm725, %vm726
  %v729 = vshrl.u32 %v711, 16
  %v731 = vrot.slane %v729, 7
  %v732 = vrot.slane %v731, 2
  %v734 = vshrl.u32 %v712, 16
  %v736 = vrot.slane %v734, 7
  %v737 = vshll.u32 %v712, 16
  %v739 = vor.u32 %v736, %v737
  %v740 = vsel %vm727, %v732, %v739
  %v742 = vshrl.u32 %v719, 16
  %v744 = vrot.slane %v742, 7
  %v745 = vrot.slane %v744, 2
  %v747 = vshrl.u32 %v720, 16
  %v749 = vrot.slane %v747, 7
  %v750 = vshll.u32 %v720, 16
  %v752 = vor.u32 %v749, %v750
  %v753 = vsel %vm727, %v745, %v752
  %s754 = scalar_lea.vmem %s1, 384
  %v755 = vld [vmem:[%s754] sm:$0xf]
  %v756 = vld [vmem:[%s754 + $0x4] sm:$0xf]
  %v757 = vld [vmem:[%s754 + $0x8] sm:$0xf]
  %v758 = vld [vmem:[%s754 + $0xc] sm:$0xf]
  %v759 = vld [vmem:[%s754 + $0x10] sm:$0xf]
  %v760 = vld [vmem:[%s754 + $0x14] sm:$0xf]
  %v761 = vld [vmem:[%s754 + $0x18] sm:$0xf]
  %v762 = vld [vmem:[%s754 + $0x1c] sm:$0xf]
  %v763 = vld [vmem:[%s754 + $0x20] sm:$0xf]
  %v764 = vld [vmem:[%s754 + $0x24] sm:$0xf]
  %v765 = vld [vmem:[%s754 + $0x28] sm:$0xf]
  %v766 = vld [vmem:[%s754 + $0x2c] sm:$0xf]
  %v767 = vld [vmem:[%s754 + $0x30] sm:$0xf]
  %v768 = vld [vmem:[%s754 + $0x34] sm:$0xf]
  %v769 = vld [vmem:[%s754 + $0x38] sm:$0xf]
  %v770 = vld [vmem:[%s754 + $0x3c] sm:$0xf]
  %v771 = vld [vmem:[%s754 + $0x40] sm:$0xf]
  %v772 = vld [vmem:[%s754 + $0x44] sm:$0xf]
  %v773 = vld [vmem:[%s754 + $0x48] sm:$0xf]
  %v774 = vld [vmem:[%s754 + $0x4c] sm:$0xf]
  %v775 = vld [vmem:[%s754 + $0x50] sm:$0xf]
  %v776 = vld [vmem:[%s754 + $0x54] sm:$0xf]
  %v777 = vld [vmem:[%s754 + $0x58] sm:$0xf]
  %v778 = vld [vmem:[%s754 + $0x5c] sm:$0xf]
  %v779 = vld [vmem:[%s754 + $0x60] sm:$0xf]
  %v780 = vld [vmem:[%s754 + $0x64] sm:$0xf]
  %v781 = vld [vmem:[%s754 + $0x68] sm:$0xf]
  %v782 = vld [vmem:[%s754 + $0x6c] sm:$0xf]
  %v783 = vld [vmem:[%s754 + $0x70] sm:$0xf]
  %v784 = vld [vmem:[%s754 + $0x74] sm:$0xf]
  %v785 = vld [vmem:[%s754 + $0x78] sm:$0xf]
  %v786 = vld [vmem:[%s754 + $0x7c] sm:$0xf]
  %v787 = vcombine.low %v740, %v753
  %v789 = vunpack.c.l.s4 1983009808
  %v790 = vunpack.c.0.s8 %v789
  %v791 = vlaneseq
  %v792 = vshrl.u32 %v791, 7
  %v793 = vsub.s32 %v790, %v792
  %v794 = vrot.slane %v787, %v793
  %v795 = vcombine.high %v794, %v794
  %v830 = vunpack.c.l.b16 %v755
  %v831 = vunpack.c.l.b16 %v756
  %v832 = vunpack.c.l.b16 %v757
  %v833 = vunpack.c.l.b16 %v758
  %v834 = vunpack.c.l.b16 %v759
  %v835 = vunpack.c.l.b16 %v760
  %v836 = vunpack.c.l.b16 %v761
  %v837 = vunpack.c.l.b16 %v762
  %v838 = vunpack.c.l.b16 %v763
  %v839 = vunpack.c.l.b16 %v764
  %v840 = vunpack.c.l.b16 %v765
  %v841 = vunpack.c.l.b16 %v766
  %v842 = vunpack.c.l.b16 %v767
  %v843 = vunpack.c.l.b16 %v768
  %v844 = vunpack.c.l.b16 %v769
  %v845 = vunpack.c.l.b16 %v770
  %v846 = vunpack.c.l.b16 %v771
  %v847 = vunpack.c.l.b16 %v772
  %v848 = vunpack.c.l.b16 %v773
  %v849 = vunpack.c.l.b16 %v774
  %v850 = vunpack.c.l.b16 %v775
  %v851 = vunpack.c.l.b16 %v776
  %v852 = vunpack.c.l.b16 %v777
  %v853 = vunpack.c.l.b16 %v778
  %v854 = vunpack.c.l.b16 %v779
  %v855 = vunpack.c.l.b16 %v780
  %v856 = vunpack.c.l.b16 %v781
  %v857 = vunpack.c.l.b16 %v782
  %v858 = vunpack.c.l.b16 %v783
  %v859 = vunpack.c.l.b16 %v784
  %v860 = vunpack.c.l.b16 %v785
  %v861 = vunpack.c.l.b16 %v786
  %v862 = vpack.c.b16 %v831, %v830
  %v863 = vpack.c.b16 %v833, %v832
  %v864 = vpack.c.b16 %v835, %v834
  %v865 = vpack.c.b16 %v837, %v836
  %v866 = vpack.c.b16 %v839, %v838
  %v867 = vpack.c.b16 %v841, %v840
  %v868 = vpack.c.b16 %v843, %v842
  %v869 = vpack.c.b16 %v845, %v844
  %v870 = vpack.c.b16 %v847, %v846
  %v871 = vpack.c.b16 %v849, %v848
  %v872 = vpack.c.b16 %v851, %v850
  %v873 = vpack.c.b16 %v853, %v852
  %v874 = vpack.c.b16 %v855, %v854
  %v875 = vpack.c.b16 %v857, %v856
  %v876 = vpack.c.b16 %v859, %v858
  %v877 = vpack.c.b16 %v861, %v860
  %894 = vmatprep.subr.bf16.mxu0 0
  %895 = vmatpush1.bf16.msra.mxu0 %v869
  %896 = vmatprep.subr.bf16.mxu0 0
  %897 = vmatpush1.bf16.msra.mxu0 %v868
  %898 = vmatprep.subr.bf16.mxu0 0
  %899 = vmatpush1.bf16.msra.mxu0 %v867
  %900 = vmatprep.subr.bf16.mxu0 0
  %901 = vmatpush1.bf16.msra.mxu0 %v866
  %902 = vmatprep.subr.bf16.mxu0 0
  %903 = vmatpush1.bf16.msra.mxu0 %v865
  %904 = vmatprep.subr.bf16.mxu0 0
  %905 = vmatpush1.bf16.msra.mxu0 %v864
  %906 = vmatprep.subr.bf16.mxu0 0
  %907 = vmatpush1.bf16.msra.mxu0 %v863
  %908 = vmatprep.subr.bf16.mxu0 0
  %909 = vmatpush1.bf16.msra.mxu0 %v862
  %910 = vmatprep.subr.bf16.mxu0 0
  %911 = vmatpush2.bf16.msra.mxu0 %v877
  %912 = vmatprep.subr.bf16.mxu0 0
  %913 = vmatpush2.bf16.msra.mxu0 %v876
  %914 = vmatprep.subr.bf16.mxu0 0
  %915 = vmatpush2.bf16.msra.mxu0 %v875
  %916 = vmatprep.subr.bf16.mxu0 0
  %917 = vmatpush2.bf16.msra.mxu0 %v874
  %918 = vmatprep.subr.bf16.mxu0 0
  %919 = vmatpush2.bf16.msra.mxu0 %v873
  %920 = vmatprep.subr.bf16.mxu0 0
  %921 = vmatpush2.bf16.msra.mxu0 %v872
  %922 = vmatprep.subr.bf16.mxu0 0
  %923 = vmatpush2.bf16.msra.mxu0 %v871
  %924 = vmatprep.subr.bf16.mxu0 0
  %925 = vmatpush2.bf16.msra.mxu0 %v870
  %926 = vmatprep.mubr.bf16.mxu0 %v795
  %927 = vmatmul.mubr.bf16.gmra.mxu0 %v794
  %v928 = vpop.f32.mrf.mxu0
  %v929 = vadd.f32 0.0, %v928
  %v930 = vpop.f32.mrf.mxu0
  %v931 = vpop.f32.mrf.mxu0
  %v932 = vpop.f32.mrf.mxu0
  %933 = vdwg.mxu0
  %v934 = vadd.f32 %v700, %v929
  %v935 = vld [vmem:[#allocation2] sm:$0xcc]
  %v936 = vld [vmem:[#allocation2 + $0x8] sm:$0xcc]
  %v940 = vunpack.c.l.s4 1983009808
  %v941 = vunpack.c.0.s8 %v940
  %v942 = vlaneseq
  %v943 = vshrl.u32 %v942, 7
  %v944 = vsub.s32 %v941, %v943
  %v945 = vrot.slane %v935, %v944
  %v946 = vcombine.high %v945, %v945
  %v948 = vunpack.c.l.s4 1983009808
  %v949 = vunpack.c.0.s8 %v948
  %v950 = vlaneseq
  %v951 = vshrl.u32 %v950, 7
  %v952 = vsub.s32 %v949, %v951
  %v953 = vrot.slane %v936, %v952
  %v954 = vcombine.high %v953, %v953
  %s955 = scalar_lea.vmem %s1, 512
  %v956 = vld [vmem:[%s955] sm:$0xf]
  %v957 = vld [vmem:[%s955 + $0x4] sm:$0xf]
  %v958 = vld [vmem:[%s955 + $0x8] sm:$0xf]
  %v959 = vld [vmem:[%s955 + $0xc] sm:$0xf]
  %v960 = vld [vmem:[%s955 + $0x10] sm:$0xf]
  %v961 = vld [vmem:[%s955 + $0x14] sm:$0xf]
  %v962 = vld [vmem:[%s955 + $0x18] sm:$0xf]
  %v963 = vld [vmem:[%s955 + $0x1c] sm:$0xf]
  %v964 = vld [vmem:[%s955 + $0x20] sm:$0xf]
  %v965 = vld [vmem:[%s955 + $0x24] sm:$0xf]
  %v966 = vld [vmem:[%s955 + $0x28] sm:$0xf]
  %v967 = vld [vmem:[%s955 + $0x2c] sm:$0xf]
  %v968 = vld [vmem:[%s955 + $0x30] sm:$0xf]
  %v969 = vld [vmem:[%s955 + $0x34] sm:$0xf]
  %v970 = vld [vmem:[%s955 + $0x38] sm:$0xf]
  %v971 = vld [vmem:[%s955 + $0x3c] sm:$0xf]
  %v972 = vld [vmem:[%s955 + $0x40] sm:$0xf]
  %v973 = vld [vmem:[%s955 + $0x44] sm:$0xf]
  %v974 = vld [vmem:[%s955 + $0x48] sm:$0xf]
  %v975 = vld [vmem:[%s955 + $0x4c] sm:$0xf]
  %v976 = vld [vmem:[%s955 + $0x50] sm:$0xf]
  %v977 = vld [vmem:[%s955 + $0x54] sm:$0xf]
  %v978 = vld [vmem:[%s955 + $0x58] sm:$0xf]
  %v979 = vld [vmem:[%s955 + $0x5c] sm:$0xf]
  %v980 = vld [vmem:[%s955 + $0x60] sm:$0xf]
  %v981 = vld [vmem:[%s955 + $0x64] sm:$0xf]
  %v982 = vld [vmem:[%s955 + $0x68] sm:$0xf]
  %v983 = vld [vmem:[%s955 + $0x6c] sm:$0xf]
  %v984 = vld [vmem:[%s955 + $0x70] sm:$0xf]
  %v985 = vld [vmem:[%s955 + $0x74] sm:$0xf]
  %v986 = vld [vmem:[%s955 + $0x78] sm:$0xf]
  %v987 = vld [vmem:[%s955 + $0x7c] sm:$0xf]
  %v988 = vcombine.low %v946, %v954
  %v990 = vunpack.c.l.s4 1983009808
  %v991 = vunpack.c.0.s8 %v990
  %v992 = vlaneseq
  %v993 = vshrl.u32 %v992, 7
  %v994 = vsub.s32 %v991, %v993
  %v995 = vrot.slane %v988, %v994
  %v996 = vcombine.high %v995, %v995
  %v1031 = vunpack.c.l.b16 %v956
  %v1032 = vunpack.c.l.b16 %v957
  %v1033 = vunpack.c.l.b16 %v958
  %v1034 = vunpack.c.l.b16 %v959
  %v1035 = vunpack.c.l.b16 %v960
  %v1036 = vunpack.c.l.b16 %v961
  %v1037 = vunpack.c.l.b16 %v962
  %v1038 = vunpack.c.l.b16 %v963
  %v1039 = vunpack.c.l.b16 %v964
  %v1040 = vunpack.c.l.b16 %v965
  %v1041 = vunpack.c.l.b16 %v966
  %v1042 = vunpack.c.l.b16 %v967
  %v1043 = vunpack.c.l.b16 %v968
  %v1044 = vunpack.c.l.b16 %v969
  %v1045 = vunpack.c.l.b16 %v970
  %v1046 = vunpack.c.l.b16 %v971
  %v1047 = vunpack.c.l.b16 %v972
  %v1048 = vunpack.c.l.b16 %v973
  %v1049 = vunpack.c.l.b16 %v974
  %v1050 = vunpack.c.l.b16 %v975
  %v1051 = vunpack.c.l.b16 %v976
  %v1052 = vunpack.c.l.b16 %v977
  %v1053 = vunpack.c.l.b16 %v978
  %v1054 = vunpack.c.l.b16 %v979
  %v1055 = vunpack.c.l.b16 %v980
  %v1056 = vunpack.c.l.b16 %v981
  %v1057 = vunpack.c.l.b16 %v982
  %v1058 = vunpack.c.l.b16 %v983
  %v1059 = vunpack.c.l.b16 %v984
  %v1060 = vunpack.c.l.b16 %v985
  %v1061 = vunpack.c.l.b16 %v986
  %v1062 = vunpack.c.l.b16 %v987
  %v1063 = vpack.c.b16 %v1032, %v1031
  %v1064 = vpack.c.b16 %v1034, %v1033
  %v1065 = vpack.c.b16 %v1036, %v1035
  %v1066 = vpack.c.b16 %v1038, %v1037
  %v1067 = vpack.c.b16 %v1040, %v1039
  %v1068 = vpack.c.b16 %v1042, %v1041
  %v1069 = vpack.c.b16 %v1044, %v1043
  %v1070 = vpack.c.b16 %v1046, %v1045
  %v1071 = vpack.c.b16 %v1048, %v1047
  %v1072 = vpack.c.b16 %v1050, %v1049
  %v1073 = vpack.c.b16 %v1052, %v1051
  %v1074 = vpack.c.b16 %v1054, %v1053
  %v1075 = vpack.c.b16 %v1056, %v1055
  %v1076 = vpack.c.b16 %v1058, %v1057
  %v1077 = vpack.c.b16 %v1060, %v1059
  %v1078 = vpack.c.b16 %v1062, %v1061
  %1095 = vmatprep.subr.bf16.mxu0 0
  %1096 = vmatpush1.bf16.msra.mxu0 %v1070
  %1097 = vmatprep.subr.bf16.mxu0 0
  %1098 = vmatpush1.bf16.msra.mxu0 %v1069
  %1099 = vmatprep.subr.bf16.mxu0 0
  %1100 = vmatpush1.bf16.msra.mxu0 %v1068
  %1101 = vmatprep.subr.bf16.mxu0 0
  %1102 = vmatpush1.bf16.msra.mxu0 %v1067
  %1103 = vmatprep.subr.bf16.mxu0 0
  %1104 = vmatpush1.bf16.msra.mxu0 %v1066
  %1105 = vmatprep.subr.bf16.mxu0 0
  %1106 = vmatpush1.bf16.msra.mxu0 %v1065
  %1107 = vmatprep.subr.bf16.mxu0 0
  %1108 = vmatpush1.bf16.msra.mxu0 %v1064
  %1109 = vmatprep.subr.bf16.mxu0 0
  %1110 = vmatpush1.bf16.msra.mxu0 %v1063
  %1111 = vmatprep.subr.bf16.mxu0 0
  %1112 = vmatpush2.bf16.msra.mxu0 %v1078
  %1113 = vmatprep.subr.bf16.mxu0 0
  %1114 = vmatpush2.bf16.msra.mxu0 %v1077
  %1115 = vmatprep.subr.bf16.mxu0 0
  %1116 = vmatpush2.bf16.msra.mxu0 %v1076
  %1117 = vmatprep.subr.bf16.mxu0 0
  %1118 = vmatpush2.bf16.msra.mxu0 %v1075
  %1119 = vmatprep.subr.bf16.mxu0 0
  %1120 = vmatpush2.bf16.msra.mxu0 %v1074
  %1121 = vmatprep.subr.bf16.mxu0 0
  %1122 = vmatpush2.bf16.msra.mxu0 %v1073
  %1123 = vmatprep.subr.bf16.mxu0 0
  %1124 = vmatpush2.bf16.msra.mxu0 %v1072
  %1125 = vmatprep.subr.bf16.mxu0 0
  %1126 = vmatpush2.bf16.msra.mxu0 %v1071
  %1127 = vmatprep.mubr.bf16.mxu0 %v996
  %1128 = vmatmul.mubr.bf16.gmra.mxu0 %v995
  %v1129 = vpop.f32.mrf.mxu0
  %v1130 = vadd.f32 0.0, %v1129
  %v1131 = vpop.f32.mrf.mxu0
  %v1132 = vpop.f32.mrf.mxu0
  %v1133 = vpop.f32.mrf.mxu0
  %1134 = vdwg.mxu0
  %v1135 = vadd.f32 %v934, %v1130
  %v1136 = vld [vmem:[%s2] sm:$0x1]
  %v1138 = vlaneseq
  %v1139 = vshrl.u32 %v1138, 7
  %v1140 = vsub.s32 0, %v1139
  %v1141 = vrot.slane %v1136, %v1140
  %v1143 = vadd.f32 %v1135, %v1141
  %v1144 = vmul.f32 %v1143, 0.5
  %v1145 = vmul.f32 %v1143, 0.044715
  %v1146 = vmul.f32 %v1145, %v1143
  %v1147 = vmul.f32 %v1146, %v1143
  %v1148 = vadd.f32 %v1143, %v1147
  %v1149 = vmul.f32 %v1148, 0.7978846
  %v1150 = vtanh.pop %v1149
  %v1151 = vadd.f32 %v1150, 1.0
  %v1152 = vmul.f32 %v1144, %v1151
  %v1154 = vcombine.high %v1152, %v1152
  %v1156 = vunpack.c.l.s4 1983009808
  %v1157 = vunpack.c.0.s8 %v1156
  %v1158 = vlaneseq
  %v1159 = vshrl.u32 %v1158, 7
  %v1160 = vsub.s32 %v1157, %v1159
  %v1161 = vrot.slane %v1152, %v1160
  %v1163 = vunpack.c.l.s4 1983009808
  %v1164 = vunpack.c.0.s8 %v1163
  %v1165 = vlaneseq
  %v1166 = vshrl.u32 %v1165, 7
  %v1167 = vsub.s32 %v1164, %v1166
  %v1168 = vrot.slane %v1154, %v1167
  %v1169 = vcombine.high %v1161, %v1161
  %v1170 = vcombine.high %v1168, %v1168
  %v1175 = vrot.slane %v1161, 7
  %v1176 = vrot.slane %v1175, 2
  %v1177 = vrot.slane %v1169, 7
  %v1178 = vrot.slane %v1177, 2
  %v1179 = vrot.slane %v1168, 7
  %v1180 = vrot.slane %v1179, 2
  %v1181 = vrot.slane %v1170, 7
  %v1182 = vrot.slane %v1181, 2
  %v1187 = vmax.f32 %v1161, %v1176
  %v1188 = vmax.f32 %v1169, %v1178
  %v1189 = vmax.f32 %v1168, %v1180
  %v1190 = vmax.f32 %v1170, %v1182
  %1195 = vrot.lane.b32.xlu0 %v1187, 64
  %v1196 = vpop.permute.xlu0 %1195
  %1197 = vrot.lane.b32.xlu0 %v1188, 64
  %v1198 = vpop.permute.xlu0 %1197
  %1199 = vrot.lane.b32.xlu0 %v1189, 64
  %v1200 = vpop.permute.xlu0 %1199
  %1201 = vrot.lane.b32.xlu0 %v1190, 64
  %v1202 = vpop.permute.xlu0 %1201
  %v1207 = vmax.f32 %v1187, %v1196
  %v1208 = vmax.f32 %v1188, %v1198
  %v1209 = vmax.f32 %v1189, %v1200
  %v1210 = vmax.f32 %v1190, %v1202
  %v1215 = vlaneseq
  %v1216 = vshrl.u32 %v1215, 7
  %v1217 = vsub.s32 0, %v1216
  %v1218 = vrot.slane %v1207, %v1217
  %v1219 = vlaneseq
  %v1220 = vshrl.u32 %v1219, 7
  %v1221 = vsub.s32 0, %v1220
  %v1222 = vrot.slane %v1208, %v1221
  %v1223 = vlaneseq
  %v1224 = vshrl.u32 %v1223, 7
  %v1225 = vsub.s32 0, %v1224
  %v1226 = vrot.slane %v1209, %v1225
  %v1227 = vlaneseq
  %v1228 = vshrl.u32 %v1227, 7
  %v1229 = vsub.s32 0, %v1228
  %v1230 = vrot.slane %v1210, %v1229
  %vm1231 = vcmask 1041409
  %v1232 = vsel %vm1231, %v1222, %v1218
  %v1233 = vsel %vm1231, %v1230, %v1226
  %vm1236 = vcmask 517120
  %1237 = vst.msk [vmem:[%s3] sm:$0x3] %vm1236, %v1232
  %1238 = vst.msk [vmem:[%s3 + $0x2] sm:$0x3] %vm1236, %v1233
  // Predicated region
  $region14: #{_lambda_.6} parent=0 // pred_check
    _
  $region15: #{_lambda_.6} parent=0 // pred_check_branch
    %1240 = sbr.rel (0) target = $region17
  $region16: #{_lambda_.6} parent=0 // pred_region
    _
  $region17: #{_lambda_.6} parent=0 // pred_fallthru
    _
  // Predicated region
  $region18: #{_lambda_.6} parent=0 // pred_check
    _
  $region19: #{_lambda_.6} parent=0 // pred_check_branch
    %1242 = sbr.rel (0) target = $region21
  $region20: #{_lambda_.6} parent=0 // pred_region
    _
  $region21: #{_lambda_.6} parent=0 // pred_fallthru
    _

// kernel: _lambda_.7
$region0: #{_lambda_.7}
  #allocation0 [shape = 'u32[]', space=smem, size = 0x4, offset = 0x4, fixed_abs, tag = 'smem constant byte address 0x4 - core index']
  #allocation1 [shape = 'u32[144,128]{1,0:T(1,128)}', space=vmem, size = 0x12000, scoped, tag = 'internal scratch']
  #allocation2 [shape = 'bf16[2,6,192]{2,1,0:T(8,128)(2,1)}', space=vmem, size = 0x2000, scoped, tag = 'scratch operand']
  #allocation3 [shape = 'f32[1,1]{1,0:T(1,128)S(1)}', space=vmem, size = 0x200, scoped, tag = 'scoped memory for _lambda_.7']
  %s0 = inlined_call_operand.vmem [shape: f32[2,2,64], index: 0, kind: input, shape index: {}]
  %s1 = inlined_call_operand.vmem [shape: bf16[5,192,32], index: 1, kind: input, shape index: {}]
  %s2 = inlined_call_operand.vmem [shape: f32[1,32], index: 2, kind: input, shape index: {}]
  %s3 = inlined_call_operand.vmem [shape: bf16[16,128], index: 3, kind: input, shape index: {}]
  %s4 = inlined_call_operand.vmem [shape: f32[1,128], index: 4, kind: input, shape index: {}]
  %s5 = inlined_call_operand.vmem [shape: bf16[128,64], index: 5, kind: input, shape index: {}]
  %s6 = inlined_call_operand.vmem [shape: f32[1,64], index: 6, kind: input, shape index: {}]
  %s7 = inlined_call_operand.vmem [shape: bf16[64,1], index: 7, kind: input, shape index: {}]
  %s8 = inlined_call_operand.<no memory space> [shape: f32[1,1], index: 8, kind: input, shape index: {}]
  %s9 = inlined_call_operand.vmem [shape: f32[2,1], index: 9, kind: output, shape index: {}]
  %s10 = sld [smem:[#allocation0]]
  $region46: #{_lambda_.7} parent=0
    _
  %s12 = ssub.s32 1, %s10
  %s13 = scalar_select 0, %s12, %s10
  %v14 = vstv %s8
  %15 = vst [vmem:[#allocation3] sm:$0x1] %v14
  // Predicated region
  $region2: #{_lambda_.7} parent=0 // pred_check
    _
  $region3: #{_lambda_.7} parent=0 // pred_check_branch
    %17 = sbr.rel (0) target = $region5
  $region4: #{_lambda_.7} parent=0 // pred_region
    _
  $region5: #{_lambda_.7} parent=0 // pred_fallthru
    _
  // Predicated region
  $region6: #{_lambda_.7} parent=0 // pred_check
    _
  $region7: #{_lambda_.7} parent=0 // pred_check_branch
    %19 = sbr.rel (0) target = $region9
  $region8: #{_lambda_.7} parent=0 // pred_region
    _
  $region9: #{_lambda_.7} parent=0 // pred_fallthru
    _
  // Predicated region
  $region10: #{_lambda_.7} parent=0 // pred_check
    _
  $region11: #{_lambda_.7} parent=0 // pred_check_branch
    %21 = sbr.rel (0) target = $region13
  $region12: #{_lambda_.7} parent=0 // pred_region
    _
  $region13: #{_lambda_.7} parent=0 // pred_fallthru
    _
  // Predicated region
  $region14: #{_lambda_.7} parent=0 // pred_check
    _
  $region15: #{_lambda_.7} parent=0 // pred_check_branch
    %23 = sbr.rel (0) target = $region17
  $region16: #{_lambda_.7} parent=0 // pred_region
    _
  $region17: #{_lambda_.7} parent=0 // pred_fallthru
    _
  // Predicated region
  $region18: #{_lambda_.7} parent=0 // pred_check
    _
  $region19: #{_lambda_.7} parent=0 // pred_check_branch
    %25 = sbr.rel (0) target = $region21
  $region20: #{_lambda_.7} parent=0 // pred_region
    _
  $region21: #{_lambda_.7} parent=0 // pred_fallthru
    _
  // Predicated region
  $region22: #{_lambda_.7} parent=0 // pred_check
    _
  $region23: #{_lambda_.7} parent=0 // pred_check_branch
    %27 = sbr.rel (0) target = $region25
  $region24: #{_lambda_.7} parent=0 // pred_region
    _
  $region25: #{_lambda_.7} parent=0 // pred_fallthru
    _
  // Predicated region
  $region26: #{_lambda_.7} parent=0 // pred_check
    _
  $region27: #{_lambda_.7} parent=0 // pred_check_branch
    %29 = sbr.rel (0) target = $region29
  $region28: #{_lambda_.7} parent=0 // pred_region
    _
  $region29: #{_lambda_.7} parent=0 // pred_fallthru
    _
  // Predicated region
  $region30: #{_lambda_.7} parent=0 // pred_check
    _
  $region31: #{_lambda_.7} parent=0 // pred_check_branch
    %31 = sbr.rel (0) target = $region33
  $region32: #{_lambda_.7} parent=0 // pred_region
    _
  $region33: #{_lambda_.7} parent=0 // pred_fallthru
    _
  // Predicated region
  $region34: #{_lambda_.7} parent=0 // pred_check
    _
  $region35: #{_lambda_.7} parent=0 // pred_check_branch
    %33 = sbr.rel (0) target = $region37
  $region36: #{_lambda_.7} parent=0 // pred_region
    _
  $region37: #{_lambda_.7} parent=0 // pred_fallthru
    _
  %vm35 = vcmask 1040384
  %vm36 = vcmask 520196
  %vm37 = vmor %vm36, %vm35
  %38 = vst.msk [vmem:[#allocation2] sm:$0x11] %vm37, 0
  %39 = vst.msk [vmem:[#allocation2 + $0x8] sm:$0x11] %vm37, 0
  %vm40 = vcmask 1042434
  %vm41 = vcmask 522246
  %vm42 = vmor %vm41, %vm40
  %43 = vst.msk [vmem:[#allocation2] sm:$0x44] %vm42, 0
  %44 = vst.msk [vmem:[#allocation2 + $0x8] sm:$0x44] %vm42, 0
  %vm45 = vcmask 518144
  %46 = vst.msk [vmem:[#allocation2] sm:$0x7] %vm45, 0
  %47 = vst.msk [vmem:[#allocation2 + $0x8] sm:$0x7] %vm45, 0
  %48 = vst.msk [vmem:[#allocation2 + $0x4] sm:$0x7] %vm45, 0
  %49 = vst.msk [vmem:[#allocation2 + $0xc] sm:$0x7] %vm45, 0
  %v50 = vld [vmem:[%s0] sm:$0x3]
  %v51 = vld [vmem:[%s0 + $0x2] sm:$0x3]
  %v52 = vpack.c.bf16 %v50, %v50
  %v53 = vpack.c.bf16 %v51, %v51
  %v56 = vunpack.c.l.b16 %v52
  %v57 = vunpack.c.l.b16 %v53
  %v58 = vpack.c.b16 %v56, %v56
  %v59 = vpack.c.b16 %v57, %v57
  %v60 = vrot.slane %v58, 7
  %v61 = vrot.slane %v59, 7
  %62 = vrot.lane.b32.xlu0 %v60, 64
  %v63 = vpop.permute.xlu0 %62
  %64 = vrot.lane.b32.xlu0 %v61, 64
  %v65 = vpop.permute.xlu0 %64
  %vm68 = vcmask 1041921
  %69 = vst.msk [vmem:[#allocation2] sm:$0x2] %vm68, %v63
  %70 = vst.msk [vmem:[#allocation2 + $0x8] sm:$0x2] %vm68, %v65
  %v71 = vld [vmem:[#allocation2] sm:$0x11]
  %v72 = vld [vmem:[#allocation2 + $0x8] sm:$0x11]
  %v76 = vunpack.c.l.s4 1966171168
  %v77 = vunpack.c.0.s8 %v76
  %v78 = vlaneseq
  %v79 = vshrl.u32 %v78, 7
  %v80 = vsub.s32 %v77, %v79
  %v81 = vrot.slane %v71, %v80
  %v83 = vunpack.c.l.s4 1966171168
  %v84 = vunpack.c.0.s8 %v83
  %v85 = vlaneseq
  %v86 = vshrl.u32 %v85, 7
  %v87 = vsub.s32 %v84, %v86
  %v88 = vrot.slane %v81, %v87
  %v90 = vunpack.c.l.s4 1966171168
  %v91 = vunpack.c.0.s8 %v90
  %v92 = vlaneseq
  %v93 = vshrl.u32 %v92, 7
  %v94 = vsub.s32 %v91, %v93
  %v95 = vrot.slane %v72, %v94
  %v97 = vunpack.c.l.s4 1966171168
  %v98 = vunpack.c.0.s8 %v97
  %v99 = vlaneseq
  %v100 = vshrl.u32 %v99, 7
  %v101 = vsub.s32 %v98, %v100
  %v102 = vrot.slane %v95, %v101
  %v103 = vld [vmem:[%s1] sm:$0xf]
  %v104 = vld [vmem:[%s1 + $0x4] sm:$0xf]
  %v105 = vld [vmem:[%s1 + $0x8] sm:$0xf]
  %v106 = vld [vmem:[%s1 + $0xc] sm:$0xf]
  %v107 = vld [vmem:[%s1 + $0x10] sm:$0xf]
  %v108 = vld [vmem:[%s1 + $0x14] sm:$0xf]
  %v109 = vld [vmem:[%s1 + $0x18] sm:$0xf]
  %v110 = vld [vmem:[%s1 + $0x1c] sm:$0xf]
  %v111 = vld [vmem:[%s1 + $0x20] sm:$0xf]
  %v112 = vld [vmem:[%s1 + $0x24] sm:$0xf]
  %v113 = vld [vmem:[%s1 + $0x28] sm:$0xf]
  %v114 = vld [vmem:[%s1 + $0x2c] sm:$0xf]
  %v115 = vld [vmem:[%s1 + $0x30] sm:$0xf]
  %v116 = vld [vmem:[%s1 + $0x34] sm:$0xf]
  %v117 = vld [vmem:[%s1 + $0x38] sm:$0xf]
  %v118 = vld [vmem:[%s1 + $0x3c] sm:$0xf]
  %v119 = vld [vmem:[%s1 + $0x40] sm:$0xf]
  %v120 = vld [vmem:[%s1 + $0x44] sm:$0xf]
  %v121 = vld [vmem:[%s1 + $0x48] sm:$0xf]
  %v122 = vld [vmem:[%s1 + $0x4c] sm:$0xf]
  %v123 = vld [vmem:[%s1 + $0x50] sm:$0xf]
  %v124 = vld [vmem:[%s1 + $0x54] sm:$0xf]
  %v125 = vld [vmem:[%s1 + $0x58] sm:$0xf]
  %v126 = vld [vmem:[%s1 + $0x5c] sm:$0xf]
  %v127 = vld [vmem:[#allocation2] sm:$0x33]
  %v128 = vld [vmem:[#allocation2 + $0x8] sm:$0x33]
  %v132 = vunpack.c.l.s4 1966171168
  %v133 = vunpack.c.0.s8 %v132
  %v134 = vlaneseq
  %v135 = vshrl.u32 %v134, 7
  %v136 = vsub.s32 %v133, %v135
  %v137 = vrot.slane %v127, %v136
  %v138 = vcombine.high %v137, %v137
  %v140 = vunpack.c.l.s4 1966171168
  %v141 = vunpack.c.0.s8 %v140
  %v142 = vlaneseq
  %v143 = vshrl.u32 %v142, 7
  %v144 = vsub.s32 %v141, %v143
  %v145 = vrot.slane %v137, %v144
  %v147 = vunpack.c.l.s4 1966171168
  %v148 = vunpack.c.0.s8 %v147
  %v149 = vlaneseq
  %v150 = vshrl.u32 %v149, 7
  %v151 = vsub.s32 %v148, %v150
  %v152 = vrot.slane %v138, %v151
  %v154 = vunpack.c.l.s4 1966171168
  %v155 = vunpack.c.0.s8 %v154
  %v156 = vlaneseq
  %v157 = vshrl.u32 %v156, 7
  %v158 = vsub.s32 %v155, %v157
  %v159 = vrot.slane %v128, %v158
  %v160 = vcombine.high %v159, %v159
  %v162 = vunpack.c.l.s4 1966171168
  %v163 = vunpack.c.0.s8 %v162
  %v164 = vlaneseq
  %v165 = vshrl.u32 %v164, 7
  %v166 = vsub.s32 %v163, %v165
  %v167 = vrot.slane %v159, %v166
  %v169 = vunpack.c.l.s4 1966171168
  %v170 = vunpack.c.0.s8 %v169
  %v171 = vlaneseq
  %v172 = vshrl.u32 %v171, 7
  %v173 = vsub.s32 %v170, %v172
  %v174 = vrot.slane %v160, %v173
  %vm175 = vsmask.f32 256
  %vm176 = vsmask.f32 1284
  %vm177 = vmor %vm175, %vm176
  %vm178 = vsmask.f32 2312
  %vm179 = vmor %vm177, %vm178
  %vm180 = vsmask.f32 3340
  %vm181 = vmor %vm179, %vm180
  %vm182 = vsmask.f32 4368
  %vm183 = vmor %vm181, %vm182
  %vm184 = vsmask.f32 5396
  %vm185 = vmor %vm183, %vm184
  %vm186 = vsmask.f32 6424
  %vm187 = vmor %vm185, %vm186
  %vm188 = vsmask.f32 7452
  %vm189 = vmor %vm187, %vm188
  %v191 = vshrl.u32 %v145, 16
  %v193 = vrot.slane %v191, 7
  %v194 = vrot.slane %v193, 1
  %v196 = vshll.u32 %v152, 16
  %v198 = vsel %vm189, %v194, %v196
  %v200 = vshrl.u32 %v167, 16
  %v202 = vrot.slane %v200, 7
  %v203 = vrot.slane %v202, 1
  %v205 = vshll.u32 %v174, 16
  %v207 = vsel %vm189, %v203, %v205
  %s208 = scalar_lea.vmem %s1, 96
  %v209 = vld [vmem:[%s208] sm:$0xf]
  %v210 = vld [vmem:[%s208 + $0x4] sm:$0xf]
  %v211 = vld [vmem:[%s208 + $0x8] sm:$0xf]
  %v212 = vld [vmem:[%s208 + $0xc] sm:$0xf]
  %v213 = vld [vmem:[%s208 + $0x10] sm:$0xf]
  %v214 = vld [vmem:[%s208 + $0x14] sm:$0xf]
  %v215 = vld [vmem:[%s208 + $0x18] sm:$0xf]
  %v216 = vld [vmem:[%s208 + $0x1c] sm:$0xf]
  %v217 = vld [vmem:[%s208 + $0x20] sm:$0xf]
  %v218 = vld [vmem:[%s208 + $0x24] sm:$0xf]
  %v219 = vld [vmem:[%s208 + $0x28] sm:$0xf]
  %v220 = vld [vmem:[%s208 + $0x2c] sm:$0xf]
  %v221 = vld [vmem:[%s208 + $0x30] sm:$0xf]
  %v222 = vld [vmem:[%s208 + $0x34] sm:$0xf]
  %v223 = vld [vmem:[%s208 + $0x38] sm:$0xf]
  %v224 = vld [vmem:[%s208 + $0x3c] sm:$0xf]
  %v225 = vld [vmem:[%s208 + $0x40] sm:$0xf]
  %v226 = vld [vmem:[%s208 + $0x44] sm:$0xf]
  %v227 = vld [vmem:[%s208 + $0x48] sm:$0xf]
  %v228 = vld [vmem:[%s208 + $0x4c] sm:$0xf]
  %v229 = vld [vmem:[%s208 + $0x50] sm:$0xf]
  %v230 = vld [vmem:[%s208 + $0x54] sm:$0xf]
  %v231 = vld [vmem:[%s208 + $0x58] sm:$0xf]
  %v232 = vld [vmem:[%s208 + $0x5c] sm:$0xf]
  %v233 = vcombine.low %v198, %v207
  %v235 = vunpack.c.l.s4 1966171168
  %v236 = vunpack.c.0.s8 %v235
  %v237 = vlaneseq
  %v238 = vshrl.u32 %v237, 7
  %v239 = vsub.s32 %v236, %v238
  %v240 = vrot.slane %v233, %v239
  %v241 = vcombine.high %v240, %v240
  %v243 = vunpack.c.l.s4 1966171168
  %v244 = vunpack.c.0.s8 %v243
  %v245 = vlaneseq
  %v246 = vshrl.u32 %v245, 7
  %v247 = vsub.s32 %v244, %v246
  %v248 = vrot.slane %v240, %v247
  %v250 = vunpack.c.l.s4 1966171168
  %v251 = vunpack.c.0.s8 %v250
  %v252 = vlaneseq
  %v253 = vshrl.u32 %v252, 7
  %v254 = vsub.s32 %v251, %v253
  %v255 = vrot.slane %v241, %v254
  %v281 = vunpack.c.l.b16 %v209
  %v282 = vunpack.c.l.b16 %v210
  %v283 = vunpack.c.l.b16 %v211
  %v284 = vunpack.c.l.b16 %v212
  %v285 = vunpack.c.l.b16 %v213
  %v286 = vunpack.c.l.b16 %v214
  %v287 = vunpack.c.l.b16 %v215
  %v288 = vunpack.c.l.b16 %v216
  %v289 = vunpack.c.l.b16 %v217
  %v290 = vunpack.c.l.b16 %v218
  %v291 = vunpack.c.l.b16 %v219
  %v292 = vunpack.c.l.b16 %v220
  %v293 = vunpack.c.l.b16 %v221
  %v294 = vunpack.c.l.b16 %v222
  %v295 = vunpack.c.l.b16 %v223
  %v296 = vunpack.c.l.b16 %v224
  %v297 = vunpack.c.l.b16 %v225
  %v298 = vunpack.c.l.b16 %v226
  %v299 = vunpack.c.l.b16 %v227
  %v300 = vunpack.c.l.b16 %v228
  %v301 = vunpack.c.l.b16 %v229
  %v302 = vunpack.c.l.b16 %v230
  %v303 = vunpack.c.l.b16 %v231
  %v304 = vunpack.c.l.b16 %v232
  %v305 = vpack.c.b16 %v282, %v281
  %v306 = vpack.c.b16 %v284, %v283
  %v307 = vpack.c.b16 %v286, %v285
  %v308 = vpack.c.b16 %v288, %v287
  %v309 = vpack.c.b16 %v290, %v289
  %v310 = vpack.c.b16 %v292, %v291
  %v311 = vpack.c.b16 %v294, %v293
  %v312 = vpack.c.b16 %v296, %v295
  %v313 = vpack.c.b16 %v298, %v297
  %v314 = vpack.c.b16 %v300, %v299
  %v315 = vpack.c.b16 %v302, %v301
  %v316 = vpack.c.b16 %v304, %v303
  %vm329 = vcmask 523264
  %v331 = vsel %vm329, %v255, 0
  %333 = vmatprep.subr.bf16.mxu0 0
  %334 = vmatpush1.bf16.msra.mxu0 %v312
  %335 = vmatprep.subr.bf16.mxu0 0
  %336 = vmatpush1.bf16.msra.mxu0 %v311
  %337 = vmatprep.subr.bf16.mxu0 0
  %338 = vmatpush1.bf16.msra.mxu0 %v310
  %339 = vmatprep.subr.bf16.mxu0 0
  %340 = vmatpush1.bf16.msra.mxu0 %v309
  %341 = vmatprep.subr.bf16.mxu0 0
  %342 = vmatpush1.bf16.msra.mxu0 %v308
  %343 = vmatprep.subr.bf16.mxu0 0
  %344 = vmatpush1.bf16.msra.mxu0 %v307
  %345 = vmatprep.subr.bf16.mxu0 0
  %346 = vmatpush1.bf16.msra.mxu0 %v306
  %347 = vmatprep.subr.bf16.mxu0 0
  %348 = vmatpush1.bf16.msra.mxu0 %v305
  %349 = vmatprep.subr.bf16.mxu0 0
  %350 = vmatpush2.bf16.msra.mxu0 0
  %351 = vmatprep.subr.bf16.mxu0 0
  %352 = vmatpush2.bf16.msra.mxu0 0
  %353 = vmatprep.subr.bf16.mxu0 0
  %354 = vmatpush2.bf16.msra.mxu0 0
  %355 = vmatprep.subr.bf16.mxu0 0
  %356 = vmatpush2.bf16.msra.mxu0 0
  %357 = vmatprep.subr.bf16.mxu0 0
  %358 = vmatpush2.bf16.msra.mxu0 %v316
  %359 = vmatprep.subr.bf16.mxu0 0
  %360 = vmatpush2.bf16.msra.mxu0 %v315
  %361 = vmatprep.subr.bf16.mxu0 0
  %362 = vmatpush2.bf16.msra.mxu0 %v314
  %363 = vmatprep.subr.bf16.mxu0 0
  %364 = vmatpush2.bf16.msra.mxu0 %v313
  %365 = vmatprep.mubr.bf16.mxu0 %v331
  %366 = vmatmul.mubr.bf16.gmra.mxu0 %v248
  %v367 = vpop.f32.mrf.mxu0
  %v368 = vadd.f32 0.0, %v367
  %v369 = vpop.f32.mrf.mxu0
  %v370 = vpop.f32.mrf.mxu0
  %v371 = vpop.f32.mrf.mxu0
  %372 = vdwg.mxu0
  %v373 = vcombine.low %v88, %v102
  %v375 = vunpack.c.l.s4 1966171168
  %v376 = vunpack.c.0.s8 %v375
  %v377 = vlaneseq
  %v378 = vshrl.u32 %v377, 7
  %v379 = vsub.s32 %v376, %v378
  %v380 = vrot.slane %v373, %v379
  %v381 = vcombine.high %v380, %v380
  %v383 = vunpack.c.l.s4 1966171168
  %v384 = vunpack.c.0.s8 %v383
  %v385 = vlaneseq
  %v386 = vshrl.u32 %v385, 7
  %v387 = vsub.s32 %v384, %v386
  %v388 = vrot.slane %v380, %v387
  %v390 = vunpack.c.l.s4 1966171168
  %v391 = vunpack.c.0.s8 %v390
  %v392 = vlaneseq
  %v393 = vshrl.u32 %v392, 7
  %v394 = vsub.s32 %v391, %v393
  %v395 = vrot.slane %v381, %v394
  %v421 = vunpack.c.l.b16 %v103
  %v422 = vunpack.c.l.b16 %v104
  %v423 = vunpack.c.l.b16 %v105
  %v424 = vunpack.c.l.b16 %v106
  %v425 = vunpack.c.l.b16 %v107
  %v426 = vunpack.c.l.b16 %v108
  %v427 = vunpack.c.l.b16 %v109
  %v428 = vunpack.c.l.b16 %v110
  %v429 = vunpack.c.l.b16 %v111
  %v430 = vunpack.c.l.b16 %v112
  %v431 = vunpack.c.l.b16 %v113
  %v432 = vunpack.c.l.b16 %v114
  %v433 = vunpack.c.l.b16 %v115
  %v434 = vunpack.c.l.b16 %v116
  %v435 = vunpack.c.l.b16 %v117
  %v436 = vunpack.c.l.b16 %v118
  %v437 = vunpack.c.l.b16 %v119
  %v438 = vunpack.c.l.b16 %v120
  %v439 = vunpack.c.l.b16 %v121
  %v440 = vunpack.c.l.b16 %v122
  %v441 = vunpack.c.l.b16 %v123
  %v442 = vunpack.c.l.b16 %v124
  %v443 = vunpack.c.l.b16 %v125
  %v444 = vunpack.c.l.b16 %v126
  %v445 = vpack.c.b16 %v422, %v421
  %v446 = vpack.c.b16 %v424, %v423
  %v447 = vpack.c.b16 %v426, %v425
  %v448 = vpack.c.b16 %v428, %v427
  %v449 = vpack.c.b16 %v430, %v429
  %v450 = vpack.c.b16 %v432, %v431
  %v451 = vpack.c.b16 %v434, %v433
  %v452 = vpack.c.b16 %v436, %v435
  %v453 = vpack.c.b16 %v438, %v437
  %v454 = vpack.c.b16 %v440, %v439
  %v455 = vpack.c.b16 %v442, %v441
  %v456 = vpack.c.b16 %v444, %v443
  %v470 = vsel %vm329, %v395, 0
  %472 = vmatprep.subr.bf16.mxu0 0
  %473 = vmatpush1.bf16.msra.mxu0 %v452
  %474 = vmatprep.subr.bf16.mxu0 0
  %475 = vmatpush1.bf16.msra.mxu0 %v451
  %476 = vmatprep.subr.bf16.mxu0 0
  %477 = vmatpush1.bf16.msra.mxu0 %v450
  %478 = vmatprep.subr.bf16.mxu0 0
  %479 = vmatpush1.bf16.msra.mxu0 %v449
  %480 = vmatprep.subr.bf16.mxu0 0
  %481 = vmatpush1.bf16.msra.mxu0 %v448
  %482 = vmatprep.subr.bf16.mxu0 0
  %483 = vmatpush1.bf16.msra.mxu0 %v447
  %484 = vmatprep.subr.bf16.mxu0 0
  %485 = vmatpush1.bf16.msra.mxu0 %v446
  %486 = vmatprep.subr.bf16.mxu0 0
  %487 = vmatpush1.bf16.msra.mxu0 %v445
  %488 = vmatprep.subr.bf16.mxu0 0
  %489 = vmatpush2.bf16.msra.mxu0 0
  %490 = vmatprep.subr.bf16.mxu0 0
  %491 = vmatpush2.bf16.msra.mxu0 0
  %492 = vmatprep.subr.bf16.mxu0 0
  %493 = vmatpush2.bf16.msra.mxu0 0
  %494 = vmatprep.subr.bf16.mxu0 0
  %495 = vmatpush2.bf16.msra.mxu0 0
  %496 = vmatprep.subr.bf16.mxu0 0
  %497 = vmatpush2.bf16.msra.mxu0 %v456
  %498 = vmatprep.subr.bf16.mxu0 0
  %499 = vmatpush2.bf16.msra.mxu0 %v455
  %500 = vmatprep.subr.bf16.mxu0 0
  %501 = vmatpush2.bf16.msra.mxu0 %v454
  %502 = vmatprep.subr.bf16.mxu0 0
  %503 = vmatpush2.bf16.msra.mxu0 %v453
  %504 = vmatprep.mubr.bf16.mxu0 %v470
  %505 = vmatmul.mubr.bf16.gmra.mxu0 %v388
  %v506 = vpop.f32.mrf.mxu0
  %v507 = vadd.f32 %v368, %v506
  %v508 = vpop.f32.mrf.mxu0
  %v509 = vpop.f32.mrf.mxu0
  %v510 = vpop.f32.mrf.mxu0
  %511 = vdwg.mxu0
  %v512 = vld [vmem:[#allocation2] sm:$0x22]
  %v513 = vld [vmem:[#allocation2 + $0x8] sm:$0x22]
  %v517 = vunpack.c.l.s4 1966171168
  %v518 = vunpack.c.0.s8 %v517
  %v519 = vlaneseq
  %v520 = vshrl.u32 %v519, 7
  %v521 = vsub.s32 %v518, %v520
  %v522 = vrot.slane %v512, %v521
  %v523 = vcombine.high %v522, %v522
  %v525 = vunpack.c.l.s4 1966171168
  %v526 = vunpack.c.0.s8 %v525
  %v527 = vlaneseq
  %v528 = vshrl.u32 %v527, 7
  %v529 = vsub.s32 %v526, %v528
  %v530 = vrot.slane %v523, %v529
  %v532 = vunpack.c.l.s4 1966171168
  %v533 = vunpack.c.0.s8 %v532
  %v534 = vlaneseq
  %v535 = vshrl.u32 %v534, 7
  %v536 = vsub.s32 %v533, %v535
  %v537 = vrot.slane %v513, %v536
  %v538 = vcombine.high %v537, %v537
  %v540 = vunpack.c.l.s4 1966171168
  %v541 = vunpack.c.0.s8 %v540
  %v542 = vlaneseq
  %v543 = vshrl.u32 %v542, 7
  %v544 = vsub.s32 %v541, %v543
  %v545 = vrot.slane %v538, %v544
  %s546 = scalar_lea.vmem %s1, 192
  %v547 = vld [vmem:[%s546] sm:$0xf]
  %v548 = vld [vmem:[%s546 + $0x4] sm:$0xf]
  %v549 = vld [vmem:[%s546 + $0x8] sm:$0xf]
  %v550 = vld [vmem:[%s546 + $0xc] sm:$0xf]
  %v551 = vld [vmem:[%s546 + $0x10] sm:$0xf]
  %v552 = vld [vmem:[%s546 + $0x14] sm:$0xf]
  %v553 = vld [vmem:[%s546 + $0x18] sm:$0xf]
  %v554 = vld [vmem:[%s546 + $0x1c] sm:$0xf]
  %v555 = vld [vmem:[%s546 + $0x20] sm:$0xf]
  %v556 = vld [vmem:[%s546 + $0x24] sm:$0xf]
  %v557 = vld [vmem:[%s546 + $0x28] sm:$0xf]
  %v558 = vld [vmem:[%s546 + $0x2c] sm:$0xf]
  %v559 = vld [vmem:[%s546 + $0x30] sm:$0xf]
  %v560 = vld [vmem:[%s546 + $0x34] sm:$0xf]
  %v561 = vld [vmem:[%s546 + $0x38] sm:$0xf]
  %v562 = vld [vmem:[%s546 + $0x3c] sm:$0xf]
  %v563 = vld [vmem:[%s546 + $0x40] sm:$0xf]
  %v564 = vld [vmem:[%s546 + $0x44] sm:$0xf]
  %v565 = vld [vmem:[%s546 + $0x48] sm:$0xf]
  %v566 = vld [vmem:[%s546 + $0x4c] sm:$0xf]
  %v567 = vld [vmem:[%s546 + $0x50] sm:$0xf]
  %v568 = vld [vmem:[%s546 + $0x54] sm:$0xf]
  %v569 = vld [vmem:[%s546 + $0x58] sm:$0xf]
  %v570 = vld [vmem:[%s546 + $0x5c] sm:$0xf]
  %v571 = vcombine.low %v530, %v545
  %v573 = vunpack.c.l.s4 1966171168
  %v574 = vunpack.c.0.s8 %v573
  %v575 = vlaneseq
  %v576 = vshrl.u32 %v575, 7
  %v577 = vsub.s32 %v574, %v576
  %v578 = vrot.slane %v571, %v577
  %v579 = vcombine.high %v578, %v578
  %v581 = vunpack.c.l.s4 1966171168
  %v582 = vunpack.c.0.s8 %v581
  %v583 = vlaneseq
  %v584 = vshrl.u32 %v583, 7
  %v585 = vsub.s32 %v582, %v584
  %v586 = vrot.slane %v578, %v585
  %v588 = vunpack.c.l.s4 1966171168
  %v589 = vunpack.c.0.s8 %v588
  %v590 = vlaneseq
  %v591 = vshrl.u32 %v590, 7
  %v592 = vsub.s32 %v589, %v591
  %v593 = vrot.slane %v579, %v592
  %v619 = vunpack.c.l.b16 %v547
  %v620 = vunpack.c.l.b16 %v548
  %v621 = vunpack.c.l.b16 %v549
  %v622 = vunpack.c.l.b16 %v550
  %v623 = vunpack.c.l.b16 %v551
  %v624 = vunpack.c.l.b16 %v552
  %v625 = vunpack.c.l.b16 %v553
  %v626 = vunpack.c.l.b16 %v554
  %v627 = vunpack.c.l.b16 %v555
  %v628 = vunpack.c.l.b16 %v556
  %v629 = vunpack.c.l.b16 %v557
  %v630 = vunpack.c.l.b16 %v558
  %v631 = vunpack.c.l.b16 %v559
  %v632 = vunpack.c.l.b16 %v560
  %v633 = vunpack.c.l.b16 %v561
  %v634 = vunpack.c.l.b16 %v562
  %v635 = vunpack.c.l.b16 %v563
  %v636 = vunpack.c.l.b16 %v564
  %v637 = vunpack.c.l.b16 %v565
  %v638 = vunpack.c.l.b16 %v566
  %v639 = vunpack.c.l.b16 %v567
  %v640 = vunpack.c.l.b16 %v568
  %v641 = vunpack.c.l.b16 %v569
  %v642 = vunpack.c.l.b16 %v570
  %v643 = vpack.c.b16 %v620, %v619
  %v644 = vpack.c.b16 %v622, %v621
  %v645 = vpack.c.b16 %v624, %v623
  %v646 = vpack.c.b16 %v626, %v625
  %v647 = vpack.c.b16 %v628, %v627
  %v648 = vpack.c.b16 %v630, %v629
  %v649 = vpack.c.b16 %v632, %v631
  %v650 = vpack.c.b16 %v634, %v633
  %v651 = vpack.c.b16 %v636, %v635
  %v652 = vpack.c.b16 %v638, %v637
  %v653 = vpack.c.b16 %v640, %v639
  %v654 = vpack.c.b16 %v642, %v641
  %v668 = vsel %vm329, %v593, 0
  %670 = vmatprep.subr.bf16.mxu0 0
  %671 = vmatpush1.bf16.msra.mxu0 %v650
  %672 = vmatprep.subr.bf16.mxu0 0
  %673 = vmatpush1.bf16.msra.mxu0 %v649
  %674 = vmatprep.subr.bf16.mxu0 0
  %675 = vmatpush1.bf16.msra.mxu0 %v648
  %676 = vmatprep.subr.bf16.mxu0 0
  %677 = vmatpush1.bf16.msra.mxu0 %v647
  %678 = vmatprep.subr.bf16.mxu0 0
  %679 = vmatpush1.bf16.msra.mxu0 %v646
  %680 = vmatprep.subr.bf16.mxu0 0
  %681 = vmatpush1.bf16.msra.mxu0 %v645
  %682 = vmatprep.subr.bf16.mxu0 0
  %683 = vmatpush1.bf16.msra.mxu0 %v644
  %684 = vmatprep.subr.bf16.mxu0 0
  %685 = vmatpush1.bf16.msra.mxu0 %v643
  %686 = vmatprep.subr.bf16.mxu0 0
  %687 = vmatpush2.bf16.msra.mxu0 0
  %688 = vmatprep.subr.bf16.mxu0 0
  %689 = vmatpush2.bf16.msra.mxu0 0
  %690 = vmatprep.subr.bf16.mxu0 0
  %691 = vmatpush2.bf16.msra.mxu0 0
  %692 = vmatprep.subr.bf16.mxu0 0
  %693 = vmatpush2.bf16.msra.mxu0 0
  %694 = vmatprep.subr.bf16.mxu0 0
  %695 = vmatpush2.bf16.msra.mxu0 %v654
  %696 = vmatprep.subr.bf16.mxu0 0
  %697 = vmatpush2.bf16.msra.mxu0 %v653
  %698 = vmatprep.subr.bf16.mxu0 0
  %699 = vmatpush2.bf16.msra.mxu0 %v652
  %700 = vmatprep.subr.bf16.mxu0 0
  %701 = vmatpush2.bf16.msra.mxu0 %v651
  %702 = vmatprep.mubr.bf16.mxu0 %v668
  %703 = vmatmul.mubr.bf16.gmra.mxu0 %v586
  %v704 = vpop.f32.mrf.mxu0
  %v705 = vadd.f32 0.0, %v704
  %v706 = vpop.f32.mrf.mxu0
  %v707 = vpop.f32.mrf.mxu0
  %v708 = vpop.f32.mrf.mxu0
  %709 = vdwg.mxu0
  %v710 = vadd.f32 %v507, %v705
  %v711 = vld [vmem:[#allocation2] sm:$0x66]
  %v712 = vld [vmem:[#allocation2 + $0x8] sm:$0x66]
  %v716 = vunpack.c.l.s4 1966171168
  %v717 = vunpack.c.0.s8 %v716
  %v718 = vlaneseq
  %v719 = vshrl.u32 %v718, 7
  %v720 = vsub.s32 %v717, %v719
  %v721 = vrot.slane %v711, %v720
  %v722 = vcombine.high %v721, %v721
  %v724 = vunpack.c.l.s4 1966171168
  %v725 = vunpack.c.0.s8 %v724
  %v726 = vlaneseq
  %v727 = vshrl.u32 %v726, 7
  %v728 = vsub.s32 %v725, %v727
  %v729 = vrot.slane %v721, %v728
  %v731 = vunpack.c.l.s4 1966171168
  %v732 = vunpack.c.0.s8 %v731
  %v733 = vlaneseq
  %v734 = vshrl.u32 %v733, 7
  %v735 = vsub.s32 %v732, %v734
  %v736 = vrot.slane %v722, %v735
  %v737 = vcombine.high %v729, %v729
  %v739 = vunpack.c.l.s4 1966171168
  %v740 = vunpack.c.0.s8 %v739
  %v741 = vlaneseq
  %v742 = vshrl.u32 %v741, 7
  %v743 = vsub.s32 %v740, %v742
  %v744 = vrot.slane %v712, %v743
  %v745 = vcombine.high %v744, %v744
  %v747 = vunpack.c.l.s4 1966171168
  %v748 = vunpack.c.0.s8 %v747
  %v749 = vlaneseq
  %v750 = vshrl.u32 %v749, 7
  %v751 = vsub.s32 %v748, %v750
  %v752 = vrot.slane %v744, %v751
  %v754 = vunpack.c.l.s4 1966171168
  %v755 = vunpack.c.0.s8 %v754
  %v756 = vlaneseq
  %v757 = vshrl.u32 %v756, 7
  %v758 = vsub.s32 %v755, %v757
  %v759 = vrot.slane %v745, %v758
  %v760 = vcombine.high %v752, %v752
  %v762 = vshrl.u32 %v736, 16
  %v764 = vrot.slane %v762, 7
  %v765 = vrot.slane %v764, 1
  %v767 = vshll.u32 %v737, 16
  %v769 = vsel %vm189, %v765, %v767
  %v771 = vshrl.u32 %v759, 16
  %v773 = vrot.slane %v771, 7
  %v774 = vrot.slane %v773, 1
  %v776 = vshll.u32 %v760, 16
  %v778 = vsel %vm189, %v774, %v776
  %s779 = scalar_lea.vmem %s1, 288
  %v780 = vld [vmem:[%s779] sm:$0xf]
  %v781 = vld [vmem:[%s779 + $0x4] sm:$0xf]
  %v782 = vld [vmem:[%s779 + $0x8] sm:$0xf]
  %v783 = vld [vmem:[%s779 + $0xc] sm:$0xf]
  %v784 = vld [vmem:[%s779 + $0x10] sm:$0xf]
  %v785 = vld [vmem:[%s779 + $0x14] sm:$0xf]
  %v786 = vld [vmem:[%s779 + $0x18] sm:$0xf]
  %v787 = vld [vmem:[%s779 + $0x1c] sm:$0xf]
  %v788 = vld [vmem:[%s779 + $0x20] sm:$0xf]
  %v789 = vld [vmem:[%s779 + $0x24] sm:$0xf]
  %v790 = vld [vmem:[%s779 + $0x28] sm:$0xf]
  %v791 = vld [vmem:[%s779 + $0x2c] sm:$0xf]
  %v792 = vld [vmem:[%s779 + $0x30] sm:$0xf]
  %v793 = vld [vmem:[%s779 + $0x34] sm:$0xf]
  %v794 = vld [vmem:[%s779 + $0x38] sm:$0xf]
  %v795 = vld [vmem:[%s779 + $0x3c] sm:$0xf]
  %v796 = vld [vmem:[%s779 + $0x40] sm:$0xf]
  %v797 = vld [vmem:[%s779 + $0x44] sm:$0xf]
  %v798 = vld [vmem:[%s779 + $0x48] sm:$0xf]
  %v799 = vld [vmem:[%s779 + $0x4c] sm:$0xf]
  %v800 = vld [vmem:[%s779 + $0x50] sm:$0xf]
  %v801 = vld [vmem:[%s779 + $0x54] sm:$0xf]
  %v802 = vld [vmem:[%s779 + $0x58] sm:$0xf]
  %v803 = vld [vmem:[%s779 + $0x5c] sm:$0xf]
  %v804 = vcombine.low %v769, %v778
  %v806 = vunpack.c.l.s4 1966171168
  %v807 = vunpack.c.0.s8 %v806
  %v808 = vlaneseq
  %v809 = vshrl.u32 %v808, 7
  %v810 = vsub.s32 %v807, %v809
  %v811 = vrot.slane %v804, %v810
  %v812 = vcombine.high %v811, %v811
  %v814 = vunpack.c.l.s4 1966171168
  %v815 = vunpack.c.0.s8 %v814
  %v816 = vlaneseq
  %v817 = vshrl.u32 %v816, 7
  %v818 = vsub.s32 %v815, %v817
  %v819 = vrot.slane %v811, %v818
  %v821 = vunpack.c.l.s4 1966171168
  %v822 = vunpack.c.0.s8 %v821
  %v823 = vlaneseq
  %v824 = vshrl.u32 %v823, 7
  %v825 = vsub.s32 %v822, %v824
  %v826 = vrot.slane %v812, %v825
  %v852 = vunpack.c.l.b16 %v780
  %v853 = vunpack.c.l.b16 %v781
  %v854 = vunpack.c.l.b16 %v782
  %v855 = vunpack.c.l.b16 %v783
  %v856 = vunpack.c.l.b16 %v784
  %v857 = vunpack.c.l.b16 %v785
  %v858 = vunpack.c.l.b16 %v786
  %v859 = vunpack.c.l.b16 %v787
  %v860 = vunpack.c.l.b16 %v788
  %v861 = vunpack.c.l.b16 %v789
  %v862 = vunpack.c.l.b16 %v790
  %v863 = vunpack.c.l.b16 %v791
  %v864 = vunpack.c.l.b16 %v792
  %v865 = vunpack.c.l.b16 %v793
  %v866 = vunpack.c.l.b16 %v794
  %v867 = vunpack.c.l.b16 %v795
  %v868 = vunpack.c.l.b16 %v796
  %v869 = vunpack.c.l.b16 %v797
  %v870 = vunpack.c.l.b16 %v798
  %v871 = vunpack.c.l.b16 %v799
  %v872 = vunpack.c.l.b16 %v800
  %v873 = vunpack.c.l.b16 %v801
  %v874 = vunpack.c.l.b16 %v802
  %v875 = vunpack.c.l.b16 %v803
  %v876 = vpack.c.b16 %v853, %v852
  %v877 = vpack.c.b16 %v855, %v854
  %v878 = vpack.c.b16 %v857, %v856
  %v879 = vpack.c.b16 %v859, %v858
  %v880 = vpack.c.b16 %v861, %v860
  %v881 = vpack.c.b16 %v863, %v862
  %v882 = vpack.c.b16 %v865, %v864
  %v883 = vpack.c.b16 %v867, %v866
  %v884 = vpack.c.b16 %v869, %v868
  %v885 = vpack.c.b16 %v871, %v870
  %v886 = vpack.c.b16 %v873, %v872
  %v887 = vpack.c.b16 %v875, %v874
  %v901 = vsel %vm329, %v826, 0
  %903 = vmatprep.subr.bf16.mxu0 0
  %904 = vmatpush1.bf16.msra.mxu0 %v883
  %905 = vmatprep.subr.bf16.mxu0 0
  %906 = vmatpush1.bf16.msra.mxu0 %v882
  %907 = vmatprep.subr.bf16.mxu0 0
  %908 = vmatpush1.bf16.msra.mxu0 %v881
  %909 = vmatprep.subr.bf16.mxu0 0
  %910 = vmatpush1.bf16.msra.mxu0 %v880
  %911 = vmatprep.subr.bf16.mxu0 0
  %912 = vmatpush1.bf16.msra.mxu0 %v879
  %913 = vmatprep.subr.bf16.mxu0 0
  %914 = vmatpush1.bf16.msra.mxu0 %v878
  %915 = vmatprep.subr.bf16.mxu0 0
  %916 = vmatpush1.bf16.msra.mxu0 %v877
  %917 = vmatprep.subr.bf16.mxu0 0
  %918 = vmatpush1.bf16.msra.mxu0 %v876
  %919 = vmatprep.subr.bf16.mxu0 0
  %920 = vmatpush2.bf16.msra.mxu0 0
  %921 = vmatprep.subr.bf16.mxu0 0
  %922 = vmatpush2.bf16.msra.mxu0 0
  %923 = vmatprep.subr.bf16.mxu0 0
  %924 = vmatpush2.bf16.msra.mxu0 0
  %925 = vmatprep.subr.bf16.mxu0 0
  %926 = vmatpush2.bf16.msra.mxu0 0
  %927 = vmatprep.subr.bf16.mxu0 0
  %928 = vmatpush2.bf16.msra.mxu0 %v887
  %929 = vmatprep.subr.bf16.mxu0 0
  %930 = vmatpush2.bf16.msra.mxu0 %v886
  %931 = vmatprep.subr.bf16.mxu0 0
  %932 = vmatpush2.bf16.msra.mxu0 %v885
  %933 = vmatprep.subr.bf16.mxu0 0
  %934 = vmatpush2.bf16.msra.mxu0 %v884
  %935 = vmatprep.mubr.bf16.mxu0 %v901
  %936 = vmatmul.mubr.bf16.gmra.mxu0 %v819
  %v937 = vpop.f32.mrf.mxu0
  %v938 = vadd.f32 0.0, %v937
  %v939 = vpop.f32.mrf.mxu0
  %v940 = vpop.f32.mrf.mxu0
  %v941 = vpop.f32.mrf.mxu0
  %942 = vdwg.mxu0
  %v943 = vadd.f32 %v710, %v938
  %v944 = vld [vmem:[#allocation2] sm:$0x44]
  %v945 = vld [vmem:[#allocation2 + $0x8] sm:$0x44]
  %v949 = vunpack.c.l.s4 1966171168
  %v950 = vunpack.c.0.s8 %v949
  %v951 = vlaneseq
  %v952 = vshrl.u32 %v951, 7
  %v953 = vsub.s32 %v950, %v952
  %v954 = vrot.slane %v944, %v953
  %v956 = vunpack.c.l.s4 1966171168
  %v957 = vunpack.c.0.s8 %v956
  %v958 = vlaneseq
  %v959 = vshrl.u32 %v958, 7
  %v960 = vsub.s32 %v957, %v959
  %v961 = vrot.slane %v954, %v960
  %v962 = vcombine.high %v961, %v961
  %v964 = vunpack.c.l.s4 1966171168
  %v965 = vunpack.c.0.s8 %v964
  %v966 = vlaneseq
  %v967 = vshrl.u32 %v966, 7
  %v968 = vsub.s32 %v965, %v967
  %v969 = vrot.slane %v945, %v968
  %v971 = vunpack.c.l.s4 1966171168
  %v972 = vunpack.c.0.s8 %v971
  %v973 = vlaneseq
  %v974 = vshrl.u32 %v973, 7
  %v975 = vsub.s32 %v972, %v974
  %v976 = vrot.slane %v969, %v975
  %v977 = vcombine.high %v976, %v976
  %s978 = scalar_lea.vmem %s1, 384
  %v979 = vld [vmem:[%s978] sm:$0xf]
  %v980 = vld [vmem:[%s978 + $0x4] sm:$0xf]
  %v981 = vld [vmem:[%s978 + $0x8] sm:$0xf]
  %v982 = vld [vmem:[%s978 + $0xc] sm:$0xf]
  %v983 = vld [vmem:[%s978 + $0x10] sm:$0xf]
  %v984 = vld [vmem:[%s978 + $0x14] sm:$0xf]
  %v985 = vld [vmem:[%s978 + $0x18] sm:$0xf]
  %v986 = vld [vmem:[%s978 + $0x1c] sm:$0xf]
  %v987 = vld [vmem:[%s978 + $0x20] sm:$0xf]
  %v988 = vld [vmem:[%s978 + $0x24] sm:$0xf]
  %v989 = vld [vmem:[%s978 + $0x28] sm:$0xf]
  %v990 = vld [vmem:[%s978 + $0x2c] sm:$0xf]
  %v991 = vld [vmem:[%s978 + $0x30] sm:$0xf]
  %v992 = vld [vmem:[%s978 + $0x34] sm:$0xf]
  %v993 = vld [vmem:[%s978 + $0x38] sm:$0xf]
  %v994 = vld [vmem:[%s978 + $0x3c] sm:$0xf]
  %v995 = vld [vmem:[%s978 + $0x40] sm:$0xf]
  %v996 = vld [vmem:[%s978 + $0x44] sm:$0xf]
  %v997 = vld [vmem:[%s978 + $0x48] sm:$0xf]
  %v998 = vld [vmem:[%s978 + $0x4c] sm:$0xf]
  %v999 = vld [vmem:[%s978 + $0x50] sm:$0xf]
  %v1000 = vld [vmem:[%s978 + $0x54] sm:$0xf]
  %v1001 = vld [vmem:[%s978 + $0x58] sm:$0xf]
  %v1002 = vld [vmem:[%s978 + $0x5c] sm:$0xf]
  %v1003 = vcombine.low %v962, %v977
  %v1005 = vunpack.c.l.s4 1966171168
  %v1006 = vunpack.c.0.s8 %v1005
  %v1007 = vlaneseq
  %v1008 = vshrl.u32 %v1007, 7
  %v1009 = vsub.s32 %v1006, %v1008
  %v1010 = vrot.slane %v1003, %v1009
  %v1011 = vcombine.high %v1010, %v1010
  %v1013 = vunpack.c.l.s4 1966171168
  %v1014 = vunpack.c.0.s8 %v1013
  %v1015 = vlaneseq
  %v1016 = vshrl.u32 %v1015, 7
  %v1017 = vsub.s32 %v1014, %v1016
  %v1018 = vrot.slane %v1010, %v1017
  %v1020 = vunpack.c.l.s4 1966171168
  %v1021 = vunpack.c.0.s8 %v1020
  %v1022 = vlaneseq
  %v1023 = vshrl.u32 %v1022, 7
  %v1024 = vsub.s32 %v1021, %v1023
  %v1025 = vrot.slane %v1011, %v1024
  %v1051 = vunpack.c.l.b16 %v979
  %v1052 = vunpack.c.l.b16 %v980
  %v1053 = vunpack.c.l.b16 %v981
  %v1054 = vunpack.c.l.b16 %v982
  %v1055 = vunpack.c.l.b16 %v983
  %v1056 = vunpack.c.l.b16 %v984
  %v1057 = vunpack.c.l.b16 %v985
  %v1058 = vunpack.c.l.b16 %v986
  %v1059 = vunpack.c.l.b16 %v987
  %v1060 = vunpack.c.l.b16 %v988
  %v1061 = vunpack.c.l.b16 %v989
  %v1062 = vunpack.c.l.b16 %v990
  %v1063 = vunpack.c.l.b16 %v991
  %v1064 = vunpack.c.l.b16 %v992
  %v1065 = vunpack.c.l.b16 %v993
  %v1066 = vunpack.c.l.b16 %v994
  %v1067 = vunpack.c.l.b16 %v995
  %v1068 = vunpack.c.l.b16 %v996
  %v1069 = vunpack.c.l.b16 %v997
  %v1070 = vunpack.c.l.b16 %v998
  %v1071 = vunpack.c.l.b16 %v999
  %v1072 = vunpack.c.l.b16 %v1000
  %v1073 = vunpack.c.l.b16 %v1001
  %v1074 = vunpack.c.l.b16 %v1002
  %v1075 = vpack.c.b16 %v1052, %v1051
  %v1076 = vpack.c.b16 %v1054, %v1053
  %v1077 = vpack.c.b16 %v1056, %v1055
  %v1078 = vpack.c.b16 %v1058, %v1057
  %v1079 = vpack.c.b16 %v1060, %v1059
  %v1080 = vpack.c.b16 %v1062, %v1061
  %v1081 = vpack.c.b16 %v1064, %v1063
  %v1082 = vpack.c.b16 %v1066, %v1065
  %v1083 = vpack.c.b16 %v1068, %v1067
  %v1084 = vpack.c.b16 %v1070, %v1069
  %v1085 = vpack.c.b16 %v1072, %v1071
  %v1086 = vpack.c.b16 %v1074, %v1073
  %v1100 = vsel %vm329, %v1025, 0
  %1102 = vmatprep.subr.bf16.mxu0 0
  %1103 = vmatpush1.bf16.msra.mxu0 %v1082
  %1104 = vmatprep.subr.bf16.mxu0 0
  %1105 = vmatpush1.bf16.msra.mxu0 %v1081
  %1106 = vmatprep.subr.bf16.mxu0 0
  %1107 = vmatpush1.bf16.msra.mxu0 %v1080
  %1108 = vmatprep.subr.bf16.mxu0 0
  %1109 = vmatpush1.bf16.msra.mxu0 %v1079
  %1110 = vmatprep.subr.bf16.mxu0 0
  %1111 = vmatpush1.bf16.msra.mxu0 %v1078
  %1112 = vmatprep.subr.bf16.mxu0 0
  %1113 = vmatpush1.bf16.msra.mxu0 %v1077
  %1114 = vmatprep.subr.bf16.mxu0 0
  %1115 = vmatpush1.bf16.msra.mxu0 %v1076
  %1116 = vmatprep.subr.bf16.mxu0 0
  %1117 = vmatpush1.bf16.msra.mxu0 %v1075
  %1118 = vmatprep.subr.bf16.mxu0 0
  %1119 = vmatpush2.bf16.msra.mxu0 0
  %1120 = vmatprep.subr.bf16.mxu0 0
  %1121 = vmatpush2.bf16.msra.mxu0 0
  %1122 = vmatprep.subr.bf16.mxu0 0
  %1123 = vmatpush2.bf16.msra.mxu0 0
  %1124 = vmatprep.subr.bf16.mxu0 0
  %1125 = vmatpush2.bf16.msra.mxu0 0
  %1126 = vmatprep.subr.bf16.mxu0 0
  %1127 = vmatpush2.bf16.msra.mxu0 %v1086
  %1128 = vmatprep.subr.bf16.mxu0 0
  %1129 = vmatpush2.bf16.msra.mxu0 %v1085
  %1130 = vmatprep.subr.bf16.mxu0 0
  %1131 = vmatpush2.bf16.msra.mxu0 %v1084
  %1132 = vmatprep.subr.bf16.mxu0 0
  %1133 = vmatpush2.bf16.msra.mxu0 %v1083
  %1134 = vmatprep.mubr.bf16.mxu0 %v1100
  %1135 = vmatmul.mubr.bf16.gmra.mxu0 %v1018
  %v1136 = vpop.f32.mrf.mxu0
  %v1137 = vadd.f32 0.0, %v1136
  %v1138 = vpop.f32.mrf.mxu0
  %v1139 = vpop.f32.mrf.mxu0
  %v1140 = vpop.f32.mrf.mxu0
  %1141 = vdwg.mxu0
  %v1142 = vadd.f32 %v943, %v1137
  %v1143 = vld [vmem:[%s2] sm:$0x1]
  %v1145 = vlaneseq
  %v1146 = vshrl.u32 %v1145, 7
  %v1147 = vsub.s32 0, %v1146
  %v1148 = vrot.slane %v1143, %v1147
  %v1150 = vadd.f32 %v1142, %v1148
  %v1151 = vmul.f32 %v1150, 0.5
  %v1152 = vmul.f32 %v1150, 0.044715
  %v1153 = vmul.f32 %v1152, %v1150
  %v1154 = vmul.f32 %v1153, %v1150
  %v1155 = vadd.f32 %v1150, %v1154
  %v1156 = vmul.f32 %v1155, 0.7978846
  %v1157 = vtanh.pop %v1156
  %v1158 = vadd.f32 %v1157, 1.0
  %v1159 = vmul.f32 %v1151, %v1158
  %v1162 = vunpack.c.l.s4 1983009808
  %v1163 = vunpack.c.0.s8 %v1162
  %v1164 = vlaneseq
  %v1165 = vshrl.u32 %v1164, 7
  %v1166 = vsub.s32 %v1163, %v1165
  %v1167 = vrot.slane %v1159, %v1166
  %v1168 = vcombine.high %v1167, %v1167
  %v1171 = vrot.slane %v1167, 7
  %v1172 = vrot.slane %v1171, 2
  %v1173 = vrot.slane %v1168, 7
  %v1174 = vrot.slane %v1173, 2
  %v1177 = vmax.f32 %v1167, %v1172
  %v1178 = vmax.f32 %v1168, %v1174
  %1181 = vrot.lane.b32.xlu0 %v1177, 112
  %v1182 = vpop.permute.xlu0 %1181
  %1183 = vrot.lane.b32.xlu0 %v1178, 112
  %v1184 = vpop.permute.xlu0 %1183
  %v1187 = vmax.f32 %v1177, %v1182
  %v1188 = vmax.f32 %v1178, %v1184
  %v1189 = vpack.c.bf16 %v1187, %v1187
  %v1190 = vpack.c.bf16 %v1188, %v1188
  %v1191 = vld [vmem:[%s3] sm:$0xf]
  %v1192 = vld [vmem:[%s3 + $0x4] sm:$0xf]
  %v1193 = vld [vmem:[%s4] sm:$0x1]
  %v1195 = vlaneseq
  %v1196 = vshrl.u32 %v1195, 7
  %v1197 = vsub.s32 0, %v1196
  %v1198 = vrot.slane %v1193, %v1197
  %v1202 = vunpack.c.l.b16 %v1189
  %v1203 = vunpack.c.l.b16 %v1190
  %v1204 = vrot.slane %v1203, 7
  %vm1205 = vcmask 1041409
  %v1206 = vsel %vm1205, %v1204, %v1202
  %v1207 = vpack.c.b16 %v1206, %v1206
  %v1210 = vunpack.c.l.b16 %v1191
  %v1211 = vunpack.c.l.b16 %v1192
  %v1212 = vpack.c.b16 %v1211, %v1210
  %vm1214 = vcmask 130048
  %v1216 = vsel %vm1214, %v1207, 0
  %1218 = vmatprep.subr.bf16.mxu0 0
  %1219 = vmatpush1.bf16.msra.mxu0 0
  %1220 = vmatprep.subr.bf16.mxu0 0
  %1221 = vmatpush1.bf16.msra.mxu0 0
  %1222 = vmatprep.subr.bf16.mxu0 0
  %1223 = vmatpush1.bf16.msra.mxu0 0
  %1224 = vmatprep.subr.bf16.mxu0 0
  %1225 = vmatpush1.bf16.msra.mxu0 0
  %1226 = vmatprep.subr.bf16.mxu0 0
  %1227 = vmatpush1.bf16.msra.mxu0 0
  %1228 = vmatprep.subr.bf16.mxu0 0
  %1229 = vmatpush1.bf16.msra.mxu0 0
  %1230 = vmatprep.subr.bf16.mxu0 0
  %1231 = vmatpush1.bf16.msra.mxu0 0
  %1232 = vmatprep.subr.bf16.mxu0 0
  %1233 = vmatpush1.bf16.msra.mxu0 %v1212
  %1234 = vmatprep.subr.bf16.mxu0 0
  %1235 = vmatpush2.bf16.msra.mxu0 0
  %1236 = vmatprep.subr.bf16.mxu0 0
  %1237 = vmatpush2.bf16.msra.mxu0 0
  %1238 = vmatprep.subr.bf16.mxu0 0
  %1239 = vmatpush2.bf16.msra.mxu0 0
  %1240 = vmatprep.subr.bf16.mxu0 0
  %1241 = vmatpush2.bf16.msra.mxu0 0
  %1242 = vmatprep.subr.bf16.mxu0 0
  %1243 = vmatpush2.bf16.msra.mxu0 0
  %1244 = vmatprep.subr.bf16.mxu0 0
  %1245 = vmatpush2.bf16.msra.mxu0 0
  %1246 = vmatprep.subr.bf16.mxu0 0
  %1247 = vmatpush2.bf16.msra.mxu0 0
  %1248 = vmatprep.subr.bf16.mxu0 0
  %1249 = vmatpush2.bf16.msra.mxu0 0
  %1250 = vmatprep.mubr.bf16.mxu0 0
  %1251 = vmatmul.mubr.bf16.gmra.mxu0 %v1216
  %v1252 = vpop.f32.mrf.mxu0
  %v1253 = vadd.f32 %v1198, %v1252
  %v1254 = vpop.f32.mrf.mxu0
  %v1255 = vpop.f32.mrf.mxu0
  %v1256 = vpop.f32.mrf.mxu0
  %1257 = vdwg.mxu0
  %v1258 = vtanh.pop %v1253
  %v1259 = vpack.c.bf16 %v1258, %v1258
  %v1260 = vld [vmem:[%s5] sm:$0xf]
  %v1261 = vld [vmem:[%s5 + $0x4] sm:$0xf]
  %v1262 = vld [vmem:[%s5 + $0x8] sm:$0xf]
  %v1263 = vld [vmem:[%s5 + $0xc] sm:$0xf]
  %v1264 = vld [vmem:[%s5 + $0x10] sm:$0xf]
  %v1265 = vld [vmem:[%s5 + $0x14] sm:$0xf]
  %v1266 = vld [vmem:[%s5 + $0x18] sm:$0xf]
  %v1267 = vld [vmem:[%s5 + $0x1c] sm:$0xf]
  %v1268 = vld [vmem:[%s5 + $0x20] sm:$0xf]
  %v1269 = vld [vmem:[%s5 + $0x24] sm:$0xf]
  %v1270 = vld [vmem:[%s5 + $0x28] sm:$0xf]
  %v1271 = vld [vmem:[%s5 + $0x2c] sm:$0xf]
  %v1272 = vld [vmem:[%s5 + $0x30] sm:$0xf]
  %v1273 = vld [vmem:[%s5 + $0x34] sm:$0xf]
  %v1274 = vld [vmem:[%s5 + $0x38] sm:$0xf]
  %v1275 = vld [vmem:[%s5 + $0x3c] sm:$0xf]
  %v1276 = vld [vmem:[%s6] sm:$0x1]
  %v1278 = vlaneseq
  %v1279 = vshrl.u32 %v1278, 7
  %v1280 = vsub.s32 0, %v1279
  %v1281 = vrot.slane %v1276, %v1280
  %v1299 = vunpack.c.l.b16 %v1260
  %v1300 = vunpack.c.l.b16 %v1261
  %v1301 = vunpack.c.l.b16 %v1262
  %v1302 = vunpack.c.l.b16 %v1263
  %v1303 = vunpack.c.l.b16 %v1264
  %v1304 = vunpack.c.l.b16 %v1265
  %v1305 = vunpack.c.l.b16 %v1266
  %v1306 = vunpack.c.l.b16 %v1267
  %v1307 = vunpack.c.l.b16 %v1268
  %v1308 = vunpack.c.l.b16 %v1269
  %v1309 = vunpack.c.l.b16 %v1270
  %v1310 = vunpack.c.l.b16 %v1271
  %v1311 = vunpack.c.l.b16 %v1272
  %v1312 = vunpack.c.l.b16 %v1273
  %v1313 = vunpack.c.l.b16 %v1274
  %v1314 = vunpack.c.l.b16 %v1275
  %v1315 = vpack.c.b16 %v1300, %v1299
  %v1316 = vpack.c.b16 %v1302, %v1301
  %v1317 = vpack.c.b16 %v1304, %v1303
  %v1318 = vpack.c.b16 %v1306, %v1305
  %v1319 = vpack.c.b16 %v1308, %v1307
  %v1320 = vpack.c.b16 %v1310, %v1309
  %v1321 = vpack.c.b16 %v1312, %v1311
  %v1322 = vpack.c.b16 %v1314, %v1313
  %1331 = vmatprep.subr.bf16.mxu0 0
  %1332 = vmatpush1.bf16.msra.mxu0 %v1322
  %1333 = vmatprep.subr.bf16.mxu0 0
  %1334 = vmatpush1.bf16.msra.mxu0 %v1321
  %1335 = vmatprep.subr.bf16.mxu0 0
  %1336 = vmatpush1.bf16.msra.mxu0 %v1320
  %1337 = vmatprep.subr.bf16.mxu0 0
  %1338 = vmatpush1.bf16.msra.mxu0 %v1319
  %1339 = vmatprep.subr.bf16.mxu0 0
  %1340 = vmatpush1.bf16.msra.mxu0 %v1318
  %1341 = vmatprep.subr.bf16.mxu0 0
  %1342 = vmatpush1.bf16.msra.mxu0 %v1317
  %1343 = vmatprep.subr.bf16.mxu0 0
  %1344 = vmatpush1.bf16.msra.mxu0 %v1316
  %1345 = vmatprep.subr.bf16.mxu0 0
  %1346 = vmatpush1.bf16.msra.mxu0 %v1315
  %1347 = vmatprep.subr.bf16.mxu0 0
  %1348 = vmatpush2.bf16.msra.mxu0 0
  %1349 = vmatprep.subr.bf16.mxu0 0
  %1350 = vmatpush2.bf16.msra.mxu0 0
  %1351 = vmatprep.subr.bf16.mxu0 0
  %1352 = vmatpush2.bf16.msra.mxu0 0
  %1353 = vmatprep.subr.bf16.mxu0 0
  %1354 = vmatpush2.bf16.msra.mxu0 0
  %1355 = vmatprep.subr.bf16.mxu0 0
  %1356 = vmatpush2.bf16.msra.mxu0 0
  %1357 = vmatprep.subr.bf16.mxu0 0
  %1358 = vmatpush2.bf16.msra.mxu0 0
  %1359 = vmatprep.subr.bf16.mxu0 0
  %1360 = vmatpush2.bf16.msra.mxu0 0
  %1361 = vmatprep.subr.bf16.mxu0 0
  %1362 = vmatpush2.bf16.msra.mxu0 0
  %1363 = vmatprep.mubr.bf16.mxu0 0
  %1364 = vmatmul.mubr.bf16.gmra.mxu0 %v1259
  %v1365 = vpop.f32.mrf.mxu0
  %v1366 = vadd.f32 %v1281, %v1365
  %v1367 = vpop.f32.mrf.mxu0
  %v1368 = vpop.f32.mrf.mxu0
  %v1369 = vpop.f32.mrf.mxu0
  %1370 = vdwg.mxu0
  %v1371 = vtanh.pop %v1366
  %v1372 = vpack.c.bf16 %v1371, %v1371
  %v1373 = vld [vmem:[%s7] sm:$0xf]
  %v1374 = vld [vmem:[%s7 + $0x4] sm:$0xf]
  %v1375 = vld [vmem:[%s7 + $0x8] sm:$0xf]
  %v1376 = vld [vmem:[%s7 + $0xc] sm:$0xf]
  %v1377 = vld [vmem:[%s7 + $0x10] sm:$0xf]
  %v1378 = vld [vmem:[%s7 + $0x14] sm:$0xf]
  %v1379 = vld [vmem:[%s7 + $0x18] sm:$0xf]
  %v1380 = vld [vmem:[%s7 + $0x1c] sm:$0xf]
  %v1381 = vld [vmem:[#allocation3] sm:$0x1]
  %v1383 = vlaneseq
  %v1384 = vshrl.u32 %v1383, 7
  %v1385 = vsub.s32 0, %v1384
  %v1386 = vrot.slane %v1381, %v1385
  %v1396 = vunpack.c.l.b16 %v1373
  %v1397 = vunpack.c.l.b16 %v1374
  %v1398 = vunpack.c.l.b16 %v1375
  %v1399 = vunpack.c.l.b16 %v1376
  %v1400 = vunpack.c.l.b16 %v1377
  %v1401 = vunpack.c.l.b16 %v1378
  %v1402 = vunpack.c.l.b16 %v1379
  %v1403 = vunpack.c.l.b16 %v1380
  %v1404 = vpack.c.b16 %v1397, %v1396
  %v1405 = vpack.c.b16 %v1399, %v1398
  %v1406 = vpack.c.b16 %v1401, %v1400
  %v1407 = vpack.c.b16 %v1403, %v1402
  %v1413 = vsel %vm329, %v1372, 0
  %1415 = vmatprep.subr.bf16.mxu0 0
  %1416 = vmatpush1.bf16.msra.mxu0 0
  %1417 = vmatprep.subr.bf16.mxu0 0
  %1418 = vmatpush1.bf16.msra.mxu0 0
  %1419 = vmatprep.subr.bf16.mxu0 0
  %1420 = vmatpush1.bf16.msra.mxu0 0
  %1421 = vmatprep.subr.bf16.mxu0 0
  %1422 = vmatpush1.bf16.msra.mxu0 0
  %1423 = vmatprep.subr.bf16.mxu0 0
  %1424 = vmatpush1.bf16.msra.mxu0 %v1407
  %1425 = vmatprep.subr.bf16.mxu0 0
  %1426 = vmatpush1.bf16.msra.mxu0 %v1406
  %1427 = vmatprep.subr.bf16.mxu0 0
  %1428 = vmatpush1.bf16.msra.mxu0 %v1405
  %1429 = vmatprep.subr.bf16.mxu0 0
  %1430 = vmatpush1.bf16.msra.mxu0 %v1404
  %1431 = vmatprep.subr.bf16.mxu0 0
  %1432 = vmatpush2.bf16.msra.mxu0 0
  %1433 = vmatprep.subr.bf16.mxu0 0
  %1434 = vmatpush2.bf16.msra.mxu0 0
  %1435 = vmatprep.subr.bf16.mxu0 0
  %1436 = vmatpush2.bf16.msra.mxu0 0
  %1437 = vmatprep.subr.bf16.mxu0 0
  %1438 = vmatpush2.bf16.msra.mxu0 0
  %1439 = vmatprep.subr.bf16.mxu0 0
  %1440 = vmatpush2.bf16.msra.mxu0 0
  %1441 = vmatprep.subr.bf16.mxu0 0
  %1442 = vmatpush2.bf16.msra.mxu0 0
  %1443 = vmatprep.subr.bf16.mxu0 0
  %1444 = vmatpush2.bf16.msra.mxu0 0
  %1445 = vmatprep.subr.bf16.mxu0 0
  %1446 = vmatpush2.bf16.msra.mxu0 0
  %1447 = vmatprep.mubr.bf16.mxu0 0
  %1448 = vmatmul.mubr.bf16.gmra.mxu0 %v1413
  %v1449 = vpop.f32.mrf.mxu0
  %v1450 = vadd.f32 %v1386, %v1449
  %v1451 = vpop.f32.mrf.mxu0
  %v1452 = vpop.f32.mrf.mxu0
  %v1453 = vpop.f32.mrf.mxu0
  %1454 = vdwg.mxu0
  %vm1455 = vcmask 1024
  %1456 = vst.msk [vmem:[%s9] sm:$0x3] %vm1455, %v1450
  // Predicated region
  $region38: #{_lambda_.7} parent=0 // pred_check
    _
  $region39: #{_lambda_.7} parent=0 // pred_check_branch
    %1458 = sbr.rel (0) target = $region41
  $region40: #{_lambda_.7} parent=0 // pred_region
    _
  $region41: #{_lambda_.7} parent=0 // pred_fallthru
    _
  // Predicated region
  $region42: #{_lambda_.7} parent=0 // pred_check
    _
  $region43: #{_lambda_.7} parent=0 // pred_check_branch
    %1460 = sbr.rel (0) target = $region45
  $region44: #{_lambda_.7} parent=0 // pred_region
    _
  $region45: #{_lambda_.7} parent=0 // pred_fallthru
    _

// kernel: _lambda_.4
$region0: #{_lambda_.4}
  #allocation0 [shape = 'u32[]', space=smem, size = 0x4, offset = 0x4, fixed_abs, tag = 'smem constant byte address 0x4 - core index']
  #allocation1 [shape = 'u32[144,128]{1,0:T(1,128)}', space=vmem, size = 0x12000, scoped, tag = 'internal scratch']
  #allocation2 [shape = 'bf16[1,20,80]{2,1,0:T(8,128)(2,1)}', space=vmem, size = 0x1800, scoped, tag = 'scratch operand']
  %s0 = inlined_call_operand.vmem [shape: f32[2,16,64], index: 0, kind: input, shape index: {}]
  %s1 = inlined_call_operand.hbm [shape: bf16[5,80,1024], index: 1, kind: input, shape index: {}]
  %s2 = inlined_call_operand.hbm [shape: f32[1,1024], index: 2, kind: input, shape index: {}]
  %s3 = inlined_call_operand.vmem [shape: f32[2,8,512], index: 3, kind: output, shape index: {}]
  %s4 = sld [smem:[#allocation0]]
  $region53: #{_lambda_.4} parent=0
    _
  %s6 = ssub.s32 1, %s4
  %s7 = scalar_select 0, %s6, %s4
  $region1: #{_lambda_.4} parent=0
    #allocation3 [shape = 'u8[819200]{0}', space=vmem, size = 0xc8000, scoped, tag = 'input window, operand 1, single buffered']
    #allocation4 [shape = 's32[2]{0}', space=sflag, size = 0x8, scoped, tag = 'scoped memory for _lambda_.4']
    #allocation5 [shape = 'u8[4096]{0}', space=vmem, size = 0x1000, scoped, tag = 'input window, operand 2, single buffered']
    #allocation6 [shape = 's32[1]{0}', space=sflag, size = 0x4, scoped, tag = 'scoped memory for _lambda_.4']
    %8 = vsyncpa [#allocation4], 0
    %9 = vsyncpa [#allocation6], 0
    loop: start=0, step=1, limit=4
    $region2: #{_lambda_.4} parent=1 // loop_pre_header
      _
    $region3: #{_lambda_.4} parent=1 // loop_header
      %s11 = sphi 0, %s15
      %p12 = scmp.ge.s32.totalorder %s11, 4
      %s21 = sphi 0, %s23
      %s24 = sphi 0, %s21
      %s25 = sphi 0, %s24
      %s41 = sphi 0, %s25
      %s45 = sphi 0, %s45
      %s47 = sphi 0, %s45
      %s48 = sphi 0, %s47
      %s62 = sphi 0, %s48
      %s66 = sphi 0, %s66
      %s68 = sphi 0, %s66
      %s69 = sphi 0, %s68
      %s83 = sphi 0, %s69
      %s89 = sphi 0, %s91
      %s92 = sphi 0, %s89
      %s93 = sphi 0, %s92
      %s109 = sphi 0, %s93
    $region4: #{_lambda_.4} parent=1 // loop_header_branch
      %14 = sbr.rel (%p12) target = $region8
    $region5: #{_lambda_.4} parent=1 // loop_body
      %s16 = ssub.s32 %s11, 1
      %s17 = ssub.s32 %s11, 2
      %s18 = sadd.s32 %s11, 1
      %s19 = ssub.s32 %s11, %s18
      %p20 = scmp.eq.s32.totalorder %s19, 0
      %s22 = sadd.s32 %s21, 1
      %s23 = scalar_select %p20, %s21, %s22
      %p26 = pneg %p20
      %p27 = scmp.eq.s32.totalorder %s11, 1
      %p28 = por %p26, %p27
      %p29 = scmp.ne.s32.totalorder %s21, %s24
      %p30 = scmp.eq.s32.totalorder %s11, 0
      %p31 = por %p29, %p30
      %p32 = scmp.ne.s32.totalorder %s21, %s24
      %p33 = scmp.eq.s32.totalorder %s16, 1
      %p34 = por %p32, %p33
      %p35 = scmp.ne.s32.totalorder %s24, %s25
      %p36 = scmp.eq.s32.totalorder %s16, 0
      %p37 = por %p35, %p36
      %p38 = scmp.ne.s32.totalorder %s24, %s25
      %p39 = scmp.eq.s32.totalorder %s17, 1
      %p40 = por %p38, %p39
      %p42 = scmp.ne.s32.totalorder %s25, %s41
      %p43 = scmp.eq.s32.totalorder %s17, 0
      %p44 = por %p42, %p43
      %s46 = sadd.s32 %s45, 1
      %p49 = scmp.eq.s32.totalorder %s11, 1
      %p50 = scmp.ne.s32.totalorder %s45, %s47
      %p51 = scmp.eq.s32.totalorder %s11, 0
      %p52 = por %p50, %p51
      %p53 = scmp.ne.s32.totalorder %s45, %s47
      %p54 = scmp.eq.s32.totalorder %s16, 1
      %p55 = por %p53, %p54
      %p56 = scmp.ne.s32.totalorder %s47, %s48
      %p57 = scmp.eq.s32.totalorder %s16, 0
      %p58 = por %p56, %p57
      %p59 = scmp.ne.s32.totalorder %s47, %s48
      %p60 = scmp.eq.s32.totalorder %s17, 1
      %p61 = por %p59, %p60
      %p63 = scmp.ne.s32.totalorder %s48, %s62
      %p64 = scmp.eq.s32.totalorder %s17, 0
      %p65 = por %p63, %p64
      %s67 = sadd.s32 %s66, 1
      %p70 = scmp.eq.s32.totalorder %s11, 1
      %p71 = scmp.ne.s32.totalorder %s66, %s68
      %p72 = scmp.eq.s32.totalorder %s11, 0
      %p73 = por %p71, %p72
      %p74 = scmp.ne.s32.totalorder %s66, %s68
      %p75 = scmp.eq.s32.totalorder %s16, 1
      %p76 = por %p74, %p75
      %p77 = scmp.ne.s32.totalorder %s68, %s69
      %p78 = scmp.eq.s32.totalorder %s16, 0
      %p79 = por %p77, %p78
      %p80 = scmp.ne.s32.totalorder %s68, %s69
      %p81 = scmp.eq.s32.totalorder %s17, 1
      %p82 = por %p80, %p81
      %p84 = scmp.ne.s32.totalorder %s69, %s83
      %p85 = scmp.eq.s32.totalorder %s17, 0
      %p86 = por %p84, %p85
      %s87 = ssub.s32 %s11, %s18
      %p88 = scmp.eq.s32.totalorder %s87, 0
      %s90 = sadd.s32 %s89, 1
      %s91 = scalar_select %p88, %s89, %s90
      %p94 = pneg %p88
      %p95 = scmp.eq.s32.totalorder %s11, 1
      %p96 = por %p94, %p95
      %p97 = scmp.ne.s32.totalorder %s89, %s92
      %p98 = scmp.eq.s32.totalorder %s11, 0
      %p99 = por %p97, %p98
      %p100 = scmp.ne.s32.totalorder %s89, %s92
      %p101 = scmp.eq.s32.totalorder %s16, 1
      %p102 = por %p100, %p101
      %p103 = scmp.ne.s32.totalorder %s92, %s93
      %p104 = scmp.eq.s32.totalorder %s16, 0
      %p105 = por %p103, %p104
      %p106 = scmp.ne.s32.totalorder %s92, %s93
      %p107 = scmp.eq.s32.totalorder %s17, 1
      %p108 = por %p106, %p107
      %p110 = scmp.ne.s32.totalorder %s93, %s109
      %p111 = scmp.eq.s32.totalorder %s17, 0
      %p112 = por %p110, %p111
      %p113 = scmp.le.s32.totalorder 1, %s11
      %p114 = scmp.lt.s32.totalorder %s11, 3
      %p115 = pnand %p113, %p114
      %p116 = pneg %p115
      // Predicated region
      $region9: #{_lambda_.4} parent=5 // pred_check
        _
      $region10: #{_lambda_.4} parent=5 // pred_check_branch
        %118 = sbr.rel (%p115) target = $region12
      $region11: #{_lambda_.4} parent=5 // pred_region
        %s119 = ssub.s32 %s11, 1
        // Predicated region
        $region13: #{_lambda_.4} parent=11 // pred_check
          %p120 = pneg %p58
        $region14: #{_lambda_.4} parent=11 // pred_check_branch
          %122 = sbr.rel (%p120) target = $region16
        $region15: #{_lambda_.4} parent=11 // pred_region
          %s124 = ssub.s32 25600, 25600
          %125 = vsyncadd [#allocation4], %s124
          %s126 = sshll.u32 [#allocation3], 4
          %s127 = int_to_ptr.vmem [resolvable:$true] %s126
          %132 = dma.hbm_to_vmem [thread:$0]  %s1, 25600, %s127, [#allocation4], 512, 512, 32
        $region16: #{_lambda_.4} parent=11 // pred_fallthru
          _
        // Predicated region
        $region17: #{_lambda_.4} parent=11 // pred_check
          %p133 = pneg %p79
        $region18: #{_lambda_.4} parent=11 // pred_check_branch
          %135 = sbr.rel (%p133) target = $region20
        $region19: #{_lambda_.4} parent=11 // pred_region
          %s137 = ssub.s32 128, 128
          %138 = vsyncadd [#allocation6], %s137
          %s140 = sshll.u32 [#allocation5], 4
          %s141 = int_to_ptr.vmem [resolvable:$true] %s140
          %143 = dma.hbm_to_vmem [thread:$0]  %s2, 128, %s141, [#allocation6]
        $region20: #{_lambda_.4} parent=11 // pred_fallthru
          _
      $region12: #{_lambda_.4} parent=5 // pred_fallthru
        _
      %p144 = scmp.lt.s32.totalorder %s11, 2
      // Predicated region
      $region21: #{_lambda_.4} parent=5 // pred_check
        %p145 = pneg %p144
      $region22: #{_lambda_.4} parent=5 // pred_check_branch
        %147 = sbr.rel (%p145) target = $region24
      $region23: #{_lambda_.4} parent=5 // pred_region
        // Predicated region
        $region25: #{_lambda_.4} parent=23 // pred_check
          %p148 = pneg %p31
        $region26: #{_lambda_.4} parent=23 // pred_check_branch
          %150 = sbr.rel (%p148) target = $region28
        $region27: #{_lambda_.4} parent=23 // pred_region
          %p151 = scmp.lt.s32.totalorder %s11, 1
          %s152 = scalar_select %p151, %s11, 1
          %s153 = smul.addr %s152, 2
          %s154 = smul.addr %s153, 8
          %s155 = scalar_lea.vmem %s0, %s154
        $region28: #{_lambda_.4} parent=23 // pred_fallthru
          _
      $region24: #{_lambda_.4} parent=5 // pred_fallthru
        _
      %p156 = scmp.le.s32.totalorder 1, %s11
      %p157 = scmp.lt.s32.totalorder %s11, 3
      %p158 = pnand %p156, %p157
      %p159 = pneg %p158
      // Predicated region
      $region29: #{_lambda_.4} parent=5 // pred_check
        _
      $region30: #{_lambda_.4} parent=5 // pred_check_branch
        %161 = sbr.rel (%p158) target = $region32
      $region31: #{_lambda_.4} parent=5 // pred_region
        %s162 = ssub.s32 %s11, 1
        // Predicated region
        $region33: #{_lambda_.4} parent=31 // pred_check
          %p163 = pneg %p58
        $region34: #{_lambda_.4} parent=31 // pred_check_branch
          %165 = sbr.rel (%p163) target = $region36
        $region35: #{_lambda_.4} parent=31 // pred_region
          %166 = dma.done [#allocation4], 25600
        $region36: #{_lambda_.4} parent=31 // pred_fallthru
          _
        // Predicated region
        $region37: #{_lambda_.4} parent=31 // pred_check
          %p167 = pneg %p79
        $region38: #{_lambda_.4} parent=31 // pred_check_branch
          %169 = sbr.rel (%p167) target = $region40
        $region39: #{_lambda_.4} parent=31 // pred_region
          %170 = dma.done [#allocation6], 128
        $region40: #{_lambda_.4} parent=31 // pred_fallthru
          _
        %p171 = scmp.lt.s32.totalorder %s16, 1
        %s172 = scalar_select %p171, %s16, 1
        %s173 = smul.addr %s172, 2
        %s174 = smul.addr %s173, 8
        %s175 = scalar_lea.vmem %s0, %s174
        %p176 = pneg %p37
        %p177 = pneg %p34
        %p178 = pneg %p58
        %p179 = pneg %p55
        %p180 = pneg %p79
        %p181 = pneg %p76
        %p182 = pneg %p105
        %p183 = pneg %p102
        %p184 = scmp.lt.s32.totalorder %s16, 1
        %s185 = scalar_select %p184, %s16, 1
        %s186 = smul.addr %s185, 4
        %s187 = smul.addr %s186, 8
        %s188 = scalar_lea.vmem %s3, %s187
        %p189 = scmp.lt.s32.totalorder %s16, 1
        %s190 = scalar_select %p189, %s16, 1
        %s191 = smul.addr %s190, 2
        %s192 = smul.addr %s191, 8
        %s193 = scalar_lea.vmem %s0, %s192
        %p194 = scmp.lt.s32.totalorder %s16, 1
        %s195 = scalar_select %p194, %s16, 1
        %s196 = smul.addr %s195, 4
        %s197 = smul.addr %s196, 8
        %s198 = scalar_lea.vmem %s3, %s197
        %vm200 = vcmask 647168
        %201 = vst.msk [vmem:[#allocation2] sm:$0x1] %vm200, 0
        %vm202 = vcmask 648193
        %203 = vst.msk [vmem:[#allocation2 + $0x8] sm:$0x2] %vm202, 0
        %vm204 = vcmask 60416
        %205 = vst.msk [vmem:[#allocation2] sm:$0xf] %vm204, 0
        %206 = vst.msk [vmem:[#allocation2 + $0x4] sm:$0xf] %vm204, 0
        %vm207 = vcmask 58368
        %208 = vst.msk [vmem:[#allocation2 + $0x8] sm:$0x3] %vm207, 0
        %vm209 = vcmask 650816
        %210 = vst.msk [vmem:[#allocation2] sm:$0xf] %vm209, 0
        %211 = vst.msk [vmem:[#allocation2 + $0x4] sm:$0xf] %vm209, 0
        %vm212 = vcmask 648768
        %213 = vst.msk [vmem:[#allocation2 + $0x8] sm:$0x3] %vm212, 0
        %v214 = vld [vmem:[%s193] sm:$0xff]
        %v215 = vld [vmem:[%s193 + $0x8] sm:$0xff]
        %v216 = vpack.c.bf16 %v215, %v214
        %v218 = vunpack.c.l.b16 %v216
        %v219 = vunpack.c.h.b16 %v216
        %v220 = vpack.c.b16 %v218, %v218
        %v221 = vpack.c.b16 %v219, %v219
        %vm222 = vcmask 1040384
        %vm223 = vcmask 1044484
        %vm224 = vmor %vm222, %vm223
        %v225 = vrot.slane %v220, 7
        %v226 = vrot.slane %v225, 4
        %v227 = vrot.slane %v221, 7
        %v228 = vsel %vm224, %v226, %v227
        %v229 = vrot.slane %v227, 4
        %230 = vrot.lane.b32.xlu0 %v225, 8
        %v231 = vpop.permute.xlu0 %230
        %232 = vrot.lane.b32.xlu0 %v228, 8
        %v233 = vpop.permute.xlu0 %232
        %234 = vrot.lane.b32.xlu0 %v229, 8
        %v235 = vpop.permute.xlu0 %234
        %vm239 = vcmask 584769
        %240 = vst.msk [vmem:[#allocation2] sm:$0xe] %vm239, %v231
        %vm241 = vcmask 584768
        %242 = vst.msk [vmem:[#allocation2 + $0x4] sm:$0xf] %vm241, %v233
        %vm243 = vcmask 581696
        %244 = vst.msk [vmem:[#allocation2 + $0x8] sm:$0x1] %vm243, %v235
        %v245 = vld [vmem:[#allocation2] sm:$0xf]
        %v246 = vld [vmem:[#allocation2 + $0x4] sm:$0xf]
        %v247 = vld [vmem:[#allocation3] sm:$0xff]
        %v248 = vld [vmem:[#allocation3 + $0x8] sm:$0xff]
        %v249 = vld [vmem:[#allocation3 + $0x10] sm:$0xff]
        %v250 = vld [vmem:[#allocation3 + $0x18] sm:$0xff]
        %v251 = vld [vmem:[#allocation3 + $0x20] sm:$0xff]
        %v252 = vld [vmem:[#allocation3 + $0x28] sm:$0xff]
        %v253 = vld [vmem:[#allocation3 + $0x30] sm:$0xff]
        %v254 = vld [vmem:[#allocation3 + $0x38] sm:$0xff]
        %v255 = vld [vmem:[#allocation3 + $0x40] sm:$0xff]
        %v256 = vld [vmem:[#allocation3 + $0x48] sm:$0xff]
        %v257 = vld [vmem:[#allocation3 + $0x50] sm:$0xff]
        %v258 = vld [vmem:[#allocation3 + $0x58] sm:$0xff]
        %v259 = vld [vmem:[#allocation3 + $0x60] sm:$0xff]
        %v260 = vld [vmem:[#allocation3 + $0x68] sm:$0xff]
        %v261 = vld [vmem:[#allocation3 + $0x70] sm:$0xff]
        %v262 = vld [vmem:[#allocation3 + $0x78] sm:$0xff]
        %v263 = vld [vmem:[#allocation3 + $0x80] sm:$0xff]
        %v264 = vld [vmem:[#allocation3 + $0x88] sm:$0xff]
        %v265 = vld [vmem:[#allocation3 + $0x90] sm:$0xff]
        %v266 = vld [vmem:[#allocation3 + $0x98] sm:$0xff]
        %v267 = vld [vmem:[#allocation3 + $0xa0] sm:$0xff]
        %v268 = vld [vmem:[#allocation3 + $0xa8] sm:$0xff]
        %v269 = vld [vmem:[#allocation3 + $0xb0] sm:$0xff]
        %v270 = vld [vmem:[#allocation3 + $0xb8] sm:$0xff]
        %v271 = vld [vmem:[#allocation3 + $0xc0] sm:$0xff]
        %v272 = vld [vmem:[#allocation3 + $0xc8] sm:$0xff]
        %v273 = vld [vmem:[#allocation3 + $0xd0] sm:$0xff]
        %v274 = vld [vmem:[#allocation3 + $0xd8] sm:$0xff]
        %v275 = vld [vmem:[#allocation3 + $0xe0] sm:$0xff]
        %v276 = vld [vmem:[#allocation3 + $0xe8] sm:$0xff]
        %v277 = vld [vmem:[#allocation3 + $0xf0] sm:$0xff]
        %v278 = vld [vmem:[#allocation3 + $0xf8] sm:$0xff]
        %v279 = vld [vmem:[#allocation3 + $0x100] sm:$0xff]
        %v280 = vld [vmem:[#allocation3 + $0x108] sm:$0xff]
        %v281 = vld [vmem:[#allocation3 + $0x110] sm:$0xff]
        %v282 = vld [vmem:[#allocation3 + $0x118] sm:$0xff]
        %v283 = vld [vmem:[#allocation3 + $0x120] sm:$0xff]
        %v284 = vld [vmem:[#allocation3 + $0x128] sm:$0xff]
        %v285 = vld [vmem:[#allocation3 + $0x130] sm:$0xff]
        %v286 = vld [vmem:[#allocation3 + $0x138] sm:$0xff]
        %v287 = vld [vmem:[#allocation2 + $0x8] sm:$0x1]
        %s288 = scalar_lea.vmem [#allocation3], 320
        %v289 = vld [vmem:[%s288] sm:$0xff]
        %v290 = vld [vmem:[%s288 + $0x8] sm:$0xff]
        %v291 = vld [vmem:[%s288 + $0x10] sm:$0xff]
        %v292 = vld [vmem:[%s288 + $0x18] sm:$0xff]
        %v293 = vld [vmem:[%s288 + $0x20] sm:$0xff]
        %v294 = vld [vmem:[%s288 + $0x28] sm:$0xff]
        %v295 = vld [vmem:[%s288 + $0x30] sm:$0xff]
        %v296 = vld [vmem:[%s288 + $0x38] sm:$0xff]
        %v297 = vld [vmem:[%s288 + $0x40] sm:$0xff]
        %v298 = vld [vmem:[%s288 + $0x48] sm:$0xff]
        %v299 = vld [vmem:[%s288 + $0x50] sm:$0xff]
        %v300 = vld [vmem:[%s288 + $0x58] sm:$0xff]
        %v301 = vld [vmem:[%s288 + $0x60] sm:$0xff]
        %v302 = vld [vmem:[%s288 + $0x68] sm:$0xff]
        %v303 = vld [vmem:[%s288 + $0x70] sm:$0xff]
        %v304 = vld [vmem:[%s288 + $0x78] sm:$0xff]
        %v305 = vld [vmem:[%s288 + $0x80] sm:$0xff]
        %v306 = vld [vmem:[%s288 + $0x88] sm:$0xff]
        %v307 = vld [vmem:[%s288 + $0x90] sm:$0xff]
        %v308 = vld [vmem:[%s288 + $0x98] sm:$0xff]
        %v309 = vld [vmem:[%s288 + $0xa0] sm:$0xff]
        %v310 = vld [vmem:[%s288 + $0xa8] sm:$0xff]
        %v311 = vld [vmem:[%s288 + $0xb0] sm:$0xff]
        %v312 = vld [vmem:[%s288 + $0xb8] sm:$0xff]
        %v313 = vld [vmem:[%s288 + $0xc0] sm:$0xff]
        %v314 = vld [vmem:[%s288 + $0xc8] sm:$0xff]
        %v315 = vld [vmem:[%s288 + $0xd0] sm:$0xff]
        %v316 = vld [vmem:[%s288 + $0xd8] sm:$0xff]
        %v317 = vld [vmem:[%s288 + $0xe0] sm:$0xff]
        %v318 = vld [vmem:[%s288 + $0xe8] sm:$0xff]
        %v319 = vld [vmem:[%s288 + $0xf0] sm:$0xff]
        %v320 = vld [vmem:[%s288 + $0xf8] sm:$0xff]
        %v321 = vld [vmem:[%s288 + $0x100] sm:$0xff]
        %v322 = vld [vmem:[%s288 + $0x108] sm:$0xff]
        %v323 = vld [vmem:[%s288 + $0x110] sm:$0xff]
        %v324 = vld [vmem:[%s288 + $0x118] sm:$0xff]
        %v325 = vld [vmem:[%s288 + $0x120] sm:$0xff]
        %v326 = vld [vmem:[%s288 + $0x128] sm:$0xff]
        %v327 = vld [vmem:[%s288 + $0x130] sm:$0xff]
        %v328 = vld [vmem:[%s288 + $0x138] sm:$0xff]
        %v332 = vunpack.c.l.b16 %v245
        %v333 = vunpack.c.l.b16 %v246
        %v334 = vunpack.c.l.b16 %v287
        %v335 = vpack.c.b16 %v333, %v332
        %v336 = vpack.c.b16 %v334, %v334
        %vm337 = vsmask.f32 7424
        %v339 = vshrl.u32 %v335, 16
        %v341 = vshll.u32 %v335, 16
        %v343 = vrot.slane %v341, 1
        %v344 = vor.u32 %v339, %v343
        %v346 = vshll.u32 %v336, 16
        %v348 = vrot.slane %v346, 1
        %v349 = vsel %vm337, %v344, %v348
        %v390 = vunpack.c.l.b16 %v289
        %v391 = vunpack.c.h.b16 %v289
        %v392 = vunpack.c.l.b16 %v290
        %v393 = vunpack.c.h.b16 %v290
        %v394 = vunpack.c.l.b16 %v291
        %v395 = vunpack.c.h.b16 %v291
        %v396 = vunpack.c.l.b16 %v292
        %v397 = vunpack.c.h.b16 %v292
        %v398 = vunpack.c.l.b16 %v293
        %v399 = vunpack.c.h.b16 %v293
        %v400 = vunpack.c.l.b16 %v294
        %v401 = vunpack.c.h.b16 %v294
        %v402 = vunpack.c.l.b16 %v295
        %v403 = vunpack.c.h.b16 %v295
        %v404 = vunpack.c.l.b16 %v296
        %v405 = vunpack.c.h.b16 %v296
        %v406 = vunpack.c.l.b16 %v297
        %v407 = vunpack.c.h.b16 %v297
        %v408 = vunpack.c.l.b16 %v298
        %v409 = vunpack.c.h.b16 %v298
        %v410 = vunpack.c.l.b16 %v299
        %v411 = vunpack.c.h.b16 %v299
        %v412 = vunpack.c.l.b16 %v300
        %v413 = vunpack.c.h.b16 %v300
        %v414 = vunpack.c.l.b16 %v301
        %v415 = vunpack.c.h.b16 %v301
        %v416 = vunpack.c.l.b16 %v302
        %v417 = vunpack.c.h.b16 %v302
        %v418 = vunpack.c.l.b16 %v303
        %v419 = vunpack.c.h.b16 %v303
        %v420 = vunpack.c.l.b16 %v304
        %v421 = vunpack.c.h.b16 %v304
        %v422 = vunpack.c.l.b16 %v305
        %v423 = vunpack.c.h.b16 %v305
        %v424 = vunpack.c.l.b16 %v306
        %v425 = vunpack.c.h.b16 %v306
        %v426 = vunpack.c.l.b16 %v307
        %v427 = vunpack.c.h.b16 %v307
        %v428 = vunpack.c.l.b16 %v308
        %v429 = vunpack.c.h.b16 %v308
        %v430 = vunpack.c.l.b16 %v309
        %v431 = vunpack.c.h.b16 %v309
        %v432 = vunpack.c.l.b16 %v310
        %v433 = vunpack.c.h.b16 %v310
        %v434 = vunpack.c.l.b16 %v311
        %v435 = vunpack.c.h.b16 %v311
        %v436 = vunpack.c.l.b16 %v312
        %v437 = vunpack.c.h.b16 %v312
        %v438 = vunpack.c.l.b16 %v313
        %v439 = vunpack.c.h.b16 %v313
        %v440 = vunpack.c.l.b16 %v314
        %v441 = vunpack.c.h.b16 %v314
        %v442 = vunpack.c.l.b16 %v315
        %v443 = vunpack.c.h.b16 %v315
        %v444 = vunpack.c.l.b16 %v316
        %v445 = vunpack.c.h.b16 %v316
        %v446 = vunpack.c.l.b16 %v317
        %v447 = vunpack.c.h.b16 %v317
        %v448 = vunpack.c.l.b16 %v318
        %v449 = vunpack.c.h.b16 %v318
        %v450 = vunpack.c.l.b16 %v319
        %v451 = vunpack.c.h.b16 %v319
        %v452 = vunpack.c.l.b16 %v320
        %v453 = vunpack.c.h.b16 %v320
        %v454 = vunpack.c.l.b16 %v321
        %v455 = vunpack.c.h.b16 %v321
        %v456 = vunpack.c.l.b16 %v322
        %v457 = vunpack.c.h.b16 %v322
        %v458 = vunpack.c.l.b16 %v323
        %v459 = vunpack.c.h.b16 %v323
        %v460 = vunpack.c.l.b16 %v324
        %v461 = vunpack.c.h.b16 %v324
        %v462 = vunpack.c.l.b16 %v325
        %v463 = vunpack.c.h.b16 %v325
        %v464 = vunpack.c.l.b16 %v326
        %v465 = vunpack.c.h.b16 %v326
        %v466 = vunpack.c.l.b16 %v327
        %v467 = vunpack.c.h.b16 %v327
        %v468 = vunpack.c.l.b16 %v328
        %v469 = vunpack.c.h.b16 %v328
        %v470 = vpack.c.b16 %v398, %v390
        %v471 = vpack.c.b16 %v399, %v391
        %v472 = vpack.c.b16 %v400, %v392
        %v473 = vpack.c.b16 %v401, %v393
        %v474 = vpack.c.b16 %v402, %v394
        %v475 = vpack.c.b16 %v403, %v395
        %v476 = vpack.c.b16 %v404, %v396
        %v477 = vpack.c.b16 %v405, %v397
        %v478 = vpack.c.b16 %v414, %v406
        %v479 = vpack.c.b16 %v415, %v407
        %v480 = vpack.c.b16 %v416, %v408
        %v481 = vpack.c.b16 %v417, %v409
        %v482 = vpack.c.b16 %v418, %v410
        %v483 = vpack.c.b16 %v419, %v411
        %v484 = vpack.c.b16 %v420, %v412
        %v485 = vpack.c.b16 %v421, %v413
        %v486 = vpack.c.b16 %v430, %v422
        %v487 = vpack.c.b16 %v431, %v423
        %v488 = vpack.c.b16 %v432, %v424
        %v489 = vpack.c.b16 %v433, %v425
        %v490 = vpack.c.b16 %v434, %v426
        %v491 = vpack.c.b16 %v435, %v427
        %v492 = vpack.c.b16 %v436, %v428
        %v493 = vpack.c.b16 %v437, %v429
        %v494 = vpack.c.b16 %v446, %v438
        %v495 = vpack.c.b16 %v447, %v439
        %v496 = vpack.c.b16 %v448, %v440
        %v497 = vpack.c.b16 %v449, %v441
        %v498 = vpack.c.b16 %v450, %v442
        %v499 = vpack.c.b16 %v451, %v443
        %v500 = vpack.c.b16 %v452, %v444
        %v501 = vpack.c.b16 %v453, %v445
        %v502 = vpack.c.b16 %v462, %v454
        %v503 = vpack.c.b16 %v463, %v455
        %v504 = vpack.c.b16 %v464, %v456
        %v505 = vpack.c.b16 %v465, %v457
        %v506 = vpack.c.b16 %v466, %v458
        %v507 = vpack.c.b16 %v467, %v459
        %v508 = vpack.c.b16 %v468, %v460
        %v509 = vpack.c.b16 %v469, %v461
        %vm550 = vcmask 654336
        %v552 = vsel %vm550, %v349, 0
        %554 = vmatprep.subr.bf16.mxu0 0
        %555 = vmatpush1.bf16.msra.mxu0 0
        %556 = vmatprep.subr.bf16.mxu0 0
        %557 = vmatpush1.bf16.msra.mxu0 0
        %558 = vmatprep.subr.bf16.mxu0 0
        %559 = vmatpush1.bf16.msra.mxu0 0
        %560 = vmatprep.subr.bf16.mxu0 %v503
        %561 = vmatpush1.bf16.msra.mxu0 %v502
        %562 = vmatprep.subr.bf16.mxu0 %v495
        %563 = vmatpush1.bf16.msra.mxu0 %v494
        %564 = vmatprep.subr.bf16.mxu0 %v487
        %565 = vmatpush1.bf16.msra.mxu0 %v486
        %566 = vmatprep.subr.bf16.mxu0 %v479
        %567 = vmatpush1.bf16.msra.mxu0 %v478
        %568 = vmatprep.subr.bf16.mxu0 %v471
        %569 = vmatpush1.bf16.msra.mxu0 %v470
        %570 = vmatprep.subr.bf16.mxu0 0
        %571 = vmatpush2.bf16.msra.mxu0 0
        %572 = vmatprep.subr.bf16.mxu0 0
        %573 = vmatpush2.bf16.msra.mxu0 0
        %574 = vmatprep.subr.bf16.mxu0 0
        %575 = vmatpush2.bf16.msra.mxu0 0
        %576 = vmatprep.subr.bf16.mxu0 0
        %577 = vmatpush2.bf16.msra.mxu0 0
        %578 = vmatprep.subr.bf16.mxu0 0
        %579 = vmatpush2.bf16.msra.mxu0 0
        %580 = vmatprep.subr.bf16.mxu0 0
        %581 = vmatpush2.bf16.msra.mxu0 0
        %582 = vmatprep.subr.bf16.mxu0 0
        %583 = vmatpush2.bf16.msra.mxu0 0
        %584 = vmatprep.subr.bf16.mxu0 0
        %585 = vmatpush2.bf16.msra.mxu0 0
        %586 = vmatprep.mubr.bf16.mxu0 0
        %587 = vmatmul.mubr.bf16.gmra.mxu0 %v552
        %v588 = vpop.f32.mrf.mxu0
        %v589 = vadd.f32 0.0, %v588
        %v590 = vpop.f32.mrf.mxu0
        %v591 = vadd.f32 0.0, %v590
        %v592 = vpop.f32.mrf.mxu0
        %v593 = vadd.f32 0.0, %v592
        %v594 = vpop.f32.mrf.mxu0
        %v595 = vadd.f32 0.0, %v594
        %596 = vdwg.mxu0
        %597 = vmatprep.subr.bf16.mxu0 0
        %598 = vmatpush1.bf16.msra.mxu0 0
        %599 = vmatprep.subr.bf16.mxu0 0
        %600 = vmatpush1.bf16.msra.mxu0 0
        %601 = vmatprep.subr.bf16.mxu0 0
        %602 = vmatpush1.bf16.msra.mxu0 0
        %603 = vmatprep.subr.bf16.mxu0 %v505
        %604 = vmatpush1.bf16.msra.mxu0 %v504
        %605 = vmatprep.subr.bf16.mxu0 %v497
        %606 = vmatpush1.bf16.msra.mxu0 %v496
        %607 = vmatprep.subr.bf16.mxu0 %v489
        %608 = vmatpush1.bf16.msra.mxu0 %v488
        %609 = vmatprep.subr.bf16.mxu0 %v481
        %610 = vmatpush1.bf16.msra.mxu0 %v480
        %611 = vmatprep.subr.bf16.mxu0 %v473
        %612 = vmatpush1.bf16.msra.mxu0 %v472
        %613 = vmatprep.subr.bf16.mxu0 0
        %614 = vmatpush2.bf16.msra.mxu0 0
        %615 = vmatprep.subr.bf16.mxu0 0
        %616 = vmatpush2.bf16.msra.mxu0 0
        %617 = vmatprep.subr.bf16.mxu0 0
        %618 = vmatpush2.bf16.msra.mxu0 0
        %619 = vmatprep.subr.bf16.mxu0 0
        %620 = vmatpush2.bf16.msra.mxu0 0
        %621 = vmatprep.subr.bf16.mxu0 0
        %622 = vmatpush2.bf16.msra.mxu0 0
        %623 = vmatprep.subr.bf16.mxu0 0
        %624 = vmatpush2.bf16.msra.mxu0 0
        %625 = vmatprep.subr.bf16.mxu0 0
        %626 = vmatpush2.bf16.msra.mxu0 0
        %627 = vmatprep.subr.bf16.mxu0 0
        %628 = vmatpush2.bf16.msra.mxu0 0
        %629 = vmatprep.mubr.bf16.mxu0 0
        %630 = vmatmul.mubr.bf16.gmra.mxu0 %v552
        %v631 = vpop.f32.mrf.mxu0
        %v632 = vadd.f32 0.0, %v631
        %v633 = vpop.f32.mrf.mxu0
        %v634 = vadd.f32 0.0, %v633
        %v635 = vpop.f32.mrf.mxu0
        %v636 = vadd.f32 0.0, %v635
        %v637 = vpop.f32.mrf.mxu0
        %v638 = vadd.f32 0.0, %v637
        %639 = vdwg.mxu0
        %640 = vmatprep.subr.bf16.mxu0 0
        %641 = vmatpush1.bf16.msra.mxu0 0
        %642 = vmatprep.subr.bf16.mxu0 0
        %643 = vmatpush1.bf16.msra.mxu0 0
        %644 = vmatprep.subr.bf16.mxu0 0
        %645 = vmatpush1.bf16.msra.mxu0 0
        %646 = vmatprep.subr.bf16.mxu0 %v507
        %647 = vmatpush1.bf16.msra.mxu0 %v506
        %648 = vmatprep.subr.bf16.mxu0 %v499
        %649 = vmatpush1.bf16.msra.mxu0 %v498
        %650 = vmatprep.subr.bf16.mxu0 %v491
        %651 = vmatpush1.bf16.msra.mxu0 %v490
        %652 = vmatprep.subr.bf16.mxu0 %v483
        %653 = vmatpush1.bf16.msra.mxu0 %v482
        %654 = vmatprep.subr.bf16.mxu0 %v475
        %655 = vmatpush1.bf16.msra.mxu0 %v474
        %656 = vmatprep.subr.bf16.mxu0 0
        %657 = vmatpush2.bf16.msra.mxu0 0
        %658 = vmatprep.subr.bf16.mxu0 0
        %659 = vmatpush2.bf16.msra.mxu0 0
        %660 = vmatprep.subr.bf16.mxu0 0
        %661 = vmatpush2.bf16.msra.mxu0 0
        %662 = vmatprep.subr.bf16.mxu0 0
        %663 = vmatpush2.bf16.msra.mxu0 0
        %664 = vmatprep.subr.bf16.mxu0 0
        %665 = vmatpush2.bf16.msra.mxu0 0
        %666 = vmatprep.subr.bf16.mxu0 0
        %667 = vmatpush2.bf16.msra.mxu0 0
        %668 = vmatprep.subr.bf16.mxu0 0
        %669 = vmatpush2.bf16.msra.mxu0 0
        %670 = vmatprep.subr.bf16.mxu0 0
        %671 = vmatpush2.bf16.msra.mxu0 0
        %672 = vmatprep.mubr.bf16.mxu0 0
        %673 = vmatmul.mubr.bf16.gmra.mxu0 %v552
        %v674 = vpop.f32.mrf.mxu0
        %v675 = vadd.f32 0.0, %v674
        %v676 = vpop.f32.mrf.mxu0
        %v677 = vadd.f32 0.0, %v676
        %v678 = vpop.f32.mrf.mxu0
        %v679 = vadd.f32 0.0, %v678
        %v680 = vpop.f32.mrf.mxu0
        %v681 = vadd.f32 0.0, %v680
        %682 = vdwg.mxu0
        %683 = vmatprep.subr.bf16.mxu0 0
        %684 = vmatpush1.bf16.msra.mxu0 0
        %685 = vmatprep.subr.bf16.mxu0 0
        %686 = vmatpush1.bf16.msra.mxu0 0
        %687 = vmatprep.subr.bf16.mxu0 0
        %688 = vmatpush1.bf16.msra.mxu0 0
        %689 = vmatprep.subr.bf16.mxu0 %v509
        %690 = vmatpush1.bf16.msra.mxu0 %v508
        %691 = vmatprep.subr.bf16.mxu0 %v501
        %692 = vmatpush1.bf16.msra.mxu0 %v500
        %693 = vmatprep.subr.bf16.mxu0 %v493
        %694 = vmatpush1.bf16.msra.mxu0 %v492
        %695 = vmatprep.subr.bf16.mxu0 %v485
        %696 = vmatpush1.bf16.msra.mxu0 %v484
        %697 = vmatprep.subr.bf16.mxu0 %v477
        %698 = vmatpush1.bf16.msra.mxu0 %v476
        %699 = vmatprep.subr.bf16.mxu0 0
        %700 = vmatpush2.bf16.msra.mxu0 0
        %701 = vmatprep.subr.bf16.mxu0 0
        %702 = vmatpush2.bf16.msra.mxu0 0
        %703 = vmatprep.subr.bf16.mxu0 0
        %704 = vmatpush2.bf16.msra.mxu0 0
        %705 = vmatprep.subr.bf16.mxu0 0
        %706 = vmatpush2.bf16.msra.mxu0 0
        %707 = vmatprep.subr.bf16.mxu0 0
        %708 = vmatpush2.bf16.msra.mxu0 0
        %709 = vmatprep.subr.bf16.mxu0 0
        %710 = vmatpush2.bf16.msra.mxu0 0
        %711 = vmatprep.subr.bf16.mxu0 0
        %712 = vmatpush2.bf16.msra.mxu0 0
        %713 = vmatprep.subr.bf16.mxu0 0
        %714 = vmatpush2.bf16.msra.mxu0 0
        %715 = vmatprep.mubr.bf16.mxu0 0
        %716 = vmatmul.mubr.bf16.gmra.mxu0 %v552
        %v717 = vpop.f32.mrf.mxu0
        %v718 = vadd.f32 0.0, %v717
        %v719 = vpop.f32.mrf.mxu0
        %v720 = vadd.f32 0.0, %v719
        %v721 = vpop.f32.mrf.mxu0
        %v722 = vadd.f32 0.0, %v721
        %v723 = vpop.f32.mrf.mxu0
        %v724 = vadd.f32 0.0, %v723
        %725 = vdwg.mxu0
        %v766 = vunpack.c.l.b16 %v247
        %v767 = vunpack.c.h.b16 %v247
        %v768 = vunpack.c.l.b16 %v248
        %v769 = vunpack.c.h.b16 %v248
        %v770 = vunpack.c.l.b16 %v249
        %v771 = vunpack.c.h.b16 %v249
        %v772 = vunpack.c.l.b16 %v250
        %v773 = vunpack.c.h.b16 %v250
        %v774 = vunpack.c.l.b16 %v251
        %v775 = vunpack.c.h.b16 %v251
        %v776 = vunpack.c.l.b16 %v252
        %v777 = vunpack.c.h.b16 %v252
        %v778 = vunpack.c.l.b16 %v253
        %v779 = vunpack.c.h.b16 %v253
        %v780 = vunpack.c.l.b16 %v254
        %v781 = vunpack.c.h.b16 %v254
        %v782 = vunpack.c.l.b16 %v255
        %v783 = vunpack.c.h.b16 %v255
        %v784 = vunpack.c.l.b16 %v256
        %v785 = vunpack.c.h.b16 %v256
        %v786 = vunpack.c.l.b16 %v257
        %v787 = vunpack.c.h.b16 %v257
        %v788 = vunpack.c.l.b16 %v258
        %v789 = vunpack.c.h.b16 %v258
        %v790 = vunpack.c.l.b16 %v259
        %v791 = vunpack.c.h.b16 %v259
        %v792 = vunpack.c.l.b16 %v260
        %v793 = vunpack.c.h.b16 %v260
        %v794 = vunpack.c.l.b16 %v261
        %v795 = vunpack.c.h.b16 %v261
        %v796 = vunpack.c.l.b16 %v262
        %v797 = vunpack.c.h.b16 %v262
        %v798 = vunpack.c.l.b16 %v263
        %v799 = vunpack.c.h.b16 %v263
        %v800 = vunpack.c.l.b16 %v264
        %v801 = vunpack.c.h.b16 %v264
        %v802 = vunpack.c.l.b16 %v265
        %v803 = vunpack.c.h.b16 %v265
        %v804 = vunpack.c.l.b16 %v266
        %v805 = vunpack.c.h.b16 %v266
        %v806 = vunpack.c.l.b16 %v267
        %v807 = vunpack.c.h.b16 %v267
        %v808 = vunpack.c.l.b16 %v268
        %v809 = vunpack.c.h.b16 %v268
        %v810 = vunpack.c.l.b16 %v269
        %v811 = vunpack.c.h.b16 %v269
        %v812 = vunpack.c.l.b16 %v270
        %v813 = vunpack.c.h.b16 %v270
        %v814 = vunpack.c.l.b16 %v271
        %v815 = vunpack.c.h.b16 %v271
        %v816 = vunpack.c.l.b16 %v272
        %v817 = vunpack.c.h.b16 %v272
        %v818 = vunpack.c.l.b16 %v273
        %v819 = vunpack.c.h.b16 %v273
        %v820 = vunpack.c.l.b16 %v274
        %v821 = vunpack.c.h.b16 %v274
        %v822 = vunpack.c.l.b16 %v275
        %v823 = vunpack.c.h.b16 %v275
        %v824 = vunpack.c.l.b16 %v276
        %v825 = vunpack.c.h.b16 %v276
        %v826 = vunpack.c.l.b16 %v277
        %v827 = vunpack.c.h.b16 %v277
        %v828 = vunpack.c.l.b16 %v278
        %v829 = vunpack.c.h.b16 %v278
        %v830 = vunpack.c.l.b16 %v279
        %v831 = vunpack.c.h.b16 %v279
        %v832 = vunpack.c.l.b16 %v280
        %v833 = vunpack.c.h.b16 %v280
        %v834 = vunpack.c.l.b16 %v281
        %v835 = vunpack.c.h.b16 %v281
        %v836 = vunpack.c.l.b16 %v282
        %v837 = vunpack.c.h.b16 %v282
        %v838 = vunpack.c.l.b16 %v283
        %v839 = vunpack.c.h.b16 %v283
        %v840 = vunpack.c.l.b16 %v284
        %v841 = vunpack.c.h.b16 %v284
        %v842 = vunpack.c.l.b16 %v285
        %v843 = vunpack.c.h.b16 %v285
        %v844 = vunpack.c.l.b16 %v286
        %v845 = vunpack.c.h.b16 %v286
        %v846 = vpack.c.b16 %v774, %v766
        %v847 = vpack.c.b16 %v775, %v767
        %v848 = vpack.c.b16 %v776, %v768
        %v849 = vpack.c.b16 %v777, %v769
        %v850 = vpack.c.b16 %v778, %v770
        %v851 = vpack.c.b16 %v779, %v771
        %v852 = vpack.c.b16 %v780, %v772
        %v853 = vpack.c.b16 %v781, %v773
        %v854 = vpack.c.b16 %v790, %v782
        %v855 = vpack.c.b16 %v791, %v783
        %v856 = vpack.c.b16 %v792, %v784
        %v857 = vpack.c.b16 %v793, %v785
        %v858 = vpack.c.b16 %v794, %v786
        %v859 = vpack.c.b16 %v795, %v787
        %v860 = vpack.c.b16 %v796, %v788
        %v861 = vpack.c.b16 %v797, %v789
        %v862 = vpack.c.b16 %v806, %v798
        %v863 = vpack.c.b16 %v807, %v799
        %v864 = vpack.c.b16 %v808, %v800
        %v865 = vpack.c.b16 %v809, %v801
        %v866 = vpack.c.b16 %v810, %v802
        %v867 = vpack.c.b16 %v811, %v803
        %v868 = vpack.c.b16 %v812, %v804
        %v869 = vpack.c.b16 %v813, %v805
        %v870 = vpack.c.b16 %v822, %v814
        %v871 = vpack.c.b16 %v823, %v815
        %v872 = vpack.c.b16 %v824, %v816
        %v873 = vpack.c.b16 %v825, %v817
        %v874 = vpack.c.b16 %v826, %v818
        %v875 = vpack.c.b16 %v827, %v819
        %v876 = vpack.c.b16 %v828, %v820
        %v877 = vpack.c.b16 %v829, %v821
        %v878 = vpack.c.b16 %v838, %v830
        %v879 = vpack.c.b16 %v839, %v831
        %v880 = vpack.c.b16 %v840, %v832
        %v881 = vpack.c.b16 %v841, %v833
        %v882 = vpack.c.b16 %v842, %v834
        %v883 = vpack.c.b16 %v843, %v835
        %v884 = vpack.c.b16 %v844, %v836
        %v885 = vpack.c.b16 %v845, %v837
        %v926 = vsel %vm550, %v335, 0
        %928 = vmatprep.subr.bf16.mxu0 0
        %929 = vmatpush1.bf16.msra.mxu0 0
        %930 = vmatprep.subr.bf16.mxu0 0
        %931 = vmatpush1.bf16.msra.mxu0 0
        %932 = vmatprep.subr.bf16.mxu0 0
        %933 = vmatpush1.bf16.msra.mxu0 0
        %934 = vmatprep.subr.bf16.mxu0 %v879
        %935 = vmatpush1.bf16.msra.mxu0 %v878
        %936 = vmatprep.subr.bf16.mxu0 %v871
        %937 = vmatpush1.bf16.msra.mxu0 %v870
        %938 = vmatprep.subr.bf16.mxu0 %v863
        %939 = vmatpush1.bf16.msra.mxu0 %v862
        %940 = vmatprep.subr.bf16.mxu0 %v855
        %941 = vmatpush1.bf16.msra.mxu0 %v854
        %942 = vmatprep.subr.bf16.mxu0 %v847
        %943 = vmatpush1.bf16.msra.mxu0 %v846
        %944 = vmatprep.subr.bf16.mxu0 0
        %945 = vmatpush2.bf16.msra.mxu0 0
        %946 = vmatprep.subr.bf16.mxu0 0
        %947 = vmatpush2.bf16.msra.mxu0 0
        %948 = vmatprep.subr.bf16.mxu0 0
        %949 = vmatpush2.bf16.msra.mxu0 0
        %950 = vmatprep.subr.bf16.mxu0 0
        %951 = vmatpush2.bf16.msra.mxu0 0
        %952 = vmatprep.subr.bf16.mxu0 0
        %953 = vmatpush2.bf16.msra.mxu0 0
        %954 = vmatprep.subr.bf16.mxu0 0
        %955 = vmatpush2.bf16.msra.mxu0 0
        %956 = vmatprep.subr.bf16.mxu0 0
        %957 = vmatpush2.bf16.msra.mxu0 0
        %958 = vmatprep.subr.bf16.mxu0 0
        %959 = vmatpush2.bf16.msra.mxu0 0
        %960 = vmatprep.mubr.bf16.mxu0 0
        %961 = vmatmul.mubr.bf16.gmra.mxu0 %v926
        %v962 = vpop.f32.mrf.mxu0
        %v963 = vadd.f32 %v589, %v962
        %v964 = vpop.f32.mrf.mxu0
        %v965 = vadd.f32 %v591, %v964
        %v966 = vpop.f32.mrf.mxu0
        %v967 = vadd.f32 %v593, %v966
        %v968 = vpop.f32.mrf.mxu0
        %v969 = vadd.f32 %v595, %v968
        %970 = vdwg.mxu0
        %971 = vmatprep.subr.bf16.mxu0 0
        %972 = vmatpush1.bf16.msra.mxu0 0
        %973 = vmatprep.subr.bf16.mxu0 0
        %974 = vmatpush1.bf16.msra.mxu0 0
        %975 = vmatprep.subr.bf16.mxu0 0
        %976 = vmatpush1.bf16.msra.mxu0 0
        %977 = vmatprep.subr.bf16.mxu0 %v881
        %978 = vmatpush1.bf16.msra.mxu0 %v880
        %979 = vmatprep.subr.bf16.mxu0 %v873
        %980 = vmatpush1.bf16.msra.mxu0 %v872
        %981 = vmatprep.subr.bf16.mxu0 %v865
        %982 = vmatpush1.bf16.msra.mxu0 %v864
        %983 = vmatprep.subr.bf16.mxu0 %v857
        %984 = vmatpush1.bf16.msra.mxu0 %v856
        %985 = vmatprep.subr.bf16.mxu0 %v849
        %986 = vmatpush1.bf16.msra.mxu0 %v848
        %987 = vmatprep.subr.bf16.mxu0 0
        %988 = vmatpush2.bf16.msra.mxu0 0
        %989 = vmatprep.subr.bf16.mxu0 0
        %990 = vmatpush2.bf16.msra.mxu0 0
        %991 = vmatprep.subr.bf16.mxu0 0
        %992 = vmatpush2.bf16.msra.mxu0 0
        %993 = vmatprep.subr.bf16.mxu0 0
        %994 = vmatpush2.bf16.msra.mxu0 0
        %995 = vmatprep.subr.bf16.mxu0 0
        %996 = vmatpush2.bf16.msra.mxu0 0
        %997 = vmatprep.subr.bf16.mxu0 0
        %998 = vmatpush2.bf16.msra.mxu0 0
        %999 = vmatprep.subr.bf16.mxu0 0
        %1000 = vmatpush2.bf16.msra.mxu0 0
        %1001 = vmatprep.subr.bf16.mxu0 0
        %1002 = vmatpush2.bf16.msra.mxu0 0
        %1003 = vmatprep.mubr.bf16.mxu0 0
        %1004 = vmatmul.mubr.bf16.gmra.mxu0 %v926
        %v1005 = vpop.f32.mrf.mxu0
        %v1006 = vadd.f32 %v632, %v1005
        %v1007 = vpop.f32.mrf.mxu0
        %v1008 = vadd.f32 %v634, %v1007
        %v1009 = vpop.f32.mrf.mxu0
        %v1010 = vadd.f32 %v636, %v1009
        %v1011 = vpop.f32.mrf.mxu0
        %v1012 = vadd.f32 %v638, %v1011
        %1013 = vdwg.mxu0
        %1014 = vmatprep.subr.bf16.mxu0 0
        %1015 = vmatpush1.bf16.msra.mxu0 0
        %1016 = vmatprep.subr.bf16.mxu0 0
        %1017 = vmatpush1.bf16.msra.mxu0 0
        %1018 = vmatprep.subr.bf16.mxu0 0
        %1019 = vmatpush1.bf16.msra.mxu0 0
        %1020 = vmatprep.subr.bf16.mxu0 %v883
        %1021 = vmatpush1.bf16.msra.mxu0 %v882
        %1022 = vmatprep.subr.bf16.mxu0 %v875
        %1023 = vmatpush1.bf16.msra.mxu0 %v874
        %1024 = vmatprep.subr.bf16.mxu0 %v867
        %1025 = vmatpush1.bf16.msra.mxu0 %v866
        %1026 = vmatprep.subr.bf16.mxu0 %v859
        %1027 = vmatpush1.bf16.msra.mxu0 %v858
        %1028 = vmatprep.subr.bf16.mxu0 %v851
        %1029 = vmatpush1.bf16.msra.mxu0 %v850
        %1030 = vmatprep.subr.bf16.mxu0 0
        %1031 = vmatpush2.bf16.msra.mxu0 0
        %1032 = vmatprep.subr.bf16.mxu0 0
        %1033 = vmatpush2.bf16.msra.mxu0 0
        %1034 = vmatprep.subr.bf16.mxu0 0
        %1035 = vmatpush2.bf16.msra.mxu0 0
        %1036 = vmatprep.subr.bf16.mxu0 0
        %1037 = vmatpush2.bf16.msra.mxu0 0
        %1038 = vmatprep.subr.bf16.mxu0 0
        %1039 = vmatpush2.bf16.msra.mxu0 0
        %1040 = vmatprep.subr.bf16.mxu0 0
        %1041 = vmatpush2.bf16.msra.mxu0 0
        %1042 = vmatprep.subr.bf16.mxu0 0
        %1043 = vmatpush2.bf16.msra.mxu0 0
        %1044 = vmatprep.subr.bf16.mxu0 0
        %1045 = vmatpush2.bf16.msra.mxu0 0
        %1046 = vmatprep.mubr.bf16.mxu0 0
        %1047 = vmatmul.mubr.bf16.gmra.mxu0 %v926
        %v1048 = vpop.f32.mrf.mxu0
        %v1049 = vadd.f32 %v675, %v1048
        %v1050 = vpop.f32.mrf.mxu0
        %v1051 = vadd.f32 %v677, %v1050
        %v1052 = vpop.f32.mrf.mxu0
        %v1053 = vadd.f32 %v679, %v1052
        %v1054 = vpop.f32.mrf.mxu0
        %v1055 = vadd.f32 %v681, %v1054
        %1056 = vdwg.mxu0
        %1057 = vmatprep.subr.bf16.mxu0 0
        %1058 = vmatpush1.bf16.msra.mxu0 0
        %1059 = vmatprep.subr.bf16.mxu0 0
        %1060 = vmatpush1.bf16.msra.mxu0 0
        %1061 = vmatprep.subr.bf16.mxu0 0
        %1062 = vmatpush1.bf16.msra.mxu0 0
        %1063 = vmatprep.subr.bf16.mxu0 %v885
        %1064 = vmatpush1.bf16.msra.mxu0 %v884
        %1065 = vmatprep.subr.bf16.mxu0 %v877
        %1066 = vmatpush1.bf16.msra.mxu0 %v876
        %1067 = vmatprep.subr.bf16.mxu0 %v869
        %1068 = vmatpush1.bf16.msra.mxu0 %v868
        %1069 = vmatprep.subr.bf16.mxu0 %v861
        %1070 = vmatpush1.bf16.msra.mxu0 %v860
        %1071 = vmatprep.subr.bf16.mxu0 %v853
        %1072 = vmatpush1.bf16.msra.mxu0 %v852
        %1073 = vmatprep.subr.bf16.mxu0 0
        %1074 = vmatpush2.bf16.msra.mxu0 0
        %1075 = vmatprep.subr.bf16.mxu0 0
        %1076 = vmatpush2.bf16.msra.mxu0 0
        %1077 = vmatprep.subr.bf16.mxu0 0
        %1078 = vmatpush2.bf16.msra.mxu0 0
        %1079 = vmatprep.subr.bf16.mxu0 0
        %1080 = vmatpush2.bf16.msra.mxu0 0
        %1081 = vmatprep.subr.bf16.mxu0 0
        %1082 = vmatpush2.bf16.msra.mxu0 0
        %1083 = vmatprep.subr.bf16.mxu0 0
        %1084 = vmatpush2.bf16.msra.mxu0 0
        %1085 = vmatprep.subr.bf16.mxu0 0
        %1086 = vmatpush2.bf16.msra.mxu0 0
        %1087 = vmatprep.subr.bf16.mxu0 0
        %1088 = vmatpush2.bf16.msra.mxu0 0
        %1089 = vmatprep.mubr.bf16.mxu0 0
        %1090 = vmatmul.mubr.bf16.gmra.mxu0 %v926
        %v1091 = vpop.f32.mrf.mxu0
        %v1092 = vadd.f32 %v718, %v1091
        %v1093 = vpop.f32.mrf.mxu0
        %v1094 = vadd.f32 %v720, %v1093
        %v1095 = vpop.f32.mrf.mxu0
        %v1096 = vadd.f32 %v722, %v1095
        %v1097 = vpop.f32.mrf.mxu0
        %v1098 = vadd.f32 %v724, %v1097
        %1099 = vdwg.mxu0
        %v1100 = vld [vmem:[#allocation2] sm:$0xe]
        %s1101 = scalar_lea.vmem [#allocation3], 640
        %v1102 = vld [vmem:[%s1101] sm:$0xff]
        %v1103 = vld [vmem:[%s1101 + $0x8] sm:$0xff]
        %v1104 = vld [vmem:[%s1101 + $0x10] sm:$0xff]
        %v1105 = vld [vmem:[%s1101 + $0x18] sm:$0xff]
        %v1106 = vld [vmem:[%s1101 + $0x20] sm:$0xff]
        %v1107 = vld [vmem:[%s1101 + $0x28] sm:$0xff]
        %v1108 = vld [vmem:[%s1101 + $0x30] sm:$0xff]
        %v1109 = vld [vmem:[%s1101 + $0x38] sm:$0xff]
        %v1110 = vld [vmem:[%s1101 + $0x40] sm:$0xff]
        %v1111 = vld [vmem:[%s1101 + $0x48] sm:$0xff]
        %v1112 = vld [vmem:[%s1101 + $0x50] sm:$0xff]
        %v1113 = vld [vmem:[%s1101 + $0x58] sm:$0xff]
        %v1114 = vld [vmem:[%s1101 + $0x60] sm:$0xff]
        %v1115 = vld [vmem:[%s1101 + $0x68] sm:$0xff]
        %v1116 = vld [vmem:[%s1101 + $0x70] sm:$0xff]
        %v1117 = vld [vmem:[%s1101 + $0x78] sm:$0xff]
        %v1118 = vld [vmem:[%s1101 + $0x80] sm:$0xff]
        %v1119 = vld [vmem:[%s1101 + $0x88] sm:$0xff]
        %v1120 = vld [vmem:[%s1101 + $0x90] sm:$0xff]
        %v1121 = vld [vmem:[%s1101 + $0x98] sm:$0xff]
        %v1122 = vld [vmem:[%s1101 + $0xa0] sm:$0xff]
        %v1123 = vld [vmem:[%s1101 + $0xa8] sm:$0xff]
        %v1124 = vld [vmem:[%s1101 + $0xb0] sm:$0xff]
        %v1125 = vld [vmem:[%s1101 + $0xb8] sm:$0xff]
        %v1126 = vld [vmem:[%s1101 + $0xc0] sm:$0xff]
        %v1127 = vld [vmem:[%s1101 + $0xc8] sm:$0xff]
        %v1128 = vld [vmem:[%s1101 + $0xd0] sm:$0xff]
        %v1129 = vld [vmem:[%s1101 + $0xd8] sm:$0xff]
        %v1130 = vld [vmem:[%s1101 + $0xe0] sm:$0xff]
        %v1131 = vld [vmem:[%s1101 + $0xe8] sm:$0xff]
        %v1132 = vld [vmem:[%s1101 + $0xf0] sm:$0xff]
        %v1133 = vld [vmem:[%s1101 + $0xf8] sm:$0xff]
        %v1134 = vld [vmem:[%s1101 + $0x100] sm:$0xff]
        %v1135 = vld [vmem:[%s1101 + $0x108] sm:$0xff]
        %v1136 = vld [vmem:[%s1101 + $0x110] sm:$0xff]
        %v1137 = vld [vmem:[%s1101 + $0x118] sm:$0xff]
        %v1138 = vld [vmem:[%s1101 + $0x120] sm:$0xff]
        %v1139 = vld [vmem:[%s1101 + $0x128] sm:$0xff]
        %v1140 = vld [vmem:[%s1101 + $0x130] sm:$0xff]
        %v1141 = vld [vmem:[%s1101 + $0x138] sm:$0xff]
        %v1143 = vunpack.c.l.b16 %v1100
        %v1144 = vpack.c.b16 %v333, %v1143
        %vm1145 = vcmask 1046528
        %v1146 = vrot.slane %v1144, 1
        %v1147 = vrot.slane %v336, 1
        %v1148 = vsel %vm1145, %v1146, %v1147
        %v1189 = vunpack.c.l.b16 %v1102
        %v1190 = vunpack.c.h.b16 %v1102
        %v1191 = vunpack.c.l.b16 %v1103
        %v1192 = vunpack.c.h.b16 %v1103
        %v1193 = vunpack.c.l.b16 %v1104
        %v1194 = vunpack.c.h.b16 %v1104
        %v1195 = vunpack.c.l.b16 %v1105
        %v1196 = vunpack.c.h.b16 %v1105
        %v1197 = vunpack.c.l.b16 %v1106
        %v1198 = vunpack.c.h.b16 %v1106
        %v1199 = vunpack.c.l.b16 %v1107
        %v1200 = vunpack.c.h.b16 %v1107
        %v1201 = vunpack.c.l.b16 %v1108
        %v1202 = vunpack.c.h.b16 %v1108
        %v1203 = vunpack.c.l.b16 %v1109
        %v1204 = vunpack.c.h.b16 %v1109
        %v1205 = vunpack.c.l.b16 %v1110
        %v1206 = vunpack.c.h.b16 %v1110
        %v1207 = vunpack.c.l.b16 %v1111
        %v1208 = vunpack.c.h.b16 %v1111
        %v1209 = vunpack.c.l.b16 %v1112
        %v1210 = vunpack.c.h.b16 %v1112
        %v1211 = vunpack.c.l.b16 %v1113
        %v1212 = vunpack.c.h.b16 %v1113
        %v1213 = vunpack.c.l.b16 %v1114
        %v1214 = vunpack.c.h.b16 %v1114
        %v1215 = vunpack.c.l.b16 %v1115
        %v1216 = vunpack.c.h.b16 %v1115
        %v1217 = vunpack.c.l.b16 %v1116
        %v1218 = vunpack.c.h.b16 %v1116
        %v1219 = vunpack.c.l.b16 %v1117
        %v1220 = vunpack.c.h.b16 %v1117
        %v1221 = vunpack.c.l.b16 %v1118
        %v1222 = vunpack.c.h.b16 %v1118
        %v1223 = vunpack.c.l.b16 %v1119
        %v1224 = vunpack.c.h.b16 %v1119
        %v1225 = vunpack.c.l.b16 %v1120
        %v1226 = vunpack.c.h.b16 %v1120
        %v1227 = vunpack.c.l.b16 %v1121
        %v1228 = vunpack.c.h.b16 %v1121
        %v1229 = vunpack.c.l.b16 %v1122
        %v1230 = vunpack.c.h.b16 %v1122
        %v1231 = vunpack.c.l.b16 %v1123
        %v1232 = vunpack.c.h.b16 %v1123
        %v1233 = vunpack.c.l.b16 %v1124
        %v1234 = vunpack.c.h.b16 %v1124
        %v1235 = vunpack.c.l.b16 %v1125
        %v1236 = vunpack.c.h.b16 %v1125
        %v1237 = vunpack.c.l.b16 %v1126
        %v1238 = vunpack.c.h.b16 %v1126
        %v1239 = vunpack.c.l.b16 %v1127
        %v1240 = vunpack.c.h.b16 %v1127
        %v1241 = vunpack.c.l.b16 %v1128
        %v1242 = vunpack.c.h.b16 %v1128
        %v1243 = vunpack.c.l.b16 %v1129
        %v1244 = vunpack.c.h.b16 %v1129
        %v1245 = vunpack.c.l.b16 %v1130
        %v1246 = vunpack.c.h.b16 %v1130
        %v1247 = vunpack.c.l.b16 %v1131
        %v1248 = vunpack.c.h.b16 %v1131
        %v1249 = vunpack.c.l.b16 %v1132
        %v1250 = vunpack.c.h.b16 %v1132
        %v1251 = vunpack.c.l.b16 %v1133
        %v1252 = vunpack.c.h.b16 %v1133
        %v1253 = vunpack.c.l.b16 %v1134
        %v1254 = vunpack.c.h.b16 %v1134
        %v1255 = vunpack.c.l.b16 %v1135
        %v1256 = vunpack.c.h.b16 %v1135
        %v1257 = vunpack.c.l.b16 %v1136
        %v1258 = vunpack.c.h.b16 %v1136
        %v1259 = vunpack.c.l.b16 %v1137
        %v1260 = vunpack.c.h.b16 %v1137
        %v1261 = vunpack.c.l.b16 %v1138
        %v1262 = vunpack.c.h.b16 %v1138
        %v1263 = vunpack.c.l.b16 %v1139
        %v1264 = vunpack.c.h.b16 %v1139
        %v1265 = vunpack.c.l.b16 %v1140
        %v1266 = vunpack.c.h.b16 %v1140
        %v1267 = vunpack.c.l.b16 %v1141
        %v1268 = vunpack.c.h.b16 %v1141
        %v1269 = vpack.c.b16 %v1197, %v1189
        %v1270 = vpack.c.b16 %v1198, %v1190
        %v1271 = vpack.c.b16 %v1199, %v1191
        %v1272 = vpack.c.b16 %v1200, %v1192
        %v1273 = vpack.c.b16 %v1201, %v1193
        %v1274 = vpack.c.b16 %v1202, %v1194
        %v1275 = vpack.c.b16 %v1203, %v1195
        %v1276 = vpack.c.b16 %v1204, %v1196
        %v1277 = vpack.c.b16 %v1213, %v1205
        %v1278 = vpack.c.b16 %v1214, %v1206
        %v1279 = vpack.c.b16 %v1215, %v1207
        %v1280 = vpack.c.b16 %v1216, %v1208
        %v1281 = vpack.c.b16 %v1217, %v1209
        %v1282 = vpack.c.b16 %v1218, %v1210
        %v1283 = vpack.c.b16 %v1219, %v1211
        %v1284 = vpack.c.b16 %v1220, %v1212
        %v1285 = vpack.c.b16 %v1229, %v1221
        %v1286 = vpack.c.b16 %v1230, %v1222
        %v1287 = vpack.c.b16 %v1231, %v1223
        %v1288 = vpack.c.b16 %v1232, %v1224
        %v1289 = vpack.c.b16 %v1233, %v1225
        %v1290 = vpack.c.b16 %v1234, %v1226
        %v1291 = vpack.c.b16 %v1235, %v1227
        %v1292 = vpack.c.b16 %v1236, %v1228
        %v1293 = vpack.c.b16 %v1245, %v1237
        %v1294 = vpack.c.b16 %v1246, %v1238
        %v1295 = vpack.c.b16 %v1247, %v1239
        %v1296 = vpack.c.b16 %v1248, %v1240
        %v1297 = vpack.c.b16 %v1249, %v1241
        %v1298 = vpack.c.b16 %v1250, %v1242
        %v1299 = vpack.c.b16 %v1251, %v1243
        %v1300 = vpack.c.b16 %v1252, %v1244
        %v1301 = vpack.c.b16 %v1261, %v1253
        %v1302 = vpack.c.b16 %v1262, %v1254
        %v1303 = vpack.c.b16 %v1263, %v1255
        %v1304 = vpack.c.b16 %v1264, %v1256
        %v1305 = vpack.c.b16 %v1265, %v1257
        %v1306 = vpack.c.b16 %v1266, %v1258
        %v1307 = vpack.c.b16 %v1267, %v1259
        %v1308 = vpack.c.b16 %v1268, %v1260
        %v1350 = vsel %vm550, %v1148, 0
        %1352 = vmatprep.subr.bf16.mxu0 0
        %1353 = vmatpush1.bf16.msra.mxu0 0
        %1354 = vmatprep.subr.bf16.mxu0 0
        %1355 = vmatpush1.bf16.msra.mxu0 0
        %1356 = vmatprep.subr.bf16.mxu0 0
        %1357 = vmatpush1.bf16.msra.mxu0 0
        %1358 = vmatprep.subr.bf16.mxu0 %v1302
        %1359 = vmatpush1.bf16.msra.mxu0 %v1301
        %1360 = vmatprep.subr.bf16.mxu0 %v1294
        %1361 = vmatpush1.bf16.msra.mxu0 %v1293
        %1362 = vmatprep.subr.bf16.mxu0 %v1286
        %1363 = vmatpush1.bf16.msra.mxu0 %v1285
        %1364 = vmatprep.subr.bf16.mxu0 %v1278
        %1365 = vmatpush1.bf16.msra.mxu0 %v1277
        %1366 = vmatprep.subr.bf16.mxu0 %v1270
        %1367 = vmatpush1.bf16.msra.mxu0 %v1269
        %1368 = vmatprep.subr.bf16.mxu0 0
        %1369 = vmatpush2.bf16.msra.mxu0 0
        %1370 = vmatprep.subr.bf16.mxu0 0
        %1371 = vmatpush2.bf16.msra.mxu0 0
        %1372 = vmatprep.subr.bf16.mxu0 0
        %1373 = vmatpush2.bf16.msra.mxu0 0
        %1374 = vmatprep.subr.bf16.mxu0 0
        %1375 = vmatpush2.bf16.msra.mxu0 0
        %1376 = vmatprep.subr.bf16.mxu0 0
        %1377 = vmatpush2.bf16.msra.mxu0 0
        %1378 = vmatprep.subr.bf16.mxu0 0
        %1379 = vmatpush2.bf16.msra.mxu0 0
        %1380 = vmatprep.subr.bf16.mxu0 0
        %1381 = vmatpush2.bf16.msra.mxu0 0
        %1382 = vmatprep.subr.bf16.mxu0 0
        %1383 = vmatpush2.bf16.msra.mxu0 0
        %1384 = vmatprep.mubr.bf16.mxu0 0
        %1385 = vmatmul.mubr.bf16.gmra.mxu0 %v1350
        %v1386 = vpop.f32.mrf.mxu0
        %v1387 = vadd.f32 0.0, %v1386
        %v1388 = vpop.f32.mrf.mxu0
        %v1389 = vadd.f32 0.0, %v1388
        %v1390 = vpop.f32.mrf.mxu0
        %v1391 = vadd.f32 0.0, %v1390
        %v1392 = vpop.f32.mrf.mxu0
        %v1393 = vadd.f32 0.0, %v1392
        %1394 = vdwg.mxu0
        %1395 = vmatprep.subr.bf16.mxu0 0
        %1396 = vmatpush1.bf16.msra.mxu0 0
        %1397 = vmatprep.subr.bf16.mxu0 0
        %1398 = vmatpush1.bf16.msra.mxu0 0
        %1399 = vmatprep.subr.bf16.mxu0 0
        %1400 = vmatpush1.bf16.msra.mxu0 0
        %1401 = vmatprep.subr.bf16.mxu0 %v1304
        %1402 = vmatpush1.bf16.msra.mxu0 %v1303
        %1403 = vmatprep.subr.bf16.mxu0 %v1296
        %1404 = vmatpush1.bf16.msra.mxu0 %v1295
        %1405 = vmatprep.subr.bf16.mxu0 %v1288
        %1406 = vmatpush1.bf16.msra.mxu0 %v1287
        %1407 = vmatprep.subr.bf16.mxu0 %v1280
        %1408 = vmatpush1.bf16.msra.mxu0 %v1279
        %1409 = vmatprep.subr.bf16.mxu0 %v1272
        %1410 = vmatpush1.bf16.msra.mxu0 %v1271
        %1411 = vmatprep.subr.bf16.mxu0 0
        %1412 = vmatpush2.bf16.msra.mxu0 0
        %1413 = vmatprep.subr.bf16.mxu0 0
        %1414 = vmatpush2.bf16.msra.mxu0 0
        %1415 = vmatprep.subr.bf16.mxu0 0
        %1416 = vmatpush2.bf16.msra.mxu0 0
        %1417 = vmatprep.subr.bf16.mxu0 0
        %1418 = vmatpush2.bf16.msra.mxu0 0
        %1419 = vmatprep.subr.bf16.mxu0 0
        %1420 = vmatpush2.bf16.msra.mxu0 0
        %1421 = vmatprep.subr.bf16.mxu0 0
        %1422 = vmatpush2.bf16.msra.mxu0 0
        %1423 = vmatprep.subr.bf16.mxu0 0
        %1424 = vmatpush2.bf16.msra.mxu0 0
        %1425 = vmatprep.subr.bf16.mxu0 0
        %1426 = vmatpush2.bf16.msra.mxu0 0
        %1427 = vmatprep.mubr.bf16.mxu0 0
        %1428 = vmatmul.mubr.bf16.gmra.mxu0 %v1350
        %v1429 = vpop.f32.mrf.mxu0
        %v1430 = vadd.f32 0.0, %v1429
        %v1431 = vpop.f32.mrf.mxu0
        %v1432 = vadd.f32 0.0, %v1431
        %v1433 = vpop.f32.mrf.mxu0
        %v1434 = vadd.f32 0.0, %v1433
        %v1435 = vpop.f32.mrf.mxu0
        %v1436 = vadd.f32 0.0, %v1435
        %1437 = vdwg.mxu0
        %1438 = vmatprep.subr.bf16.mxu0 0
        %1439 = vmatpush1.bf16.msra.mxu0 0
        %1440 = vmatprep.subr.bf16.mxu0 0
        %1441 = vmatpush1.bf16.msra.mxu0 0
        %1442 = vmatprep.subr.bf16.mxu0 0
        %1443 = vmatpush1.bf16.msra.mxu0 0
        %1444 = vmatprep.subr.bf16.mxu0 %v1306
        %1445 = vmatpush1.bf16.msra.mxu0 %v1305
        %1446 = vmatprep.subr.bf16.mxu0 %v1298
        %1447 = vmatpush1.bf16.msra.mxu0 %v1297
        %1448 = vmatprep.subr.bf16.mxu0 %v1290
        %1449 = vmatpush1.bf16.msra.mxu0 %v1289
        %1450 = vmatprep.subr.bf16.mxu0 %v1282
        %1451 = vmatpush1.bf16.msra.mxu0 %v1281
        %1452 = vmatprep.subr.bf16.mxu0 %v1274
        %1453 = vmatpush1.bf16.msra.mxu0 %v1273
        %1454 = vmatprep.subr.bf16.mxu0 0
        %1455 = vmatpush2.bf16.msra.mxu0 0
        %1456 = vmatprep.subr.bf16.mxu0 0
        %1457 = vmatpush2.bf16.msra.mxu0 0
        %1458 = vmatprep.subr.bf16.mxu0 0
        %1459 = vmatpush2.bf16.msra.mxu0 0
        %1460 = vmatprep.subr.bf16.mxu0 0
        %1461 = vmatpush2.bf16.msra.mxu0 0
        %1462 = vmatprep.subr.bf16.mxu0 0
        %1463 = vmatpush2.bf16.msra.mxu0 0
        %1464 = vmatprep.subr.bf16.mxu0 0
        %1465 = vmatpush2.bf16.msra.mxu0 0
        %1466 = vmatprep.subr.bf16.mxu0 0
        %1467 = vmatpush2.bf16.msra.mxu0 0
        %1468 = vmatprep.subr.bf16.mxu0 0
        %1469 = vmatpush2.bf16.msra.mxu0 0
        %1470 = vmatprep.mubr.bf16.mxu0 0
        %1471 = vmatmul.mubr.bf16.gmra.mxu0 %v1350
        %v1472 = vpop.f32.mrf.mxu0
        %v1473 = vadd.f32 0.0, %v1472
        %v1474 = vpop.f32.mrf.mxu0
        %v1475 = vadd.f32 0.0, %v1474
        %v1476 = vpop.f32.mrf.mxu0
        %v1477 = vadd.f32 0.0, %v1476
        %v1478 = vpop.f32.mrf.mxu0
        %v1479 = vadd.f32 0.0, %v1478
        %1480 = vdwg.mxu0
        %1481 = vmatprep.subr.bf16.mxu0 0
        %1482 = vmatpush1.bf16.msra.mxu0 0
        %1483 = vmatprep.subr.bf16.mxu0 0
        %1484 = vmatpush1.bf16.msra.mxu0 0
        %1485 = vmatprep.subr.bf16.mxu0 0
        %1486 = vmatpush1.bf16.msra.mxu0 0
        %1487 = vmatprep.subr.bf16.mxu0 %v1308
        %1488 = vmatpush1.bf16.msra.mxu0 %v1307
        %1489 = vmatprep.subr.bf16.mxu0 %v1300
        %1490 = vmatpush1.bf16.msra.mxu0 %v1299
        %1491 = vmatprep.subr.bf16.mxu0 %v1292
        %1492 = vmatpush1.bf16.msra.mxu0 %v1291
        %1493 = vmatprep.subr.bf16.mxu0 %v1284
        %1494 = vmatpush1.bf16.msra.mxu0 %v1283
        %1495 = vmatprep.subr.bf16.mxu0 %v1276
        %1496 = vmatpush1.bf16.msra.mxu0 %v1275
        %1497 = vmatprep.subr.bf16.mxu0 0
        %1498 = vmatpush2.bf16.msra.mxu0 0
        %1499 = vmatprep.subr.bf16.mxu0 0
        %1500 = vmatpush2.bf16.msra.mxu0 0
        %1501 = vmatprep.subr.bf16.mxu0 0
        %1502 = vmatpush2.bf16.msra.mxu0 0
        %1503 = vmatprep.subr.bf16.mxu0 0
        %1504 = vmatpush2.bf16.msra.mxu0 0
        %1505 = vmatprep.subr.bf16.mxu0 0
        %1506 = vmatpush2.bf16.msra.mxu0 0
        %1507 = vmatprep.subr.bf16.mxu0 0
        %1508 = vmatpush2.bf16.msra.mxu0 0
        %1509 = vmatprep.subr.bf16.mxu0 0
        %1510 = vmatpush2.bf16.msra.mxu0 0
        %1511 = vmatprep.subr.bf16.mxu0 0
        %1512 = vmatpush2.bf16.msra.mxu0 0
        %1513 = vmatprep.mubr.bf16.mxu0 0
        %1514 = vmatmul.mubr.bf16.gmra.mxu0 %v1350
        %v1515 = vpop.f32.mrf.mxu0
        %v1516 = vadd.f32 0.0, %v1515
        %v1517 = vpop.f32.mrf.mxu0
        %v1518 = vadd.f32 0.0, %v1517
        %v1519 = vpop.f32.mrf.mxu0
        %v1520 = vadd.f32 0.0, %v1519
        %v1521 = vpop.f32.mrf.mxu0
        %v1522 = vadd.f32 0.0, %v1521
        %1523 = vdwg.mxu0
        %v1524 = vadd.f32 %v963, %v1387
        %v1525 = vadd.f32 %v965, %v1389
        %v1526 = vadd.f32 %v1006, %v1430
        %v1527 = vadd.f32 %v1008, %v1432
        %v1528 = vadd.f32 %v1049, %v1473
        %v1529 = vadd.f32 %v1051, %v1475
        %v1530 = vadd.f32 %v1092, %v1516
        %v1531 = vadd.f32 %v1094, %v1518
        %v1532 = vadd.f32 %v967, %v1391
        %v1533 = vadd.f32 %v969, %v1393
        %v1534 = vadd.f32 %v1010, %v1434
        %v1535 = vadd.f32 %v1012, %v1436
        %v1536 = vadd.f32 %v1053, %v1477
        %v1537 = vadd.f32 %v1055, %v1479
        %v1538 = vadd.f32 %v1096, %v1520
        %v1539 = vadd.f32 %v1098, %v1522
        %v1540 = vld [vmem:[#allocation2 + $0x8] sm:$0x3]
        %s1541 = scalar_lea.vmem [#allocation3], 960
        %v1542 = vld [vmem:[%s1541] sm:$0xff]
        %v1543 = vld [vmem:[%s1541 + $0x8] sm:$0xff]
        %v1544 = vld [vmem:[%s1541 + $0x10] sm:$0xff]
        %v1545 = vld [vmem:[%s1541 + $0x18] sm:$0xff]
        %v1546 = vld [vmem:[%s1541 + $0x20] sm:$0xff]
        %v1547 = vld [vmem:[%s1541 + $0x28] sm:$0xff]
        %v1548 = vld [vmem:[%s1541 + $0x30] sm:$0xff]
        %v1549 = vld [vmem:[%s1541 + $0x38] sm:$0xff]
        %v1550 = vld [vmem:[%s1541 + $0x40] sm:$0xff]
        %v1551 = vld [vmem:[%s1541 + $0x48] sm:$0xff]
        %v1552 = vld [vmem:[%s1541 + $0x50] sm:$0xff]
        %v1553 = vld [vmem:[%s1541 + $0x58] sm:$0xff]
        %v1554 = vld [vmem:[%s1541 + $0x60] sm:$0xff]
        %v1555 = vld [vmem:[%s1541 + $0x68] sm:$0xff]
        %v1556 = vld [vmem:[%s1541 + $0x70] sm:$0xff]
        %v1557 = vld [vmem:[%s1541 + $0x78] sm:$0xff]
        %v1558 = vld [vmem:[%s1541 + $0x80] sm:$0xff]
        %v1559 = vld [vmem:[%s1541 + $0x88] sm:$0xff]
        %v1560 = vld [vmem:[%s1541 + $0x90] sm:$0xff]
        %v1561 = vld [vmem:[%s1541 + $0x98] sm:$0xff]
        %v1562 = vld [vmem:[%s1541 + $0xa0] sm:$0xff]
        %v1563 = vld [vmem:[%s1541 + $0xa8] sm:$0xff]
        %v1564 = vld [vmem:[%s1541 + $0xb0] sm:$0xff]
        %v1565 = vld [vmem:[%s1541 + $0xb8] sm:$0xff]
        %v1566 = vld [vmem:[%s1541 + $0xc0] sm:$0xff]
        %v1567 = vld [vmem:[%s1541 + $0xc8] sm:$0xff]
        %v1568 = vld [vmem:[%s1541 + $0xd0] sm:$0xff]
        %v1569 = vld [vmem:[%s1541 + $0xd8] sm:$0xff]
        %v1570 = vld [vmem:[%s1541 + $0xe0] sm:$0xff]
        %v1571 = vld [vmem:[%s1541 + $0xe8] sm:$0xff]
        %v1572 = vld [vmem:[%s1541 + $0xf0] sm:$0xff]
        %v1573 = vld [vmem:[%s1541 + $0xf8] sm:$0xff]
        %v1574 = vld [vmem:[%s1541 + $0x100] sm:$0xff]
        %v1575 = vld [vmem:[%s1541 + $0x108] sm:$0xff]
        %v1576 = vld [vmem:[%s1541 + $0x110] sm:$0xff]
        %v1577 = vld [vmem:[%s1541 + $0x118] sm:$0xff]
        %v1578 = vld [vmem:[%s1541 + $0x120] sm:$0xff]
        %v1579 = vld [vmem:[%s1541 + $0x128] sm:$0xff]
        %v1580 = vld [vmem:[%s1541 + $0x130] sm:$0xff]
        %v1581 = vld [vmem:[%s1541 + $0x138] sm:$0xff]
        %v1583 = vunpack.c.l.b16 %v1540
        %v1584 = vpack.c.b16 %v1583, %v1583
        %vm1585 = vsmask.f32 6400
        %v1587 = vshrl.u32 %v1144, 16
        %v1589 = vrot.slane %v1587, 1
        %v1590 = vshll.u32 %v1144, 16
        %v1592 = vrot.slane %v1590, 2
        %v1593 = vor.u32 %v1589, %v1592
        %v1595 = vshrl.u32 %v1584, 16
        %v1597 = vrot.slane %v1595, 1
        %v1598 = vshll.u32 %v1584, 16
        %v1600 = vrot.slane %v1598, 2
        %v1601 = vor.u32 %v1597, %v1600
        %v1602 = vsel %vm1585, %v1593, %v1601
        %v1643 = vunpack.c.l.b16 %v1542
        %v1644 = vunpack.c.h.b16 %v1542
        %v1645 = vunpack.c.l.b16 %v1543
        %v1646 = vunpack.c.h.b16 %v1543
        %v1647 = vunpack.c.l.b16 %v1544
        %v1648 = vunpack.c.h.b16 %v1544
        %v1649 = vunpack.c.l.b16 %v1545
        %v1650 = vunpack.c.h.b16 %v1545
        %v1651 = vunpack.c.l.b16 %v1546
        %v1652 = vunpack.c.h.b16 %v1546
        %v1653 = vunpack.c.l.b16 %v1547
        %v1654 = vunpack.c.h.b16 %v1547
        %v1655 = vunpack.c.l.b16 %v1548
        %v1656 = vunpack.c.h.b16 %v1548
        %v1657 = vunpack.c.l.b16 %v1549
        %v1658 = vunpack.c.h.b16 %v1549
        %v1659 = vunpack.c.l.b16 %v1550
        %v1660 = vunpack.c.h.b16 %v1550
        %v1661 = vunpack.c.l.b16 %v1551
        %v1662 = vunpack.c.h.b16 %v1551
        %v1663 = vunpack.c.l.b16 %v1552
        %v1664 = vunpack.c.h.b16 %v1552
        %v1665 = vunpack.c.l.b16 %v1553
        %v1666 = vunpack.c.h.b16 %v1553
        %v1667 = vunpack.c.l.b16 %v1554
        %v1668 = vunpack.c.h.b16 %v1554
        %v1669 = vunpack.c.l.b16 %v1555
        %v1670 = vunpack.c.h.b16 %v1555
        %v1671 = vunpack.c.l.b16 %v1556
        %v1672 = vunpack.c.h.b16 %v1556
        %v1673 = vunpack.c.l.b16 %v1557
        %v1674 = vunpack.c.h.b16 %v1557
        %v1675 = vunpack.c.l.b16 %v1558
        %v1676 = vunpack.c.h.b16 %v1558
        %v1677 = vunpack.c.l.b16 %v1559
        %v1678 = vunpack.c.h.b16 %v1559
        %v1679 = vunpack.c.l.b16 %v1560
        %v1680 = vunpack.c.h.b16 %v1560
        %v1681 = vunpack.c.l.b16 %v1561
        %v1682 = vunpack.c.h.b16 %v1561
        %v1683 = vunpack.c.l.b16 %v1562
        %v1684 = vunpack.c.h.b16 %v1562
        %v1685 = vunpack.c.l.b16 %v1563
        %v1686 = vunpack.c.h.b16 %v1563
        %v1687 = vunpack.c.l.b16 %v1564
        %v1688 = vunpack.c.h.b16 %v1564
        %v1689 = vunpack.c.l.b16 %v1565
        %v1690 = vunpack.c.h.b16 %v1565
        %v1691 = vunpack.c.l.b16 %v1566
        %v1692 = vunpack.c.h.b16 %v1566
        %v1693 = vunpack.c.l.b16 %v1567
        %v1694 = vunpack.c.h.b16 %v1567
        %v1695 = vunpack.c.l.b16 %v1568
        %v1696 = vunpack.c.h.b16 %v1568
        %v1697 = vunpack.c.l.b16 %v1569
        %v1698 = vunpack.c.h.b16 %v1569
        %v1699 = vunpack.c.l.b16 %v1570
        %v1700 = vunpack.c.h.b16 %v1570
        %v1701 = vunpack.c.l.b16 %v1571
        %v1702 = vunpack.c.h.b16 %v1571
        %v1703 = vunpack.c.l.b16 %v1572
        %v1704 = vunpack.c.h.b16 %v1572
        %v1705 = vunpack.c.l.b16 %v1573
        %v1706 = vunpack.c.h.b16 %v1573
        %v1707 = vunpack.c.l.b16 %v1574
        %v1708 = vunpack.c.h.b16 %v1574
        %v1709 = vunpack.c.l.b16 %v1575
        %v1710 = vunpack.c.h.b16 %v1575
        %v1711 = vunpack.c.l.b16 %v1576
        %v1712 = vunpack.c.h.b16 %v1576
        %v1713 = vunpack.c.l.b16 %v1577
        %v1714 = vunpack.c.h.b16 %v1577
        %v1715 = vunpack.c.l.b16 %v1578
        %v1716 = vunpack.c.h.b16 %v1578
        %v1717 = vunpack.c.l.b16 %v1579
        %v1718 = vunpack.c.h.b16 %v1579
        %v1719 = vunpack.c.l.b16 %v1580
        %v1720 = vunpack.c.h.b16 %v1580
        %v1721 = vunpack.c.l.b16 %v1581
        %v1722 = vunpack.c.h.b16 %v1581
        %v1723 = vpack.c.b16 %v1651, %v1643
        %v1724 = vpack.c.b16 %v1652, %v1644
        %v1725 = vpack.c.b16 %v1653, %v1645
        %v1726 = vpack.c.b16 %v1654, %v1646
        %v1727 = vpack.c.b16 %v1655, %v1647
        %v1728 = vpack.c.b16 %v1656, %v1648
        %v1729 = vpack.c.b16 %v1657, %v1649
        %v1730 = vpack.c.b16 %v1658, %v1650
        %v1731 = vpack.c.b16 %v1667, %v1659
        %v1732 = vpack.c.b16 %v1668, %v1660
        %v1733 = vpack.c.b16 %v1669, %v1661
        %v1734 = vpack.c.b16 %v1670, %v1662
        %v1735 = vpack.c.b16 %v1671, %v1663
        %v1736 = vpack.c.b16 %v1672, %v1664
        %v1737 = vpack.c.b16 %v1673, %v1665
        %v1738 = vpack.c.b16 %v1674, %v1666
        %v1739 = vpack.c.b16 %v1683, %v1675
        %v1740 = vpack.c.b16 %v1684, %v1676
        %v1741 = vpack.c.b16 %v1685, %v1677
        %v1742 = vpack.c.b16 %v1686, %v1678
        %v1743 = vpack.c.b16 %v1687, %v1679
        %v1744 = vpack.c.b16 %v1688, %v1680
        %v1745 = vpack.c.b16 %v1689, %v1681
        %v1746 = vpack.c.b16 %v1690, %v1682
        %v1747 = vpack.c.b16 %v1699, %v1691
        %v1748 = vpack.c.b16 %v1700, %v1692
        %v1749 = vpack.c.b16 %v1701, %v1693
        %v1750 = vpack.c.b16 %v1702, %v1694
        %v1751 = vpack.c.b16 %v1703, %v1695
        %v1752 = vpack.c.b16 %v1704, %v1696
        %v1753 = vpack.c.b16 %v1705, %v1697
        %v1754 = vpack.c.b16 %v1706, %v1698
        %v1755 = vpack.c.b16 %v1715, %v1707
        %v1756 = vpack.c.b16 %v1716, %v1708
        %v1757 = vpack.c.b16 %v1717, %v1709
        %v1758 = vpack.c.b16 %v1718, %v1710
        %v1759 = vpack.c.b16 %v1719, %v1711
        %v1760 = vpack.c.b16 %v1720, %v1712
        %v1761 = vpack.c.b16 %v1721, %v1713
        %v1762 = vpack.c.b16 %v1722, %v1714
        %v1804 = vsel %vm550, %v1602, 0
        %1806 = vmatprep.subr.bf16.mxu0 0
        %1807 = vmatpush1.bf16.msra.mxu0 0
        %1808 = vmatprep.subr.bf16.mxu0 0
        %1809 = vmatpush1.bf16.msra.mxu0 0
        %1810 = vmatprep.subr.bf16.mxu0 0
        %1811 = vmatpush1.bf16.msra.mxu0 0
        %1812 = vmatprep.subr.bf16.mxu0 %v1756
        %1813 = vmatpush1.bf16.msra.mxu0 %v1755
        %1814 = vmatprep.subr.bf16.mxu0 %v1748
        %1815 = vmatpush1.bf16.msra.mxu0 %v1747
        %1816 = vmatprep.subr.bf16.mxu0 %v1740
        %1817 = vmatpush1.bf16.msra.mxu0 %v1739
        %1818 = vmatprep.subr.bf16.mxu0 %v1732
        %1819 = vmatpush1.bf16.msra.mxu0 %v1731
        %1820 = vmatprep.subr.bf16.mxu0 %v1724
        %1821 = vmatpush1.bf16.msra.mxu0 %v1723
        %1822 = vmatprep.subr.bf16.mxu0 0
        %1823 = vmatpush2.bf16.msra.mxu0 0
        %1824 = vmatprep.subr.bf16.mxu0 0
        %1825 = vmatpush2.bf16.msra.mxu0 0
        %1826 = vmatprep.subr.bf16.mxu0 0
        %1827 = vmatpush2.bf16.msra.mxu0 0
        %1828 = vmatprep.subr.bf16.mxu0 0
        %1829 = vmatpush2.bf16.msra.mxu0 0
        %1830 = vmatprep.subr.bf16.mxu0 0
        %1831 = vmatpush2.bf16.msra.mxu0 0
        %1832 = vmatprep.subr.bf16.mxu0 0
        %1833 = vmatpush2.bf16.msra.mxu0 0
        %1834 = vmatprep.subr.bf16.mxu0 0
        %1835 = vmatpush2.bf16.msra.mxu0 0
        %1836 = vmatprep.subr.bf16.mxu0 0
        %1837 = vmatpush2.bf16.msra.mxu0 0
        %1838 = vmatprep.mubr.bf16.mxu0 0
        %1839 = vmatmul.mubr.bf16.gmra.mxu0 %v1804
        %v1840 = vpop.f32.mrf.mxu0
        %v1841 = vadd.f32 0.0, %v1840
        %v1842 = vpop.f32.mrf.mxu0
        %v1843 = vadd.f32 0.0, %v1842
        %v1844 = vpop.f32.mrf.mxu0
        %v1845 = vadd.f32 0.0, %v1844
        %v1846 = vpop.f32.mrf.mxu0
        %v1847 = vadd.f32 0.0, %v1846
        %1848 = vdwg.mxu0
        %1849 = vmatprep.subr.bf16.mxu0 0
        %1850 = vmatpush1.bf16.msra.mxu0 0
        %1851 = vmatprep.subr.bf16.mxu0 0
        %1852 = vmatpush1.bf16.msra.mxu0 0
        %1853 = vmatprep.subr.bf16.mxu0 0
        %1854 = vmatpush1.bf16.msra.mxu0 0
        %1855 = vmatprep.subr.bf16.mxu0 %v1758
        %1856 = vmatpush1.bf16.msra.mxu0 %v1757
        %1857 = vmatprep.subr.bf16.mxu0 %v1750
        %1858 = vmatpush1.bf16.msra.mxu0 %v1749
        %1859 = vmatprep.subr.bf16.mxu0 %v1742
        %1860 = vmatpush1.bf16.msra.mxu0 %v1741
        %1861 = vmatprep.subr.bf16.mxu0 %v1734
        %1862 = vmatpush1.bf16.msra.mxu0 %v1733
        %1863 = vmatprep.subr.bf16.mxu0 %v1726
        %1864 = vmatpush1.bf16.msra.mxu0 %v1725
        %1865 = vmatprep.subr.bf16.mxu0 0
        %1866 = vmatpush2.bf16.msra.mxu0 0
        %1867 = vmatprep.subr.bf16.mxu0 0
        %1868 = vmatpush2.bf16.msra.mxu0 0
        %1869 = vmatprep.subr.bf16.mxu0 0
        %1870 = vmatpush2.bf16.msra.mxu0 0
        %1871 = vmatprep.subr.bf16.mxu0 0
        %1872 = vmatpush2.bf16.msra.mxu0 0
        %1873 = vmatprep.subr.bf16.mxu0 0
        %1874 = vmatpush2.bf16.msra.mxu0 0
        %1875 = vmatprep.subr.bf16.mxu0 0
        %1876 = vmatpush2.bf16.msra.mxu0 0
        %1877 = vmatprep.subr.bf16.mxu0 0
        %1878 = vmatpush2.bf16.msra.mxu0 0
        %1879 = vmatprep.subr.bf16.mxu0 0
        %1880 = vmatpush2.bf16.msra.mxu0 0
        %1881 = vmatprep.mubr.bf16.mxu0 0
        %1882 = vmatmul.mubr.bf16.gmra.mxu0 %v1804
        %v1883 = vpop.f32.mrf.mxu0
        %v1884 = vadd.f32 0.0, %v1883
        %v1885 = vpop.f32.mrf.mxu0
        %v1886 = vadd.f32 0.0, %v1885
        %v1887 = vpop.f32.mrf.mxu0
        %v1888 = vadd.f32 0.0, %v1887
        %v1889 = vpop.f32.mrf.mxu0
        %v1890 = vadd.f32 0.0, %v1889
        %1891 = vdwg.mxu0
        %1892 = vmatprep.subr.bf16.mxu0 0
        %1893 = vmatpush1.bf16.msra.mxu0 0
        %1894 = vmatprep.subr.bf16.mxu0 0
        %1895 = vmatpush1.bf16.msra.mxu0 0
        %1896 = vmatprep.subr.bf16.mxu0 0
        %1897 = vmatpush1.bf16.msra.mxu0 0
        %1898 = vmatprep.subr.bf16.mxu0 %v1760
        %1899 = vmatpush1.bf16.msra.mxu0 %v1759
        %1900 = vmatprep.subr.bf16.mxu0 %v1752
        %1901 = vmatpush1.bf16.msra.mxu0 %v1751
        %1902 = vmatprep.subr.bf16.mxu0 %v1744
        %1903 = vmatpush1.bf16.msra.mxu0 %v1743
        %1904 = vmatprep.subr.bf16.mxu0 %v1736
        %1905 = vmatpush1.bf16.msra.mxu0 %v1735
        %1906 = vmatprep.subr.bf16.mxu0 %v1728
        %1907 = vmatpush1.bf16.msra.mxu0 %v1727
        %1908 = vmatprep.subr.bf16.mxu0 0
        %1909 = vmatpush2.bf16.msra.mxu0 0
        %1910 = vmatprep.subr.bf16.mxu0 0
        %1911 = vmatpush2.bf16.msra.mxu0 0
        %1912 = vmatprep.subr.bf16.mxu0 0
        %1913 = vmatpush2.bf16.msra.mxu0 0
        %1914 = vmatprep.subr.bf16.mxu0 0
        %1915 = vmatpush2.bf16.msra.mxu0 0
        %1916 = vmatprep.subr.bf16.mxu0 0
        %1917 = vmatpush2.bf16.msra.mxu0 0
        %1918 = vmatprep.subr.bf16.mxu0 0
        %1919 = vmatpush2.bf16.msra.mxu0 0
        %1920 = vmatprep.subr.bf16.mxu0 0
        %1921 = vmatpush2.bf16.msra.mxu0 0
        %1922 = vmatprep.subr.bf16.mxu0 0
        %1923 = vmatpush2.bf16.msra.mxu0 0
        %1924 = vmatprep.mubr.bf16.mxu0 0
        %1925 = vmatmul.mubr.bf16.gmra.mxu0 %v1804
        %v1926 = vpop.f32.mrf.mxu0
        %v1927 = vadd.f32 0.0, %v1926
        %v1928 = vpop.f32.mrf.mxu0
        %v1929 = vadd.f32 0.0, %v1928
        %v1930 = vpop.f32.mrf.mxu0
        %v1931 = vadd.f32 0.0, %v1930
        %v1932 = vpop.f32.mrf.mxu0
        %v1933 = vadd.f32 0.0, %v1932
        %1934 = vdwg.mxu0
        %1935 = vmatprep.subr.bf16.mxu0 0
        %1936 = vmatpush1.bf16.msra.mxu0 0
        %1937 = vmatprep.subr.bf16.mxu0 0
        %1938 = vmatpush1.bf16.msra.mxu0 0
        %1939 = vmatprep.subr.bf16.mxu0 0
        %1940 = vmatpush1.bf16.msra.mxu0 0
        %1941 = vmatprep.subr.bf16.mxu0 %v1762
        %1942 = vmatpush1.bf16.msra.mxu0 %v1761
        %1943 = vmatprep.subr.bf16.mxu0 %v1754
        %1944 = vmatpush1.bf16.msra.mxu0 %v1753
        %1945 = vmatprep.subr.bf16.mxu0 %v1746
        %1946 = vmatpush1.bf16.msra.mxu0 %v1745
        %1947 = vmatprep.subr.bf16.mxu0 %v1738
        %1948 = vmatpush1.bf16.msra.mxu0 %v1737
        %1949 = vmatprep.subr.bf16.mxu0 %v1730
        %1950 = vmatpush1.bf16.msra.mxu0 %v1729
        %1951 = vmatprep.subr.bf16.mxu0 0
        %1952 = vmatpush2.bf16.msra.mxu0 0
        %1953 = vmatprep.subr.bf16.mxu0 0
        %1954 = vmatpush2.bf16.msra.mxu0 0
        %1955 = vmatprep.subr.bf16.mxu0 0
        %1956 = vmatpush2.bf16.msra.mxu0 0
        %1957 = vmatprep.subr.bf16.mxu0 0
        %1958 = vmatpush2.bf16.msra.mxu0 0
        %1959 = vmatprep.subr.bf16.mxu0 0
        %1960 = vmatpush2.bf16.msra.mxu0 0
        %1961 = vmatprep.subr.bf16.mxu0 0
        %1962 = vmatpush2.bf16.msra.mxu0 0
        %1963 = vmatprep.subr.bf16.mxu0 0
        %1964 = vmatpush2.bf16.msra.mxu0 0
        %1965 = vmatprep.subr.bf16.mxu0 0
        %1966 = vmatpush2.bf16.msra.mxu0 0
        %1967 = vmatprep.mubr.bf16.mxu0 0
        %1968 = vmatmul.mubr.bf16.gmra.mxu0 %v1804
        %v1969 = vpop.f32.mrf.mxu0
        %v1970 = vadd.f32 0.0, %v1969
        %v1971 = vpop.f32.mrf.mxu0
        %v1972 = vadd.f32 0.0, %v1971
        %v1973 = vpop.f32.mrf.mxu0
        %v1974 = vadd.f32 0.0, %v1973
        %v1975 = vpop.f32.mrf.mxu0
        %v1976 = vadd.f32 0.0, %v1975
        %1977 = vdwg.mxu0
        %v1978 = vadd.f32 %v1524, %v1841
        %v1979 = vadd.f32 %v1525, %v1843
        %v1980 = vadd.f32 %v1526, %v1884
        %v1981 = vadd.f32 %v1527, %v1886
        %v1982 = vadd.f32 %v1528, %v1927
        %v1983 = vadd.f32 %v1529, %v1929
        %v1984 = vadd.f32 %v1530, %v1970
        %v1985 = vadd.f32 %v1531, %v1972
        %v1986 = vadd.f32 %v1532, %v1845
        %v1987 = vadd.f32 %v1533, %v1847
        %v1988 = vadd.f32 %v1534, %v1888
        %v1989 = vadd.f32 %v1535, %v1890
        %v1990 = vadd.f32 %v1536, %v1931
        %v1991 = vadd.f32 %v1537, %v1933
        %v1992 = vadd.f32 %v1538, %v1974
        %v1993 = vadd.f32 %v1539, %v1976
        %v1994 = vld [vmem:[#allocation2] sm:$0xc]
        %s1995 = scalar_lea.vmem [#allocation3], 1280
        %v1996 = vld [vmem:[%s1995] sm:$0xff]
        %v1997 = vld [vmem:[%s1995 + $0x8] sm:$0xff]
        %v1998 = vld [vmem:[%s1995 + $0x10] sm:$0xff]
        %v1999 = vld [vmem:[%s1995 + $0x18] sm:$0xff]
        %v2000 = vld [vmem:[%s1995 + $0x20] sm:$0xff]
        %v2001 = vld [vmem:[%s1995 + $0x28] sm:$0xff]
        %v2002 = vld [vmem:[%s1995 + $0x30] sm:$0xff]
        %v2003 = vld [vmem:[%s1995 + $0x38] sm:$0xff]
        %v2004 = vld [vmem:[%s1995 + $0x40] sm:$0xff]
        %v2005 = vld [vmem:[%s1995 + $0x48] sm:$0xff]
        %v2006 = vld [vmem:[%s1995 + $0x50] sm:$0xff]
        %v2007 = vld [vmem:[%s1995 + $0x58] sm:$0xff]
        %v2008 = vld [vmem:[%s1995 + $0x60] sm:$0xff]
        %v2009 = vld [vmem:[%s1995 + $0x68] sm:$0xff]
        %v2010 = vld [vmem:[%s1995 + $0x70] sm:$0xff]
        %v2011 = vld [vmem:[%s1995 + $0x78] sm:$0xff]
        %v2012 = vld [vmem:[%s1995 + $0x80] sm:$0xff]
        %v2013 = vld [vmem:[%s1995 + $0x88] sm:$0xff]
        %v2014 = vld [vmem:[%s1995 + $0x90] sm:$0xff]
        %v2015 = vld [vmem:[%s1995 + $0x98] sm:$0xff]
        %v2016 = vld [vmem:[%s1995 + $0xa0] sm:$0xff]
        %v2017 = vld [vmem:[%s1995 + $0xa8] sm:$0xff]
        %v2018 = vld [vmem:[%s1995 + $0xb0] sm:$0xff]
        %v2019 = vld [vmem:[%s1995 + $0xb8] sm:$0xff]
        %v2020 = vld [vmem:[%s1995 + $0xc0] sm:$0xff]
        %v2021 = vld [vmem:[%s1995 + $0xc8] sm:$0xff]
        %v2022 = vld [vmem:[%s1995 + $0xd0] sm:$0xff]
        %v2023 = vld [vmem:[%s1995 + $0xd8] sm:$0xff]
        %v2024 = vld [vmem:[%s1995 + $0xe0] sm:$0xff]
        %v2025 = vld [vmem:[%s1995 + $0xe8] sm:$0xff]
        %v2026 = vld [vmem:[%s1995 + $0xf0] sm:$0xff]
        %v2027 = vld [vmem:[%s1995 + $0xf8] sm:$0xff]
        %v2028 = vld [vmem:[%s1995 + $0x100] sm:$0xff]
        %v2029 = vld [vmem:[%s1995 + $0x108] sm:$0xff]
        %v2030 = vld [vmem:[%s1995 + $0x110] sm:$0xff]
        %v2031 = vld [vmem:[%s1995 + $0x118] sm:$0xff]
        %v2032 = vld [vmem:[%s1995 + $0x120] sm:$0xff]
        %v2033 = vld [vmem:[%s1995 + $0x128] sm:$0xff]
        %v2034 = vld [vmem:[%s1995 + $0x130] sm:$0xff]
        %v2035 = vld [vmem:[%s1995 + $0x138] sm:$0xff]
        %v2037 = vunpack.c.l.b16 %v1994
        %v2038 = vpack.c.b16 %v333, %v2037
        %vm2039 = vcmask 1045504
        %v2040 = vrot.slane %v2038, 2
        %v2041 = vrot.slane %v1584, 2
        %v2042 = vsel %vm2039, %v2040, %v2041
        %v2083 = vunpack.c.l.b16 %v1996
        %v2084 = vunpack.c.h.b16 %v1996
        %v2085 = vunpack.c.l.b16 %v1997
        %v2086 = vunpack.c.h.b16 %v1997
        %v2087 = vunpack.c.l.b16 %v1998
        %v2088 = vunpack.c.h.b16 %v1998
        %v2089 = vunpack.c.l.b16 %v1999
        %v2090 = vunpack.c.h.b16 %v1999
        %v2091 = vunpack.c.l.b16 %v2000
        %v2092 = vunpack.c.h.b16 %v2000
        %v2093 = vunpack.c.l.b16 %v2001
        %v2094 = vunpack.c.h.b16 %v2001
        %v2095 = vunpack.c.l.b16 %v2002
        %v2096 = vunpack.c.h.b16 %v2002
        %v2097 = vunpack.c.l.b16 %v2003
        %v2098 = vunpack.c.h.b16 %v2003
        %v2099 = vunpack.c.l.b16 %v2004
        %v2100 = vunpack.c.h.b16 %v2004
        %v2101 = vunpack.c.l.b16 %v2005
        %v2102 = vunpack.c.h.b16 %v2005
        %v2103 = vunpack.c.l.b16 %v2006
        %v2104 = vunpack.c.h.b16 %v2006
        %v2105 = vunpack.c.l.b16 %v2007
        %v2106 = vunpack.c.h.b16 %v2007
        %v2107 = vunpack.c.l.b16 %v2008
        %v2108 = vunpack.c.h.b16 %v2008
        %v2109 = vunpack.c.l.b16 %v2009
        %v2110 = vunpack.c.h.b16 %v2009
        %v2111 = vunpack.c.l.b16 %v2010
        %v2112 = vunpack.c.h.b16 %v2010
        %v2113 = vunpack.c.l.b16 %v2011
        %v2114 = vunpack.c.h.b16 %v2011
        %v2115 = vunpack.c.l.b16 %v2012
        %v2116 = vunpack.c.h.b16 %v2012
        %v2117 = vunpack.c.l.b16 %v2013
        %v2118 = vunpack.c.h.b16 %v2013
        %v2119 = vunpack.c.l.b16 %v2014
        %v2120 = vunpack.c.h.b16 %v2014
        %v2121 = vunpack.c.l.b16 %v2015
        %v2122 = vunpack.c.h.b16 %v2015
        %v2123 = vunpack.c.l.b16 %v2016
        %v2124 = vunpack.c.h.b16 %v2016
        %v2125 = vunpack.c.l.b16 %v2017
        %v2126 = vunpack.c.h.b16 %v2017
        %v2127 = vunpack.c.l.b16 %v2018
        %v2128 = vunpack.c.h.b16 %v2018
        %v2129 = vunpack.c.l.b16 %v2019
        %v2130 = vunpack.c.h.b16 %v2019
        %v2131 = vunpack.c.l.b16 %v2020
        %v2132 = vunpack.c.h.b16 %v2020
        %v2133 = vunpack.c.l.b16 %v2021
        %v2134 = vunpack.c.h.b16 %v2021
        %v2135 = vunpack.c.l.b16 %v2022
        %v2136 = vunpack.c.h.b16 %v2022
        %v2137 = vunpack.c.l.b16 %v2023
        %v2138 = vunpack.c.h.b16 %v2023
        %v2139 = vunpack.c.l.b16 %v2024
        %v2140 = vunpack.c.h.b16 %v2024
        %v2141 = vunpack.c.l.b16 %v2025
        %v2142 = vunpack.c.h.b16 %v2025
        %v2143 = vunpack.c.l.b16 %v2026
        %v2144 = vunpack.c.h.b16 %v2026
        %v2145 = vunpack.c.l.b16 %v2027
        %v2146 = vunpack.c.h.b16 %v2027
        %v2147 = vunpack.c.l.b16 %v2028
        %v2148 = vunpack.c.h.b16 %v2028
        %v2149 = vunpack.c.l.b16 %v2029
        %v2150 = vunpack.c.h.b16 %v2029
        %v2151 = vunpack.c.l.b16 %v2030
        %v2152 = vunpack.c.h.b16 %v2030
        %v2153 = vunpack.c.l.b16 %v2031
        %v2154 = vunpack.c.h.b16 %v2031
        %v2155 = vunpack.c.l.b16 %v2032
        %v2156 = vunpack.c.h.b16 %v2032
        %v2157 = vunpack.c.l.b16 %v2033
        %v2158 = vunpack.c.h.b16 %v2033
        %v2159 = vunpack.c.l.b16 %v2034
        %v2160 = vunpack.c.h.b16 %v2034
        %v2161 = vunpack.c.l.b16 %v2035
        %v2162 = vunpack.c.h.b16 %v2035
        %v2163 = vpack.c.b16 %v2091, %v2083
        %v2164 = vpack.c.b16 %v2092, %v2084
        %v2165 = vpack.c.b16 %v2093, %v2085
        %v2166 = vpack.c.b16 %v2094, %v2086
        %v2167 = vpack.c.b16 %v2095, %v2087
        %v2168 = vpack.c.b16 %v2096, %v2088
        %v2169 = vpack.c.b16 %v2097, %v2089
        %v2170 = vpack.c.b16 %v2098, %v2090
        %v2171 = vpack.c.b16 %v2107, %v2099
        %v2172 = vpack.c.b16 %v2108, %v2100
        %v2173 = vpack.c.b16 %v2109, %v2101
        %v2174 = vpack.c.b16 %v2110, %v2102
        %v2175 = vpack.c.b16 %v2111, %v2103
        %v2176 = vpack.c.b16 %v2112, %v2104
        %v2177 = vpack.c.b16 %v2113, %v2105
        %v2178 = vpack.c.b16 %v2114, %v2106
        %v2179 = vpack.c.b16 %v2123, %v2115
        %v2180 = vpack.c.b16 %v2124, %v2116
        %v2181 = vpack.c.b16 %v2125, %v2117
        %v2182 = vpack.c.b16 %v2126, %v2118
        %v2183 = vpack.c.b16 %v2127, %v2119
        %v2184 = vpack.c.b16 %v2128, %v2120
        %v2185 = vpack.c.b16 %v2129, %v2121
        %v2186 = vpack.c.b16 %v2130, %v2122
        %v2187 = vpack.c.b16 %v2139, %v2131
        %v2188 = vpack.c.b16 %v2140, %v2132
        %v2189 = vpack.c.b16 %v2141, %v2133
        %v2190 = vpack.c.b16 %v2142, %v2134
        %v2191 = vpack.c.b16 %v2143, %v2135
        %v2192 = vpack.c.b16 %v2144, %v2136
        %v2193 = vpack.c.b16 %v2145, %v2137
        %v2194 = vpack.c.b16 %v2146, %v2138
        %v2195 = vpack.c.b16 %v2155, %v2147
        %v2196 = vpack.c.b16 %v2156, %v2148
        %v2197 = vpack.c.b16 %v2157, %v2149
        %v2198 = vpack.c.b16 %v2158, %v2150
        %v2199 = vpack.c.b16 %v2159, %v2151
        %v2200 = vpack.c.b16 %v2160, %v2152
        %v2201 = vpack.c.b16 %v2161, %v2153
        %v2202 = vpack.c.b16 %v2162, %v2154
        %v2244 = vsel %vm550, %v2042, 0
        %2246 = vmatprep.subr.bf16.mxu0 0
        %2247 = vmatpush1.bf16.msra.mxu0 0
        %2248 = vmatprep.subr.bf16.mxu0 0
        %2249 = vmatpush1.bf16.msra.mxu0 0
        %2250 = vmatprep.subr.bf16.mxu0 0
        %2251 = vmatpush1.bf16.msra.mxu0 0
        %2252 = vmatprep.subr.bf16.mxu0 %v2196
        %2253 = vmatpush1.bf16.msra.mxu0 %v2195
        %2254 = vmatprep.subr.bf16.mxu0 %v2188
        %2255 = vmatpush1.bf16.msra.mxu0 %v2187
        %2256 = vmatprep.subr.bf16.mxu0 %v2180
        %2257 = vmatpush1.bf16.msra.mxu0 %v2179
        %2258 = vmatprep.subr.bf16.mxu0 %v2172
        %2259 = vmatpush1.bf16.msra.mxu0 %v2171
        %2260 = vmatprep.subr.bf16.mxu0 %v2164
        %2261 = vmatpush1.bf16.msra.mxu0 %v2163
        %2262 = vmatprep.subr.bf16.mxu0 0
        %2263 = vmatpush2.bf16.msra.mxu0 0
        %2264 = vmatprep.subr.bf16.mxu0 0
        %2265 = vmatpush2.bf16.msra.mxu0 0
        %2266 = vmatprep.subr.bf16.mxu0 0
        %2267 = vmatpush2.bf16.msra.mxu0 0
        %2268 = vmatprep.subr.bf16.mxu0 0
        %2269 = vmatpush2.bf16.msra.mxu0 0
        %2270 = vmatprep.subr.bf16.mxu0 0
        %2271 = vmatpush2.bf16.msra.mxu0 0
        %2272 = vmatprep.subr.bf16.mxu0 0
        %2273 = vmatpush2.bf16.msra.mxu0 0
        %2274 = vmatprep.subr.bf16.mxu0 0
        %2275 = vmatpush2.bf16.msra.mxu0 0
        %2276 = vmatprep.subr.bf16.mxu0 0
        %2277 = vmatpush2.bf16.msra.mxu0 0
        %2278 = vmatprep.mubr.bf16.mxu0 0
        %2279 = vmatmul.mubr.bf16.gmra.mxu0 %v2244
        %v2280 = vpop.f32.mrf.mxu0
        %v2281 = vadd.f32 0.0, %v2280
        %v2282 = vpop.f32.mrf.mxu0
        %v2283 = vadd.f32 0.0, %v2282
        %v2284 = vpop.f32.mrf.mxu0
        %v2285 = vadd.f32 0.0, %v2284
        %v2286 = vpop.f32.mrf.mxu0
        %v2287 = vadd.f32 0.0, %v2286
        %2288 = vdwg.mxu0
        %2289 = vmatprep.subr.bf16.mxu0 0
        %2290 = vmatpush1.bf16.msra.mxu0 0
        %2291 = vmatprep.subr.bf16.mxu0 0
        %2292 = vmatpush1.bf16.msra.mxu0 0
        %2293 = vmatprep.subr.bf16.mxu0 0
        %2294 = vmatpush1.bf16.msra.mxu0 0
        %2295 = vmatprep.subr.bf16.mxu0 %v2198
        %2296 = vmatpush1.bf16.msra.mxu0 %v2197
        %2297 = vmatprep.subr.bf16.mxu0 %v2190
        %2298 = vmatpush1.bf16.msra.mxu0 %v2189
        %2299 = vmatprep.subr.bf16.mxu0 %v2182
        %2300 = vmatpush1.bf16.msra.mxu0 %v2181
        %2301 = vmatprep.subr.bf16.mxu0 %v2174
        %2302 = vmatpush1.bf16.msra.mxu0 %v2173
        %2303 = vmatprep.subr.bf16.mxu0 %v2166
        %2304 = vmatpush1.bf16.msra.mxu0 %v2165
        %2305 = vmatprep.subr.bf16.mxu0 0
        %2306 = vmatpush2.bf16.msra.mxu0 0
        %2307 = vmatprep.subr.bf16.mxu0 0
        %2308 = vmatpush2.bf16.msra.mxu0 0
        %2309 = vmatprep.subr.bf16.mxu0 0
        %2310 = vmatpush2.bf16.msra.mxu0 0
        %2311 = vmatprep.subr.bf16.mxu0 0
        %2312 = vmatpush2.bf16.msra.mxu0 0
        %2313 = vmatprep.subr.bf16.mxu0 0
        %2314 = vmatpush2.bf16.msra.mxu0 0
        %2315 = vmatprep.subr.bf16.mxu0 0
        %2316 = vmatpush2.bf16.msra.mxu0 0
        %2317 = vmatprep.subr.bf16.mxu0 0
        %2318 = vmatpush2.bf16.msra.mxu0 0
        %2319 = vmatprep.subr.bf16.mxu0 0
        %2320 = vmatpush2.bf16.msra.mxu0 0
        %2321 = vmatprep.mubr.bf16.mxu0 0
        %2322 = vmatmul.mubr.bf16.gmra.mxu0 %v2244
        %v2323 = vpop.f32.mrf.mxu0
        %v2324 = vadd.f32 0.0, %v2323
        %v2325 = vpop.f32.mrf.mxu0
        %v2326 = vadd.f32 0.0, %v2325
        %v2327 = vpop.f32.mrf.mxu0
        %v2328 = vadd.f32 0.0, %v2327
        %v2329 = vpop.f32.mrf.mxu0
        %v2330 = vadd.f32 0.0, %v2329
        %2331 = vdwg.mxu0
        %2332 = vmatprep.subr.bf16.mxu0 0
        %2333 = vmatpush1.bf16.msra.mxu0 0
        %2334 = vmatprep.subr.bf16.mxu0 0
        %2335 = vmatpush1.bf16.msra.mxu0 0
        %2336 = vmatprep.subr.bf16.mxu0 0
        %2337 = vmatpush1.bf16.msra.mxu0 0
        %2338 = vmatprep.subr.bf16.mxu0 %v2200
        %2339 = vmatpush1.bf16.msra.mxu0 %v2199
        %2340 = vmatprep.subr.bf16.mxu0 %v2192
        %2341 = vmatpush1.bf16.msra.mxu0 %v2191
        %2342 = vmatprep.subr.bf16.mxu0 %v2184
        %2343 = vmatpush1.bf16.msra.mxu0 %v2183
        %2344 = vmatprep.subr.bf16.mxu0 %v2176
        %2345 = vmatpush1.bf16.msra.mxu0 %v2175
        %2346 = vmatprep.subr.bf16.mxu0 %v2168
        %2347 = vmatpush1.bf16.msra.mxu0 %v2167
        %2348 = vmatprep.subr.bf16.mxu0 0
        %2349 = vmatpush2.bf16.msra.mxu0 0
        %2350 = vmatprep.subr.bf16.mxu0 0
        %2351 = vmatpush2.bf16.msra.mxu0 0
        %2352 = vmatprep.subr.bf16.mxu0 0
        %2353 = vmatpush2.bf16.msra.mxu0 0
        %2354 = vmatprep.subr.bf16.mxu0 0
        %2355 = vmatpush2.bf16.msra.mxu0 0
        %2356 = vmatprep.subr.bf16.mxu0 0
        %2357 = vmatpush2.bf16.msra.mxu0 0
        %2358 = vmatprep.subr.bf16.mxu0 0
        %2359 = vmatpush2.bf16.msra.mxu0 0
        %2360 = vmatprep.subr.bf16.mxu0 0
        %2361 = vmatpush2.bf16.msra.mxu0 0
        %2362 = vmatprep.subr.bf16.mxu0 0
        %2363 = vmatpush2.bf16.msra.mxu0 0
        %2364 = vmatprep.mubr.bf16.mxu0 0
        %2365 = vmatmul.mubr.bf16.gmra.mxu0 %v2244
        %v2366 = vpop.f32.mrf.mxu0
        %v2367 = vadd.f32 0.0, %v2366
        %v2368 = vpop.f32.mrf.mxu0
        %v2369 = vadd.f32 0.0, %v2368
        %v2370 = vpop.f32.mrf.mxu0
        %v2371 = vadd.f32 0.0, %v2370
        %v2372 = vpop.f32.mrf.mxu0
        %v2373 = vadd.f32 0.0, %v2372
        %2374 = vdwg.mxu0
        %2375 = vmatprep.subr.bf16.mxu0 0
        %2376 = vmatpush1.bf16.msra.mxu0 0
        %2377 = vmatprep.subr.bf16.mxu0 0
        %2378 = vmatpush1.bf16.msra.mxu0 0
        %2379 = vmatprep.subr.bf16.mxu0 0
        %2380 = vmatpush1.bf16.msra.mxu0 0
        %2381 = vmatprep.subr.bf16.mxu0 %v2202
        %2382 = vmatpush1.bf16.msra.mxu0 %v2201
        %2383 = vmatprep.subr.bf16.mxu0 %v2194
        %2384 = vmatpush1.bf16.msra.mxu0 %v2193
        %2385 = vmatprep.subr.bf16.mxu0 %v2186
        %2386 = vmatpush1.bf16.msra.mxu0 %v2185
        %2387 = vmatprep.subr.bf16.mxu0 %v2178
        %2388 = vmatpush1.bf16.msra.mxu0 %v2177
        %2389 = vmatprep.subr.bf16.mxu0 %v2170
        %2390 = vmatpush1.bf16.msra.mxu0 %v2169
        %2391 = vmatprep.subr.bf16.mxu0 0
        %2392 = vmatpush2.bf16.msra.mxu0 0
        %2393 = vmatprep.subr.bf16.mxu0 0
        %2394 = vmatpush2.bf16.msra.mxu0 0
        %2395 = vmatprep.subr.bf16.mxu0 0
        %2396 = vmatpush2.bf16.msra.mxu0 0
        %2397 = vmatprep.subr.bf16.mxu0 0
        %2398 = vmatpush2.bf16.msra.mxu0 0
        %2399 = vmatprep.subr.bf16.mxu0 0
        %2400 = vmatpush2.bf16.msra.mxu0 0
        %2401 = vmatprep.subr.bf16.mxu0 0
        %2402 = vmatpush2.bf16.msra.mxu0 0
        %2403 = vmatprep.subr.bf16.mxu0 0
        %2404 = vmatpush2.bf16.msra.mxu0 0
        %2405 = vmatprep.subr.bf16.mxu0 0
        %2406 = vmatpush2.bf16.msra.mxu0 0
        %2407 = vmatprep.mubr.bf16.mxu0 0
        %2408 = vmatmul.mubr.bf16.gmra.mxu0 %v2244
        %v2409 = vpop.f32.mrf.mxu0
        %v2410 = vadd.f32 0.0, %v2409
        %v2411 = vpop.f32.mrf.mxu0
        %v2412 = vadd.f32 0.0, %v2411
        %v2413 = vpop.f32.mrf.mxu0
        %v2414 = vadd.f32 0.0, %v2413
        %v2415 = vpop.f32.mrf.mxu0
        %v2416 = vadd.f32 0.0, %v2415
        %2417 = vdwg.mxu0
        %v2418 = vadd.f32 %v1978, %v2281
        %v2419 = vadd.f32 %v1979, %v2283
        %v2420 = vadd.f32 %v1980, %v2324
        %v2421 = vadd.f32 %v1981, %v2326
        %v2422 = vadd.f32 %v1982, %v2367
        %v2423 = vadd.f32 %v1983, %v2369
        %v2424 = vadd.f32 %v1984, %v2410
        %v2425 = vadd.f32 %v1985, %v2412
        %v2426 = vadd.f32 %v1986, %v2285
        %v2427 = vadd.f32 %v1987, %v2287
        %v2428 = vadd.f32 %v1988, %v2328
        %v2429 = vadd.f32 %v1989, %v2330
        %v2430 = vadd.f32 %v1990, %v2371
        %v2431 = vadd.f32 %v1991, %v2373
        %v2432 = vadd.f32 %v1992, %v2414
        %v2433 = vadd.f32 %v1993, %v2416
        %v2434 = vld [vmem:[#allocation5] sm:$0xff]
        %v2436 = vlaneseq
        %v2437 = vshrl.u32 %v2436, 7
        %v2438 = vsub.s32 0, %v2437
        %v2439 = vrot.slane %v2434, %v2438
        %v2440 = vlaneseq
        %v2441 = vshrl.u32 %v2440, 7
        %v2442 = vsub.s32 1, %v2441
        %v2443 = vrot.slane %v2434, %v2442
        %v2444 = vlaneseq
        %v2445 = vshrl.u32 %v2444, 7
        %v2446 = vsub.s32 2, %v2445
        %v2447 = vrot.slane %v2434, %v2446
        %v2448 = vlaneseq
        %v2449 = vshrl.u32 %v2448, 7
        %v2450 = vsub.s32 3, %v2449
        %v2451 = vrot.slane %v2434, %v2450
        %v2452 = vlaneseq
        %v2453 = vshrl.u32 %v2452, 7
        %v2454 = vsub.s32 4, %v2453
        %v2455 = vrot.slane %v2434, %v2454
        %v2456 = vlaneseq
        %v2457 = vshrl.u32 %v2456, 7
        %v2458 = vsub.s32 5, %v2457
        %v2459 = vrot.slane %v2434, %v2458
        %v2460 = vlaneseq
        %v2461 = vshrl.u32 %v2460, 7
        %v2462 = vsub.s32 6, %v2461
        %v2463 = vrot.slane %v2434, %v2462
        %v2464 = vlaneseq
        %v2465 = vshrl.u32 %v2464, 7
        %v2466 = vsub.s32 7, %v2465
        %v2467 = vrot.slane %v2434, %v2466
        %v2476 = vadd.f32 %v2418, %v2439
        %v2477 = vadd.f32 %v2419, %v2443
        %v2478 = vadd.f32 %v2420, %v2447
        %v2479 = vadd.f32 %v2421, %v2451
        %v2480 = vadd.f32 %v2422, %v2455
        %v2481 = vadd.f32 %v2423, %v2459
        %v2482 = vadd.f32 %v2424, %v2463
        %v2483 = vadd.f32 %v2425, %v2467
        %v2484 = vadd.f32 %v2426, %v2439
        %v2485 = vadd.f32 %v2427, %v2443
        %v2486 = vadd.f32 %v2428, %v2447
        %v2487 = vadd.f32 %v2429, %v2451
        %v2488 = vadd.f32 %v2430, %v2455
        %v2489 = vadd.f32 %v2431, %v2459
        %v2490 = vadd.f32 %v2432, %v2463
        %v2491 = vadd.f32 %v2433, %v2467
        %v2492 = vmul.f32 %v2476, 0.5
        %v2493 = vmul.f32 %v2477, 0.5
        %v2494 = vmul.f32 %v2478, 0.5
        %v2495 = vmul.f32 %v2479, 0.5
        %v2496 = vmul.f32 %v2480, 0.5
        %v2497 = vmul.f32 %v2481, 0.5
        %v2498 = vmul.f32 %v2482, 0.5
        %v2499 = vmul.f32 %v2483, 0.5
        %v2500 = vmul.f32 %v2484, 0.5
        %v2501 = vmul.f32 %v2485, 0.5
        %v2502 = vmul.f32 %v2486, 0.5
        %v2503 = vmul.f32 %v2487, 0.5
        %v2504 = vmul.f32 %v2488, 0.5
        %v2505 = vmul.f32 %v2489, 0.5
        %v2506 = vmul.f32 %v2490, 0.5
        %v2507 = vmul.f32 %v2491, 0.5
        %v2508 = vmul.f32 %v2476, 0.044715
        %v2509 = vmul.f32 %v2477, 0.044715
        %v2510 = vmul.f32 %v2478, 0.044715
        %v2511 = vmul.f32 %v2479, 0.044715
        %v2512 = vmul.f32 %v2480, 0.044715
        %v2513 = vmul.f32 %v2481, 0.044715
        %v2514 = vmul.f32 %v2482, 0.044715
        %v2515 = vmul.f32 %v2483, 0.044715
        %v2516 = vmul.f32 %v2484, 0.044715
        %v2517 = vmul.f32 %v2485, 0.044715
        %v2518 = vmul.f32 %v2486, 0.044715
        %v2519 = vmul.f32 %v2487, 0.044715
        %v2520 = vmul.f32 %v2488, 0.044715
        %v2521 = vmul.f32 %v2489, 0.044715
        %v2522 = vmul.f32 %v2490, 0.044715
        %v2523 = vmul.f32 %v2491, 0.044715
        %v2524 = vmul.f32 %v2508, %v2476
        %v2525 = vmul.f32 %v2509, %v2477
        %v2526 = vmul.f32 %v2510, %v2478
        %v2527 = vmul.f32 %v2511, %v2479
        %v2528 = vmul.f32 %v2512, %v2480
        %v2529 = vmul.f32 %v2513, %v2481
        %v2530 = vmul.f32 %v2514, %v2482
        %v2531 = vmul.f32 %v2515, %v2483
        %v2532 = vmul.f32 %v2516, %v2484
        %v2533 = vmul.f32 %v2517, %v2485
        %v2534 = vmul.f32 %v2518, %v2486
        %v2535 = vmul.f32 %v2519, %v2487
        %v2536 = vmul.f32 %v2520, %v2488
        %v2537 = vmul.f32 %v2521, %v2489
        %v2538 = vmul.f32 %v2522, %v2490
        %v2539 = vmul.f32 %v2523, %v2491
        %v2540 = vmul.f32 %v2524, %v2476
        %v2541 = vmul.f32 %v2525, %v2477
        %v2542 = vmul.f32 %v2526, %v2478
        %v2543 = vmul.f32 %v2527, %v2479
        %v2544 = vmul.f32 %v2528, %v2480
        %v2545 = vmul.f32 %v2529, %v2481
        %v2546 = vmul.f32 %v2530, %v2482
        %v2547 = vmul.f32 %v2531, %v2483
        %v2548 = vmul.f32 %v2532, %v2484
        %v2549 = vmul.f32 %v2533, %v2485
        %v2550 = vmul.f32 %v2534, %v2486
        %v2551 = vmul.f32 %v2535, %v2487
        %v2552 = vmul.f32 %v2536, %v2488
        %v2553 = vmul.f32 %v2537, %v2489
        %v2554 = vmul.f32 %v2538, %v2490
        %v2555 = vmul.f32 %v2539, %v2491
        %v2556 = vadd.f32 %v2476, %v2540
        %v2557 = vadd.f32 %v2477, %v2541
        %v2558 = vadd.f32 %v2478, %v2542
        %v2559 = vadd.f32 %v2479, %v2543
        %v2560 = vadd.f32 %v2480, %v2544
        %v2561 = vadd.f32 %v2481, %v2545
        %v2562 = vadd.f32 %v2482, %v2546
        %v2563 = vadd.f32 %v2483, %v2547
        %v2564 = vadd.f32 %v2484, %v2548
        %v2565 = vadd.f32 %v2485, %v2549
        %v2566 = vadd.f32 %v2486, %v2550
        %v2567 = vadd.f32 %v2487, %v2551
        %v2568 = vadd.f32 %v2488, %v2552
        %v2569 = vadd.f32 %v2489, %v2553
        %v2570 = vadd.f32 %v2490, %v2554
        %v2571 = vadd.f32 %v2491, %v2555
        %v2572 = vmul.f32 %v2556, 0.7978846
        %v2573 = vmul.f32 %v2557, 0.7978846
        %v2574 = vmul.f32 %v2558, 0.7978846
        %v2575 = vmul.f32 %v2559, 0.7978846
        %v2576 = vmul.f32 %v2560, 0.7978846
        %v2577 = vmul.f32 %v2561, 0.7978846
        %v2578 = vmul.f32 %v2562, 0.7978846
        %v2579 = vmul.f32 %v2563, 0.7978846
        %v2580 = vmul.f32 %v2564, 0.7978846
        %v2581 = vmul.f32 %v2565, 0.7978846
        %v2582 = vmul.f32 %v2566, 0.7978846
        %v2583 = vmul.f32 %v2567, 0.7978846
        %v2584 = vmul.f32 %v2568, 0.7978846
        %v2585 = vmul.f32 %v2569, 0.7978846
        %v2586 = vmul.f32 %v2570, 0.7978846
        %v2587 = vmul.f32 %v2571, 0.7978846
        %v2588 = vtanh.pop %v2572
        %v2589 = vtanh.pop %v2573
        %v2590 = vtanh.pop %v2574
        %v2591 = vtanh.pop %v2575
        %v2592 = vtanh.pop %v2576
        %v2593 = vtanh.pop %v2577
        %v2594 = vtanh.pop %v2578
        %v2595 = vtanh.pop %v2579
        %v2596 = vtanh.pop %v2580
        %v2597 = vtanh.pop %v2581
        %v2598 = vtanh.pop %v2582
        %v2599 = vtanh.pop %v2583
        %v2600 = vtanh.pop %v2584
        %v2601 = vtanh.pop %v2585
        %v2602 = vtanh.pop %v2586
        %v2603 = vtanh.pop %v2587
        %v2604 = vadd.f32 %v2588, 1.0
        %v2605 = vadd.f32 %v2589, 1.0
        %v2606 = vadd.f32 %v2590, 1.0
        %v2607 = vadd.f32 %v2591, 1.0
        %v2608 = vadd.f32 %v2592, 1.0
        %v2609 = vadd.f32 %v2593, 1.0
        %v2610 = vadd.f32 %v2594, 1.0
        %v2611 = vadd.f32 %v2595, 1.0
        %v2612 = vadd.f32 %v2596, 1.0
        %v2613 = vadd.f32 %v2597, 1.0
        %v2614 = vadd.f32 %v2598, 1.0
        %v2615 = vadd.f32 %v2599, 1.0
        %v2616 = vadd.f32 %v2600, 1.0
        %v2617 = vadd.f32 %v2601, 1.0
        %v2618 = vadd.f32 %v2602, 1.0
        %v2619 = vadd.f32 %v2603, 1.0
        %v2620 = vmul.f32 %v2492, %v2604
        %v2621 = vmul.f32 %v2493, %v2605
        %v2622 = vmul.f32 %v2494, %v2606
        %v2623 = vmul.f32 %v2495, %v2607
        %v2624 = vmul.f32 %v2496, %v2608
        %v2625 = vmul.f32 %v2497, %v2609
        %v2626 = vmul.f32 %v2498, %v2610
        %v2627 = vmul.f32 %v2499, %v2611
        %v2628 = vmul.f32 %v2500, %v2612
        %v2629 = vmul.f32 %v2501, %v2613
        %v2630 = vmul.f32 %v2502, %v2614
        %v2631 = vmul.f32 %v2503, %v2615
        %v2632 = vmul.f32 %v2504, %v2616
        %v2633 = vmul.f32 %v2505, %v2617
        %v2634 = vmul.f32 %v2506, %v2618
        %v2635 = vmul.f32 %v2507, %v2619
        %v2652 = vcombine.low %v2620, %v2621
        %v2653 = vcombine.high %v2620, %v2621
        %v2654 = vcombine.low %v2622, %v2623
        %v2655 = vcombine.high %v2622, %v2623
        %v2657 = vunpack.c.l.s4 1983009808
        %v2658 = vunpack.c.0.s8 %v2657
        %v2659 = vlaneseq
        %v2660 = vshrl.u32 %v2659, 7
        %v2661 = vsub.s32 %v2658, %v2660
        %v2662 = vrot.slane %v2652, %v2661
        %v2664 = vunpack.c.l.s4 1983009808
        %v2665 = vunpack.c.0.s8 %v2664
        %v2666 = vlaneseq
        %v2667 = vshrl.u32 %v2666, 7
        %v2668 = vsub.s32 %v2665, %v2667
        %v2669 = vrot.slane %v2653, %v2668
        %v2671 = vunpack.c.l.s4 1983009808
        %v2672 = vunpack.c.0.s8 %v2671
        %v2673 = vlaneseq
        %v2674 = vshrl.u32 %v2673, 7
        %v2675 = vsub.s32 %v2672, %v2674
        %v2676 = vrot.slane %v2654, %v2675
        %v2678 = vunpack.c.l.s4 1983009808
        %v2679 = vunpack.c.0.s8 %v2678
        %v2680 = vlaneseq
        %v2681 = vshrl.u32 %v2680, 7
        %v2682 = vsub.s32 %v2679, %v2681
        %v2683 = vrot.slane %v2655, %v2682
        %v2684 = vcombine.low %v2662, %v2676
        %v2685 = vcombine.high %v2662, %v2676
        %v2686 = vcombine.low %v2669, %v2683
        %v2687 = vcombine.high %v2669, %v2683
        %v2688 = vcombine.low %v2624, %v2625
        %v2689 = vcombine.high %v2624, %v2625
        %v2690 = vcombine.low %v2626, %v2627
        %v2691 = vcombine.high %v2626, %v2627
        %v2693 = vunpack.c.l.s4 1983009808
        %v2694 = vunpack.c.0.s8 %v2693
        %v2695 = vlaneseq
        %v2696 = vshrl.u32 %v2695, 7
        %v2697 = vsub.s32 %v2694, %v2696
        %v2698 = vrot.slane %v2688, %v2697
        %v2700 = vunpack.c.l.s4 1983009808
        %v2701 = vunpack.c.0.s8 %v2700
        %v2702 = vlaneseq
        %v2703 = vshrl.u32 %v2702, 7
        %v2704 = vsub.s32 %v2701, %v2703
        %v2705 = vrot.slane %v2689, %v2704
        %v2707 = vunpack.c.l.s4 1983009808
        %v2708 = vunpack.c.0.s8 %v2707
        %v2709 = vlaneseq
        %v2710 = vshrl.u32 %v2709, 7
        %v2711 = vsub.s32 %v2708, %v2710
        %v2712 = vrot.slane %v2690, %v2711
        %v2714 = vunpack.c.l.s4 1983009808
        %v2715 = vunpack.c.0.s8 %v2714
        %v2716 = vlaneseq
        %v2717 = vshrl.u32 %v2716, 7
        %v2718 = vsub.s32 %v2715, %v2717
        %v2719 = vrot.slane %v2691, %v2718
        %v2720 = vcombine.low %v2698, %v2712
        %v2721 = vcombine.high %v2698, %v2712
        %v2722 = vcombine.low %v2705, %v2719
        %v2723 = vcombine.high %v2705, %v2719
        %v2724 = vcombine.low %v2628, %v2629
        %v2725 = vcombine.high %v2628, %v2629
        %v2726 = vcombine.low %v2630, %v2631
        %v2727 = vcombine.high %v2630, %v2631
        %v2729 = vunpack.c.l.s4 1983009808
        %v2730 = vunpack.c.0.s8 %v2729
        %v2731 = vlaneseq
        %v2732 = vshrl.u32 %v2731, 7
        %v2733 = vsub.s32 %v2730, %v2732
        %v2734 = vrot.slane %v2724, %v2733
        %v2736 = vunpack.c.l.s4 1983009808
        %v2737 = vunpack.c.0.s8 %v2736
        %v2738 = vlaneseq
        %v2739 = vshrl.u32 %v2738, 7
        %v2740 = vsub.s32 %v2737, %v2739
        %v2741 = vrot.slane %v2725, %v2740
        %v2743 = vunpack.c.l.s4 1983009808
        %v2744 = vunpack.c.0.s8 %v2743
        %v2745 = vlaneseq
        %v2746 = vshrl.u32 %v2745, 7
        %v2747 = vsub.s32 %v2744, %v2746
        %v2748 = vrot.slane %v2726, %v2747
        %v2750 = vunpack.c.l.s4 1983009808
        %v2751 = vunpack.c.0.s8 %v2750
        %v2752 = vlaneseq
        %v2753 = vshrl.u32 %v2752, 7
        %v2754 = vsub.s32 %v2751, %v2753
        %v2755 = vrot.slane %v2727, %v2754
        %v2756 = vcombine.low %v2734, %v2748
        %v2757 = vcombine.high %v2734, %v2748
        %v2758 = vcombine.low %v2741, %v2755
        %v2759 = vcombine.high %v2741, %v2755
        %v2760 = vcombine.low %v2632, %v2633
        %v2761 = vcombine.high %v2632, %v2633
        %v2762 = vcombine.low %v2634, %v2635
        %v2763 = vcombine.high %v2634, %v2635
        %v2765 = vunpack.c.l.s4 1983009808
        %v2766 = vunpack.c.0.s8 %v2765
        %v2767 = vlaneseq
        %v2768 = vshrl.u32 %v2767, 7
        %v2769 = vsub.s32 %v2766, %v2768
        %v2770 = vrot.slane %v2760, %v2769
        %v2772 = vunpack.c.l.s4 1983009808
        %v2773 = vunpack.c.0.s8 %v2772
        %v2774 = vlaneseq
        %v2775 = vshrl.u32 %v2774, 7
        %v2776 = vsub.s32 %v2773, %v2775
        %v2777 = vrot.slane %v2761, %v2776
        %v2779 = vunpack.c.l.s4 1983009808
        %v2780 = vunpack.c.0.s8 %v2779
        %v2781 = vlaneseq
        %v2782 = vshrl.u32 %v2781, 7
        %v2783 = vsub.s32 %v2780, %v2782
        %v2784 = vrot.slane %v2762, %v2783
        %v2786 = vunpack.c.l.s4 1983009808
        %v2787 = vunpack.c.0.s8 %v2786
        %v2788 = vlaneseq
        %v2789 = vshrl.u32 %v2788, 7
        %v2790 = vsub.s32 %v2787, %v2789
        %v2791 = vrot.slane %v2763, %v2790
        %v2792 = vcombine.low %v2770, %v2784
        %v2793 = vcombine.high %v2770, %v2784
        %v2794 = vcombine.low %v2777, %v2791
        %v2795 = vcombine.high %v2777, %v2791
        %v2812 = vrot.slane %v2684, 7
        %v2813 = vrot.slane %v2812, 2
        %v2814 = vrot.slane %v2720, 7
        %v2815 = vrot.slane %v2814, 2
        %v2816 = vrot.slane %v2685, 7
        %v2817 = vrot.slane %v2816, 2
        %v2818 = vrot.slane %v2721, 7
        %v2819 = vrot.slane %v2818, 2
        %v2820 = vrot.slane %v2686, 7
        %v2821 = vrot.slane %v2820, 2
        %v2822 = vrot.slane %v2722, 7
        %v2823 = vrot.slane %v2822, 2
        %v2824 = vrot.slane %v2687, 7
        %v2825 = vrot.slane %v2824, 2
        %v2826 = vrot.slane %v2723, 7
        %v2827 = vrot.slane %v2826, 2
        %v2828 = vrot.slane %v2756, 7
        %v2829 = vrot.slane %v2828, 2
        %v2830 = vrot.slane %v2792, 7
        %v2831 = vrot.slane %v2830, 2
        %v2832 = vrot.slane %v2757, 7
        %v2833 = vrot.slane %v2832, 2
        %v2834 = vrot.slane %v2793, 7
        %v2835 = vrot.slane %v2834, 2
        %v2836 = vrot.slane %v2758, 7
        %v2837 = vrot.slane %v2836, 2
        %v2838 = vrot.slane %v2794, 7
        %v2839 = vrot.slane %v2838, 2
        %v2840 = vrot.slane %v2759, 7
        %v2841 = vrot.slane %v2840, 2
        %v2842 = vrot.slane %v2795, 7
        %v2843 = vrot.slane %v2842, 2
        %v2860 = vmax.f32 %v2684, %v2813
        %v2861 = vmax.f32 %v2720, %v2815
        %v2862 = vmax.f32 %v2685, %v2817
        %v2863 = vmax.f32 %v2721, %v2819
        %v2864 = vmax.f32 %v2686, %v2821
        %v2865 = vmax.f32 %v2722, %v2823
        %v2866 = vmax.f32 %v2687, %v2825
        %v2867 = vmax.f32 %v2723, %v2827
        %v2868 = vmax.f32 %v2756, %v2829
        %v2869 = vmax.f32 %v2792, %v2831
        %v2870 = vmax.f32 %v2757, %v2833
        %v2871 = vmax.f32 %v2793, %v2835
        %v2872 = vmax.f32 %v2758, %v2837
        %v2873 = vmax.f32 %v2794, %v2839
        %v2874 = vmax.f32 %v2759, %v2841
        %v2875 = vmax.f32 %v2795, %v2843
        %v2876 = vmax.f32 %v2860, %v2861
        %v2877 = vmax.f32 %v2862, %v2863
        %v2878 = vmax.f32 %v2864, %v2865
        %v2879 = vmax.f32 %v2866, %v2867
        %v2880 = vmax.f32 %v2868, %v2869
        %v2881 = vmax.f32 %v2870, %v2871
        %v2882 = vmax.f32 %v2872, %v2873
        %v2883 = vmax.f32 %v2874, %v2875
        %v2892 = vlaneseq
        %v2893 = vshrl.u32 %v2892, 7
        %v2894 = vsub.s32 0, %v2893
        %v2895 = vrot.slane %v2876, %v2894
        %v2896 = vlaneseq
        %v2897 = vshrl.u32 %v2896, 7
        %v2898 = vsub.s32 2, %v2897
        %v2899 = vrot.slane %v2876, %v2898
        %v2900 = vlaneseq
        %v2901 = vshrl.u32 %v2900, 7
        %v2902 = vsub.s32 4, %v2901
        %v2903 = vrot.slane %v2876, %v2902
        %v2904 = vlaneseq
        %v2905 = vshrl.u32 %v2904, 7
        %v2906 = vsub.s32 6, %v2905
        %v2907 = vrot.slane %v2876, %v2906
        %v2908 = vlaneseq
        %v2909 = vshrl.u32 %v2908, 7
        %v2910 = vsub.s32 0, %v2909
        %v2911 = vrot.slane %v2877, %v2910
        %v2912 = vlaneseq
        %v2913 = vshrl.u32 %v2912, 7
        %v2914 = vsub.s32 2, %v2913
        %v2915 = vrot.slane %v2877, %v2914
        %v2916 = vlaneseq
        %v2917 = vshrl.u32 %v2916, 7
        %v2918 = vsub.s32 4, %v2917
        %v2919 = vrot.slane %v2877, %v2918
        %v2920 = vlaneseq
        %v2921 = vshrl.u32 %v2920, 7
        %v2922 = vsub.s32 6, %v2921
        %v2923 = vrot.slane %v2877, %v2922
        %v2924 = vlaneseq
        %v2925 = vshrl.u32 %v2924, 7
        %v2926 = vsub.s32 0, %v2925
        %v2927 = vrot.slane %v2878, %v2926
        %v2928 = vlaneseq
        %v2929 = vshrl.u32 %v2928, 7
        %v2930 = vsub.s32 2, %v2929
        %v2931 = vrot.slane %v2878, %v2930
        %v2932 = vlaneseq
        %v2933 = vshrl.u32 %v2932, 7
        %v2934 = vsub.s32 4, %v2933
        %v2935 = vrot.slane %v2878, %v2934
        %v2936 = vlaneseq
        %v2937 = vshrl.u32 %v2936, 7
        %v2938 = vsub.s32 6, %v2937
        %v2939 = vrot.slane %v2878, %v2938
        %v2940 = vlaneseq
        %v2941 = vshrl.u32 %v2940, 7
        %v2942 = vsub.s32 0, %v2941
        %v2943 = vrot.slane %v2879, %v2942
        %v2944 = vlaneseq
        %v2945 = vshrl.u32 %v2944, 7
        %v2946 = vsub.s32 2, %v2945
        %v2947 = vrot.slane %v2879, %v2946
        %v2948 = vlaneseq
        %v2949 = vshrl.u32 %v2948, 7
        %v2950 = vsub.s32 4, %v2949
        %v2951 = vrot.slane %v2879, %v2950
        %v2952 = vlaneseq
        %v2953 = vshrl.u32 %v2952, 7
        %v2954 = vsub.s32 6, %v2953
        %v2955 = vrot.slane %v2879, %v2954
        %v2956 = vlaneseq
        %v2957 = vshrl.u32 %v2956, 7
        %v2958 = vsub.s32 0, %v2957
        %v2959 = vrot.slane %v2880, %v2958
        %v2960 = vlaneseq
        %v2961 = vshrl.u32 %v2960, 7
        %v2962 = vsub.s32 2, %v2961
        %v2963 = vrot.slane %v2880, %v2962
        %v2964 = vlaneseq
        %v2965 = vshrl.u32 %v2964, 7
        %v2966 = vsub.s32 4, %v2965
        %v2967 = vrot.slane %v2880, %v2966
        %v2968 = vlaneseq
        %v2969 = vshrl.u32 %v2968, 7
        %v2970 = vsub.s32 6, %v2969
        %v2971 = vrot.slane %v2880, %v2970
        %v2972 = vlaneseq
        %v2973 = vshrl.u32 %v2972, 7
        %v2974 = vsub.s32 0, %v2973
        %v2975 = vrot.slane %v2881, %v2974
        %v2976 = vlaneseq
        %v2977 = vshrl.u32 %v2976, 7
        %v2978 = vsub.s32 2, %v2977
        %v2979 = vrot.slane %v2881, %v2978
        %v2980 = vlaneseq
        %v2981 = vshrl.u32 %v2980, 7
        %v2982 = vsub.s32 4, %v2981
        %v2983 = vrot.slane %v2881, %v2982
        %v2984 = vlaneseq
        %v2985 = vshrl.u32 %v2984, 7
        %v2986 = vsub.s32 6, %v2985
        %v2987 = vrot.slane %v2881, %v2986
        %v2988 = vlaneseq
        %v2989 = vshrl.u32 %v2988, 7
        %v2990 = vsub.s32 0, %v2989
        %v2991 = vrot.slane %v2882, %v2990
        %v2992 = vlaneseq
        %v2993 = vshrl.u32 %v2992, 7
        %v2994 = vsub.s32 2, %v2993
        %v2995 = vrot.slane %v2882, %v2994
        %v2996 = vlaneseq
        %v2997 = vshrl.u32 %v2996, 7
        %v2998 = vsub.s32 4, %v2997
        %v2999 = vrot.slane %v2882, %v2998
        %v3000 = vlaneseq
        %v3001 = vshrl.u32 %v3000, 7
        %v3002 = vsub.s32 6, %v3001
        %v3003 = vrot.slane %v2882, %v3002
        %v3004 = vlaneseq
        %v3005 = vshrl.u32 %v3004, 7
        %v3006 = vsub.s32 0, %v3005
        %v3007 = vrot.slane %v2883, %v3006
        %v3008 = vlaneseq
        %v3009 = vshrl.u32 %v3008, 7
        %v3010 = vsub.s32 2, %v3009
        %v3011 = vrot.slane %v2883, %v3010
        %v3012 = vlaneseq
        %v3013 = vshrl.u32 %v3012, 7
        %v3014 = vsub.s32 4, %v3013
        %v3015 = vrot.slane %v2883, %v3014
        %v3016 = vlaneseq
        %v3017 = vshrl.u32 %v3016, 7
        %v3018 = vsub.s32 6, %v3017
        %v3019 = vrot.slane %v2883, %v3018
        %vm3020 = vcmask 1041409
        %v3021 = vsel %vm3020, %v2911, %v2895
        %vm3022 = vcmask 1042434
        %v3023 = vsel %vm3022, %v2927, %v3021
        %vm3024 = vcmask 1043459
        %v3025 = vsel %vm3024, %v2943, %v3023
        %vm3026 = vcmask 1044484
        %v3027 = vsel %vm3026, %v2959, %v3025
        %vm3028 = vcmask 1045509
        %v3029 = vsel %vm3028, %v2975, %v3027
        %vm3030 = vcmask 1046534
        %v3031 = vsel %vm3030, %v2991, %v3029
        %vm3032 = vcmask 1047559
        %v3033 = vsel %vm3032, %v3007, %v3031
        %v3034 = vsel %vm3020, %v2915, %v2899
        %v3035 = vsel %vm3022, %v2931, %v3034
        %v3036 = vsel %vm3024, %v2947, %v3035
        %v3037 = vsel %vm3026, %v2963, %v3036
        %v3038 = vsel %vm3028, %v2979, %v3037
        %v3039 = vsel %vm3030, %v2995, %v3038
        %v3040 = vsel %vm3032, %v3011, %v3039
        %v3041 = vsel %vm3020, %v2919, %v2903
        %v3042 = vsel %vm3022, %v2935, %v3041
        %v3043 = vsel %vm3024, %v2951, %v3042
        %v3044 = vsel %vm3026, %v2967, %v3043
        %v3045 = vsel %vm3028, %v2983, %v3044
        %v3046 = vsel %vm3030, %v2999, %v3045
        %v3047 = vsel %vm3032, %v3015, %v3046
        %v3048 = vsel %vm3020, %v2923, %v2907
        %v3049 = vsel %vm3022, %v2939, %v3048
        %v3050 = vsel %vm3024, %v2955, %v3049
        %v3051 = vsel %vm3026, %v2971, %v3050
        %v3052 = vsel %vm3028, %v2987, %v3051
        %v3053 = vsel %vm3030, %v3003, %v3052
        %v3054 = vsel %vm3032, %v3019, %v3053
        %3059 = vst [vmem:[%s198] sm:$0xff] %v3033
        %3060 = vst [vmem:[%s198 + $0x8] sm:$0xff] %v3040
        %3061 = vst [vmem:[%s198 + $0x10] sm:$0xff] %v3047
        %3062 = vst [vmem:[%s198 + $0x18] sm:$0xff] %v3054
        %p3063 = scmp.lt.s32.totalorder %s16, 1
        %s3064 = scalar_select %p3063, %s16, 1
        %s3065 = smul.addr %s3064, 4
        %s3066 = smul.addr %s3065, 8
        %s3067 = scalar_lea.vmem %s3, %s3066
        // Predicated region
        $region41: #{_lambda_.4} parent=31 // pred_check
          %p3068 = pneg %p102
        $region42: #{_lambda_.4} parent=31 // pred_check_branch
          %3070 = sbr.rel (%p3068) target = $region44
        $region43: #{_lambda_.4} parent=31 // pred_region
          _
        $region44: #{_lambda_.4} parent=31 // pred_fallthru
          _
      $region32: #{_lambda_.4} parent=5 // pred_fallthru
        _
      %p3071 = scmp.le.s32.totalorder 2, %s11
      // Predicated region
      $region45: #{_lambda_.4} parent=5 // pred_check
        %p3072 = pneg %p3071
      $region46: #{_lambda_.4} parent=5 // pred_check_branch
        %3074 = sbr.rel (%p3072) target = $region48
      $region47: #{_lambda_.4} parent=5 // pred_region
        %s3075 = ssub.s32 %s11, 2
        // Predicated region
        $region49: #{_lambda_.4} parent=47 // pred_check
          %p3076 = pneg %p108
        $region50: #{_lambda_.4} parent=47 // pred_check_branch
          %3078 = sbr.rel (%p3076) target = $region52
        $region51: #{_lambda_.4} parent=47 // pred_region
          %p3079 = scmp.lt.s32.totalorder %s17, 1
          %s3080 = scalar_select %p3079, %s17, 1
          %s3081 = smul.addr %s3080, 4
          %s3082 = smul.addr %s3081, 8
          %s3083 = scalar_lea.vmem %s3, %s3082
        $region52: #{_lambda_.4} parent=47 // pred_fallthru
          _
      $region48: #{_lambda_.4} parent=5 // pred_fallthru
        _
    $region6: #{_lambda_.4} parent=1 // loop_footer
      %s15 = sadd.s32 1, %s11
    $region7: #{_lambda_.4} parent=1 // loop_footer_branch
      %10 = sbr.rel target = $region3
    $region8: #{_lambda_.4} parent=1 // loop_exit
      _
    %3084 = vsyncpa [#allocation4], 1
    %s3085 = scalar_lea.sflag [#allocation4], 1
    %3086 = vsyncpa %s3085, 1
    %3087 = vsyncpa [#allocation6], 1

// kernel: _lambda_.5
$region0: #{_lambda_.5}
  #allocation0 [shape = 'u32[]', space=smem, size = 0x4, offset = 0x4, fixed_abs, tag = 'smem constant byte address 0x4 - core index']
  #allocation1 [shape = 'u32[144,128]{1,0:T(1,128)}', space=vmem, size = 0x12000, scoped, tag = 'internal scratch']
  #allocation2 [shape = 'bf16[2,12,768]{2,1,0:T(8,128)(2,1)}', space=vmem, size = 0xc000, scoped, tag = 'scratch operand']
  %s0 = inlined_call_operand.vmem [shape: f32[2,8,512], index: 0, kind: input, shape index: {}]
  %s1 = inlined_call_operand.hbm [shape: bf16[5,768,256], index: 1, kind: input, shape index: {}]
  %s2 = inlined_call_operand.hbm [shape: f32[1,256], index: 2, kind: input, shape index: {}]
  %s3 = inlined_call_operand.vmem [shape: f32[2,4,128], index: 3, kind: output, shape index: {}]
  %s4 = sld [smem:[#allocation0]]
  $region30: #{_lambda_.5} parent=0
    _
  %s6 = ssub.s32 1, %s4
  %s7 = scalar_select 0, %s6, %s4
  $region1: #{_lambda_.5} parent=0
    #allocation3 [shape = 'u8[1966080]{0}', space=vmem, size = 0x1e0000, scoped, tag = 'input window, operand 1, single buffered']
    #allocation4 [shape = 's32[1]{0}', space=sflag, size = 0x4, scoped, tag = 'scoped memory for _lambda_.5']
    #allocation5 [shape = 'u8[1024]{0}', space=vmem, size = 0x400, scoped, tag = 'input window, operand 2, single buffered']
    #allocation6 [shape = 's32[1]{0}', space=sflag, size = 0x4, scoped, tag = 'scoped memory for _lambda_.5']
    %8 = vsyncpa [#allocation4], 0
    %9 = vsyncpa [#allocation6], 0
    // Predicated region
    $region2: #{_lambda_.5} parent=1 // pred_check
      _
    $region3: #{_lambda_.5} parent=1 // pred_check_branch
      %11 = sbr.rel (0) target = $region5
    $region4: #{_lambda_.5} parent=1 // pred_region
      _
    $region5: #{_lambda_.5} parent=1 // pred_fallthru
      _
    // Predicated region
    $region6: #{_lambda_.5} parent=1 // pred_check
      _
    $region7: #{_lambda_.5} parent=1 // pred_check_branch
      %13 = sbr.rel (0) target = $region9
    $region8: #{_lambda_.5} parent=1 // pred_region
      %s15 = ssub.s32 61440, 61440
      %16 = vsyncadd [#allocation4], %s15
      %s17 = sshll.u32 [#allocation3], 4
      %s18 = int_to_ptr.vmem [resolvable:$true] %s17
      %23 = dma.hbm_to_vmem [thread:$0]  %s1, 61440, %s18, [#allocation4], 128, 128, 8
    $region9: #{_lambda_.5} parent=1 // pred_fallthru
      _
    // Predicated region
    $region10: #{_lambda_.5} parent=1 // pred_check
      _
    $region11: #{_lambda_.5} parent=1 // pred_check_branch
      %25 = sbr.rel (0) target = $region13
    $region12: #{_lambda_.5} parent=1 // pred_region
      %s27 = ssub.s32 32, 32
      %28 = vsyncadd [#allocation6], %s27
      %s30 = sshll.u32 [#allocation5], 4
      %s31 = int_to_ptr.vmem [resolvable:$true] %s30
      %33 = dma.hbm_to_vmem [thread:$0]  %s2, 32, %s31, [#allocation6]
    $region13: #{_lambda_.5} parent=1 // pred_fallthru
      _
    // Predicated region
    $region14: #{_lambda_.5} parent=1 // pred_check
      _
    $region15: #{_lambda_.5} parent=1 // pred_check_branch
      %35 = sbr.rel (0) target = $region17
    $region16: #{_lambda_.5} parent=1 // pred_region
      %36 = dma.done [#allocation4], 61440
    $region17: #{_lambda_.5} parent=1 // pred_fallthru
      _
    // Predicated region
    $region18: #{_lambda_.5} parent=1 // pred_check
      _
    $region19: #{_lambda_.5} parent=1 // pred_check_branch
      %38 = sbr.rel (0) target = $region21
    $region20: #{_lambda_.5} parent=1 // pred_region
      %39 = dma.done [#allocation6], 32
    $region21: #{_lambda_.5} parent=1 // pred_fallthru
      _
    %41 = vst [vmem:[#allocation2] sm:$0x11] 0
    %42 = vst [vmem:[#allocation2 + $0x8] sm:$0x11] 0
    %43 = vst [vmem:[#allocation2 + $0x10] sm:$0x11] 0
    %44 = vst [vmem:[#allocation2 + $0x30] sm:$0x11] 0
    %45 = vst [vmem:[#allocation2 + $0x38] sm:$0x11] 0
    %46 = vst [vmem:[#allocation2 + $0x40] sm:$0x11] 0
    %47 = vst [vmem:[#allocation2 + $0x18] sm:$0x22] 0
    %48 = vst [vmem:[#allocation2 + $0x20] sm:$0x22] 0
    %49 = vst [vmem:[#allocation2 + $0x28] sm:$0x22] 0
    %50 = vst [vmem:[#allocation2 + $0x48] sm:$0x22] 0
    %51 = vst [vmem:[#allocation2 + $0x50] sm:$0x22] 0
    %52 = vst [vmem:[#allocation2 + $0x58] sm:$0x22] 0
    %53 = vst [vmem:[#allocation2] sm:$0xf] 0
    %54 = vst [vmem:[#allocation2 + $0x18] sm:$0x3] 0
    %55 = vst [vmem:[#allocation2 + $0x30] sm:$0xf] 0
    %56 = vst [vmem:[#allocation2 + $0x48] sm:$0x3] 0
    %57 = vst [vmem:[#allocation2 + $0x14] sm:$0xf] 0
    %58 = vst [vmem:[#allocation2 + $0x2c] sm:$0x3] 0
    %59 = vst [vmem:[#allocation2 + $0x44] sm:$0xf] 0
    %60 = vst [vmem:[#allocation2 + $0x5c] sm:$0x3] 0
    %v61 = vld [vmem:[%s0] sm:$0xff]
    %v62 = vld [vmem:[%s0 + $0x8] sm:$0xff]
    %v63 = vld [vmem:[%s0 + $0x10] sm:$0xff]
    %v64 = vld [vmem:[%s0 + $0x18] sm:$0xff]
    %v65 = vld [vmem:[%s0 + $0x20] sm:$0xff]
    %v66 = vld [vmem:[%s0 + $0x28] sm:$0xff]
    %v67 = vld [vmem:[%s0 + $0x30] sm:$0xff]
    %v68 = vld [vmem:[%s0 + $0x38] sm:$0xff]
    %v69 = vpack.c.bf16 %v61, %v61
    %v70 = vpack.c.bf16 %v62, %v62
    %v71 = vpack.c.bf16 %v63, %v63
    %v72 = vpack.c.bf16 %v64, %v64
    %v73 = vpack.c.bf16 %v65, %v65
    %v74 = vpack.c.bf16 %v66, %v66
    %v75 = vpack.c.bf16 %v67, %v67
    %v76 = vpack.c.bf16 %v68, %v68
    %v85 = vunpack.c.l.b16 %v69
    %v86 = vunpack.c.l.b16 %v70
    %v87 = vunpack.c.l.b16 %v71
    %v88 = vunpack.c.l.b16 %v72
    %v89 = vunpack.c.l.b16 %v73
    %v90 = vunpack.c.l.b16 %v74
    %v91 = vunpack.c.l.b16 %v75
    %v92 = vunpack.c.l.b16 %v76
    %v93 = vpack.c.b16 %v86, %v85
    %v94 = vpack.c.b16 %v88, %v87
    %v95 = vpack.c.b16 %v90, %v89
    %v96 = vpack.c.b16 %v92, %v91
    %v97 = vrot.slane %v93, 7
    %v98 = vrot.slane %v94, 7
    %v99 = vrot.slane %v97, 4
    %v100 = vrot.slane %v98, 4
    %v101 = vrot.slane %v95, 7
    %v102 = vrot.slane %v96, 7
    %v103 = vrot.slane %v101, 4
    %v104 = vrot.slane %v102, 4
    %113 = vst [vmem:[#allocation2 + $0x4] sm:$0xee] %v97
    %114 = vst [vmem:[#allocation2 + $0xc] sm:$0xee] %v98
    %115 = vst [vmem:[#allocation2 + $0x1c] sm:$0x11] %v99
    %116 = vst [vmem:[#allocation2 + $0x24] sm:$0x11] %v100
    %117 = vst [vmem:[#allocation2 + $0x34] sm:$0xee] %v101
    %118 = vst [vmem:[#allocation2 + $0x3c] sm:$0xee] %v102
    %119 = vst [vmem:[#allocation2 + $0x4c] sm:$0x11] %v103
    %120 = vst [vmem:[#allocation2 + $0x54] sm:$0x11] %v104
    %v121 = vld [vmem:[#allocation2] sm:$0xff]
    %v122 = vld [vmem:[#allocation2 + $0x8] sm:$0xff]
    %v123 = vld [vmem:[#allocation2 + $0x10] sm:$0xff]
    %v124 = vld [vmem:[#allocation2 + $0x30] sm:$0xff]
    %v125 = vld [vmem:[#allocation2 + $0x38] sm:$0xff]
    %v126 = vld [vmem:[#allocation2 + $0x40] sm:$0xff]
    %v127 = vld [vmem:[#allocation3] sm:$0xff]
    %v128 = vld [vmem:[#allocation3 + $0x8] sm:$0xff]
    %v129 = vld [vmem:[#allocation3 + $0x10] sm:$0xff]
    %v130 = vld [vmem:[#allocation3 + $0x18] sm:$0xff]
    %v131 = vld [vmem:[#allocation3 + $0x20] sm:$0xff]
    %v132 = vld [vmem:[#allocation3 + $0x28] sm:$0xff]
    %v133 = vld [vmem:[#allocation3 + $0x30] sm:$0xff]
    %v134 = vld [vmem:[#allocation3 + $0x38] sm:$0xff]
    %v135 = vld [vmem:[#allocation3 + $0x40] sm:$0xff]
    %v136 = vld [vmem:[#allocation3 + $0x48] sm:$0xff]
    %v137 = vld [vmem:[#allocation3 + $0x50] sm:$0xff]
    %v138 = vld [vmem:[#allocation3 + $0x58] sm:$0xff]
    %v139 = vld [vmem:[#allocation3 + $0x60] sm:$0xff]
    %v140 = vld [vmem:[#allocation3 + $0x68] sm:$0xff]
    %v141 = vld [vmem:[#allocation3 + $0x70] sm:$0xff]
    %v142 = vld [vmem:[#allocation3 + $0x78] sm:$0xff]
    %v143 = vld [vmem:[#allocation3 + $0x80] sm:$0xff]
    %v144 = vld [vmem:[#allocation3 + $0x88] sm:$0xff]
    %v145 = vld [vmem:[#allocation3 + $0x90] sm:$0xff]
    %v146 = vld [vmem:[#allocation3 + $0x98] sm:$0xff]
    %v147 = vld [vmem:[#allocation3 + $0xa0] sm:$0xff]
    %v148 = vld [vmem:[#allocation3 + $0xa8] sm:$0xff]
    %v149 = vld [vmem:[#allocation3 + $0xb0] sm:$0xff]
    %v150 = vld [vmem:[#allocation3 + $0xb8] sm:$0xff]
    %v151 = vld [vmem:[#allocation3 + $0xc0] sm:$0xff]
    %v152 = vld [vmem:[#allocation3 + $0xc8] sm:$0xff]
    %v153 = vld [vmem:[#allocation3 + $0xd0] sm:$0xff]
    %v154 = vld [vmem:[#allocation3 + $0xd8] sm:$0xff]
    %v155 = vld [vmem:[#allocation3 + $0xe0] sm:$0xff]
    %v156 = vld [vmem:[#allocation3 + $0xe8] sm:$0xff]
    %v157 = vld [vmem:[#allocation3 + $0xf0] sm:$0xff]
    %v158 = vld [vmem:[#allocation3 + $0xf8] sm:$0xff]
    %v159 = vld [vmem:[#allocation3 + $0x100] sm:$0xff]
    %v160 = vld [vmem:[#allocation3 + $0x108] sm:$0xff]
    %v161 = vld [vmem:[#allocation3 + $0x110] sm:$0xff]
    %v162 = vld [vmem:[#allocation3 + $0x118] sm:$0xff]
    %v163 = vld [vmem:[#allocation3 + $0x120] sm:$0xff]
    %v164 = vld [vmem:[#allocation3 + $0x128] sm:$0xff]
    %v165 = vld [vmem:[#allocation3 + $0x130] sm:$0xff]
    %v166 = vld [vmem:[#allocation3 + $0x138] sm:$0xff]
    %v167 = vld [vmem:[#allocation3 + $0x140] sm:$0xff]
    %v168 = vld [vmem:[#allocation3 + $0x148] sm:$0xff]
    %v169 = vld [vmem:[#allocation3 + $0x150] sm:$0xff]
    %v170 = vld [vmem:[#allocation3 + $0x158] sm:$0xff]
    %v171 = vld [vmem:[#allocation3 + $0x160] sm:$0xff]
    %v172 = vld [vmem:[#allocation3 + $0x168] sm:$0xff]
    %v173 = vld [vmem:[#allocation3 + $0x170] sm:$0xff]
    %v174 = vld [vmem:[#allocation3 + $0x178] sm:$0xff]
    %v175 = vld [vmem:[#allocation3 + $0x180] sm:$0xff]
    %v176 = vld [vmem:[#allocation3 + $0x188] sm:$0xff]
    %v177 = vld [vmem:[#allocation3 + $0x190] sm:$0xff]
    %v178 = vld [vmem:[#allocation3 + $0x198] sm:$0xff]
    %v179 = vld [vmem:[#allocation3 + $0x1a0] sm:$0xff]
    %v180 = vld [vmem:[#allocation3 + $0x1a8] sm:$0xff]
    %v181 = vld [vmem:[#allocation3 + $0x1b0] sm:$0xff]
    %v182 = vld [vmem:[#allocation3 + $0x1b8] sm:$0xff]
    %v183 = vld [vmem:[#allocation3 + $0x1c0] sm:$0xff]
    %v184 = vld [vmem:[#allocation3 + $0x1c8] sm:$0xff]
    %v185 = vld [vmem:[#allocation3 + $0x1d0] sm:$0xff]
    %v186 = vld [vmem:[#allocation3 + $0x1d8] sm:$0xff]
    %v187 = vld [vmem:[#allocation3 + $0x1e0] sm:$0xff]
    %v188 = vld [vmem:[#allocation3 + $0x1e8] sm:$0xff]
    %v189 = vld [vmem:[#allocation3 + $0x1f0] sm:$0xff]
    %v190 = vld [vmem:[#allocation3 + $0x1f8] sm:$0xff]
    %v191 = vld [vmem:[#allocation3 + $0x200] sm:$0xff]
    %v192 = vld [vmem:[#allocation3 + $0x208] sm:$0xff]
    %v193 = vld [vmem:[#allocation3 + $0x210] sm:$0xff]
    %v194 = vld [vmem:[#allocation3 + $0x218] sm:$0xff]
    %v195 = vld [vmem:[#allocation3 + $0x220] sm:$0xff]
    %v196 = vld [vmem:[#allocation3 + $0x228] sm:$0xff]
    %v197 = vld [vmem:[#allocation3 + $0x230] sm:$0xff]
    %v198 = vld [vmem:[#allocation3 + $0x238] sm:$0xff]
    %v199 = vld [vmem:[#allocation3 + $0x240] sm:$0xff]
    %v200 = vld [vmem:[#allocation3 + $0x248] sm:$0xff]
    %v201 = vld [vmem:[#allocation3 + $0x250] sm:$0xff]
    %v202 = vld [vmem:[#allocation3 + $0x258] sm:$0xff]
    %v203 = vld [vmem:[#allocation3 + $0x260] sm:$0xff]
    %v204 = vld [vmem:[#allocation3 + $0x268] sm:$0xff]
    %v205 = vld [vmem:[#allocation3 + $0x270] sm:$0xff]
    %v206 = vld [vmem:[#allocation3 + $0x278] sm:$0xff]
    %v207 = vld [vmem:[#allocation3 + $0x280] sm:$0xff]
    %v208 = vld [vmem:[#allocation3 + $0x288] sm:$0xff]
    %v209 = vld [vmem:[#allocation3 + $0x290] sm:$0xff]
    %v210 = vld [vmem:[#allocation3 + $0x298] sm:$0xff]
    %v211 = vld [vmem:[#allocation3 + $0x2a0] sm:$0xff]
    %v212 = vld [vmem:[#allocation3 + $0x2a8] sm:$0xff]
    %v213 = vld [vmem:[#allocation3 + $0x2b0] sm:$0xff]
    %v214 = vld [vmem:[#allocation3 + $0x2b8] sm:$0xff]
    %v215 = vld [vmem:[#allocation3 + $0x2c0] sm:$0xff]
    %v216 = vld [vmem:[#allocation3 + $0x2c8] sm:$0xff]
    %v217 = vld [vmem:[#allocation3 + $0x2d0] sm:$0xff]
    %v218 = vld [vmem:[#allocation3 + $0x2d8] sm:$0xff]
    %v219 = vld [vmem:[#allocation3 + $0x2e0] sm:$0xff]
    %v220 = vld [vmem:[#allocation3 + $0x2e8] sm:$0xff]
    %v221 = vld [vmem:[#allocation3 + $0x2f0] sm:$0xff]
    %v222 = vld [vmem:[#allocation3 + $0x2f8] sm:$0xff]
    %v223 = vld [vmem:[#allocation2 + $0x18] sm:$0x11]
    %v224 = vld [vmem:[#allocation2 + $0x20] sm:$0x11]
    %v225 = vld [vmem:[#allocation2 + $0x28] sm:$0x11]
    %v226 = vld [vmem:[#allocation2 + $0x48] sm:$0x11]
    %v227 = vld [vmem:[#allocation2 + $0x50] sm:$0x11]
    %v228 = vld [vmem:[#allocation2 + $0x58] sm:$0x11]
    %vm229 = vsmask.f32 3328
    %vm230 = vsmask.f32 7440
    %vm231 = vmor %vm229, %vm230
    %v233 = vshrl.u32 %v121, 16
    %v235 = vrot.slane %v233, 4
    %v236 = vshll.u32 %v121, 16
    %v238 = vrot.slane %v236, 5
    %v239 = vor.u32 %v235, %v238
    %v240 = vrot.slane %v239, 4
    %v242 = vshll.u32 %v223, 16
    %v244 = vrot.slane %v242, 5
    %v245 = vsel %vm231, %v240, %v244
    %v247 = vshrl.u32 %v122, 16
    %v249 = vrot.slane %v247, 4
    %v250 = vshll.u32 %v122, 16
    %v252 = vrot.slane %v250, 5
    %v253 = vor.u32 %v249, %v252
    %v254 = vrot.slane %v253, 4
    %v256 = vshll.u32 %v224, 16
    %v258 = vrot.slane %v256, 5
    %v259 = vsel %vm231, %v254, %v258
    %v261 = vshrl.u32 %v123, 16
    %v263 = vrot.slane %v261, 4
    %v264 = vshll.u32 %v123, 16
    %v266 = vrot.slane %v264, 5
    %v267 = vor.u32 %v263, %v266
    %v268 = vrot.slane %v267, 4
    %v270 = vshll.u32 %v225, 16
    %v272 = vrot.slane %v270, 5
    %v273 = vsel %vm231, %v268, %v272
    %v275 = vshrl.u32 %v124, 16
    %v277 = vrot.slane %v275, 4
    %v278 = vshll.u32 %v124, 16
    %v280 = vrot.slane %v278, 5
    %v281 = vor.u32 %v277, %v280
    %v282 = vrot.slane %v281, 4
    %v284 = vshll.u32 %v226, 16
    %v286 = vrot.slane %v284, 5
    %v287 = vsel %vm231, %v282, %v286
    %v289 = vshrl.u32 %v125, 16
    %v291 = vrot.slane %v289, 4
    %v292 = vshll.u32 %v125, 16
    %v294 = vrot.slane %v292, 5
    %v295 = vor.u32 %v291, %v294
    %v296 = vrot.slane %v295, 4
    %v298 = vshll.u32 %v227, 16
    %v300 = vrot.slane %v298, 5
    %v301 = vsel %vm231, %v296, %v300
    %v303 = vshrl.u32 %v126, 16
    %v305 = vrot.slane %v303, 4
    %v306 = vshll.u32 %v126, 16
    %v308 = vrot.slane %v306, 5
    %v309 = vor.u32 %v305, %v308
    %v310 = vrot.slane %v309, 4
    %v312 = vshll.u32 %v228, 16
    %v314 = vrot.slane %v312, 5
    %v315 = vsel %vm231, %v310, %v314
    %s316 = scalar_lea.vmem [#allocation3], 768
    %v317 = vld [vmem:[%s316] sm:$0xff]
    %v318 = vld [vmem:[%s316 + $0x8] sm:$0xff]
    %v319 = vld [vmem:[%s316 + $0x10] sm:$0xff]
    %v320 = vld [vmem:[%s316 + $0x18] sm:$0xff]
    %v321 = vld [vmem:[%s316 + $0x20] sm:$0xff]
    %v322 = vld [vmem:[%s316 + $0x28] sm:$0xff]
    %v323 = vld [vmem:[%s316 + $0x30] sm:$0xff]
    %v324 = vld [vmem:[%s316 + $0x38] sm:$0xff]
    %v325 = vld [vmem:[%s316 + $0x40] sm:$0xff]
    %v326 = vld [vmem:[%s316 + $0x48] sm:$0xff]
    %v327 = vld [vmem:[%s316 + $0x50] sm:$0xff]
    %v328 = vld [vmem:[%s316 + $0x58] sm:$0xff]
    %v329 = vld [vmem:[%s316 + $0x60] sm:$0xff]
    %v330 = vld [vmem:[%s316 + $0x68] sm:$0xff]
    %v331 = vld [vmem:[%s316 + $0x70] sm:$0xff]
    %v332 = vld [vmem:[%s316 + $0x78] sm:$0xff]
    %v333 = vld [vmem:[%s316 + $0x80] sm:$0xff]
    %v334 = vld [vmem:[%s316 + $0x88] sm:$0xff]
    %v335 = vld [vmem:[%s316 + $0x90] sm:$0xff]
    %v336 = vld [vmem:[%s316 + $0x98] sm:$0xff]
    %v337 = vld [vmem:[%s316 + $0xa0] sm:$0xff]
    %v338 = vld [vmem:[%s316 + $0xa8] sm:$0xff]
    %v339 = vld [vmem:[%s316 + $0xb0] sm:$0xff]
    %v340 = vld [vmem:[%s316 + $0xb8] sm:$0xff]
    %v341 = vld [vmem:[%s316 + $0xc0] sm:$0xff]
    %v342 = vld [vmem:[%s316 + $0xc8] sm:$0xff]
    %v343 = vld [vmem:[%s316 + $0xd0] sm:$0xff]
    %v344 = vld [vmem:[%s316 + $0xd8] sm:$0xff]
    %v345 = vld [vmem:[%s316 + $0xe0] sm:$0xff]
    %v346 = vld [vmem:[%s316 + $0xe8] sm:$0xff]
    %v347 = vld [vmem:[%s316 + $0xf0] sm:$0xff]
    %v348 = vld [vmem:[%s316 + $0xf8] sm:$0xff]
    %v349 = vld [vmem:[%s316 + $0x100] sm:$0xff]
    %v350 = vld [vmem:[%s316 + $0x108] sm:$0xff]
    %v351 = vld [vmem:[%s316 + $0x110] sm:$0xff]
    %v352 = vld [vmem:[%s316 + $0x118] sm:$0xff]
    %v353 = vld [vmem:[%s316 + $0x120] sm:$0xff]
    %v354 = vld [vmem:[%s316 + $0x128] sm:$0xff]
    %v355 = vld [vmem:[%s316 + $0x130] sm:$0xff]
    %v356 = vld [vmem:[%s316 + $0x138] sm:$0xff]
    %v357 = vld [vmem:[%s316 + $0x140] sm:$0xff]
    %v358 = vld [vmem:[%s316 + $0x148] sm:$0xff]
    %v359 = vld [vmem:[%s316 + $0x150] sm:$0xff]
    %v360 = vld [vmem:[%s316 + $0x158] sm:$0xff]
    %v361 = vld [vmem:[%s316 + $0x160] sm:$0xff]
    %v362 = vld [vmem:[%s316 + $0x168] sm:$0xff]
    %v363 = vld [vmem:[%s316 + $0x170] sm:$0xff]
    %v364 = vld [vmem:[%s316 + $0x178] sm:$0xff]
    %v365 = vld [vmem:[%s316 + $0x180] sm:$0xff]
    %v366 = vld [vmem:[%s316 + $0x188] sm:$0xff]
    %v367 = vld [vmem:[%s316 + $0x190] sm:$0xff]
    %v368 = vld [vmem:[%s316 + $0x198] sm:$0xff]
    %v369 = vld [vmem:[%s316 + $0x1a0] sm:$0xff]
    %v370 = vld [vmem:[%s316 + $0x1a8] sm:$0xff]
    %v371 = vld [vmem:[%s316 + $0x1b0] sm:$0xff]
    %v372 = vld [vmem:[%s316 + $0x1b8] sm:$0xff]
    %v373 = vld [vmem:[%s316 + $0x1c0] sm:$0xff]
    %v374 = vld [vmem:[%s316 + $0x1c8] sm:$0xff]
    %v375 = vld [vmem:[%s316 + $0x1d0] sm:$0xff]
    %v376 = vld [vmem:[%s316 + $0x1d8] sm:$0xff]
    %v377 = vld [vmem:[%s316 + $0x1e0] sm:$0xff]
    %v378 = vld [vmem:[%s316 + $0x1e8] sm:$0xff]
    %v379 = vld [vmem:[%s316 + $0x1f0] sm:$0xff]
    %v380 = vld [vmem:[%s316 + $0x1f8] sm:$0xff]
    %v381 = vld [vmem:[%s316 + $0x200] sm:$0xff]
    %v382 = vld [vmem:[%s316 + $0x208] sm:$0xff]
    %v383 = vld [vmem:[%s316 + $0x210] sm:$0xff]
    %v384 = vld [vmem:[%s316 + $0x218] sm:$0xff]
    %v385 = vld [vmem:[%s316 + $0x220] sm:$0xff]
    %v386 = vld [vmem:[%s316 + $0x228] sm:$0xff]
    %v387 = vld [vmem:[%s316 + $0x230] sm:$0xff]
    %v388 = vld [vmem:[%s316 + $0x238] sm:$0xff]
    %v389 = vld [vmem:[%s316 + $0x240] sm:$0xff]
    %v390 = vld [vmem:[%s316 + $0x248] sm:$0xff]
    %v391 = vld [vmem:[%s316 + $0x250] sm:$0xff]
    %v392 = vld [vmem:[%s316 + $0x258] sm:$0xff]
    %v393 = vld [vmem:[%s316 + $0x260] sm:$0xff]
    %v394 = vld [vmem:[%s316 + $0x268] sm:$0xff]
    %v395 = vld [vmem:[%s316 + $0x270] sm:$0xff]
    %v396 = vld [vmem:[%s316 + $0x278] sm:$0xff]
    %v397 = vld [vmem:[%s316 + $0x280] sm:$0xff]
    %v398 = vld [vmem:[%s316 + $0x288] sm:$0xff]
    %v399 = vld [vmem:[%s316 + $0x290] sm:$0xff]
    %v400 = vld [vmem:[%s316 + $0x298] sm:$0xff]
    %v401 = vld [vmem:[%s316 + $0x2a0] sm:$0xff]
    %v402 = vld [vmem:[%s316 + $0x2a8] sm:$0xff]
    %v403 = vld [vmem:[%s316 + $0x2b0] sm:$0xff]
    %v404 = vld [vmem:[%s316 + $0x2b8] sm:$0xff]
    %v405 = vld [vmem:[%s316 + $0x2c0] sm:$0xff]
    %v406 = vld [vmem:[%s316 + $0x2c8] sm:$0xff]
    %v407 = vld [vmem:[%s316 + $0x2d0] sm:$0xff]
    %v408 = vld [vmem:[%s316 + $0x2d8] sm:$0xff]
    %v409 = vld [vmem:[%s316 + $0x2e0] sm:$0xff]
    %v410 = vld [vmem:[%s316 + $0x2e8] sm:$0xff]
    %v411 = vld [vmem:[%s316 + $0x2f0] sm:$0xff]
    %v412 = vld [vmem:[%s316 + $0x2f8] sm:$0xff]
    %v413 = vunpack.c.l.b16 %v245
    %v414 = vunpack.c.h.b16 %v245
    %v415 = vunpack.c.l.b16 %v259
    %v416 = vunpack.c.h.b16 %v259
    %v417 = vunpack.c.l.b16 %v273
    %v418 = vunpack.c.h.b16 %v273
    %v419 = vunpack.c.l.b16 %v287
    %v420 = vunpack.c.h.b16 %v287
    %v421 = vunpack.c.l.b16 %v301
    %v422 = vunpack.c.h.b16 %v301
    %v423 = vunpack.c.l.b16 %v315
    %v424 = vunpack.c.h.b16 %v315
    %v425 = vpack.c.b16 %v419, %v413
    %v426 = vpack.c.b16 %v420, %v414
    %v427 = vpack.c.b16 %v421, %v415
    %v428 = vpack.c.b16 %v422, %v416
    %v429 = vpack.c.b16 %v423, %v417
    %v430 = vpack.c.b16 %v424, %v418
    %v533 = vunpack.c.l.b16 %v317
    %v534 = vunpack.c.h.b16 %v317
    %v535 = vunpack.c.l.b16 %v318
    %v536 = vunpack.c.h.b16 %v318
    %v537 = vunpack.c.l.b16 %v319
    %v538 = vunpack.c.h.b16 %v319
    %v539 = vunpack.c.l.b16 %v320
    %v540 = vunpack.c.h.b16 %v320
    %v541 = vunpack.c.l.b16 %v321
    %v542 = vunpack.c.h.b16 %v321
    %v543 = vunpack.c.l.b16 %v322
    %v544 = vunpack.c.h.b16 %v322
    %v545 = vunpack.c.l.b16 %v323
    %v546 = vunpack.c.h.b16 %v323
    %v547 = vunpack.c.l.b16 %v324
    %v548 = vunpack.c.h.b16 %v324
    %v549 = vunpack.c.l.b16 %v325
    %v550 = vunpack.c.h.b16 %v325
    %v551 = vunpack.c.l.b16 %v326
    %v552 = vunpack.c.h.b16 %v326
    %v553 = vunpack.c.l.b16 %v327
    %v554 = vunpack.c.h.b16 %v327
    %v555 = vunpack.c.l.b16 %v328
    %v556 = vunpack.c.h.b16 %v328
    %v557 = vunpack.c.l.b16 %v329
    %v558 = vunpack.c.h.b16 %v329
    %v559 = vunpack.c.l.b16 %v330
    %v560 = vunpack.c.h.b16 %v330
    %v561 = vunpack.c.l.b16 %v331
    %v562 = vunpack.c.h.b16 %v331
    %v563 = vunpack.c.l.b16 %v332
    %v564 = vunpack.c.h.b16 %v332
    %v565 = vunpack.c.l.b16 %v333
    %v566 = vunpack.c.h.b16 %v333
    %v567 = vunpack.c.l.b16 %v334
    %v568 = vunpack.c.h.b16 %v334
    %v569 = vunpack.c.l.b16 %v335
    %v570 = vunpack.c.h.b16 %v335
    %v571 = vunpack.c.l.b16 %v336
    %v572 = vunpack.c.h.b16 %v336
    %v573 = vunpack.c.l.b16 %v337
    %v574 = vunpack.c.h.b16 %v337
    %v575 = vunpack.c.l.b16 %v338
    %v576 = vunpack.c.h.b16 %v338
    %v577 = vunpack.c.l.b16 %v339
    %v578 = vunpack.c.h.b16 %v339
    %v579 = vunpack.c.l.b16 %v340
    %v580 = vunpack.c.h.b16 %v340
    %v581 = vunpack.c.l.b16 %v341
    %v582 = vunpack.c.h.b16 %v341
    %v583 = vunpack.c.l.b16 %v342
    %v584 = vunpack.c.h.b16 %v342
    %v585 = vunpack.c.l.b16 %v343
    %v586 = vunpack.c.h.b16 %v343
    %v587 = vunpack.c.l.b16 %v344
    %v588 = vunpack.c.h.b16 %v344
    %v589 = vunpack.c.l.b16 %v345
    %v590 = vunpack.c.h.b16 %v345
    %v591 = vunpack.c.l.b16 %v346
    %v592 = vunpack.c.h.b16 %v346
    %v593 = vunpack.c.l.b16 %v347
    %v594 = vunpack.c.h.b16 %v347
    %v595 = vunpack.c.l.b16 %v348
    %v596 = vunpack.c.h.b16 %v348
    %v597 = vunpack.c.l.b16 %v349
    %v598 = vunpack.c.h.b16 %v349
    %v599 = vunpack.c.l.b16 %v350
    %v600 = vunpack.c.h.b16 %v350
    %v601 = vunpack.c.l.b16 %v351
    %v602 = vunpack.c.h.b16 %v351
    %v603 = vunpack.c.l.b16 %v352
    %v604 = vunpack.c.h.b16 %v352
    %v605 = vunpack.c.l.b16 %v353
    %v606 = vunpack.c.h.b16 %v353
    %v607 = vunpack.c.l.b16 %v354
    %v608 = vunpack.c.h.b16 %v354
    %v609 = vunpack.c.l.b16 %v355
    %v610 = vunpack.c.h.b16 %v355
    %v611 = vunpack.c.l.b16 %v356
    %v612 = vunpack.c.h.b16 %v356
    %v613 = vunpack.c.l.b16 %v357
    %v614 = vunpack.c.h.b16 %v357
    %v615 = vunpack.c.l.b16 %v358
    %v616 = vunpack.c.h.b16 %v358
    %v617 = vunpack.c.l.b16 %v359
    %v618 = vunpack.c.h.b16 %v359
    %v619 = vunpack.c.l.b16 %v360
    %v620 = vunpack.c.h.b16 %v360
    %v621 = vunpack.c.l.b16 %v361
    %v622 = vunpack.c.h.b16 %v361
    %v623 = vunpack.c.l.b16 %v362
    %v624 = vunpack.c.h.b16 %v362
    %v625 = vunpack.c.l.b16 %v363
    %v626 = vunpack.c.h.b16 %v363
    %v627 = vunpack.c.l.b16 %v364
    %v628 = vunpack.c.h.b16 %v364
    %v629 = vunpack.c.l.b16 %v365
    %v630 = vunpack.c.h.b16 %v365
    %v631 = vunpack.c.l.b16 %v366
    %v632 = vunpack.c.h.b16 %v366
    %v633 = vunpack.c.l.b16 %v367
    %v634 = vunpack.c.h.b16 %v367
    %v635 = vunpack.c.l.b16 %v368
    %v636 = vunpack.c.h.b16 %v368
    %v637 = vunpack.c.l.b16 %v369
    %v638 = vunpack.c.h.b16 %v369
    %v639 = vunpack.c.l.b16 %v370
    %v640 = vunpack.c.h.b16 %v370
    %v641 = vunpack.c.l.b16 %v371
    %v642 = vunpack.c.h.b16 %v371
    %v643 = vunpack.c.l.b16 %v372
    %v644 = vunpack.c.h.b16 %v372
    %v645 = vunpack.c.l.b16 %v373
    %v646 = vunpack.c.h.b16 %v373
    %v647 = vunpack.c.l.b16 %v374
    %v648 = vunpack.c.h.b16 %v374
    %v649 = vunpack.c.l.b16 %v375
    %v650 = vunpack.c.h.b16 %v375
    %v651 = vunpack.c.l.b16 %v376
    %v652 = vunpack.c.h.b16 %v376
    %v653 = vunpack.c.l.b16 %v377
    %v654 = vunpack.c.h.b16 %v377
    %v655 = vunpack.c.l.b16 %v378
    %v656 = vunpack.c.h.b16 %v378
    %v657 = vunpack.c.l.b16 %v379
    %v658 = vunpack.c.h.b16 %v379
    %v659 = vunpack.c.l.b16 %v380
    %v660 = vunpack.c.h.b16 %v380
    %v661 = vunpack.c.l.b16 %v381
    %v662 = vunpack.c.h.b16 %v381
    %v663 = vunpack.c.l.b16 %v382
    %v664 = vunpack.c.h.b16 %v382
    %v665 = vunpack.c.l.b16 %v383
    %v666 = vunpack.c.h.b16 %v383
    %v667 = vunpack.c.l.b16 %v384
    %v668 = vunpack.c.h.b16 %v384
    %v669 = vunpack.c.l.b16 %v385
    %v670 = vunpack.c.h.b16 %v385
    %v671 = vunpack.c.l.b16 %v386
    %v672 = vunpack.c.h.b16 %v386
    %v673 = vunpack.c.l.b16 %v387
    %v674 = vunpack.c.h.b16 %v387
    %v675 = vunpack.c.l.b16 %v388
    %v676 = vunpack.c.h.b16 %v388
    %v677 = vunpack.c.l.b16 %v389
    %v678 = vunpack.c.h.b16 %v389
    %v679 = vunpack.c.l.b16 %v390
    %v680 = vunpack.c.h.b16 %v390
    %v681 = vunpack.c.l.b16 %v391
    %v682 = vunpack.c.h.b16 %v391
    %v683 = vunpack.c.l.b16 %v392
    %v684 = vunpack.c.h.b16 %v392
    %v685 = vunpack.c.l.b16 %v393
    %v686 = vunpack.c.h.b16 %v393
    %v687 = vunpack.c.l.b16 %v394
    %v688 = vunpack.c.h.b16 %v394
    %v689 = vunpack.c.l.b16 %v395
    %v690 = vunpack.c.h.b16 %v395
    %v691 = vunpack.c.l.b16 %v396
    %v692 = vunpack.c.h.b16 %v396
    %v693 = vunpack.c.l.b16 %v397
    %v694 = vunpack.c.h.b16 %v397
    %v695 = vunpack.c.l.b16 %v398
    %v696 = vunpack.c.h.b16 %v398
    %v697 = vunpack.c.l.b16 %v399
    %v698 = vunpack.c.h.b16 %v399
    %v699 = vunpack.c.l.b16 %v400
    %v700 = vunpack.c.h.b16 %v400
    %v701 = vunpack.c.l.b16 %v401
    %v702 = vunpack.c.h.b16 %v401
    %v703 = vunpack.c.l.b16 %v402
    %v704 = vunpack.c.h.b16 %v402
    %v705 = vunpack.c.l.b16 %v403
    %v706 = vunpack.c.h.b16 %v403
    %v707 = vunpack.c.l.b16 %v404
    %v708 = vunpack.c.h.b16 %v404
    %v709 = vunpack.c.l.b16 %v405
    %v710 = vunpack.c.h.b16 %v405
    %v711 = vunpack.c.l.b16 %v406
    %v712 = vunpack.c.h.b16 %v406
    %v713 = vunpack.c.l.b16 %v407
    %v714 = vunpack.c.h.b16 %v407
    %v715 = vunpack.c.l.b16 %v408
    %v716 = vunpack.c.h.b16 %v408
    %v717 = vunpack.c.l.b16 %v409
    %v718 = vunpack.c.h.b16 %v409
    %v719 = vunpack.c.l.b16 %v410
    %v720 = vunpack.c.h.b16 %v410
    %v721 = vunpack.c.l.b16 %v411
    %v722 = vunpack.c.h.b16 %v411
    %v723 = vunpack.c.l.b16 %v412
    %v724 = vunpack.c.h.b16 %v412
    %v725 = vpack.c.b16 %v535, %v533
    %v726 = vpack.c.b16 %v536, %v534
    %v727 = vpack.c.b16 %v539, %v537
    %v728 = vpack.c.b16 %v540, %v538
    %v729 = vpack.c.b16 %v543, %v541
    %v730 = vpack.c.b16 %v544, %v542
    %v731 = vpack.c.b16 %v547, %v545
    %v732 = vpack.c.b16 %v548, %v546
    %v733 = vpack.c.b16 %v551, %v549
    %v734 = vpack.c.b16 %v552, %v550
    %v735 = vpack.c.b16 %v555, %v553
    %v736 = vpack.c.b16 %v556, %v554
    %v737 = vpack.c.b16 %v559, %v557
    %v738 = vpack.c.b16 %v560, %v558
    %v739 = vpack.c.b16 %v563, %v561
    %v740 = vpack.c.b16 %v564, %v562
    %v741 = vpack.c.b16 %v567, %v565
    %v742 = vpack.c.b16 %v568, %v566
    %v743 = vpack.c.b16 %v571, %v569
    %v744 = vpack.c.b16 %v572, %v570
    %v745 = vpack.c.b16 %v575, %v573
    %v746 = vpack.c.b16 %v576, %v574
    %v747 = vpack.c.b16 %v579, %v577
    %v748 = vpack.c.b16 %v580, %v578
    %v749 = vpack.c.b16 %v583, %v581
    %v750 = vpack.c.b16 %v584, %v582
    %v751 = vpack.c.b16 %v587, %v585
    %v752 = vpack.c.b16 %v588, %v586
    %v753 = vpack.c.b16 %v591, %v589
    %v754 = vpack.c.b16 %v592, %v590
    %v755 = vpack.c.b16 %v595, %v593
    %v756 = vpack.c.b16 %v596, %v594
    %v757 = vpack.c.b16 %v599, %v597
    %v758 = vpack.c.b16 %v600, %v598
    %v759 = vpack.c.b16 %v603, %v601
    %v760 = vpack.c.b16 %v604, %v602
    %v761 = vpack.c.b16 %v607, %v605
    %v762 = vpack.c.b16 %v608, %v606
    %v763 = vpack.c.b16 %v611, %v609
    %v764 = vpack.c.b16 %v612, %v610
    %v765 = vpack.c.b16 %v615, %v613
    %v766 = vpack.c.b16 %v616, %v614
    %v767 = vpack.c.b16 %v619, %v617
    %v768 = vpack.c.b16 %v620, %v618
    %v769 = vpack.c.b16 %v623, %v621
    %v770 = vpack.c.b16 %v624, %v622
    %v771 = vpack.c.b16 %v627, %v625
    %v772 = vpack.c.b16 %v628, %v626
    %v773 = vpack.c.b16 %v631, %v629
    %v774 = vpack.c.b16 %v632, %v630
    %v775 = vpack.c.b16 %v635, %v633
    %v776 = vpack.c.b16 %v636, %v634
    %v777 = vpack.c.b16 %v639, %v637
    %v778 = vpack.c.b16 %v640, %v638
    %v779 = vpack.c.b16 %v643, %v641
    %v780 = vpack.c.b16 %v644, %v642
    %v781 = vpack.c.b16 %v647, %v645
    %v782 = vpack.c.b16 %v648, %v646
    %v783 = vpack.c.b16 %v651, %v649
    %v784 = vpack.c.b16 %v652, %v650
    %v785 = vpack.c.b16 %v655, %v653
    %v786 = vpack.c.b16 %v656, %v654
    %v787 = vpack.c.b16 %v659, %v657
    %v788 = vpack.c.b16 %v660, %v658
    %v789 = vpack.c.b16 %v663, %v661
    %v790 = vpack.c.b16 %v664, %v662
    %v791 = vpack.c.b16 %v667, %v665
    %v792 = vpack.c.b16 %v668, %v666
    %v793 = vpack.c.b16 %v671, %v669
    %v794 = vpack.c.b16 %v672, %v670
    %v795 = vpack.c.b16 %v675, %v673
    %v796 = vpack.c.b16 %v676, %v674
    %v797 = vpack.c.b16 %v679, %v677
    %v798 = vpack.c.b16 %v680, %v678
    %v799 = vpack.c.b16 %v683, %v681
    %v800 = vpack.c.b16 %v684, %v682
    %v801 = vpack.c.b16 %v687, %v685
    %v802 = vpack.c.b16 %v688, %v686
    %v803 = vpack.c.b16 %v691, %v689
    %v804 = vpack.c.b16 %v692, %v690
    %v805 = vpack.c.b16 %v695, %v693
    %v806 = vpack.c.b16 %v696, %v694
    %v807 = vpack.c.b16 %v699, %v697
    %v808 = vpack.c.b16 %v700, %v698
    %v809 = vpack.c.b16 %v703, %v701
    %v810 = vpack.c.b16 %v704, %v702
    %v811 = vpack.c.b16 %v707, %v705
    %v812 = vpack.c.b16 %v708, %v706
    %v813 = vpack.c.b16 %v711, %v709
    %v814 = vpack.c.b16 %v712, %v710
    %v815 = vpack.c.b16 %v715, %v713
    %v816 = vpack.c.b16 %v716, %v714
    %v817 = vpack.c.b16 %v719, %v717
    %v818 = vpack.c.b16 %v720, %v718
    %v819 = vpack.c.b16 %v723, %v721
    %v820 = vpack.c.b16 %v724, %v722
    %917 = vmatprep.subr.bf16.mxu0 %v740
    %918 = vmatpush1.bf16.msra.mxu0 %v739
    %919 = vmatprep.subr.bf16.mxu0 %v738
    %920 = vmatpush1.bf16.msra.mxu0 %v737
    %921 = vmatprep.subr.bf16.mxu0 %v736
    %922 = vmatpush1.bf16.msra.mxu0 %v735
    %923 = vmatprep.subr.bf16.mxu0 %v734
    %924 = vmatpush1.bf16.msra.mxu0 %v733
    %925 = vmatprep.subr.bf16.mxu0 %v732
    %926 = vmatpush1.bf16.msra.mxu0 %v731
    %927 = vmatprep.subr.bf16.mxu0 %v730
    %928 = vmatpush1.bf16.msra.mxu0 %v729
    %929 = vmatprep.subr.bf16.mxu0 %v728
    %930 = vmatpush1.bf16.msra.mxu0 %v727
    %931 = vmatprep.subr.bf16.mxu0 %v726
    %932 = vmatpush1.bf16.msra.mxu0 %v725
    %933 = vmatprep.subr.bf16.mxu0 %v756
    %934 = vmatpush2.bf16.msra.mxu0 %v755
    %935 = vmatprep.subr.bf16.mxu0 %v754
    %936 = vmatpush2.bf16.msra.mxu0 %v753
    %937 = vmatprep.subr.bf16.mxu0 %v752
    %938 = vmatpush2.bf16.msra.mxu0 %v751
    %939 = vmatprep.subr.bf16.mxu0 %v750
    %940 = vmatpush2.bf16.msra.mxu0 %v749
    %941 = vmatprep.subr.bf16.mxu0 %v748
    %942 = vmatpush2.bf16.msra.mxu0 %v747
    %943 = vmatprep.subr.bf16.mxu0 %v746
    %944 = vmatpush2.bf16.msra.mxu0 %v745
    %945 = vmatprep.subr.bf16.mxu0 %v744
    %946 = vmatpush2.bf16.msra.mxu0 %v743
    %947 = vmatprep.subr.bf16.mxu0 %v742
    %948 = vmatpush2.bf16.msra.mxu0 %v741
    %949 = vmatprep.mubr.bf16.mxu0 %v426
    %950 = vmatmul.mubr.bf16.gmra.mxu0 %v425
    %v951 = vpop.f32.mrf.mxu0
    %v952 = vadd.f32 0.0, %v951
    %v953 = vpop.f32.mrf.mxu0
    %v954 = vadd.f32 0.0, %v953
    %v955 = vpop.f32.mrf.mxu0
    %v956 = vadd.f32 0.0, %v955
    %v957 = vpop.f32.mrf.mxu0
    %v958 = vadd.f32 0.0, %v957
    %959 = vdwg.mxu0
    %960 = vmatprep.subr.bf16.mxu0 %v772
    %961 = vmatpush1.bf16.msra.mxu0 %v771
    %962 = vmatprep.subr.bf16.mxu0 %v770
    %963 = vmatpush1.bf16.msra.mxu0 %v769
    %964 = vmatprep.subr.bf16.mxu0 %v768
    %965 = vmatpush1.bf16.msra.mxu0 %v767
    %966 = vmatprep.subr.bf16.mxu0 %v766
    %967 = vmatpush1.bf16.msra.mxu0 %v765
    %968 = vmatprep.subr.bf16.mxu0 %v764
    %969 = vmatpush1.bf16.msra.mxu0 %v763
    %970 = vmatprep.subr.bf16.mxu0 %v762
    %971 = vmatpush1.bf16.msra.mxu0 %v761
    %972 = vmatprep.subr.bf16.mxu0 %v760
    %973 = vmatpush1.bf16.msra.mxu0 %v759
    %974 = vmatprep.subr.bf16.mxu0 %v758
    %975 = vmatpush1.bf16.msra.mxu0 %v757
    %976 = vmatprep.subr.bf16.mxu0 %v788
    %977 = vmatpush2.bf16.msra.mxu0 %v787
    %978 = vmatprep.subr.bf16.mxu0 %v786
    %979 = vmatpush2.bf16.msra.mxu0 %v785
    %980 = vmatprep.subr.bf16.mxu0 %v784
    %981 = vmatpush2.bf16.msra.mxu0 %v783
    %982 = vmatprep.subr.bf16.mxu0 %v782
    %983 = vmatpush2.bf16.msra.mxu0 %v781
    %984 = vmatprep.subr.bf16.mxu0 %v780
    %985 = vmatpush2.bf16.msra.mxu0 %v779
    %986 = vmatprep.subr.bf16.mxu0 %v778
    %987 = vmatpush2.bf16.msra.mxu0 %v777
    %988 = vmatprep.subr.bf16.mxu0 %v776
    %989 = vmatpush2.bf16.msra.mxu0 %v775
    %990 = vmatprep.subr.bf16.mxu0 %v774
    %991 = vmatpush2.bf16.msra.mxu0 %v773
    %992 = vmatprep.mubr.bf16.mxu0 %v428
    %993 = vmatmul.mubr.bf16.gmra.mxu0 %v427
    %v994 = vpop.f32.mrf.mxu0
    %v995 = vadd.f32 %v952, %v994
    %v996 = vpop.f32.mrf.mxu0
    %v997 = vadd.f32 %v954, %v996
    %v998 = vpop.f32.mrf.mxu0
    %v999 = vadd.f32 %v956, %v998
    %v1000 = vpop.f32.mrf.mxu0
    %v1001 = vadd.f32 %v958, %v1000
    %1002 = vdwg.mxu0
    %1003 = vmatprep.subr.bf16.mxu0 %v804
    %1004 = vmatpush1.bf16.msra.mxu0 %v803
    %1005 = vmatprep.subr.bf16.mxu0 %v802
    %1006 = vmatpush1.bf16.msra.mxu0 %v801
    %1007 = vmatprep.subr.bf16.mxu0 %v800
    %1008 = vmatpush1.bf16.msra.mxu0 %v799
    %1009 = vmatprep.subr.bf16.mxu0 %v798
    %1010 = vmatpush1.bf16.msra.mxu0 %v797
    %1011 = vmatprep.subr.bf16.mxu0 %v796
    %1012 = vmatpush1.bf16.msra.mxu0 %v795
    %1013 = vmatprep.subr.bf16.mxu0 %v794
    %1014 = vmatpush1.bf16.msra.mxu0 %v793
    %1015 = vmatprep.subr.bf16.mxu0 %v792
    %1016 = vmatpush1.bf16.msra.mxu0 %v791
    %1017 = vmatprep.subr.bf16.mxu0 %v790
    %1018 = vmatpush1.bf16.msra.mxu0 %v789
    %1019 = vmatprep.subr.bf16.mxu0 %v820
    %1020 = vmatpush2.bf16.msra.mxu0 %v819
    %1021 = vmatprep.subr.bf16.mxu0 %v818
    %1022 = vmatpush2.bf16.msra.mxu0 %v817
    %1023 = vmatprep.subr.bf16.mxu0 %v816
    %1024 = vmatpush2.bf16.msra.mxu0 %v815
    %1025 = vmatprep.subr.bf16.mxu0 %v814
    %1026 = vmatpush2.bf16.msra.mxu0 %v813
    %1027 = vmatprep.subr.bf16.mxu0 %v812
    %1028 = vmatpush2.bf16.msra.mxu0 %v811
    %1029 = vmatprep.subr.bf16.mxu0 %v810
    %1030 = vmatpush2.bf16.msra.mxu0 %v809
    %1031 = vmatprep.subr.bf16.mxu0 %v808
    %1032 = vmatpush2.bf16.msra.mxu0 %v807
    %1033 = vmatprep.subr.bf16.mxu0 %v806
    %1034 = vmatpush2.bf16.msra.mxu0 %v805
    %1035 = vmatprep.mubr.bf16.mxu0 %v430
    %1036 = vmatmul.mubr.bf16.gmra.mxu0 %v429
    %v1037 = vpop.f32.mrf.mxu0
    %v1038 = vadd.f32 %v995, %v1037
    %v1039 = vpop.f32.mrf.mxu0
    %v1040 = vadd.f32 %v997, %v1039
    %v1041 = vpop.f32.mrf.mxu0
    %v1042 = vadd.f32 %v999, %v1041
    %v1043 = vpop.f32.mrf.mxu0
    %v1044 = vadd.f32 %v1001, %v1043
    %1045 = vdwg.mxu0
    %v1052 = vunpack.c.l.b16 %v121
    %v1053 = vunpack.c.h.b16 %v121
    %v1054 = vunpack.c.l.b16 %v122
    %v1055 = vunpack.c.h.b16 %v122
    %v1056 = vunpack.c.l.b16 %v123
    %v1057 = vunpack.c.h.b16 %v123
    %v1058 = vunpack.c.l.b16 %v124
    %v1059 = vunpack.c.h.b16 %v124
    %v1060 = vunpack.c.l.b16 %v125
    %v1061 = vunpack.c.h.b16 %v125
    %v1062 = vunpack.c.l.b16 %v126
    %v1063 = vunpack.c.h.b16 %v126
    %v1064 = vpack.c.b16 %v1058, %v1052
    %v1065 = vpack.c.b16 %v1059, %v1053
    %v1066 = vpack.c.b16 %v1060, %v1054
    %v1067 = vpack.c.b16 %v1061, %v1055
    %v1068 = vpack.c.b16 %v1062, %v1056
    %v1069 = vpack.c.b16 %v1063, %v1057
    %v1172 = vunpack.c.l.b16 %v127
    %v1173 = vunpack.c.h.b16 %v127
    %v1174 = vunpack.c.l.b16 %v128
    %v1175 = vunpack.c.h.b16 %v128
    %v1176 = vunpack.c.l.b16 %v129
    %v1177 = vunpack.c.h.b16 %v129
    %v1178 = vunpack.c.l.b16 %v130
    %v1179 = vunpack.c.h.b16 %v130
    %v1180 = vunpack.c.l.b16 %v131
    %v1181 = vunpack.c.h.b16 %v131
    %v1182 = vunpack.c.l.b16 %v132
    %v1183 = vunpack.c.h.b16 %v132
    %v1184 = vunpack.c.l.b16 %v133
    %v1185 = vunpack.c.h.b16 %v133
    %v1186 = vunpack.c.l.b16 %v134
    %v1187 = vunpack.c.h.b16 %v134
    %v1188 = vunpack.c.l.b16 %v135
    %v1189 = vunpack.c.h.b16 %v135
    %v1190 = vunpack.c.l.b16 %v136
    %v1191 = vunpack.c.h.b16 %v136
    %v1192 = vunpack.c.l.b16 %v137
    %v1193 = vunpack.c.h.b16 %v137
    %v1194 = vunpack.c.l.b16 %v138
    %v1195 = vunpack.c.h.b16 %v138
    %v1196 = vunpack.c.l.b16 %v139
    %v1197 = vunpack.c.h.b16 %v139
    %v1198 = vunpack.c.l.b16 %v140
    %v1199 = vunpack.c.h.b16 %v140
    %v1200 = vunpack.c.l.b16 %v141
    %v1201 = vunpack.c.h.b16 %v141
    %v1202 = vunpack.c.l.b16 %v142
    %v1203 = vunpack.c.h.b16 %v142
    %v1204 = vunpack.c.l.b16 %v143
    %v1205 = vunpack.c.h.b16 %v143
    %v1206 = vunpack.c.l.b16 %v144
    %v1207 = vunpack.c.h.b16 %v144
    %v1208 = vunpack.c.l.b16 %v145
    %v1209 = vunpack.c.h.b16 %v145
    %v1210 = vunpack.c.l.b16 %v146
    %v1211 = vunpack.c.h.b16 %v146
    %v1212 = vunpack.c.l.b16 %v147
    %v1213 = vunpack.c.h.b16 %v147
    %v1214 = vunpack.c.l.b16 %v148
    %v1215 = vunpack.c.h.b16 %v148
    %v1216 = vunpack.c.l.b16 %v149
    %v1217 = vunpack.c.h.b16 %v149
    %v1218 = vunpack.c.l.b16 %v150
    %v1219 = vunpack.c.h.b16 %v150
    %v1220 = vunpack.c.l.b16 %v151
    %v1221 = vunpack.c.h.b16 %v151
    %v1222 = vunpack.c.l.b16 %v152
    %v1223 = vunpack.c.h.b16 %v152
    %v1224 = vunpack.c.l.b16 %v153
    %v1225 = vunpack.c.h.b16 %v153
    %v1226 = vunpack.c.l.b16 %v154
    %v1227 = vunpack.c.h.b16 %v154
    %v1228 = vunpack.c.l.b16 %v155
    %v1229 = vunpack.c.h.b16 %v155
    %v1230 = vunpack.c.l.b16 %v156
    %v1231 = vunpack.c.h.b16 %v156
    %v1232 = vunpack.c.l.b16 %v157
    %v1233 = vunpack.c.h.b16 %v157
    %v1234 = vunpack.c.l.b16 %v158
    %v1235 = vunpack.c.h.b16 %v158
    %v1236 = vunpack.c.l.b16 %v159
    %v1237 = vunpack.c.h.b16 %v159
    %v1238 = vunpack.c.l.b16 %v160
    %v1239 = vunpack.c.h.b16 %v160
    %v1240 = vunpack.c.l.b16 %v161
    %v1241 = vunpack.c.h.b16 %v161
    %v1242 = vunpack.c.l.b16 %v162
    %v1243 = vunpack.c.h.b16 %v162
    %v1244 = vunpack.c.l.b16 %v163
    %v1245 = vunpack.c.h.b16 %v163
    %v1246 = vunpack.c.l.b16 %v164
    %v1247 = vunpack.c.h.b16 %v164
    %v1248 = vunpack.c.l.b16 %v165
    %v1249 = vunpack.c.h.b16 %v165
    %v1250 = vunpack.c.l.b16 %v166
    %v1251 = vunpack.c.h.b16 %v166
    %v1252 = vunpack.c.l.b16 %v167
    %v1253 = vunpack.c.h.b16 %v167
    %v1254 = vunpack.c.l.b16 %v168
    %v1255 = vunpack.c.h.b16 %v168
    %v1256 = vunpack.c.l.b16 %v169
    %v1257 = vunpack.c.h.b16 %v169
    %v1258 = vunpack.c.l.b16 %v170
    %v1259 = vunpack.c.h.b16 %v170
    %v1260 = vunpack.c.l.b16 %v171
    %v1261 = vunpack.c.h.b16 %v171
    %v1262 = vunpack.c.l.b16 %v172
    %v1263 = vunpack.c.h.b16 %v172
    %v1264 = vunpack.c.l.b16 %v173
    %v1265 = vunpack.c.h.b16 %v173
    %v1266 = vunpack.c.l.b16 %v174
    %v1267 = vunpack.c.h.b16 %v174
    %v1268 = vunpack.c.l.b16 %v175
    %v1269 = vunpack.c.h.b16 %v175
    %v1270 = vunpack.c.l.b16 %v176
    %v1271 = vunpack.c.h.b16 %v176
    %v1272 = vunpack.c.l.b16 %v177
    %v1273 = vunpack.c.h.b16 %v177
    %v1274 = vunpack.c.l.b16 %v178
    %v1275 = vunpack.c.h.b16 %v178
    %v1276 = vunpack.c.l.b16 %v179
    %v1277 = vunpack.c.h.b16 %v179
    %v1278 = vunpack.c.l.b16 %v180
    %v1279 = vunpack.c.h.b16 %v180
    %v1280 = vunpack.c.l.b16 %v181
    %v1281 = vunpack.c.h.b16 %v181
    %v1282 = vunpack.c.l.b16 %v182
    %v1283 = vunpack.c.h.b16 %v182
    %v1284 = vunpack.c.l.b16 %v183
    %v1285 = vunpack.c.h.b16 %v183
    %v1286 = vunpack.c.l.b16 %v184
    %v1287 = vunpack.c.h.b16 %v184
    %v1288 = vunpack.c.l.b16 %v185
    %v1289 = vunpack.c.h.b16 %v185
    %v1290 = vunpack.c.l.b16 %v186
    %v1291 = vunpack.c.h.b16 %v186
    %v1292 = vunpack.c.l.b16 %v187
    %v1293 = vunpack.c.h.b16 %v187
    %v1294 = vunpack.c.l.b16 %v188
    %v1295 = vunpack.c.h.b16 %v188
    %v1296 = vunpack.c.l.b16 %v189
    %v1297 = vunpack.c.h.b16 %v189
    %v1298 = vunpack.c.l.b16 %v190
    %v1299 = vunpack.c.h.b16 %v190
    %v1300 = vunpack.c.l.b16 %v191
    %v1301 = vunpack.c.h.b16 %v191
    %v1302 = vunpack.c.l.b16 %v192
    %v1303 = vunpack.c.h.b16 %v192
    %v1304 = vunpack.c.l.b16 %v193
    %v1305 = vunpack.c.h.b16 %v193
    %v1306 = vunpack.c.l.b16 %v194
    %v1307 = vunpack.c.h.b16 %v194
    %v1308 = vunpack.c.l.b16 %v195
    %v1309 = vunpack.c.h.b16 %v195
    %v1310 = vunpack.c.l.b16 %v196
    %v1311 = vunpack.c.h.b16 %v196
    %v1312 = vunpack.c.l.b16 %v197
    %v1313 = vunpack.c.h.b16 %v197
    %v1314 = vunpack.c.l.b16 %v198
    %v1315 = vunpack.c.h.b16 %v198
    %v1316 = vunpack.c.l.b16 %v199
    %v1317 = vunpack.c.h.b16 %v199
    %v1318 = vunpack.c.l.b16 %v200
    %v1319 = vunpack.c.h.b16 %v200
    %v1320 = vunpack.c.l.b16 %v201
    %v1321 = vunpack.c.h.b16 %v201
    %v1322 = vunpack.c.l.b16 %v202
    %v1323 = vunpack.c.h.b16 %v202
    %v1324 = vunpack.c.l.b16 %v203
    %v1325 = vunpack.c.h.b16 %v203
    %v1326 = vunpack.c.l.b16 %v204
    %v1327 = vunpack.c.h.b16 %v204
    %v1328 = vunpack.c.l.b16 %v205
    %v1329 = vunpack.c.h.b16 %v205
    %v1330 = vunpack.c.l.b16 %v206
    %v1331 = vunpack.c.h.b16 %v206
    %v1332 = vunpack.c.l.b16 %v207
    %v1333 = vunpack.c.h.b16 %v207
    %v1334 = vunpack.c.l.b16 %v208
    %v1335 = vunpack.c.h.b16 %v208
    %v1336 = vunpack.c.l.b16 %v209
    %v1337 = vunpack.c.h.b16 %v209
    %v1338 = vunpack.c.l.b16 %v210
    %v1339 = vunpack.c.h.b16 %v210
    %v1340 = vunpack.c.l.b16 %v211
    %v1341 = vunpack.c.h.b16 %v211
    %v1342 = vunpack.c.l.b16 %v212
    %v1343 = vunpack.c.h.b16 %v212
    %v1344 = vunpack.c.l.b16 %v213
    %v1345 = vunpack.c.h.b16 %v213
    %v1346 = vunpack.c.l.b16 %v214
    %v1347 = vunpack.c.h.b16 %v214
    %v1348 = vunpack.c.l.b16 %v215
    %v1349 = vunpack.c.h.b16 %v215
    %v1350 = vunpack.c.l.b16 %v216
    %v1351 = vunpack.c.h.b16 %v216
    %v1352 = vunpack.c.l.b16 %v217
    %v1353 = vunpack.c.h.b16 %v217
    %v1354 = vunpack.c.l.b16 %v218
    %v1355 = vunpack.c.h.b16 %v218
    %v1356 = vunpack.c.l.b16 %v219
    %v1357 = vunpack.c.h.b16 %v219
    %v1358 = vunpack.c.l.b16 %v220
    %v1359 = vunpack.c.h.b16 %v220
    %v1360 = vunpack.c.l.b16 %v221
    %v1361 = vunpack.c.h.b16 %v221
    %v1362 = vunpack.c.l.b16 %v222
    %v1363 = vunpack.c.h.b16 %v222
    %v1364 = vpack.c.b16 %v1174, %v1172
    %v1365 = vpack.c.b16 %v1175, %v1173
    %v1366 = vpack.c.b16 %v1178, %v1176
    %v1367 = vpack.c.b16 %v1179, %v1177
    %v1368 = vpack.c.b16 %v1182, %v1180
    %v1369 = vpack.c.b16 %v1183, %v1181
    %v1370 = vpack.c.b16 %v1186, %v1184
    %v1371 = vpack.c.b16 %v1187, %v1185
    %v1372 = vpack.c.b16 %v1190, %v1188
    %v1373 = vpack.c.b16 %v1191, %v1189
    %v1374 = vpack.c.b16 %v1194, %v1192
    %v1375 = vpack.c.b16 %v1195, %v1193
    %v1376 = vpack.c.b16 %v1198, %v1196
    %v1377 = vpack.c.b16 %v1199, %v1197
    %v1378 = vpack.c.b16 %v1202, %v1200
    %v1379 = vpack.c.b16 %v1203, %v1201
    %v1380 = vpack.c.b16 %v1206, %v1204
    %v1381 = vpack.c.b16 %v1207, %v1205
    %v1382 = vpack.c.b16 %v1210, %v1208
    %v1383 = vpack.c.b16 %v1211, %v1209
    %v1384 = vpack.c.b16 %v1214, %v1212
    %v1385 = vpack.c.b16 %v1215, %v1213
    %v1386 = vpack.c.b16 %v1218, %v1216
    %v1387 = vpack.c.b16 %v1219, %v1217
    %v1388 = vpack.c.b16 %v1222, %v1220
    %v1389 = vpack.c.b16 %v1223, %v1221
    %v1390 = vpack.c.b16 %v1226, %v1224
    %v1391 = vpack.c.b16 %v1227, %v1225
    %v1392 = vpack.c.b16 %v1230, %v1228
    %v1393 = vpack.c.b16 %v1231, %v1229
    %v1394 = vpack.c.b16 %v1234, %v1232
    %v1395 = vpack.c.b16 %v1235, %v1233
    %v1396 = vpack.c.b16 %v1238, %v1236
    %v1397 = vpack.c.b16 %v1239, %v1237
    %v1398 = vpack.c.b16 %v1242, %v1240
    %v1399 = vpack.c.b16 %v1243, %v1241
    %v1400 = vpack.c.b16 %v1246, %v1244
    %v1401 = vpack.c.b16 %v1247, %v1245
    %v1402 = vpack.c.b16 %v1250, %v1248
    %v1403 = vpack.c.b16 %v1251, %v1249
    %v1404 = vpack.c.b16 %v1254, %v1252
    %v1405 = vpack.c.b16 %v1255, %v1253
    %v1406 = vpack.c.b16 %v1258, %v1256
    %v1407 = vpack.c.b16 %v1259, %v1257
    %v1408 = vpack.c.b16 %v1262, %v1260
    %v1409 = vpack.c.b16 %v1263, %v1261
    %v1410 = vpack.c.b16 %v1266, %v1264
    %v1411 = vpack.c.b16 %v1267, %v1265
    %v1412 = vpack.c.b16 %v1270, %v1268
    %v1413 = vpack.c.b16 %v1271, %v1269
    %v1414 = vpack.c.b16 %v1274, %v1272
    %v1415 = vpack.c.b16 %v1275, %v1273
    %v1416 = vpack.c.b16 %v1278, %v1276
    %v1417 = vpack.c.b16 %v1279, %v1277
    %v1418 = vpack.c.b16 %v1282, %v1280
    %v1419 = vpack.c.b16 %v1283, %v1281
    %v1420 = vpack.c.b16 %v1286, %v1284
    %v1421 = vpack.c.b16 %v1287, %v1285
    %v1422 = vpack.c.b16 %v1290, %v1288
    %v1423 = vpack.c.b16 %v1291, %v1289
    %v1424 = vpack.c.b16 %v1294, %v1292
    %v1425 = vpack.c.b16 %v1295, %v1293
    %v1426 = vpack.c.b16 %v1298, %v1296
    %v1427 = vpack.c.b16 %v1299, %v1297
    %v1428 = vpack.c.b16 %v1302, %v1300
    %v1429 = vpack.c.b16 %v1303, %v1301
    %v1430 = vpack.c.b16 %v1306, %v1304
    %v1431 = vpack.c.b16 %v1307, %v1305
    %v1432 = vpack.c.b16 %v1310, %v1308
    %v1433 = vpack.c.b16 %v1311, %v1309
    %v1434 = vpack.c.b16 %v1314, %v1312
    %v1435 = vpack.c.b16 %v1315, %v1313
    %v1436 = vpack.c.b16 %v1318, %v1316
    %v1437 = vpack.c.b16 %v1319, %v1317
    %v1438 = vpack.c.b16 %v1322, %v1320
    %v1439 = vpack.c.b16 %v1323, %v1321
    %v1440 = vpack.c.b16 %v1326, %v1324
    %v1441 = vpack.c.b16 %v1327, %v1325
    %v1442 = vpack.c.b16 %v1330, %v1328
    %v1443 = vpack.c.b16 %v1331, %v1329
    %v1444 = vpack.c.b16 %v1334, %v1332
    %v1445 = vpack.c.b16 %v1335, %v1333
    %v1446 = vpack.c.b16 %v1338, %v1336
    %v1447 = vpack.c.b16 %v1339, %v1337
    %v1448 = vpack.c.b16 %v1342, %v1340
    %v1449 = vpack.c.b16 %v1343, %v1341
    %v1450 = vpack.c.b16 %v1346, %v1344
    %v1451 = vpack.c.b16 %v1347, %v1345
    %v1452 = vpack.c.b16 %v1350, %v1348
    %v1453 = vpack.c.b16 %v1351, %v1349
    %v1454 = vpack.c.b16 %v1354, %v1352
    %v1455 = vpack.c.b16 %v1355, %v1353
    %v1456 = vpack.c.b16 %v1358, %v1356
    %v1457 = vpack.c.b16 %v1359, %v1357
    %v1458 = vpack.c.b16 %v1362, %v1360
    %v1459 = vpack.c.b16 %v1363, %v1361
    %1556 = vmatprep.subr.bf16.mxu0 %v1379
    %1557 = vmatpush1.bf16.msra.mxu0 %v1378
    %1558 = vmatprep.subr.bf16.mxu0 %v1377
    %1559 = vmatpush1.bf16.msra.mxu0 %v1376
    %1560 = vmatprep.subr.bf16.mxu0 %v1375
    %1561 = vmatpush1.bf16.msra.mxu0 %v1374
    %1562 = vmatprep.subr.bf16.mxu0 %v1373
    %1563 = vmatpush1.bf16.msra.mxu0 %v1372
    %1564 = vmatprep.subr.bf16.mxu0 %v1371
    %1565 = vmatpush1.bf16.msra.mxu0 %v1370
    %1566 = vmatprep.subr.bf16.mxu0 %v1369
    %1567 = vmatpush1.bf16.msra.mxu0 %v1368
    %1568 = vmatprep.subr.bf16.mxu0 %v1367
    %1569 = vmatpush1.bf16.msra.mxu0 %v1366
    %1570 = vmatprep.subr.bf16.mxu0 %v1365
    %1571 = vmatpush1.bf16.msra.mxu0 %v1364
    %1572 = vmatprep.subr.bf16.mxu0 %v1395
    %1573 = vmatpush2.bf16.msra.mxu0 %v1394
    %1574 = vmatprep.subr.bf16.mxu0 %v1393
    %1575 = vmatpush2.bf16.msra.mxu0 %v1392
    %1576 = vmatprep.subr.bf16.mxu0 %v1391
    %1577 = vmatpush2.bf16.msra.mxu0 %v1390
    %1578 = vmatprep.subr.bf16.mxu0 %v1389
    %1579 = vmatpush2.bf16.msra.mxu0 %v1388
    %1580 = vmatprep.subr.bf16.mxu0 %v1387
    %1581 = vmatpush2.bf16.msra.mxu0 %v1386
    %1582 = vmatprep.subr.bf16.mxu0 %v1385
    %1583 = vmatpush2.bf16.msra.mxu0 %v1384
    %1584 = vmatprep.subr.bf16.mxu0 %v1383
    %1585 = vmatpush2.bf16.msra.mxu0 %v1382
    %1586 = vmatprep.subr.bf16.mxu0 %v1381
    %1587 = vmatpush2.bf16.msra.mxu0 %v1380
    %1588 = vmatprep.mubr.bf16.mxu0 %v1065
    %1589 = vmatmul.mubr.bf16.gmra.mxu0 %v1064
    %v1590 = vpop.f32.mrf.mxu0
    %v1591 = vadd.f32 %v1038, %v1590
    %v1592 = vpop.f32.mrf.mxu0
    %v1593 = vadd.f32 %v1040, %v1592
    %v1594 = vpop.f32.mrf.mxu0
    %v1595 = vadd.f32 %v1042, %v1594
    %v1596 = vpop.f32.mrf.mxu0
    %v1597 = vadd.f32 %v1044, %v1596
    %1598 = vdwg.mxu0
    %1599 = vmatprep.subr.bf16.mxu0 %v1411
    %1600 = vmatpush1.bf16.msra.mxu0 %v1410
    %1601 = vmatprep.subr.bf16.mxu0 %v1409
    %1602 = vmatpush1.bf16.msra.mxu0 %v1408
    %1603 = vmatprep.subr.bf16.mxu0 %v1407
    %1604 = vmatpush1.bf16.msra.mxu0 %v1406
    %1605 = vmatprep.subr.bf16.mxu0 %v1405
    %1606 = vmatpush1.bf16.msra.mxu0 %v1404
    %1607 = vmatprep.subr.bf16.mxu0 %v1403
    %1608 = vmatpush1.bf16.msra.mxu0 %v1402
    %1609 = vmatprep.subr.bf16.mxu0 %v1401
    %1610 = vmatpush1.bf16.msra.mxu0 %v1400
    %1611 = vmatprep.subr.bf16.mxu0 %v1399
    %1612 = vmatpush1.bf16.msra.mxu0 %v1398
    %1613 = vmatprep.subr.bf16.mxu0 %v1397
    %1614 = vmatpush1.bf16.msra.mxu0 %v1396
    %1615 = vmatprep.subr.bf16.mxu0 %v1427
    %1616 = vmatpush2.bf16.msra.mxu0 %v1426
    %1617 = vmatprep.subr.bf16.mxu0 %v1425
    %1618 = vmatpush2.bf16.msra.mxu0 %v1424
    %1619 = vmatprep.subr.bf16.mxu0 %v1423
    %1620 = vmatpush2.bf16.msra.mxu0 %v1422
    %1621 = vmatprep.subr.bf16.mxu0 %v1421
    %1622 = vmatpush2.bf16.msra.mxu0 %v1420
    %1623 = vmatprep.subr.bf16.mxu0 %v1419
    %1624 = vmatpush2.bf16.msra.mxu0 %v1418
    %1625 = vmatprep.subr.bf16.mxu0 %v1417
    %1626 = vmatpush2.bf16.msra.mxu0 %v1416
    %1627 = vmatprep.subr.bf16.mxu0 %v1415
    %1628 = vmatpush2.bf16.msra.mxu0 %v1414
    %1629 = vmatprep.subr.bf16.mxu0 %v1413
    %1630 = vmatpush2.bf16.msra.mxu0 %v1412
    %1631 = vmatprep.mubr.bf16.mxu0 %v1067
    %1632 = vmatmul.mubr.bf16.gmra.mxu0 %v1066
    %v1633 = vpop.f32.mrf.mxu0
    %v1634 = vadd.f32 %v1591, %v1633
    %v1635 = vpop.f32.mrf.mxu0
    %v1636 = vadd.f32 %v1593, %v1635
    %v1637 = vpop.f32.mrf.mxu0
    %v1638 = vadd.f32 %v1595, %v1637
    %v1639 = vpop.f32.mrf.mxu0
    %v1640 = vadd.f32 %v1597, %v1639
    %1641 = vdwg.mxu0
    %1642 = vmatprep.subr.bf16.mxu0 %v1443
    %1643 = vmatpush1.bf16.msra.mxu0 %v1442
    %1644 = vmatprep.subr.bf16.mxu0 %v1441
    %1645 = vmatpush1.bf16.msra.mxu0 %v1440
    %1646 = vmatprep.subr.bf16.mxu0 %v1439
    %1647 = vmatpush1.bf16.msra.mxu0 %v1438
    %1648 = vmatprep.subr.bf16.mxu0 %v1437
    %1649 = vmatpush1.bf16.msra.mxu0 %v1436
    %1650 = vmatprep.subr.bf16.mxu0 %v1435
    %1651 = vmatpush1.bf16.msra.mxu0 %v1434
    %1652 = vmatprep.subr.bf16.mxu0 %v1433
    %1653 = vmatpush1.bf16.msra.mxu0 %v1432
    %1654 = vmatprep.subr.bf16.mxu0 %v1431
    %1655 = vmatpush1.bf16.msra.mxu0 %v1430
    %1656 = vmatprep.subr.bf16.mxu0 %v1429
    %1657 = vmatpush1.bf16.msra.mxu0 %v1428
    %1658 = vmatprep.subr.bf16.mxu0 %v1459
    %1659 = vmatpush2.bf16.msra.mxu0 %v1458
    %1660 = vmatprep.subr.bf16.mxu0 %v1457
    %1661 = vmatpush2.bf16.msra.mxu0 %v1456
    %1662 = vmatprep.subr.bf16.mxu0 %v1455
    %1663 = vmatpush2.bf16.msra.mxu0 %v1454
    %1664 = vmatprep.subr.bf16.mxu0 %v1453
    %1665 = vmatpush2.bf16.msra.mxu0 %v1452
    %1666 = vmatprep.subr.bf16.mxu0 %v1451
    %1667 = vmatpush2.bf16.msra.mxu0 %v1450
    %1668 = vmatprep.subr.bf16.mxu0 %v1449
    %1669 = vmatpush2.bf16.msra.mxu0 %v1448
    %1670 = vmatprep.subr.bf16.mxu0 %v1447
    %1671 = vmatpush2.bf16.msra.mxu0 %v1446
    %1672 = vmatprep.subr.bf16.mxu0 %v1445
    %1673 = vmatpush2.bf16.msra.mxu0 %v1444
    %1674 = vmatprep.mubr.bf16.mxu0 %v1069
    %1675 = vmatmul.mubr.bf16.gmra.mxu0 %v1068
    %v1676 = vpop.f32.mrf.mxu0
    %v1677 = vadd.f32 %v1634, %v1676
    %v1678 = vpop.f32.mrf.mxu0
    %v1679 = vadd.f32 %v1636, %v1678
    %v1680 = vpop.f32.mrf.mxu0
    %v1681 = vadd.f32 %v1638, %v1680
    %v1682 = vpop.f32.mrf.mxu0
    %v1683 = vadd.f32 %v1640, %v1682
    %1684 = vdwg.mxu0
    %v1685 = vld [vmem:[#allocation2] sm:$0xee]
    %v1686 = vld [vmem:[#allocation2 + $0x8] sm:$0xee]
    %v1687 = vld [vmem:[#allocation2 + $0x10] sm:$0xee]
    %v1688 = vld [vmem:[#allocation2 + $0x30] sm:$0xee]
    %v1689 = vld [vmem:[#allocation2 + $0x38] sm:$0xee]
    %v1690 = vld [vmem:[#allocation2 + $0x40] sm:$0xee]
    %vm1703 = vcmask 1042432
    %vm1704 = vcmask 1046532
    %vm1705 = vmor %vm1703, %vm1704
    %v1706 = vrot.slane %v1685, 5
    %v1707 = vrot.slane %v1706, 4
    %v1708 = vrot.slane %v223, 5
    %v1709 = vsel %vm1705, %v1707, %v1708
    %v1710 = vrot.slane %v1686, 5
    %v1711 = vrot.slane %v1710, 4
    %v1712 = vrot.slane %v224, 5
    %v1713 = vsel %vm1705, %v1711, %v1712
    %v1714 = vrot.slane %v1687, 5
    %v1715 = vrot.slane %v1714, 4
    %v1716 = vrot.slane %v225, 5
    %v1717 = vsel %vm1705, %v1715, %v1716
    %v1718 = vrot.slane %v1688, 5
    %v1719 = vrot.slane %v1718, 4
    %v1720 = vrot.slane %v226, 5
    %v1721 = vsel %vm1705, %v1719, %v1720
    %v1722 = vrot.slane %v1689, 5
    %v1723 = vrot.slane %v1722, 4
    %v1724 = vrot.slane %v227, 5
    %v1725 = vsel %vm1705, %v1723, %v1724
    %v1726 = vrot.slane %v1690, 5
    %v1727 = vrot.slane %v1726, 4
    %v1728 = vrot.slane %v228, 5
    %v1729 = vsel %vm1705, %v1727, %v1728
    %s1730 = scalar_lea.vmem [#allocation3], 1536
    %v1731 = vld [vmem:[%s1730] sm:$0xff]
    %v1732 = vld [vmem:[%s1730 + $0x8] sm:$0xff]
    %v1733 = vld [vmem:[%s1730 + $0x10] sm:$0xff]
    %v1734 = vld [vmem:[%s1730 + $0x18] sm:$0xff]
    %v1735 = vld [vmem:[%s1730 + $0x20] sm:$0xff]
    %v1736 = vld [vmem:[%s1730 + $0x28] sm:$0xff]
    %v1737 = vld [vmem:[%s1730 + $0x30] sm:$0xff]
    %v1738 = vld [vmem:[%s1730 + $0x38] sm:$0xff]
    %v1739 = vld [vmem:[%s1730 + $0x40] sm:$0xff]
    %v1740 = vld [vmem:[%s1730 + $0x48] sm:$0xff]
    %v1741 = vld [vmem:[%s1730 + $0x50] sm:$0xff]
    %v1742 = vld [vmem:[%s1730 + $0x58] sm:$0xff]
    %v1743 = vld [vmem:[%s1730 + $0x60] sm:$0xff]
    %v1744 = vld [vmem:[%s1730 + $0x68] sm:$0xff]
    %v1745 = vld [vmem:[%s1730 + $0x70] sm:$0xff]
    %v1746 = vld [vmem:[%s1730 + $0x78] sm:$0xff]
    %v1747 = vld [vmem:[%s1730 + $0x80] sm:$0xff]
    %v1748 = vld [vmem:[%s1730 + $0x88] sm:$0xff]
    %v1749 = vld [vmem:[%s1730 + $0x90] sm:$0xff]
    %v1750 = vld [vmem:[%s1730 + $0x98] sm:$0xff]
    %v1751 = vld [vmem:[%s1730 + $0xa0] sm:$0xff]
    %v1752 = vld [vmem:[%s1730 + $0xa8] sm:$0xff]
    %v1753 = vld [vmem:[%s1730 + $0xb0] sm:$0xff]
    %v1754 = vld [vmem:[%s1730 + $0xb8] sm:$0xff]
    %v1755 = vld [vmem:[%s1730 + $0xc0] sm:$0xff]
    %v1756 = vld [vmem:[%s1730 + $0xc8] sm:$0xff]
    %v1757 = vld [vmem:[%s1730 + $0xd0] sm:$0xff]
    %v1758 = vld [vmem:[%s1730 + $0xd8] sm:$0xff]
    %v1759 = vld [vmem:[%s1730 + $0xe0] sm:$0xff]
    %v1760 = vld [vmem:[%s1730 + $0xe8] sm:$0xff]
    %v1761 = vld [vmem:[%s1730 + $0xf0] sm:$0xff]
    %v1762 = vld [vmem:[%s1730 + $0xf8] sm:$0xff]
    %v1763 = vld [vmem:[%s1730 + $0x100] sm:$0xff]
    %v1764 = vld [vmem:[%s1730 + $0x108] sm:$0xff]
    %v1765 = vld [vmem:[%s1730 + $0x110] sm:$0xff]
    %v1766 = vld [vmem:[%s1730 + $0x118] sm:$0xff]
    %v1767 = vld [vmem:[%s1730 + $0x120] sm:$0xff]
    %v1768 = vld [vmem:[%s1730 + $0x128] sm:$0xff]
    %v1769 = vld [vmem:[%s1730 + $0x130] sm:$0xff]
    %v1770 = vld [vmem:[%s1730 + $0x138] sm:$0xff]
    %v1771 = vld [vmem:[%s1730 + $0x140] sm:$0xff]
    %v1772 = vld [vmem:[%s1730 + $0x148] sm:$0xff]
    %v1773 = vld [vmem:[%s1730 + $0x150] sm:$0xff]
    %v1774 = vld [vmem:[%s1730 + $0x158] sm:$0xff]
    %v1775 = vld [vmem:[%s1730 + $0x160] sm:$0xff]
    %v1776 = vld [vmem:[%s1730 + $0x168] sm:$0xff]
    %v1777 = vld [vmem:[%s1730 + $0x170] sm:$0xff]
    %v1778 = vld [vmem:[%s1730 + $0x178] sm:$0xff]
    %v1779 = vld [vmem:[%s1730 + $0x180] sm:$0xff]
    %v1780 = vld [vmem:[%s1730 + $0x188] sm:$0xff]
    %v1781 = vld [vmem:[%s1730 + $0x190] sm:$0xff]
    %v1782 = vld [vmem:[%s1730 + $0x198] sm:$0xff]
    %v1783 = vld [vmem:[%s1730 + $0x1a0] sm:$0xff]
    %v1784 = vld [vmem:[%s1730 + $0x1a8] sm:$0xff]
    %v1785 = vld [vmem:[%s1730 + $0x1b0] sm:$0xff]
    %v1786 = vld [vmem:[%s1730 + $0x1b8] sm:$0xff]
    %v1787 = vld [vmem:[%s1730 + $0x1c0] sm:$0xff]
    %v1788 = vld [vmem:[%s1730 + $0x1c8] sm:$0xff]
    %v1789 = vld [vmem:[%s1730 + $0x1d0] sm:$0xff]
    %v1790 = vld [vmem:[%s1730 + $0x1d8] sm:$0xff]
    %v1791 = vld [vmem:[%s1730 + $0x1e0] sm:$0xff]
    %v1792 = vld [vmem:[%s1730 + $0x1e8] sm:$0xff]
    %v1793 = vld [vmem:[%s1730 + $0x1f0] sm:$0xff]
    %v1794 = vld [vmem:[%s1730 + $0x1f8] sm:$0xff]
    %v1795 = vld [vmem:[%s1730 + $0x200] sm:$0xff]
    %v1796 = vld [vmem:[%s1730 + $0x208] sm:$0xff]
    %v1797 = vld [vmem:[%s1730 + $0x210] sm:$0xff]
    %v1798 = vld [vmem:[%s1730 + $0x218] sm:$0xff]
    %v1799 = vld [vmem:[%s1730 + $0x220] sm:$0xff]
    %v1800 = vld [vmem:[%s1730 + $0x228] sm:$0xff]
    %v1801 = vld [vmem:[%s1730 + $0x230] sm:$0xff]
    %v1802 = vld [vmem:[%s1730 + $0x238] sm:$0xff]
    %v1803 = vld [vmem:[%s1730 + $0x240] sm:$0xff]
    %v1804 = vld [vmem:[%s1730 + $0x248] sm:$0xff]
    %v1805 = vld [vmem:[%s1730 + $0x250] sm:$0xff]
    %v1806 = vld [vmem:[%s1730 + $0x258] sm:$0xff]
    %v1807 = vld [vmem:[%s1730 + $0x260] sm:$0xff]
    %v1808 = vld [vmem:[%s1730 + $0x268] sm:$0xff]
    %v1809 = vld [vmem:[%s1730 + $0x270] sm:$0xff]
    %v1810 = vld [vmem:[%s1730 + $0x278] sm:$0xff]
    %v1811 = vld [vmem:[%s1730 + $0x280] sm:$0xff]
    %v1812 = vld [vmem:[%s1730 + $0x288] sm:$0xff]
    %v1813 = vld [vmem:[%s1730 + $0x290] sm:$0xff]
    %v1814 = vld [vmem:[%s1730 + $0x298] sm:$0xff]
    %v1815 = vld [vmem:[%s1730 + $0x2a0] sm:$0xff]
    %v1816 = vld [vmem:[%s1730 + $0x2a8] sm:$0xff]
    %v1817 = vld [vmem:[%s1730 + $0x2b0] sm:$0xff]
    %v1818 = vld [vmem:[%s1730 + $0x2b8] sm:$0xff]
    %v1819 = vld [vmem:[%s1730 + $0x2c0] sm:$0xff]
    %v1820 = vld [vmem:[%s1730 + $0x2c8] sm:$0xff]
    %v1821 = vld [vmem:[%s1730 + $0x2d0] sm:$0xff]
    %v1822 = vld [vmem:[%s1730 + $0x2d8] sm:$0xff]
    %v1823 = vld [vmem:[%s1730 + $0x2e0] sm:$0xff]
    %v1824 = vld [vmem:[%s1730 + $0x2e8] sm:$0xff]
    %v1825 = vld [vmem:[%s1730 + $0x2f0] sm:$0xff]
    %v1826 = vld [vmem:[%s1730 + $0x2f8] sm:$0xff]
    %v1827 = vunpack.c.l.b16 %v1709
    %v1828 = vunpack.c.h.b16 %v1709
    %v1829 = vunpack.c.l.b16 %v1713
    %v1830 = vunpack.c.h.b16 %v1713
    %v1831 = vunpack.c.l.b16 %v1717
    %v1832 = vunpack.c.h.b16 %v1717
    %v1833 = vunpack.c.l.b16 %v1721
    %v1834 = vunpack.c.h.b16 %v1721
    %v1835 = vunpack.c.l.b16 %v1725
    %v1836 = vunpack.c.h.b16 %v1725
    %v1837 = vunpack.c.l.b16 %v1729
    %v1838 = vunpack.c.h.b16 %v1729
    %v1839 = vpack.c.b16 %v1833, %v1827
    %v1840 = vpack.c.b16 %v1834, %v1828
    %v1841 = vpack.c.b16 %v1835, %v1829
    %v1842 = vpack.c.b16 %v1836, %v1830
    %v1843 = vpack.c.b16 %v1837, %v1831
    %v1844 = vpack.c.b16 %v1838, %v1832
    %v1947 = vunpack.c.l.b16 %v1731
    %v1948 = vunpack.c.h.b16 %v1731
    %v1949 = vunpack.c.l.b16 %v1732
    %v1950 = vunpack.c.h.b16 %v1732
    %v1951 = vunpack.c.l.b16 %v1733
    %v1952 = vunpack.c.h.b16 %v1733
    %v1953 = vunpack.c.l.b16 %v1734
    %v1954 = vunpack.c.h.b16 %v1734
    %v1955 = vunpack.c.l.b16 %v1735
    %v1956 = vunpack.c.h.b16 %v1735
    %v1957 = vunpack.c.l.b16 %v1736
    %v1958 = vunpack.c.h.b16 %v1736
    %v1959 = vunpack.c.l.b16 %v1737
    %v1960 = vunpack.c.h.b16 %v1737
    %v1961 = vunpack.c.l.b16 %v1738
    %v1962 = vunpack.c.h.b16 %v1738
    %v1963 = vunpack.c.l.b16 %v1739
    %v1964 = vunpack.c.h.b16 %v1739
    %v1965 = vunpack.c.l.b16 %v1740
    %v1966 = vunpack.c.h.b16 %v1740
    %v1967 = vunpack.c.l.b16 %v1741
    %v1968 = vunpack.c.h.b16 %v1741
    %v1969 = vunpack.c.l.b16 %v1742
    %v1970 = vunpack.c.h.b16 %v1742
    %v1971 = vunpack.c.l.b16 %v1743
    %v1972 = vunpack.c.h.b16 %v1743
    %v1973 = vunpack.c.l.b16 %v1744
    %v1974 = vunpack.c.h.b16 %v1744
    %v1975 = vunpack.c.l.b16 %v1745
    %v1976 = vunpack.c.h.b16 %v1745
    %v1977 = vunpack.c.l.b16 %v1746
    %v1978 = vunpack.c.h.b16 %v1746
    %v1979 = vunpack.c.l.b16 %v1747
    %v1980 = vunpack.c.h.b16 %v1747
    %v1981 = vunpack.c.l.b16 %v1748
    %v1982 = vunpack.c.h.b16 %v1748
    %v1983 = vunpack.c.l.b16 %v1749
    %v1984 = vunpack.c.h.b16 %v1749
    %v1985 = vunpack.c.l.b16 %v1750
    %v1986 = vunpack.c.h.b16 %v1750
    %v1987 = vunpack.c.l.b16 %v1751
    %v1988 = vunpack.c.h.b16 %v1751
    %v1989 = vunpack.c.l.b16 %v1752
    %v1990 = vunpack.c.h.b16 %v1752
    %v1991 = vunpack.c.l.b16 %v1753
    %v1992 = vunpack.c.h.b16 %v1753
    %v1993 = vunpack.c.l.b16 %v1754
    %v1994 = vunpack.c.h.b16 %v1754
    %v1995 = vunpack.c.l.b16 %v1755
    %v1996 = vunpack.c.h.b16 %v1755
    %v1997 = vunpack.c.l.b16 %v1756
    %v1998 = vunpack.c.h.b16 %v1756
    %v1999 = vunpack.c.l.b16 %v1757
    %v2000 = vunpack.c.h.b16 %v1757
    %v2001 = vunpack.c.l.b16 %v1758
    %v2002 = vunpack.c.h.b16 %v1758
    %v2003 = vunpack.c.l.b16 %v1759
    %v2004 = vunpack.c.h.b16 %v1759
    %v2005 = vunpack.c.l.b16 %v1760
    %v2006 = vunpack.c.h.b16 %v1760
    %v2007 = vunpack.c.l.b16 %v1761
    %v2008 = vunpack.c.h.b16 %v1761
    %v2009 = vunpack.c.l.b16 %v1762
    %v2010 = vunpack.c.h.b16 %v1762
    %v2011 = vunpack.c.l.b16 %v1763
    %v2012 = vunpack.c.h.b16 %v1763
    %v2013 = vunpack.c.l.b16 %v1764
    %v2014 = vunpack.c.h.b16 %v1764
    %v2015 = vunpack.c.l.b16 %v1765
    %v2016 = vunpack.c.h.b16 %v1765
    %v2017 = vunpack.c.l.b16 %v1766
    %v2018 = vunpack.c.h.b16 %v1766
    %v2019 = vunpack.c.l.b16 %v1767
    %v2020 = vunpack.c.h.b16 %v1767
    %v2021 = vunpack.c.l.b16 %v1768
    %v2022 = vunpack.c.h.b16 %v1768
    %v2023 = vunpack.c.l.b16 %v1769
    %v2024 = vunpack.c.h.b16 %v1769
    %v2025 = vunpack.c.l.b16 %v1770
    %v2026 = vunpack.c.h.b16 %v1770
    %v2027 = vunpack.c.l.b16 %v1771
    %v2028 = vunpack.c.h.b16 %v1771
    %v2029 = vunpack.c.l.b16 %v1772
    %v2030 = vunpack.c.h.b16 %v1772
    %v2031 = vunpack.c.l.b16 %v1773
    %v2032 = vunpack.c.h.b16 %v1773
    %v2033 = vunpack.c.l.b16 %v1774
    %v2034 = vunpack.c.h.b16 %v1774
    %v2035 = vunpack.c.l.b16 %v1775
    %v2036 = vunpack.c.h.b16 %v1775
    %v2037 = vunpack.c.l.b16 %v1776
    %v2038 = vunpack.c.h.b16 %v1776
    %v2039 = vunpack.c.l.b16 %v1777
    %v2040 = vunpack.c.h.b16 %v1777
    %v2041 = vunpack.c.l.b16 %v1778
    %v2042 = vunpack.c.h.b16 %v1778
    %v2043 = vunpack.c.l.b16 %v1779
    %v2044 = vunpack.c.h.b16 %v1779
    %v2045 = vunpack.c.l.b16 %v1780
    %v2046 = vunpack.c.h.b16 %v1780
    %v2047 = vunpack.c.l.b16 %v1781
    %v2048 = vunpack.c.h.b16 %v1781
    %v2049 = vunpack.c.l.b16 %v1782
    %v2050 = vunpack.c.h.b16 %v1782
    %v2051 = vunpack.c.l.b16 %v1783
    %v2052 = vunpack.c.h.b16 %v1783
    %v2053 = vunpack.c.l.b16 %v1784
    %v2054 = vunpack.c.h.b16 %v1784
    %v2055 = vunpack.c.l.b16 %v1785
    %v2056 = vunpack.c.h.b16 %v1785
    %v2057 = vunpack.c.l.b16 %v1786
    %v2058 = vunpack.c.h.b16 %v1786
    %v2059 = vunpack.c.l.b16 %v1787
    %v2060 = vunpack.c.h.b16 %v1787
    %v2061 = vunpack.c.l.b16 %v1788
    %v2062 = vunpack.c.h.b16 %v1788
    %v2063 = vunpack.c.l.b16 %v1789
    %v2064 = vunpack.c.h.b16 %v1789
    %v2065 = vunpack.c.l.b16 %v1790
    %v2066 = vunpack.c.h.b16 %v1790
    %v2067 = vunpack.c.l.b16 %v1791
    %v2068 = vunpack.c.h.b16 %v1791
    %v2069 = vunpack.c.l.b16 %v1792
    %v2070 = vunpack.c.h.b16 %v1792
    %v2071 = vunpack.c.l.b16 %v1793
    %v2072 = vunpack.c.h.b16 %v1793
    %v2073 = vunpack.c.l.b16 %v1794
    %v2074 = vunpack.c.h.b16 %v1794
    %v2075 = vunpack.c.l.b16 %v1795
    %v2076 = vunpack.c.h.b16 %v1795
    %v2077 = vunpack.c.l.b16 %v1796
    %v2078 = vunpack.c.h.b16 %v1796
    %v2079 = vunpack.c.l.b16 %v1797
    %v2080 = vunpack.c.h.b16 %v1797
    %v2081 = vunpack.c.l.b16 %v1798
    %v2082 = vunpack.c.h.b16 %v1798
    %v2083 = vunpack.c.l.b16 %v1799
    %v2084 = vunpack.c.h.b16 %v1799
    %v2085 = vunpack.c.l.b16 %v1800
    %v2086 = vunpack.c.h.b16 %v1800
    %v2087 = vunpack.c.l.b16 %v1801
    %v2088 = vunpack.c.h.b16 %v1801
    %v2089 = vunpack.c.l.b16 %v1802
    %v2090 = vunpack.c.h.b16 %v1802
    %v2091 = vunpack.c.l.b16 %v1803
    %v2092 = vunpack.c.h.b16 %v1803
    %v2093 = vunpack.c.l.b16 %v1804
    %v2094 = vunpack.c.h.b16 %v1804
    %v2095 = vunpack.c.l.b16 %v1805
    %v2096 = vunpack.c.h.b16 %v1805
    %v2097 = vunpack.c.l.b16 %v1806
    %v2098 = vunpack.c.h.b16 %v1806
    %v2099 = vunpack.c.l.b16 %v1807
    %v2100 = vunpack.c.h.b16 %v1807
    %v2101 = vunpack.c.l.b16 %v1808
    %v2102 = vunpack.c.h.b16 %v1808
    %v2103 = vunpack.c.l.b16 %v1809
    %v2104 = vunpack.c.h.b16 %v1809
    %v2105 = vunpack.c.l.b16 %v1810
    %v2106 = vunpack.c.h.b16 %v1810
    %v2107 = vunpack.c.l.b16 %v1811
    %v2108 = vunpack.c.h.b16 %v1811
    %v2109 = vunpack.c.l.b16 %v1812
    %v2110 = vunpack.c.h.b16 %v1812
    %v2111 = vunpack.c.l.b16 %v1813
    %v2112 = vunpack.c.h.b16 %v1813
    %v2113 = vunpack.c.l.b16 %v1814
    %v2114 = vunpack.c.h.b16 %v1814
    %v2115 = vunpack.c.l.b16 %v1815
    %v2116 = vunpack.c.h.b16 %v1815
    %v2117 = vunpack.c.l.b16 %v1816
    %v2118 = vunpack.c.h.b16 %v1816
    %v2119 = vunpack.c.l.b16 %v1817
    %v2120 = vunpack.c.h.b16 %v1817
    %v2121 = vunpack.c.l.b16 %v1818
    %v2122 = vunpack.c.h.b16 %v1818
    %v2123 = vunpack.c.l.b16 %v1819
    %v2124 = vunpack.c.h.b16 %v1819
    %v2125 = vunpack.c.l.b16 %v1820
    %v2126 = vunpack.c.h.b16 %v1820
    %v2127 = vunpack.c.l.b16 %v1821
    %v2128 = vunpack.c.h.b16 %v1821
    %v2129 = vunpack.c.l.b16 %v1822
    %v2130 = vunpack.c.h.b16 %v1822
    %v2131 = vunpack.c.l.b16 %v1823
    %v2132 = vunpack.c.h.b16 %v1823
    %v2133 = vunpack.c.l.b16 %v1824
    %v2134 = vunpack.c.h.b16 %v1824
    %v2135 = vunpack.c.l.b16 %v1825
    %v2136 = vunpack.c.h.b16 %v1825
    %v2137 = vunpack.c.l.b16 %v1826
    %v2138 = vunpack.c.h.b16 %v1826
    %v2139 = vpack.c.b16 %v1949, %v1947
    %v2140 = vpack.c.b16 %v1950, %v1948
    %v2141 = vpack.c.b16 %v1953, %v1951
    %v2142 = vpack.c.b16 %v1954, %v1952
    %v2143 = vpack.c.b16 %v1957, %v1955
    %v2144 = vpack.c.b16 %v1958, %v1956
    %v2145 = vpack.c.b16 %v1961, %v1959
    %v2146 = vpack.c.b16 %v1962, %v1960
    %v2147 = vpack.c.b16 %v1965, %v1963
    %v2148 = vpack.c.b16 %v1966, %v1964
    %v2149 = vpack.c.b16 %v1969, %v1967
    %v2150 = vpack.c.b16 %v1970, %v1968
    %v2151 = vpack.c.b16 %v1973, %v1971
    %v2152 = vpack.c.b16 %v1974, %v1972
    %v2153 = vpack.c.b16 %v1977, %v1975
    %v2154 = vpack.c.b16 %v1978, %v1976
    %v2155 = vpack.c.b16 %v1981, %v1979
    %v2156 = vpack.c.b16 %v1982, %v1980
    %v2157 = vpack.c.b16 %v1985, %v1983
    %v2158 = vpack.c.b16 %v1986, %v1984
    %v2159 = vpack.c.b16 %v1989, %v1987
    %v2160 = vpack.c.b16 %v1990, %v1988
    %v2161 = vpack.c.b16 %v1993, %v1991
    %v2162 = vpack.c.b16 %v1994, %v1992
    %v2163 = vpack.c.b16 %v1997, %v1995
    %v2164 = vpack.c.b16 %v1998, %v1996
    %v2165 = vpack.c.b16 %v2001, %v1999
    %v2166 = vpack.c.b16 %v2002, %v2000
    %v2167 = vpack.c.b16 %v2005, %v2003
    %v2168 = vpack.c.b16 %v2006, %v2004
    %v2169 = vpack.c.b16 %v2009, %v2007
    %v2170 = vpack.c.b16 %v2010, %v2008
    %v2171 = vpack.c.b16 %v2013, %v2011
    %v2172 = vpack.c.b16 %v2014, %v2012
    %v2173 = vpack.c.b16 %v2017, %v2015
    %v2174 = vpack.c.b16 %v2018, %v2016
    %v2175 = vpack.c.b16 %v2021, %v2019
    %v2176 = vpack.c.b16 %v2022, %v2020
    %v2177 = vpack.c.b16 %v2025, %v2023
    %v2178 = vpack.c.b16 %v2026, %v2024
    %v2179 = vpack.c.b16 %v2029, %v2027
    %v2180 = vpack.c.b16 %v2030, %v2028
    %v2181 = vpack.c.b16 %v2033, %v2031
    %v2182 = vpack.c.b16 %v2034, %v2032
    %v2183 = vpack.c.b16 %v2037, %v2035
    %v2184 = vpack.c.b16 %v2038, %v2036
    %v2185 = vpack.c.b16 %v2041, %v2039
    %v2186 = vpack.c.b16 %v2042, %v2040
    %v2187 = vpack.c.b16 %v2045, %v2043
    %v2188 = vpack.c.b16 %v2046, %v2044
    %v2189 = vpack.c.b16 %v2049, %v2047
    %v2190 = vpack.c.b16 %v2050, %v2048
    %v2191 = vpack.c.b16 %v2053, %v2051
    %v2192 = vpack.c.b16 %v2054, %v2052
    %v2193 = vpack.c.b16 %v2057, %v2055
    %v2194 = vpack.c.b16 %v2058, %v2056
    %v2195 = vpack.c.b16 %v2061, %v2059
    %v2196 = vpack.c.b16 %v2062, %v2060
    %v2197 = vpack.c.b16 %v2065, %v2063
    %v2198 = vpack.c.b16 %v2066, %v2064
    %v2199 = vpack.c.b16 %v2069, %v2067
    %v2200 = vpack.c.b16 %v2070, %v2068
    %v2201 = vpack.c.b16 %v2073, %v2071
    %v2202 = vpack.c.b16 %v2074, %v2072
    %v2203 = vpack.c.b16 %v2077, %v2075
    %v2204 = vpack.c.b16 %v2078, %v2076
    %v2205 = vpack.c.b16 %v2081, %v2079
    %v2206 = vpack.c.b16 %v2082, %v2080
    %v2207 = vpack.c.b16 %v2085, %v2083
    %v2208 = vpack.c.b16 %v2086, %v2084
    %v2209 = vpack.c.b16 %v2089, %v2087
    %v2210 = vpack.c.b16 %v2090, %v2088
    %v2211 = vpack.c.b16 %v2093, %v2091
    %v2212 = vpack.c.b16 %v2094, %v2092
    %v2213 = vpack.c.b16 %v2097, %v2095
    %v2214 = vpack.c.b16 %v2098, %v2096
    %v2215 = vpack.c.b16 %v2101, %v2099
    %v2216 = vpack.c.b16 %v2102, %v2100
    %v2217 = vpack.c.b16 %v2105, %v2103
    %v2218 = vpack.c.b16 %v2106, %v2104
    %v2219 = vpack.c.b16 %v2109, %v2107
    %v2220 = vpack.c.b16 %v2110, %v2108
    %v2221 = vpack.c.b16 %v2113, %v2111
    %v2222 = vpack.c.b16 %v2114, %v2112
    %v2223 = vpack.c.b16 %v2117, %v2115
    %v2224 = vpack.c.b16 %v2118, %v2116
    %v2225 = vpack.c.b16 %v2121, %v2119
    %v2226 = vpack.c.b16 %v2122, %v2120
    %v2227 = vpack.c.b16 %v2125, %v2123
    %v2228 = vpack.c.b16 %v2126, %v2124
    %v2229 = vpack.c.b16 %v2129, %v2127
    %v2230 = vpack.c.b16 %v2130, %v2128
    %v2231 = vpack.c.b16 %v2133, %v2131
    %v2232 = vpack.c.b16 %v2134, %v2132
    %v2233 = vpack.c.b16 %v2137, %v2135
    %v2234 = vpack.c.b16 %v2138, %v2136
    %2331 = vmatprep.subr.bf16.mxu0 %v2154
    %2332 = vmatpush1.bf16.msra.mxu0 %v2153
    %2333 = vmatprep.subr.bf16.mxu0 %v2152
    %2334 = vmatpush1.bf16.msra.mxu0 %v2151
    %2335 = vmatprep.subr.bf16.mxu0 %v2150
    %2336 = vmatpush1.bf16.msra.mxu0 %v2149
    %2337 = vmatprep.subr.bf16.mxu0 %v2148
    %2338 = vmatpush1.bf16.msra.mxu0 %v2147
    %2339 = vmatprep.subr.bf16.mxu0 %v2146
    %2340 = vmatpush1.bf16.msra.mxu0 %v2145
    %2341 = vmatprep.subr.bf16.mxu0 %v2144
    %2342 = vmatpush1.bf16.msra.mxu0 %v2143
    %2343 = vmatprep.subr.bf16.mxu0 %v2142
    %2344 = vmatpush1.bf16.msra.mxu0 %v2141
    %2345 = vmatprep.subr.bf16.mxu0 %v2140
    %2346 = vmatpush1.bf16.msra.mxu0 %v2139
    %2347 = vmatprep.subr.bf16.mxu0 %v2170
    %2348 = vmatpush2.bf16.msra.mxu0 %v2169
    %2349 = vmatprep.subr.bf16.mxu0 %v2168
    %2350 = vmatpush2.bf16.msra.mxu0 %v2167
    %2351 = vmatprep.subr.bf16.mxu0 %v2166
    %2352 = vmatpush2.bf16.msra.mxu0 %v2165
    %2353 = vmatprep.subr.bf16.mxu0 %v2164
    %2354 = vmatpush2.bf16.msra.mxu0 %v2163
    %2355 = vmatprep.subr.bf16.mxu0 %v2162
    %2356 = vmatpush2.bf16.msra.mxu0 %v2161
    %2357 = vmatprep.subr.bf16.mxu0 %v2160
    %2358 = vmatpush2.bf16.msra.mxu0 %v2159
    %2359 = vmatprep.subr.bf16.mxu0 %v2158
    %2360 = vmatpush2.bf16.msra.mxu0 %v2157
    %2361 = vmatprep.subr.bf16.mxu0 %v2156
    %2362 = vmatpush2.bf16.msra.mxu0 %v2155
    %2363 = vmatprep.mubr.bf16.mxu0 %v1840
    %2364 = vmatmul.mubr.bf16.gmra.mxu0 %v1839
    %v2365 = vpop.f32.mrf.mxu0
    %v2366 = vadd.f32 0.0, %v2365
    %v2367 = vpop.f32.mrf.mxu0
    %v2368 = vadd.f32 0.0, %v2367
    %v2369 = vpop.f32.mrf.mxu0
    %v2370 = vadd.f32 0.0, %v2369
    %v2371 = vpop.f32.mrf.mxu0
    %v2372 = vadd.f32 0.0, %v2371
    %2373 = vdwg.mxu0
    %2374 = vmatprep.subr.bf16.mxu0 %v2186
    %2375 = vmatpush1.bf16.msra.mxu0 %v2185
    %2376 = vmatprep.subr.bf16.mxu0 %v2184
    %2377 = vmatpush1.bf16.msra.mxu0 %v2183
    %2378 = vmatprep.subr.bf16.mxu0 %v2182
    %2379 = vmatpush1.bf16.msra.mxu0 %v2181
    %2380 = vmatprep.subr.bf16.mxu0 %v2180
    %2381 = vmatpush1.bf16.msra.mxu0 %v2179
    %2382 = vmatprep.subr.bf16.mxu0 %v2178
    %2383 = vmatpush1.bf16.msra.mxu0 %v2177
    %2384 = vmatprep.subr.bf16.mxu0 %v2176
    %2385 = vmatpush1.bf16.msra.mxu0 %v2175
    %2386 = vmatprep.subr.bf16.mxu0 %v2174
    %2387 = vmatpush1.bf16.msra.mxu0 %v2173
    %2388 = vmatprep.subr.bf16.mxu0 %v2172
    %2389 = vmatpush1.bf16.msra.mxu0 %v2171
    %2390 = vmatprep.subr.bf16.mxu0 %v2202
    %2391 = vmatpush2.bf16.msra.mxu0 %v2201
    %2392 = vmatprep.subr.bf16.mxu0 %v2200
    %2393 = vmatpush2.bf16.msra.mxu0 %v2199
    %2394 = vmatprep.subr.bf16.mxu0 %v2198
    %2395 = vmatpush2.bf16.msra.mxu0 %v2197
    %2396 = vmatprep.subr.bf16.mxu0 %v2196
    %2397 = vmatpush2.bf16.msra.mxu0 %v2195
    %2398 = vmatprep.subr.bf16.mxu0 %v2194
    %2399 = vmatpush2.bf16.msra.mxu0 %v2193
    %2400 = vmatprep.subr.bf16.mxu0 %v2192
    %2401 = vmatpush2.bf16.msra.mxu0 %v2191
    %2402 = vmatprep.subr.bf16.mxu0 %v2190
    %2403 = vmatpush2.bf16.msra.mxu0 %v2189
    %2404 = vmatprep.subr.bf16.mxu0 %v2188
    %2405 = vmatpush2.bf16.msra.mxu0 %v2187
    %2406 = vmatprep.mubr.bf16.mxu0 %v1842
    %2407 = vmatmul.mubr.bf16.gmra.mxu0 %v1841
    %v2408 = vpop.f32.mrf.mxu0
    %v2409 = vadd.f32 %v2366, %v2408
    %v2410 = vpop.f32.mrf.mxu0
    %v2411 = vadd.f32 %v2368, %v2410
    %v2412 = vpop.f32.mrf.mxu0
    %v2413 = vadd.f32 %v2370, %v2412
    %v2414 = vpop.f32.mrf.mxu0
    %v2415 = vadd.f32 %v2372, %v2414
    %2416 = vdwg.mxu0
    %2417 = vmatprep.subr.bf16.mxu0 %v2218
    %2418 = vmatpush1.bf16.msra.mxu0 %v2217
    %2419 = vmatprep.subr.bf16.mxu0 %v2216
    %2420 = vmatpush1.bf16.msra.mxu0 %v2215
    %2421 = vmatprep.subr.bf16.mxu0 %v2214
    %2422 = vmatpush1.bf16.msra.mxu0 %v2213
    %2423 = vmatprep.subr.bf16.mxu0 %v2212
    %2424 = vmatpush1.bf16.msra.mxu0 %v2211
    %2425 = vmatprep.subr.bf16.mxu0 %v2210
    %2426 = vmatpush1.bf16.msra.mxu0 %v2209
    %2427 = vmatprep.subr.bf16.mxu0 %v2208
    %2428 = vmatpush1.bf16.msra.mxu0 %v2207
    %2429 = vmatprep.subr.bf16.mxu0 %v2206
    %2430 = vmatpush1.bf16.msra.mxu0 %v2205
    %2431 = vmatprep.subr.bf16.mxu0 %v2204
    %2432 = vmatpush1.bf16.msra.mxu0 %v2203
    %2433 = vmatprep.subr.bf16.mxu0 %v2234
    %2434 = vmatpush2.bf16.msra.mxu0 %v2233
    %2435 = vmatprep.subr.bf16.mxu0 %v2232
    %2436 = vmatpush2.bf16.msra.mxu0 %v2231
    %2437 = vmatprep.subr.bf16.mxu0 %v2230
    %2438 = vmatpush2.bf16.msra.mxu0 %v2229
    %2439 = vmatprep.subr.bf16.mxu0 %v2228
    %2440 = vmatpush2.bf16.msra.mxu0 %v2227
    %2441 = vmatprep.subr.bf16.mxu0 %v2226
    %2442 = vmatpush2.bf16.msra.mxu0 %v2225
    %2443 = vmatprep.subr.bf16.mxu0 %v2224
    %2444 = vmatpush2.bf16.msra.mxu0 %v2223
    %2445 = vmatprep.subr.bf16.mxu0 %v2222
    %2446 = vmatpush2.bf16.msra.mxu0 %v2221
    %2447 = vmatprep.subr.bf16.mxu0 %v2220
    %2448 = vmatpush2.bf16.msra.mxu0 %v2219
    %2449 = vmatprep.mubr.bf16.mxu0 %v1844
    %2450 = vmatmul.mubr.bf16.gmra.mxu0 %v1843
    %v2451 = vpop.f32.mrf.mxu0
    %v2452 = vadd.f32 %v2409, %v2451
    %v2453 = vpop.f32.mrf.mxu0
    %v2454 = vadd.f32 %v2411, %v2453
    %v2455 = vpop.f32.mrf.mxu0
    %v2456 = vadd.f32 %v2413, %v2455
    %v2457 = vpop.f32.mrf.mxu0
    %v2458 = vadd.f32 %v2415, %v2457
    %2459 = vdwg.mxu0
    %v2460 = vadd.f32 %v1677, %v2452
    %v2461 = vadd.f32 %v1679, %v2454
    %v2462 = vadd.f32 %v1681, %v2456
    %v2463 = vadd.f32 %v1683, %v2458
    %v2464 = vld [vmem:[#allocation2 + $0x18] sm:$0x33]
    %v2465 = vld [vmem:[#allocation2 + $0x20] sm:$0x33]
    %v2466 = vld [vmem:[#allocation2 + $0x28] sm:$0x33]
    %v2467 = vld [vmem:[#allocation2 + $0x48] sm:$0x33]
    %v2468 = vld [vmem:[#allocation2 + $0x50] sm:$0x33]
    %v2469 = vld [vmem:[#allocation2 + $0x58] sm:$0x33]
    %vm2470 = vsmask.f32 2304
    %vm2471 = vsmask.f32 6416
    %vm2472 = vmor %vm2470, %vm2471
    %v2474 = vshrl.u32 %v1685, 16
    %v2476 = vrot.slane %v2474, 5
    %v2477 = vshll.u32 %v1685, 16
    %v2479 = vrot.slane %v2477, 6
    %v2480 = vor.u32 %v2476, %v2479
    %v2481 = vrot.slane %v2480, 4
    %v2483 = vshrl.u32 %v2464, 16
    %v2485 = vrot.slane %v2483, 5
    %v2486 = vshll.u32 %v2464, 16
    %v2488 = vrot.slane %v2486, 6
    %v2489 = vor.u32 %v2485, %v2488
    %v2490 = vsel %vm2472, %v2481, %v2489
    %v2492 = vshrl.u32 %v1686, 16
    %v2494 = vrot.slane %v2492, 5
    %v2495 = vshll.u32 %v1686, 16
    %v2497 = vrot.slane %v2495, 6
    %v2498 = vor.u32 %v2494, %v2497
    %v2499 = vrot.slane %v2498, 4
    %v2501 = vshrl.u32 %v2465, 16
    %v2503 = vrot.slane %v2501, 5
    %v2504 = vshll.u32 %v2465, 16
    %v2506 = vrot.slane %v2504, 6
    %v2507 = vor.u32 %v2503, %v2506
    %v2508 = vsel %vm2472, %v2499, %v2507
    %v2510 = vshrl.u32 %v1687, 16
    %v2512 = vrot.slane %v2510, 5
    %v2513 = vshll.u32 %v1687, 16
    %v2515 = vrot.slane %v2513, 6
    %v2516 = vor.u32 %v2512, %v2515
    %v2517 = vrot.slane %v2516, 4
    %v2519 = vshrl.u32 %v2466, 16
    %v2521 = vrot.slane %v2519, 5
    %v2522 = vshll.u32 %v2466, 16
    %v2524 = vrot.slane %v2522, 6
    %v2525 = vor.u32 %v2521, %v2524
    %v2526 = vsel %vm2472, %v2517, %v2525
    %v2528 = vshrl.u32 %v1688, 16
    %v2530 = vrot.slane %v2528, 5
    %v2531 = vshll.u32 %v1688, 16
    %v2533 = vrot.slane %v2531, 6
    %v2534 = vor.u32 %v2530, %v2533
    %v2535 = vrot.slane %v2534, 4
    %v2537 = vshrl.u32 %v2467, 16
    %v2539 = vrot.slane %v2537, 5
    %v2540 = vshll.u32 %v2467, 16
    %v2542 = vrot.slane %v2540, 6
    %v2543 = vor.u32 %v2539, %v2542
    %v2544 = vsel %vm2472, %v2535, %v2543
    %v2546 = vshrl.u32 %v1689, 16
    %v2548 = vrot.slane %v2546, 5
    %v2549 = vshll.u32 %v1689, 16
    %v2551 = vrot.slane %v2549, 6
    %v2552 = vor.u32 %v2548, %v2551
    %v2553 = vrot.slane %v2552, 4
    %v2555 = vshrl.u32 %v2468, 16
    %v2557 = vrot.slane %v2555, 5
    %v2558 = vshll.u32 %v2468, 16
    %v2560 = vrot.slane %v2558, 6
    %v2561 = vor.u32 %v2557, %v2560
    %v2562 = vsel %vm2472, %v2553, %v2561
    %v2564 = vshrl.u32 %v1690, 16
    %v2566 = vrot.slane %v2564, 5
    %v2567 = vshll.u32 %v1690, 16
    %v2569 = vrot.slane %v2567, 6
    %v2570 = vor.u32 %v2566, %v2569
    %v2571 = vrot.slane %v2570, 4
    %v2573 = vshrl.u32 %v2469, 16
    %v2575 = vrot.slane %v2573, 5
    %v2576 = vshll.u32 %v2469, 16
    %v2578 = vrot.slane %v2576, 6
    %v2579 = vor.u32 %v2575, %v2578
    %v2580 = vsel %vm2472, %v2571, %v2579
    %s2581 = scalar_lea.vmem [#allocation3], 2304
    %v2582 = vld [vmem:[%s2581] sm:$0xff]
    %v2583 = vld [vmem:[%s2581 + $0x8] sm:$0xff]
    %v2584 = vld [vmem:[%s2581 + $0x10] sm:$0xff]
    %v2585 = vld [vmem:[%s2581 + $0x18] sm:$0xff]
    %v2586 = vld [vmem:[%s2581 + $0x20] sm:$0xff]
    %v2587 = vld [vmem:[%s2581 + $0x28] sm:$0xff]
    %v2588 = vld [vmem:[%s2581 + $0x30] sm:$0xff]
    %v2589 = vld [vmem:[%s2581 + $0x38] sm:$0xff]
    %v2590 = vld [vmem:[%s2581 + $0x40] sm:$0xff]
    %v2591 = vld [vmem:[%s2581 + $0x48] sm:$0xff]
    %v2592 = vld [vmem:[%s2581 + $0x50] sm:$0xff]
    %v2593 = vld [vmem:[%s2581 + $0x58] sm:$0xff]
    %v2594 = vld [vmem:[%s2581 + $0x60] sm:$0xff]
    %v2595 = vld [vmem:[%s2581 + $0x68] sm:$0xff]
    %v2596 = vld [vmem:[%s2581 + $0x70] sm:$0xff]
    %v2597 = vld [vmem:[%s2581 + $0x78] sm:$0xff]
    %v2598 = vld [vmem:[%s2581 + $0x80] sm:$0xff]
    %v2599 = vld [vmem:[%s2581 + $0x88] sm:$0xff]
    %v2600 = vld [vmem:[%s2581 + $0x90] sm:$0xff]
    %v2601 = vld [vmem:[%s2581 + $0x98] sm:$0xff]
    %v2602 = vld [vmem:[%s2581 + $0xa0] sm:$0xff]
    %v2603 = vld [vmem:[%s2581 + $0xa8] sm:$0xff]
    %v2604 = vld [vmem:[%s2581 + $0xb0] sm:$0xff]
    %v2605 = vld [vmem:[%s2581 + $0xb8] sm:$0xff]
    %v2606 = vld [vmem:[%s2581 + $0xc0] sm:$0xff]
    %v2607 = vld [vmem:[%s2581 + $0xc8] sm:$0xff]
    %v2608 = vld [vmem:[%s2581 + $0xd0] sm:$0xff]
    %v2609 = vld [vmem:[%s2581 + $0xd8] sm:$0xff]
    %v2610 = vld [vmem:[%s2581 + $0xe0] sm:$0xff]
    %v2611 = vld [vmem:[%s2581 + $0xe8] sm:$0xff]
    %v2612 = vld [vmem:[%s2581 + $0xf0] sm:$0xff]
    %v2613 = vld [vmem:[%s2581 + $0xf8] sm:$0xff]
    %v2614 = vld [vmem:[%s2581 + $0x100] sm:$0xff]
    %v2615 = vld [vmem:[%s2581 + $0x108] sm:$0xff]
    %v2616 = vld [vmem:[%s2581 + $0x110] sm:$0xff]
    %v2617 = vld [vmem:[%s2581 + $0x118] sm:$0xff]
    %v2618 = vld [vmem:[%s2581 + $0x120] sm:$0xff]
    %v2619 = vld [vmem:[%s2581 + $0x128] sm:$0xff]
    %v2620 = vld [vmem:[%s2581 + $0x130] sm:$0xff]
    %v2621 = vld [vmem:[%s2581 + $0x138] sm:$0xff]
    %v2622 = vld [vmem:[%s2581 + $0x140] sm:$0xff]
    %v2623 = vld [vmem:[%s2581 + $0x148] sm:$0xff]
    %v2624 = vld [vmem:[%s2581 + $0x150] sm:$0xff]
    %v2625 = vld [vmem:[%s2581 + $0x158] sm:$0xff]
    %v2626 = vld [vmem:[%s2581 + $0x160] sm:$0xff]
    %v2627 = vld [vmem:[%s2581 + $0x168] sm:$0xff]
    %v2628 = vld [vmem:[%s2581 + $0x170] sm:$0xff]
    %v2629 = vld [vmem:[%s2581 + $0x178] sm:$0xff]
    %v2630 = vld [vmem:[%s2581 + $0x180] sm:$0xff]
    %v2631 = vld [vmem:[%s2581 + $0x188] sm:$0xff]
    %v2632 = vld [vmem:[%s2581 + $0x190] sm:$0xff]
    %v2633 = vld [vmem:[%s2581 + $0x198] sm:$0xff]
    %v2634 = vld [vmem:[%s2581 + $0x1a0] sm:$0xff]
    %v2635 = vld [vmem:[%s2581 + $0x1a8] sm:$0xff]
    %v2636 = vld [vmem:[%s2581 + $0x1b0] sm:$0xff]
    %v2637 = vld [vmem:[%s2581 + $0x1b8] sm:$0xff]
    %v2638 = vld [vmem:[%s2581 + $0x1c0] sm:$0xff]
    %v2639 = vld [vmem:[%s2581 + $0x1c8] sm:$0xff]
    %v2640 = vld [vmem:[%s2581 + $0x1d0] sm:$0xff]
    %v2641 = vld [vmem:[%s2581 + $0x1d8] sm:$0xff]
    %v2642 = vld [vmem:[%s2581 + $0x1e0] sm:$0xff]
    %v2643 = vld [vmem:[%s2581 + $0x1e8] sm:$0xff]
    %v2644 = vld [vmem:[%s2581 + $0x1f0] sm:$0xff]
    %v2645 = vld [vmem:[%s2581 + $0x1f8] sm:$0xff]
    %v2646 = vld [vmem:[%s2581 + $0x200] sm:$0xff]
    %v2647 = vld [vmem:[%s2581 + $0x208] sm:$0xff]
    %v2648 = vld [vmem:[%s2581 + $0x210] sm:$0xff]
    %v2649 = vld [vmem:[%s2581 + $0x218] sm:$0xff]
    %v2650 = vld [vmem:[%s2581 + $0x220] sm:$0xff]
    %v2651 = vld [vmem:[%s2581 + $0x228] sm:$0xff]
    %v2652 = vld [vmem:[%s2581 + $0x230] sm:$0xff]
    %v2653 = vld [vmem:[%s2581 + $0x238] sm:$0xff]
    %v2654 = vld [vmem:[%s2581 + $0x240] sm:$0xff]
    %v2655 = vld [vmem:[%s2581 + $0x248] sm:$0xff]
    %v2656 = vld [vmem:[%s2581 + $0x250] sm:$0xff]
    %v2657 = vld [vmem:[%s2581 + $0x258] sm:$0xff]
    %v2658 = vld [vmem:[%s2581 + $0x260] sm:$0xff]
    %v2659 = vld [vmem:[%s2581 + $0x268] sm:$0xff]
    %v2660 = vld [vmem:[%s2581 + $0x270] sm:$0xff]
    %v2661 = vld [vmem:[%s2581 + $0x278] sm:$0xff]
    %v2662 = vld [vmem:[%s2581 + $0x280] sm:$0xff]
    %v2663 = vld [vmem:[%s2581 + $0x288] sm:$0xff]
    %v2664 = vld [vmem:[%s2581 + $0x290] sm:$0xff]
    %v2665 = vld [vmem:[%s2581 + $0x298] sm:$0xff]
    %v2666 = vld [vmem:[%s2581 + $0x2a0] sm:$0xff]
    %v2667 = vld [vmem:[%s2581 + $0x2a8] sm:$0xff]
    %v2668 = vld [vmem:[%s2581 + $0x2b0] sm:$0xff]
    %v2669 = vld [vmem:[%s2581 + $0x2b8] sm:$0xff]
    %v2670 = vld [vmem:[%s2581 + $0x2c0] sm:$0xff]
    %v2671 = vld [vmem:[%s2581 + $0x2c8] sm:$0xff]
    %v2672 = vld [vmem:[%s2581 + $0x2d0] sm:$0xff]
    %v2673 = vld [vmem:[%s2581 + $0x2d8] sm:$0xff]
    %v2674 = vld [vmem:[%s2581 + $0x2e0] sm:$0xff]
    %v2675 = vld [vmem:[%s2581 + $0x2e8] sm:$0xff]
    %v2676 = vld [vmem:[%s2581 + $0x2f0] sm:$0xff]
    %v2677 = vld [vmem:[%s2581 + $0x2f8] sm:$0xff]
    %v2678 = vunpack.c.l.b16 %v2490
    %v2679 = vunpack.c.h.b16 %v2490
    %v2680 = vunpack.c.l.b16 %v2508
    %v2681 = vunpack.c.h.b16 %v2508
    %v2682 = vunpack.c.l.b16 %v2526
    %v2683 = vunpack.c.h.b16 %v2526
    %v2684 = vunpack.c.l.b16 %v2544
    %v2685 = vunpack.c.h.b16 %v2544
    %v2686 = vunpack.c.l.b16 %v2562
    %v2687 = vunpack.c.h.b16 %v2562
    %v2688 = vunpack.c.l.b16 %v2580
    %v2689 = vunpack.c.h.b16 %v2580
    %v2690 = vpack.c.b16 %v2684, %v2678
    %v2691 = vpack.c.b16 %v2685, %v2679
    %v2692 = vpack.c.b16 %v2686, %v2680
    %v2693 = vpack.c.b16 %v2687, %v2681
    %v2694 = vpack.c.b16 %v2688, %v2682
    %v2695 = vpack.c.b16 %v2689, %v2683
    %v2798 = vunpack.c.l.b16 %v2582
    %v2799 = vunpack.c.h.b16 %v2582
    %v2800 = vunpack.c.l.b16 %v2583
    %v2801 = vunpack.c.h.b16 %v2583
    %v2802 = vunpack.c.l.b16 %v2584
    %v2803 = vunpack.c.h.b16 %v2584
    %v2804 = vunpack.c.l.b16 %v2585
    %v2805 = vunpack.c.h.b16 %v2585
    %v2806 = vunpack.c.l.b16 %v2586
    %v2807 = vunpack.c.h.b16 %v2586
    %v2808 = vunpack.c.l.b16 %v2587
    %v2809 = vunpack.c.h.b16 %v2587
    %v2810 = vunpack.c.l.b16 %v2588
    %v2811 = vunpack.c.h.b16 %v2588
    %v2812 = vunpack.c.l.b16 %v2589
    %v2813 = vunpack.c.h.b16 %v2589
    %v2814 = vunpack.c.l.b16 %v2590
    %v2815 = vunpack.c.h.b16 %v2590
    %v2816 = vunpack.c.l.b16 %v2591
    %v2817 = vunpack.c.h.b16 %v2591
    %v2818 = vunpack.c.l.b16 %v2592
    %v2819 = vunpack.c.h.b16 %v2592
    %v2820 = vunpack.c.l.b16 %v2593
    %v2821 = vunpack.c.h.b16 %v2593
    %v2822 = vunpack.c.l.b16 %v2594
    %v2823 = vunpack.c.h.b16 %v2594
    %v2824 = vunpack.c.l.b16 %v2595
    %v2825 = vunpack.c.h.b16 %v2595
    %v2826 = vunpack.c.l.b16 %v2596
    %v2827 = vunpack.c.h.b16 %v2596
    %v2828 = vunpack.c.l.b16 %v2597
    %v2829 = vunpack.c.h.b16 %v2597
    %v2830 = vunpack.c.l.b16 %v2598
    %v2831 = vunpack.c.h.b16 %v2598
    %v2832 = vunpack.c.l.b16 %v2599
    %v2833 = vunpack.c.h.b16 %v2599
    %v2834 = vunpack.c.l.b16 %v2600
    %v2835 = vunpack.c.h.b16 %v2600
    %v2836 = vunpack.c.l.b16 %v2601
    %v2837 = vunpack.c.h.b16 %v2601
    %v2838 = vunpack.c.l.b16 %v2602
    %v2839 = vunpack.c.h.b16 %v2602
    %v2840 = vunpack.c.l.b16 %v2603
    %v2841 = vunpack.c.h.b16 %v2603
    %v2842 = vunpack.c.l.b16 %v2604
    %v2843 = vunpack.c.h.b16 %v2604
    %v2844 = vunpack.c.l.b16 %v2605
    %v2845 = vunpack.c.h.b16 %v2605
    %v2846 = vunpack.c.l.b16 %v2606
    %v2847 = vunpack.c.h.b16 %v2606
    %v2848 = vunpack.c.l.b16 %v2607
    %v2849 = vunpack.c.h.b16 %v2607
    %v2850 = vunpack.c.l.b16 %v2608
    %v2851 = vunpack.c.h.b16 %v2608
    %v2852 = vunpack.c.l.b16 %v2609
    %v2853 = vunpack.c.h.b16 %v2609
    %v2854 = vunpack.c.l.b16 %v2610
    %v2855 = vunpack.c.h.b16 %v2610
    %v2856 = vunpack.c.l.b16 %v2611
    %v2857 = vunpack.c.h.b16 %v2611
    %v2858 = vunpack.c.l.b16 %v2612
    %v2859 = vunpack.c.h.b16 %v2612
    %v2860 = vunpack.c.l.b16 %v2613
    %v2861 = vunpack.c.h.b16 %v2613
    %v2862 = vunpack.c.l.b16 %v2614
    %v2863 = vunpack.c.h.b16 %v2614
    %v2864 = vunpack.c.l.b16 %v2615
    %v2865 = vunpack.c.h.b16 %v2615
    %v2866 = vunpack.c.l.b16 %v2616
    %v2867 = vunpack.c.h.b16 %v2616
    %v2868 = vunpack.c.l.b16 %v2617
    %v2869 = vunpack.c.h.b16 %v2617
    %v2870 = vunpack.c.l.b16 %v2618
    %v2871 = vunpack.c.h.b16 %v2618
    %v2872 = vunpack.c.l.b16 %v2619
    %v2873 = vunpack.c.h.b16 %v2619
    %v2874 = vunpack.c.l.b16 %v2620
    %v2875 = vunpack.c.h.b16 %v2620
    %v2876 = vunpack.c.l.b16 %v2621
    %v2877 = vunpack.c.h.b16 %v2621
    %v2878 = vunpack.c.l.b16 %v2622
    %v2879 = vunpack.c.h.b16 %v2622
    %v2880 = vunpack.c.l.b16 %v2623
    %v2881 = vunpack.c.h.b16 %v2623
    %v2882 = vunpack.c.l.b16 %v2624
    %v2883 = vunpack.c.h.b16 %v2624
    %v2884 = vunpack.c.l.b16 %v2625
    %v2885 = vunpack.c.h.b16 %v2625
    %v2886 = vunpack.c.l.b16 %v2626
    %v2887 = vunpack.c.h.b16 %v2626
    %v2888 = vunpack.c.l.b16 %v2627
    %v2889 = vunpack.c.h.b16 %v2627
    %v2890 = vunpack.c.l.b16 %v2628
    %v2891 = vunpack.c.h.b16 %v2628
    %v2892 = vunpack.c.l.b16 %v2629
    %v2893 = vunpack.c.h.b16 %v2629
    %v2894 = vunpack.c.l.b16 %v2630
    %v2895 = vunpack.c.h.b16 %v2630
    %v2896 = vunpack.c.l.b16 %v2631
    %v2897 = vunpack.c.h.b16 %v2631
    %v2898 = vunpack.c.l.b16 %v2632
    %v2899 = vunpack.c.h.b16 %v2632
    %v2900 = vunpack.c.l.b16 %v2633
    %v2901 = vunpack.c.h.b16 %v2633
    %v2902 = vunpack.c.l.b16 %v2634
    %v2903 = vunpack.c.h.b16 %v2634
    %v2904 = vunpack.c.l.b16 %v2635
    %v2905 = vunpack.c.h.b16 %v2635
    %v2906 = vunpack.c.l.b16 %v2636
    %v2907 = vunpack.c.h.b16 %v2636
    %v2908 = vunpack.c.l.b16 %v2637
    %v2909 = vunpack.c.h.b16 %v2637
    %v2910 = vunpack.c.l.b16 %v2638
    %v2911 = vunpack.c.h.b16 %v2638
    %v2912 = vunpack.c.l.b16 %v2639
    %v2913 = vunpack.c.h.b16 %v2639
    %v2914 = vunpack.c.l.b16 %v2640
    %v2915 = vunpack.c.h.b16 %v2640
    %v2916 = vunpack.c.l.b16 %v2641
    %v2917 = vunpack.c.h.b16 %v2641
    %v2918 = vunpack.c.l.b16 %v2642
    %v2919 = vunpack.c.h.b16 %v2642
    %v2920 = vunpack.c.l.b16 %v2643
    %v2921 = vunpack.c.h.b16 %v2643
    %v2922 = vunpack.c.l.b16 %v2644
    %v2923 = vunpack.c.h.b16 %v2644
    %v2924 = vunpack.c.l.b16 %v2645
    %v2925 = vunpack.c.h.b16 %v2645
    %v2926 = vunpack.c.l.b16 %v2646
    %v2927 = vunpack.c.h.b16 %v2646
    %v2928 = vunpack.c.l.b16 %v2647
    %v2929 = vunpack.c.h.b16 %v2647
    %v2930 = vunpack.c.l.b16 %v2648
    %v2931 = vunpack.c.h.b16 %v2648
    %v2932 = vunpack.c.l.b16 %v2649
    %v2933 = vunpack.c.h.b16 %v2649
    %v2934 = vunpack.c.l.b16 %v2650
    %v2935 = vunpack.c.h.b16 %v2650
    %v2936 = vunpack.c.l.b16 %v2651
    %v2937 = vunpack.c.h.b16 %v2651
    %v2938 = vunpack.c.l.b16 %v2652
    %v2939 = vunpack.c.h.b16 %v2652
    %v2940 = vunpack.c.l.b16 %v2653
    %v2941 = vunpack.c.h.b16 %v2653
    %v2942 = vunpack.c.l.b16 %v2654
    %v2943 = vunpack.c.h.b16 %v2654
    %v2944 = vunpack.c.l.b16 %v2655
    %v2945 = vunpack.c.h.b16 %v2655
    %v2946 = vunpack.c.l.b16 %v2656
    %v2947 = vunpack.c.h.b16 %v2656
    %v2948 = vunpack.c.l.b16 %v2657
    %v2949 = vunpack.c.h.b16 %v2657
    %v2950 = vunpack.c.l.b16 %v2658
    %v2951 = vunpack.c.h.b16 %v2658
    %v2952 = vunpack.c.l.b16 %v2659
    %v2953 = vunpack.c.h.b16 %v2659
    %v2954 = vunpack.c.l.b16 %v2660
    %v2955 = vunpack.c.h.b16 %v2660
    %v2956 = vunpack.c.l.b16 %v2661
    %v2957 = vunpack.c.h.b16 %v2661
    %v2958 = vunpack.c.l.b16 %v2662
    %v2959 = vunpack.c.h.b16 %v2662
    %v2960 = vunpack.c.l.b16 %v2663
    %v2961 = vunpack.c.h.b16 %v2663
    %v2962 = vunpack.c.l.b16 %v2664
    %v2963 = vunpack.c.h.b16 %v2664
    %v2964 = vunpack.c.l.b16 %v2665
    %v2965 = vunpack.c.h.b16 %v2665
    %v2966 = vunpack.c.l.b16 %v2666
    %v2967 = vunpack.c.h.b16 %v2666
    %v2968 = vunpack.c.l.b16 %v2667
    %v2969 = vunpack.c.h.b16 %v2667
    %v2970 = vunpack.c.l.b16 %v2668
    %v2971 = vunpack.c.h.b16 %v2668
    %v2972 = vunpack.c.l.b16 %v2669
    %v2973 = vunpack.c.h.b16 %v2669
    %v2974 = vunpack.c.l.b16 %v2670
    %v2975 = vunpack.c.h.b16 %v2670
    %v2976 = vunpack.c.l.b16 %v2671
    %v2977 = vunpack.c.h.b16 %v2671
    %v2978 = vunpack.c.l.b16 %v2672
    %v2979 = vunpack.c.h.b16 %v2672
    %v2980 = vunpack.c.l.b16 %v2673
    %v2981 = vunpack.c.h.b16 %v2673
    %v2982 = vunpack.c.l.b16 %v2674
    %v2983 = vunpack.c.h.b16 %v2674
    %v2984 = vunpack.c.l.b16 %v2675
    %v2985 = vunpack.c.h.b16 %v2675
    %v2986 = vunpack.c.l.b16 %v2676
    %v2987 = vunpack.c.h.b16 %v2676
    %v2988 = vunpack.c.l.b16 %v2677
    %v2989 = vunpack.c.h.b16 %v2677
    %v2990 = vpack.c.b16 %v2800, %v2798
    %v2991 = vpack.c.b16 %v2801, %v2799
    %v2992 = vpack.c.b16 %v2804, %v2802
    %v2993 = vpack.c.b16 %v2805, %v2803
    %v2994 = vpack.c.b16 %v2808, %v2806
    %v2995 = vpack.c.b16 %v2809, %v2807
    %v2996 = vpack.c.b16 %v2812, %v2810
    %v2997 = vpack.c.b16 %v2813, %v2811
    %v2998 = vpack.c.b16 %v2816, %v2814
    %v2999 = vpack.c.b16 %v2817, %v2815
    %v3000 = vpack.c.b16 %v2820, %v2818
    %v3001 = vpack.c.b16 %v2821, %v2819
    %v3002 = vpack.c.b16 %v2824, %v2822
    %v3003 = vpack.c.b16 %v2825, %v2823
    %v3004 = vpack.c.b16 %v2828, %v2826
    %v3005 = vpack.c.b16 %v2829, %v2827
    %v3006 = vpack.c.b16 %v2832, %v2830
    %v3007 = vpack.c.b16 %v2833, %v2831
    %v3008 = vpack.c.b16 %v2836, %v2834
    %v3009 = vpack.c.b16 %v2837, %v2835
    %v3010 = vpack.c.b16 %v2840, %v2838
    %v3011 = vpack.c.b16 %v2841, %v2839
    %v3012 = vpack.c.b16 %v2844, %v2842
    %v3013 = vpack.c.b16 %v2845, %v2843
    %v3014 = vpack.c.b16 %v2848, %v2846
    %v3015 = vpack.c.b16 %v2849, %v2847
    %v3016 = vpack.c.b16 %v2852, %v2850
    %v3017 = vpack.c.b16 %v2853, %v2851
    %v3018 = vpack.c.b16 %v2856, %v2854
    %v3019 = vpack.c.b16 %v2857, %v2855
    %v3020 = vpack.c.b16 %v2860, %v2858
    %v3021 = vpack.c.b16 %v2861, %v2859
    %v3022 = vpack.c.b16 %v2864, %v2862
    %v3023 = vpack.c.b16 %v2865, %v2863
    %v3024 = vpack.c.b16 %v2868, %v2866
    %v3025 = vpack.c.b16 %v2869, %v2867
    %v3026 = vpack.c.b16 %v2872, %v2870
    %v3027 = vpack.c.b16 %v2873, %v2871
    %v3028 = vpack.c.b16 %v2876, %v2874
    %v3029 = vpack.c.b16 %v2877, %v2875
    %v3030 = vpack.c.b16 %v2880, %v2878
    %v3031 = vpack.c.b16 %v2881, %v2879
    %v3032 = vpack.c.b16 %v2884, %v2882
    %v3033 = vpack.c.b16 %v2885, %v2883
    %v3034 = vpack.c.b16 %v2888, %v2886
    %v3035 = vpack.c.b16 %v2889, %v2887
    %v3036 = vpack.c.b16 %v2892, %v2890
    %v3037 = vpack.c.b16 %v2893, %v2891
    %v3038 = vpack.c.b16 %v2896, %v2894
    %v3039 = vpack.c.b16 %v2897, %v2895
    %v3040 = vpack.c.b16 %v2900, %v2898
    %v3041 = vpack.c.b16 %v2901, %v2899
    %v3042 = vpack.c.b16 %v2904, %v2902
    %v3043 = vpack.c.b16 %v2905, %v2903
    %v3044 = vpack.c.b16 %v2908, %v2906
    %v3045 = vpack.c.b16 %v2909, %v2907
    %v3046 = vpack.c.b16 %v2912, %v2910
    %v3047 = vpack.c.b16 %v2913, %v2911
    %v3048 = vpack.c.b16 %v2916, %v2914
    %v3049 = vpack.c.b16 %v2917, %v2915
    %v3050 = vpack.c.b16 %v2920, %v2918
    %v3051 = vpack.c.b16 %v2921, %v2919
    %v3052 = vpack.c.b16 %v2924, %v2922
    %v3053 = vpack.c.b16 %v2925, %v2923
    %v3054 = vpack.c.b16 %v2928, %v2926
    %v3055 = vpack.c.b16 %v2929, %v2927
    %v3056 = vpack.c.b16 %v2932, %v2930
    %v3057 = vpack.c.b16 %v2933, %v2931
    %v3058 = vpack.c.b16 %v2936, %v2934
    %v3059 = vpack.c.b16 %v2937, %v2935
    %v3060 = vpack.c.b16 %v2940, %v2938
    %v3061 = vpack.c.b16 %v2941, %v2939
    %v3062 = vpack.c.b16 %v2944, %v2942
    %v3063 = vpack.c.b16 %v2945, %v2943
    %v3064 = vpack.c.b16 %v2948, %v2946
    %v3065 = vpack.c.b16 %v2949, %v2947
    %v3066 = vpack.c.b16 %v2952, %v2950
    %v3067 = vpack.c.b16 %v2953, %v2951
    %v3068 = vpack.c.b16 %v2956, %v2954
    %v3069 = vpack.c.b16 %v2957, %v2955
    %v3070 = vpack.c.b16 %v2960, %v2958
    %v3071 = vpack.c.b16 %v2961, %v2959
    %v3072 = vpack.c.b16 %v2964, %v2962
    %v3073 = vpack.c.b16 %v2965, %v2963
    %v3074 = vpack.c.b16 %v2968, %v2966
    %v3075 = vpack.c.b16 %v2969, %v2967
    %v3076 = vpack.c.b16 %v2972, %v2970
    %v3077 = vpack.c.b16 %v2973, %v2971
    %v3078 = vpack.c.b16 %v2976, %v2974
    %v3079 = vpack.c.b16 %v2977, %v2975
    %v3080 = vpack.c.b16 %v2980, %v2978
    %v3081 = vpack.c.b16 %v2981, %v2979
    %v3082 = vpack.c.b16 %v2984, %v2982
    %v3083 = vpack.c.b16 %v2985, %v2983
    %v3084 = vpack.c.b16 %v2988, %v2986
    %v3085 = vpack.c.b16 %v2989, %v2987
    %3182 = vmatprep.subr.bf16.mxu0 %v3005
    %3183 = vmatpush1.bf16.msra.mxu0 %v3004
    %3184 = vmatprep.subr.bf16.mxu0 %v3003
    %3185 = vmatpush1.bf16.msra.mxu0 %v3002
    %3186 = vmatprep.subr.bf16.mxu0 %v3001
    %3187 = vmatpush1.bf16.msra.mxu0 %v3000
    %3188 = vmatprep.subr.bf16.mxu0 %v2999
    %3189 = vmatpush1.bf16.msra.mxu0 %v2998
    %3190 = vmatprep.subr.bf16.mxu0 %v2997
    %3191 = vmatpush1.bf16.msra.mxu0 %v2996
    %3192 = vmatprep.subr.bf16.mxu0 %v2995
    %3193 = vmatpush1.bf16.msra.mxu0 %v2994
    %3194 = vmatprep.subr.bf16.mxu0 %v2993
    %3195 = vmatpush1.bf16.msra.mxu0 %v2992
    %3196 = vmatprep.subr.bf16.mxu0 %v2991
    %3197 = vmatpush1.bf16.msra.mxu0 %v2990
    %3198 = vmatprep.subr.bf16.mxu0 %v3021
    %3199 = vmatpush2.bf16.msra.mxu0 %v3020
    %3200 = vmatprep.subr.bf16.mxu0 %v3019
    %3201 = vmatpush2.bf16.msra.mxu0 %v3018
    %3202 = vmatprep.subr.bf16.mxu0 %v3017
    %3203 = vmatpush2.bf16.msra.mxu0 %v3016
    %3204 = vmatprep.subr.bf16.mxu0 %v3015
    %3205 = vmatpush2.bf16.msra.mxu0 %v3014
    %3206 = vmatprep.subr.bf16.mxu0 %v3013
    %3207 = vmatpush2.bf16.msra.mxu0 %v3012
    %3208 = vmatprep.subr.bf16.mxu0 %v3011
    %3209 = vmatpush2.bf16.msra.mxu0 %v3010
    %3210 = vmatprep.subr.bf16.mxu0 %v3009
    %3211 = vmatpush2.bf16.msra.mxu0 %v3008
    %3212 = vmatprep.subr.bf16.mxu0 %v3007
    %3213 = vmatpush2.bf16.msra.mxu0 %v3006
    %3214 = vmatprep.mubr.bf16.mxu0 %v2691
    %3215 = vmatmul.mubr.bf16.gmra.mxu0 %v2690
    %v3216 = vpop.f32.mrf.mxu0
    %v3217 = vadd.f32 0.0, %v3216
    %v3218 = vpop.f32.mrf.mxu0
    %v3219 = vadd.f32 0.0, %v3218
    %v3220 = vpop.f32.mrf.mxu0
    %v3221 = vadd.f32 0.0, %v3220
    %v3222 = vpop.f32.mrf.mxu0
    %v3223 = vadd.f32 0.0, %v3222
    %3224 = vdwg.mxu0
    %3225 = vmatprep.subr.bf16.mxu0 %v3037
    %3226 = vmatpush1.bf16.msra.mxu0 %v3036
    %3227 = vmatprep.subr.bf16.mxu0 %v3035
    %3228 = vmatpush1.bf16.msra.mxu0 %v3034
    %3229 = vmatprep.subr.bf16.mxu0 %v3033
    %3230 = vmatpush1.bf16.msra.mxu0 %v3032
    %3231 = vmatprep.subr.bf16.mxu0 %v3031
    %3232 = vmatpush1.bf16.msra.mxu0 %v3030
    %3233 = vmatprep.subr.bf16.mxu0 %v3029
    %3234 = vmatpush1.bf16.msra.mxu0 %v3028
    %3235 = vmatprep.subr.bf16.mxu0 %v3027
    %3236 = vmatpush1.bf16.msra.mxu0 %v3026
    %3237 = vmatprep.subr.bf16.mxu0 %v3025
    %3238 = vmatpush1.bf16.msra.mxu0 %v3024
    %3239 = vmatprep.subr.bf16.mxu0 %v3023
    %3240 = vmatpush1.bf16.msra.mxu0 %v3022
    %3241 = vmatprep.subr.bf16.mxu0 %v3053
    %3242 = vmatpush2.bf16.msra.mxu0 %v3052
    %3243 = vmatprep.subr.bf16.mxu0 %v3051
    %3244 = vmatpush2.bf16.msra.mxu0 %v3050
    %3245 = vmatprep.subr.bf16.mxu0 %v3049
    %3246 = vmatpush2.bf16.msra.mxu0 %v3048
    %3247 = vmatprep.subr.bf16.mxu0 %v3047
    %3248 = vmatpush2.bf16.msra.mxu0 %v3046
    %3249 = vmatprep.subr.bf16.mxu0 %v3045
    %3250 = vmatpush2.bf16.msra.mxu0 %v3044
    %3251 = vmatprep.subr.bf16.mxu0 %v3043
    %3252 = vmatpush2.bf16.msra.mxu0 %v3042
    %3253 = vmatprep.subr.bf16.mxu0 %v3041
    %3254 = vmatpush2.bf16.msra.mxu0 %v3040
    %3255 = vmatprep.subr.bf16.mxu0 %v3039
    %3256 = vmatpush2.bf16.msra.mxu0 %v3038
    %3257 = vmatprep.mubr.bf16.mxu0 %v2693
    %3258 = vmatmul.mubr.bf16.gmra.mxu0 %v2692
    %v3259 = vpop.f32.mrf.mxu0
    %v3260 = vadd.f32 %v3217, %v3259
    %v3261 = vpop.f32.mrf.mxu0
    %v3262 = vadd.f32 %v3219, %v3261
    %v3263 = vpop.f32.mrf.mxu0
    %v3264 = vadd.f32 %v3221, %v3263
    %v3265 = vpop.f32.mrf.mxu0
    %v3266 = vadd.f32 %v3223, %v3265
    %3267 = vdwg.mxu0
    %3268 = vmatprep.subr.bf16.mxu0 %v3069
    %3269 = vmatpush1.bf16.msra.mxu0 %v3068
    %3270 = vmatprep.subr.bf16.mxu0 %v3067
    %3271 = vmatpush1.bf16.msra.mxu0 %v3066
    %3272 = vmatprep.subr.bf16.mxu0 %v3065
    %3273 = vmatpush1.bf16.msra.mxu0 %v3064
    %3274 = vmatprep.subr.bf16.mxu0 %v3063
    %3275 = vmatpush1.bf16.msra.mxu0 %v3062
    %3276 = vmatprep.subr.bf16.mxu0 %v3061
    %3277 = vmatpush1.bf16.msra.mxu0 %v3060
    %3278 = vmatprep.subr.bf16.mxu0 %v3059
    %3279 = vmatpush1.bf16.msra.mxu0 %v3058
    %3280 = vmatprep.subr.bf16.mxu0 %v3057
    %3281 = vmatpush1.bf16.msra.mxu0 %v3056
    %3282 = vmatprep.subr.bf16.mxu0 %v3055
    %3283 = vmatpush1.bf16.msra.mxu0 %v3054
    %3284 = vmatprep.subr.bf16.mxu0 %v3085
    %3285 = vmatpush2.bf16.msra.mxu0 %v3084
    %3286 = vmatprep.subr.bf16.mxu0 %v3083
    %3287 = vmatpush2.bf16.msra.mxu0 %v3082
    %3288 = vmatprep.subr.bf16.mxu0 %v3081
    %3289 = vmatpush2.bf16.msra.mxu0 %v3080
    %3290 = vmatprep.subr.bf16.mxu0 %v3079
    %3291 = vmatpush2.bf16.msra.mxu0 %v3078
    %3292 = vmatprep.subr.bf16.mxu0 %v3077
    %3293 = vmatpush2.bf16.msra.mxu0 %v3076
    %3294 = vmatprep.subr.bf16.mxu0 %v3075
    %3295 = vmatpush2.bf16.msra.mxu0 %v3074
    %3296 = vmatprep.subr.bf16.mxu0 %v3073
    %3297 = vmatpush2.bf16.msra.mxu0 %v3072
    %3298 = vmatprep.subr.bf16.mxu0 %v3071
    %3299 = vmatpush2.bf16.msra.mxu0 %v3070
    %3300 = vmatprep.mubr.bf16.mxu0 %v2695
    %3301 = vmatmul.mubr.bf16.gmra.mxu0 %v2694
    %v3302 = vpop.f32.mrf.mxu0
    %v3303 = vadd.f32 %v3260, %v3302
    %v3304 = vpop.f32.mrf.mxu0
    %v3305 = vadd.f32 %v3262, %v3304
    %v3306 = vpop.f32.mrf.mxu0
    %v3307 = vadd.f32 %v3264, %v3306
    %v3308 = vpop.f32.mrf.mxu0
    %v3309 = vadd.f32 %v3266, %v3308
    %3310 = vdwg.mxu0
    %v3311 = vadd.f32 %v2460, %v3303
    %v3312 = vadd.f32 %v2461, %v3305
    %v3313 = vadd.f32 %v2462, %v3307
    %v3314 = vadd.f32 %v2463, %v3309
    %v3315 = vld [vmem:[#allocation2] sm:$0xcc]
    %v3316 = vld [vmem:[#allocation2 + $0x8] sm:$0xcc]
    %v3317 = vld [vmem:[#allocation2 + $0x10] sm:$0xcc]
    %v3318 = vld [vmem:[#allocation2 + $0x30] sm:$0xcc]
    %v3319 = vld [vmem:[#allocation2 + $0x38] sm:$0xcc]
    %v3320 = vld [vmem:[#allocation2 + $0x40] sm:$0xcc]
    %vm3333 = vcmask 1041408
    %vm3334 = vcmask 1045508
    %vm3335 = vmor %vm3333, %vm3334
    %v3336 = vrot.slane %v3315, 6
    %v3337 = vrot.slane %v3336, 4
    %v3338 = vrot.slane %v2464, 6
    %v3339 = vsel %vm3335, %v3337, %v3338
    %v3340 = vrot.slane %v3316, 6
    %v3341 = vrot.slane %v3340, 4
    %v3342 = vrot.slane %v2465, 6
    %v3343 = vsel %vm3335, %v3341, %v3342
    %v3344 = vrot.slane %v3317, 6
    %v3345 = vrot.slane %v3344, 4
    %v3346 = vrot.slane %v2466, 6
    %v3347 = vsel %vm3335, %v3345, %v3346
    %v3348 = vrot.slane %v3318, 6
    %v3349 = vrot.slane %v3348, 4
    %v3350 = vrot.slane %v2467, 6
    %v3351 = vsel %vm3335, %v3349, %v3350
    %v3352 = vrot.slane %v3319, 6
    %v3353 = vrot.slane %v3352, 4
    %v3354 = vrot.slane %v2468, 6
    %v3355 = vsel %vm3335, %v3353, %v3354
    %v3356 = vrot.slane %v3320, 6
    %v3357 = vrot.slane %v3356, 4
    %v3358 = vrot.slane %v2469, 6
    %v3359 = vsel %vm3335, %v3357, %v3358
    %s3360 = scalar_lea.vmem [#allocation3], 3072
    %v3361 = vld [vmem:[%s3360] sm:$0xff]
    %v3362 = vld [vmem:[%s3360 + $0x8] sm:$0xff]
    %v3363 = vld [vmem:[%s3360 + $0x10] sm:$0xff]
    %v3364 = vld [vmem:[%s3360 + $0x18] sm:$0xff]
    %v3365 = vld [vmem:[%s3360 + $0x20] sm:$0xff]
    %v3366 = vld [vmem:[%s3360 + $0x28] sm:$0xff]
    %v3367 = vld [vmem:[%s3360 + $0x30] sm:$0xff]
    %v3368 = vld [vmem:[%s3360 + $0x38] sm:$0xff]
    %v3369 = vld [vmem:[%s3360 + $0x40] sm:$0xff]
    %v3370 = vld [vmem:[%s3360 + $0x48] sm:$0xff]
    %v3371 = vld [vmem:[%s3360 + $0x50] sm:$0xff]
    %v3372 = vld [vmem:[%s3360 + $0x58] sm:$0xff]
    %v3373 = vld [vmem:[%s3360 + $0x60] sm:$0xff]
    %v3374 = vld [vmem:[%s3360 + $0x68] sm:$0xff]
    %v3375 = vld [vmem:[%s3360 + $0x70] sm:$0xff]
    %v3376 = vld [vmem:[%s3360 + $0x78] sm:$0xff]
    %v3377 = vld [vmem:[%s3360 + $0x80] sm:$0xff]
    %v3378 = vld [vmem:[%s3360 + $0x88] sm:$0xff]
    %v3379 = vld [vmem:[%s3360 + $0x90] sm:$0xff]
    %v3380 = vld [vmem:[%s3360 + $0x98] sm:$0xff]
    %v3381 = vld [vmem:[%s3360 + $0xa0] sm:$0xff]
    %v3382 = vld [vmem:[%s3360 + $0xa8] sm:$0xff]
    %v3383 = vld [vmem:[%s3360 + $0xb0] sm:$0xff]
    %v3384 = vld [vmem:[%s3360 + $0xb8] sm:$0xff]
    %v3385 = vld [vmem:[%s3360 + $0xc0] sm:$0xff]
    %v3386 = vld [vmem:[%s3360 + $0xc8] sm:$0xff]
    %v3387 = vld [vmem:[%s3360 + $0xd0] sm:$0xff]
    %v3388 = vld [vmem:[%s3360 + $0xd8] sm:$0xff]
    %v3389 = vld [vmem:[%s3360 + $0xe0] sm:$0xff]
    %v3390 = vld [vmem:[%s3360 + $0xe8] sm:$0xff]
    %v3391 = vld [vmem:[%s3360 + $0xf0] sm:$0xff]
    %v3392 = vld [vmem:[%s3360 + $0xf8] sm:$0xff]
    %v3393 = vld [vmem:[%s3360 + $0x100] sm:$0xff]
    %v3394 = vld [vmem:[%s3360 + $0x108] sm:$0xff]
    %v3395 = vld [vmem:[%s3360 + $0x110] sm:$0xff]
    %v3396 = vld [vmem:[%s3360 + $0x118] sm:$0xff]
    %v3397 = vld [vmem:[%s3360 + $0x120] sm:$0xff]
    %v3398 = vld [vmem:[%s3360 + $0x128] sm:$0xff]
    %v3399 = vld [vmem:[%s3360 + $0x130] sm:$0xff]
    %v3400 = vld [vmem:[%s3360 + $0x138] sm:$0xff]
    %v3401 = vld [vmem:[%s3360 + $0x140] sm:$0xff]
    %v3402 = vld [vmem:[%s3360 + $0x148] sm:$0xff]
    %v3403 = vld [vmem:[%s3360 + $0x150] sm:$0xff]
    %v3404 = vld [vmem:[%s3360 + $0x158] sm:$0xff]
    %v3405 = vld [vmem:[%s3360 + $0x160] sm:$0xff]
    %v3406 = vld [vmem:[%s3360 + $0x168] sm:$0xff]
    %v3407 = vld [vmem:[%s3360 + $0x170] sm:$0xff]
    %v3408 = vld [vmem:[%s3360 + $0x178] sm:$0xff]
    %v3409 = vld [vmem:[%s3360 + $0x180] sm:$0xff]
    %v3410 = vld [vmem:[%s3360 + $0x188] sm:$0xff]
    %v3411 = vld [vmem:[%s3360 + $0x190] sm:$0xff]
    %v3412 = vld [vmem:[%s3360 + $0x198] sm:$0xff]
    %v3413 = vld [vmem:[%s3360 + $0x1a0] sm:$0xff]
    %v3414 = vld [vmem:[%s3360 + $0x1a8] sm:$0xff]
    %v3415 = vld [vmem:[%s3360 + $0x1b0] sm:$0xff]
    %v3416 = vld [vmem:[%s3360 + $0x1b8] sm:$0xff]
    %v3417 = vld [vmem:[%s3360 + $0x1c0] sm:$0xff]
    %v3418 = vld [vmem:[%s3360 + $0x1c8] sm:$0xff]
    %v3419 = vld [vmem:[%s3360 + $0x1d0] sm:$0xff]
    %v3420 = vld [vmem:[%s3360 + $0x1d8] sm:$0xff]
    %v3421 = vld [vmem:[%s3360 + $0x1e0] sm:$0xff]
    %v3422 = vld [vmem:[%s3360 + $0x1e8] sm:$0xff]
    %v3423 = vld [vmem:[%s3360 + $0x1f0] sm:$0xff]
    %v3424 = vld [vmem:[%s3360 + $0x1f8] sm:$0xff]
    %v3425 = vld [vmem:[%s3360 + $0x200] sm:$0xff]
    %v3426 = vld [vmem:[%s3360 + $0x208] sm:$0xff]
    %v3427 = vld [vmem:[%s3360 + $0x210] sm:$0xff]
    %v3428 = vld [vmem:[%s3360 + $0x218] sm:$0xff]
    %v3429 = vld [vmem:[%s3360 + $0x220] sm:$0xff]
    %v3430 = vld [vmem:[%s3360 + $0x228] sm:$0xff]
    %v3431 = vld [vmem:[%s3360 + $0x230] sm:$0xff]
    %v3432 = vld [vmem:[%s3360 + $0x238] sm:$0xff]
    %v3433 = vld [vmem:[%s3360 + $0x240] sm:$0xff]
    %v3434 = vld [vmem:[%s3360 + $0x248] sm:$0xff]
    %v3435 = vld [vmem:[%s3360 + $0x250] sm:$0xff]
    %v3436 = vld [vmem:[%s3360 + $0x258] sm:$0xff]
    %v3437 = vld [vmem:[%s3360 + $0x260] sm:$0xff]
    %v3438 = vld [vmem:[%s3360 + $0x268] sm:$0xff]
    %v3439 = vld [vmem:[%s3360 + $0x270] sm:$0xff]
    %v3440 = vld [vmem:[%s3360 + $0x278] sm:$0xff]
    %v3441 = vld [vmem:[%s3360 + $0x280] sm:$0xff]
    %v3442 = vld [vmem:[%s3360 + $0x288] sm:$0xff]
    %v3443 = vld [vmem:[%s3360 + $0x290] sm:$0xff]
    %v3444 = vld [vmem:[%s3360 + $0x298] sm:$0xff]
    %v3445 = vld [vmem:[%s3360 + $0x2a0] sm:$0xff]
    %v3446 = vld [vmem:[%s3360 + $0x2a8] sm:$0xff]
    %v3447 = vld [vmem:[%s3360 + $0x2b0] sm:$0xff]
    %v3448 = vld [vmem:[%s3360 + $0x2b8] sm:$0xff]
    %v3449 = vld [vmem:[%s3360 + $0x2c0] sm:$0xff]
    %v3450 = vld [vmem:[%s3360 + $0x2c8] sm:$0xff]
    %v3451 = vld [vmem:[%s3360 + $0x2d0] sm:$0xff]
    %v3452 = vld [vmem:[%s3360 + $0x2d8] sm:$0xff]
    %v3453 = vld [vmem:[%s3360 + $0x2e0] sm:$0xff]
    %v3454 = vld [vmem:[%s3360 + $0x2e8] sm:$0xff]
    %v3455 = vld [vmem:[%s3360 + $0x2f0] sm:$0xff]
    %v3456 = vld [vmem:[%s3360 + $0x2f8] sm:$0xff]
    %v3457 = vunpack.c.l.b16 %v3339
    %v3458 = vunpack.c.h.b16 %v3339
    %v3459 = vunpack.c.l.b16 %v3343
    %v3460 = vunpack.c.h.b16 %v3343
    %v3461 = vunpack.c.l.b16 %v3347
    %v3462 = vunpack.c.h.b16 %v3347
    %v3463 = vunpack.c.l.b16 %v3351
    %v3464 = vunpack.c.h.b16 %v3351
    %v3465 = vunpack.c.l.b16 %v3355
    %v3466 = vunpack.c.h.b16 %v3355
    %v3467 = vunpack.c.l.b16 %v3359
    %v3468 = vunpack.c.h.b16 %v3359
    %v3469 = vpack.c.b16 %v3463, %v3457
    %v3470 = vpack.c.b16 %v3464, %v3458
    %v3471 = vpack.c.b16 %v3465, %v3459
    %v3472 = vpack.c.b16 %v3466, %v3460
    %v3473 = vpack.c.b16 %v3467, %v3461
    %v3474 = vpack.c.b16 %v3468, %v3462
    %v3577 = vunpack.c.l.b16 %v3361
    %v3578 = vunpack.c.h.b16 %v3361
    %v3579 = vunpack.c.l.b16 %v3362
    %v3580 = vunpack.c.h.b16 %v3362
    %v3581 = vunpack.c.l.b16 %v3363
    %v3582 = vunpack.c.h.b16 %v3363
    %v3583 = vunpack.c.l.b16 %v3364
    %v3584 = vunpack.c.h.b16 %v3364
    %v3585 = vunpack.c.l.b16 %v3365
    %v3586 = vunpack.c.h.b16 %v3365
    %v3587 = vunpack.c.l.b16 %v3366
    %v3588 = vunpack.c.h.b16 %v3366
    %v3589 = vunpack.c.l.b16 %v3367
    %v3590 = vunpack.c.h.b16 %v3367
    %v3591 = vunpack.c.l.b16 %v3368
    %v3592 = vunpack.c.h.b16 %v3368
    %v3593 = vunpack.c.l.b16 %v3369
    %v3594 = vunpack.c.h.b16 %v3369
    %v3595 = vunpack.c.l.b16 %v3370
    %v3596 = vunpack.c.h.b16 %v3370
    %v3597 = vunpack.c.l.b16 %v3371
    %v3598 = vunpack.c.h.b16 %v3371
    %v3599 = vunpack.c.l.b16 %v3372
    %v3600 = vunpack.c.h.b16 %v3372
    %v3601 = vunpack.c.l.b16 %v3373
    %v3602 = vunpack.c.h.b16 %v3373
    %v3603 = vunpack.c.l.b16 %v3374
    %v3604 = vunpack.c.h.b16 %v3374
    %v3605 = vunpack.c.l.b16 %v3375
    %v3606 = vunpack.c.h.b16 %v3375
    %v3607 = vunpack.c.l.b16 %v3376
    %v3608 = vunpack.c.h.b16 %v3376
    %v3609 = vunpack.c.l.b16 %v3377
    %v3610 = vunpack.c.h.b16 %v3377
    %v3611 = vunpack.c.l.b16 %v3378
    %v3612 = vunpack.c.h.b16 %v3378
    %v3613 = vunpack.c.l.b16 %v3379
    %v3614 = vunpack.c.h.b16 %v3379
    %v3615 = vunpack.c.l.b16 %v3380
    %v3616 = vunpack.c.h.b16 %v3380
    %v3617 = vunpack.c.l.b16 %v3381
    %v3618 = vunpack.c.h.b16 %v3381
    %v3619 = vunpack.c.l.b16 %v3382
    %v3620 = vunpack.c.h.b16 %v3382
    %v3621 = vunpack.c.l.b16 %v3383
    %v3622 = vunpack.c.h.b16 %v3383
    %v3623 = vunpack.c.l.b16 %v3384
    %v3624 = vunpack.c.h.b16 %v3384
    %v3625 = vunpack.c.l.b16 %v3385
    %v3626 = vunpack.c.h.b16 %v3385
    %v3627 = vunpack.c.l.b16 %v3386
    %v3628 = vunpack.c.h.b16 %v3386
    %v3629 = vunpack.c.l.b16 %v3387
    %v3630 = vunpack.c.h.b16 %v3387
    %v3631 = vunpack.c.l.b16 %v3388
    %v3632 = vunpack.c.h.b16 %v3388
    %v3633 = vunpack.c.l.b16 %v3389
    %v3634 = vunpack.c.h.b16 %v3389
    %v3635 = vunpack.c.l.b16 %v3390
    %v3636 = vunpack.c.h.b16 %v3390
    %v3637 = vunpack.c.l.b16 %v3391
    %v3638 = vunpack.c.h.b16 %v3391
    %v3639 = vunpack.c.l.b16 %v3392
    %v3640 = vunpack.c.h.b16 %v3392
    %v3641 = vunpack.c.l.b16 %v3393
    %v3642 = vunpack.c.h.b16 %v3393
    %v3643 = vunpack.c.l.b16 %v3394
    %v3644 = vunpack.c.h.b16 %v3394
    %v3645 = vunpack.c.l.b16 %v3395
    %v3646 = vunpack.c.h.b16 %v3395
    %v3647 = vunpack.c.l.b16 %v3396
    %v3648 = vunpack.c.h.b16 %v3396
    %v3649 = vunpack.c.l.b16 %v3397
    %v3650 = vunpack.c.h.b16 %v3397
    %v3651 = vunpack.c.l.b16 %v3398
    %v3652 = vunpack.c.h.b16 %v3398
    %v3653 = vunpack.c.l.b16 %v3399
    %v3654 = vunpack.c.h.b16 %v3399
    %v3655 = vunpack.c.l.b16 %v3400
    %v3656 = vunpack.c.h.b16 %v3400
    %v3657 = vunpack.c.l.b16 %v3401
    %v3658 = vunpack.c.h.b16 %v3401
    %v3659 = vunpack.c.l.b16 %v3402
    %v3660 = vunpack.c.h.b16 %v3402
    %v3661 = vunpack.c.l.b16 %v3403
    %v3662 = vunpack.c.h.b16 %v3403
    %v3663 = vunpack.c.l.b16 %v3404
    %v3664 = vunpack.c.h.b16 %v3404
    %v3665 = vunpack.c.l.b16 %v3405
    %v3666 = vunpack.c.h.b16 %v3405
    %v3667 = vunpack.c.l.b16 %v3406
    %v3668 = vunpack.c.h.b16 %v3406
    %v3669 = vunpack.c.l.b16 %v3407
    %v3670 = vunpack.c.h.b16 %v3407
    %v3671 = vunpack.c.l.b16 %v3408
    %v3672 = vunpack.c.h.b16 %v3408
    %v3673 = vunpack.c.l.b16 %v3409
    %v3674 = vunpack.c.h.b16 %v3409
    %v3675 = vunpack.c.l.b16 %v3410
    %v3676 = vunpack.c.h.b16 %v3410
    %v3677 = vunpack.c.l.b16 %v3411
    %v3678 = vunpack.c.h.b16 %v3411
    %v3679 = vunpack.c.l.b16 %v3412
    %v3680 = vunpack.c.h.b16 %v3412
    %v3681 = vunpack.c.l.b16 %v3413
    %v3682 = vunpack.c.h.b16 %v3413
    %v3683 = vunpack.c.l.b16 %v3414
    %v3684 = vunpack.c.h.b16 %v3414
    %v3685 = vunpack.c.l.b16 %v3415
    %v3686 = vunpack.c.h.b16 %v3415
    %v3687 = vunpack.c.l.b16 %v3416
    %v3688 = vunpack.c.h.b16 %v3416
    %v3689 = vunpack.c.l.b16 %v3417
    %v3690 = vunpack.c.h.b16 %v3417
    %v3691 = vunpack.c.l.b16 %v3418
    %v3692 = vunpack.c.h.b16 %v3418
    %v3693 = vunpack.c.l.b16 %v3419
    %v3694 = vunpack.c.h.b16 %v3419
    %v3695 = vunpack.c.l.b16 %v3420
    %v3696 = vunpack.c.h.b16 %v3420
    %v3697 = vunpack.c.l.b16 %v3421
    %v3698 = vunpack.c.h.b16 %v3421
    %v3699 = vunpack.c.l.b16 %v3422
    %v3700 = vunpack.c.h.b16 %v3422
    %v3701 = vunpack.c.l.b16 %v3423
    %v3702 = vunpack.c.h.b16 %v3423
    %v3703 = vunpack.c.l.b16 %v3424
    %v3704 = vunpack.c.h.b16 %v3424
    %v3705 = vunpack.c.l.b16 %v3425
    %v3706 = vunpack.c.h.b16 %v3425
    %v3707 = vunpack.c.l.b16 %v3426
    %v3708 = vunpack.c.h.b16 %v3426
    %v3709 = vunpack.c.l.b16 %v3427
    %v3710 = vunpack.c.h.b16 %v3427
    %v3711 = vunpack.c.l.b16 %v3428
    %v3712 = vunpack.c.h.b16 %v3428
    %v3713 = vunpack.c.l.b16 %v3429
    %v3714 = vunpack.c.h.b16 %v3429
    %v3715 = vunpack.c.l.b16 %v3430
    %v3716 = vunpack.c.h.b16 %v3430
    %v3717 = vunpack.c.l.b16 %v3431
    %v3718 = vunpack.c.h.b16 %v3431
    %v3719 = vunpack.c.l.b16 %v3432
    %v3720 = vunpack.c.h.b16 %v3432
    %v3721 = vunpack.c.l.b16 %v3433
    %v3722 = vunpack.c.h.b16 %v3433
    %v3723 = vunpack.c.l.b16 %v3434
    %v3724 = vunpack.c.h.b16 %v3434
    %v3725 = vunpack.c.l.b16 %v3435
    %v3726 = vunpack.c.h.b16 %v3435
    %v3727 = vunpack.c.l.b16 %v3436
    %v3728 = vunpack.c.h.b16 %v3436
    %v3729 = vunpack.c.l.b16 %v3437
    %v3730 = vunpack.c.h.b16 %v3437
    %v3731 = vunpack.c.l.b16 %v3438
    %v3732 = vunpack.c.h.b16 %v3438
    %v3733 = vunpack.c.l.b16 %v3439
    %v3734 = vunpack.c.h.b16 %v3439
    %v3735 = vunpack.c.l.b16 %v3440
    %v3736 = vunpack.c.h.b16 %v3440
    %v3737 = vunpack.c.l.b16 %v3441
    %v3738 = vunpack.c.h.b16 %v3441
    %v3739 = vunpack.c.l.b16 %v3442
    %v3740 = vunpack.c.h.b16 %v3442
    %v3741 = vunpack.c.l.b16 %v3443
    %v3742 = vunpack.c.h.b16 %v3443
    %v3743 = vunpack.c.l.b16 %v3444
    %v3744 = vunpack.c.h.b16 %v3444
    %v3745 = vunpack.c.l.b16 %v3445
    %v3746 = vunpack.c.h.b16 %v3445
    %v3747 = vunpack.c.l.b16 %v3446
    %v3748 = vunpack.c.h.b16 %v3446
    %v3749 = vunpack.c.l.b16 %v3447
    %v3750 = vunpack.c.h.b16 %v3447
    %v3751 = vunpack.c.l.b16 %v3448
    %v3752 = vunpack.c.h.b16 %v3448
    %v3753 = vunpack.c.l.b16 %v3449
    %v3754 = vunpack.c.h.b16 %v3449
    %v3755 = vunpack.c.l.b16 %v3450
    %v3756 = vunpack.c.h.b16 %v3450
    %v3757 = vunpack.c.l.b16 %v3451
    %v3758 = vunpack.c.h.b16 %v3451
    %v3759 = vunpack.c.l.b16 %v3452
    %v3760 = vunpack.c.h.b16 %v3452
    %v3761 = vunpack.c.l.b16 %v3453
    %v3762 = vunpack.c.h.b16 %v3453
    %v3763 = vunpack.c.l.b16 %v3454
    %v3764 = vunpack.c.h.b16 %v3454
    %v3765 = vunpack.c.l.b16 %v3455
    %v3766 = vunpack.c.h.b16 %v3455
    %v3767 = vunpack.c.l.b16 %v3456
    %v3768 = vunpack.c.h.b16 %v3456
    %v3769 = vpack.c.b16 %v3579, %v3577
    %v3770 = vpack.c.b16 %v3580, %v3578
    %v3771 = vpack.c.b16 %v3583, %v3581
    %v3772 = vpack.c.b16 %v3584, %v3582
    %v3773 = vpack.c.b16 %v3587, %v3585
    %v3774 = vpack.c.b16 %v3588, %v3586
    %v3775 = vpack.c.b16 %v3591, %v3589
    %v3776 = vpack.c.b16 %v3592, %v3590
    %v3777 = vpack.c.b16 %v3595, %v3593
    %v3778 = vpack.c.b16 %v3596, %v3594
    %v3779 = vpack.c.b16 %v3599, %v3597
    %v3780 = vpack.c.b16 %v3600, %v3598
    %v3781 = vpack.c.b16 %v3603, %v3601
    %v3782 = vpack.c.b16 %v3604, %v3602
    %v3783 = vpack.c.b16 %v3607, %v3605
    %v3784 = vpack.c.b16 %v3608, %v3606
    %v3785 = vpack.c.b16 %v3611, %v3609
    %v3786 = vpack.c.b16 %v3612, %v3610
    %v3787 = vpack.c.b16 %v3615, %v3613
    %v3788 = vpack.c.b16 %v3616, %v3614
    %v3789 = vpack.c.b16 %v3619, %v3617
    %v3790 = vpack.c.b16 %v3620, %v3618
    %v3791 = vpack.c.b16 %v3623, %v3621
    %v3792 = vpack.c.b16 %v3624, %v3622
    %v3793 = vpack.c.b16 %v3627, %v3625
    %v3794 = vpack.c.b16 %v3628, %v3626
    %v3795 = vpack.c.b16 %v3631, %v3629
    %v3796 = vpack.c.b16 %v3632, %v3630
    %v3797 = vpack.c.b16 %v3635, %v3633
    %v3798 = vpack.c.b16 %v3636, %v3634
    %v3799 = vpack.c.b16 %v3639, %v3637
    %v3800 = vpack.c.b16 %v3640, %v3638
    %v3801 = vpack.c.b16 %v3643, %v3641
    %v3802 = vpack.c.b16 %v3644, %v3642
    %v3803 = vpack.c.b16 %v3647, %v3645
    %v3804 = vpack.c.b16 %v3648, %v3646
    %v3805 = vpack.c.b16 %v3651, %v3649
    %v3806 = vpack.c.b16 %v3652, %v3650
    %v3807 = vpack.c.b16 %v3655, %v3653
    %v3808 = vpack.c.b16 %v3656, %v3654
    %v3809 = vpack.c.b16 %v3659, %v3657
    %v3810 = vpack.c.b16 %v3660, %v3658
    %v3811 = vpack.c.b16 %v3663, %v3661
    %v3812 = vpack.c.b16 %v3664, %v3662
    %v3813 = vpack.c.b16 %v3667, %v3665
    %v3814 = vpack.c.b16 %v3668, %v3666
    %v3815 = vpack.c.b16 %v3671, %v3669
    %v3816 = vpack.c.b16 %v3672, %v3670
    %v3817 = vpack.c.b16 %v3675, %v3673
    %v3818 = vpack.c.b16 %v3676, %v3674
    %v3819 = vpack.c.b16 %v3679, %v3677
    %v3820 = vpack.c.b16 %v3680, %v3678
    %v3821 = vpack.c.b16 %v3683, %v3681
    %v3822 = vpack.c.b16 %v3684, %v3682
    %v3823 = vpack.c.b16 %v3687, %v3685
    %v3824 = vpack.c.b16 %v3688, %v3686
    %v3825 = vpack.c.b16 %v3691, %v3689
    %v3826 = vpack.c.b16 %v3692, %v3690
    %v3827 = vpack.c.b16 %v3695, %v3693
    %v3828 = vpack.c.b16 %v3696, %v3694
    %v3829 = vpack.c.b16 %v3699, %v3697
    %v3830 = vpack.c.b16 %v3700, %v3698
    %v3831 = vpack.c.b16 %v3703, %v3701
    %v3832 = vpack.c.b16 %v3704, %v3702
    %v3833 = vpack.c.b16 %v3707, %v3705
    %v3834 = vpack.c.b16 %v3708, %v3706
    %v3835 = vpack.c.b16 %v3711, %v3709
    %v3836 = vpack.c.b16 %v3712, %v3710
    %v3837 = vpack.c.b16 %v3715, %v3713
    %v3838 = vpack.c.b16 %v3716, %v3714
    %v3839 = vpack.c.b16 %v3719, %v3717
    %v3840 = vpack.c.b16 %v3720, %v3718
    %v3841 = vpack.c.b16 %v3723, %v3721
    %v3842 = vpack.c.b16 %v3724, %v3722
    %v3843 = vpack.c.b16 %v3727, %v3725
    %v3844 = vpack.c.b16 %v3728, %v3726
    %v3845 = vpack.c.b16 %v3731, %v3729
    %v3846 = vpack.c.b16 %v3732, %v3730
    %v3847 = vpack.c.b16 %v3735, %v3733
    %v3848 = vpack.c.b16 %v3736, %v3734
    %v3849 = vpack.c.b16 %v3739, %v3737
    %v3850 = vpack.c.b16 %v3740, %v3738
    %v3851 = vpack.c.b16 %v3743, %v3741
    %v3852 = vpack.c.b16 %v3744, %v3742
    %v3853 = vpack.c.b16 %v3747, %v3745
    %v3854 = vpack.c.b16 %v3748, %v3746
    %v3855 = vpack.c.b16 %v3751, %v3749
    %v3856 = vpack.c.b16 %v3752, %v3750
    %v3857 = vpack.c.b16 %v3755, %v3753
    %v3858 = vpack.c.b16 %v3756, %v3754
    %v3859 = vpack.c.b16 %v3759, %v3757
    %v3860 = vpack.c.b16 %v3760, %v3758
    %v3861 = vpack.c.b16 %v3763, %v3761
    %v3862 = vpack.c.b16 %v3764, %v3762
    %v3863 = vpack.c.b16 %v3767, %v3765
    %v3864 = vpack.c.b16 %v3768, %v3766
    %3961 = vmatprep.subr.bf16.mxu0 %v3784
    %3962 = vmatpush1.bf16.msra.mxu0 %v3783
    %3963 = vmatprep.subr.bf16.mxu0 %v3782
    %3964 = vmatpush1.bf16.msra.mxu0 %v3781
    %3965 = vmatprep.subr.bf16.mxu0 %v3780
    %3966 = vmatpush1.bf16.msra.mxu0 %v3779
    %3967 = vmatprep.subr.bf16.mxu0 %v3778
    %3968 = vmatpush1.bf16.msra.mxu0 %v3777
    %3969 = vmatprep.subr.bf16.mxu0 %v3776
    %3970 = vmatpush1.bf16.msra.mxu0 %v3775
    %3971 = vmatprep.subr.bf16.mxu0 %v3774
    %3972 = vmatpush1.bf16.msra.mxu0 %v3773
    %3973 = vmatprep.subr.bf16.mxu0 %v3772
    %3974 = vmatpush1.bf16.msra.mxu0 %v3771
    %3975 = vmatprep.subr.bf16.mxu0 %v3770
    %3976 = vmatpush1.bf16.msra.mxu0 %v3769
    %3977 = vmatprep.subr.bf16.mxu0 %v3800
    %3978 = vmatpush2.bf16.msra.mxu0 %v3799
    %3979 = vmatprep.subr.bf16.mxu0 %v3798
    %3980 = vmatpush2.bf16.msra.mxu0 %v3797
    %3981 = vmatprep.subr.bf16.mxu0 %v3796
    %3982 = vmatpush2.bf16.msra.mxu0 %v3795
    %3983 = vmatprep.subr.bf16.mxu0 %v3794
    %3984 = vmatpush2.bf16.msra.mxu0 %v3793
    %3985 = vmatprep.subr.bf16.mxu0 %v3792
    %3986 = vmatpush2.bf16.msra.mxu0 %v3791
    %3987 = vmatprep.subr.bf16.mxu0 %v3790
    %3988 = vmatpush2.bf16.msra.mxu0 %v3789
    %3989 = vmatprep.subr.bf16.mxu0 %v3788
    %3990 = vmatpush2.bf16.msra.mxu0 %v3787
    %3991 = vmatprep.subr.bf16.mxu0 %v3786
    %3992 = vmatpush2.bf16.msra.mxu0 %v3785
    %3993 = vmatprep.mubr.bf16.mxu0 %v3470
    %3994 = vmatmul.mubr.bf16.gmra.mxu0 %v3469
    %v3995 = vpop.f32.mrf.mxu0
    %v3996 = vadd.f32 0.0, %v3995
    %v3997 = vpop.f32.mrf.mxu0
    %v3998 = vadd.f32 0.0, %v3997
    %v3999 = vpop.f32.mrf.mxu0
    %v4000 = vadd.f32 0.0, %v3999
    %v4001 = vpop.f32.mrf.mxu0
    %v4002 = vadd.f32 0.0, %v4001
    %4003 = vdwg.mxu0
    %4004 = vmatprep.subr.bf16.mxu0 %v3816
    %4005 = vmatpush1.bf16.msra.mxu0 %v3815
    %4006 = vmatprep.subr.bf16.mxu0 %v3814
    %4007 = vmatpush1.bf16.msra.mxu0 %v3813
    %4008 = vmatprep.subr.bf16.mxu0 %v3812
    %4009 = vmatpush1.bf16.msra.mxu0 %v3811
    %4010 = vmatprep.subr.bf16.mxu0 %v3810
    %4011 = vmatpush1.bf16.msra.mxu0 %v3809
    %4012 = vmatprep.subr.bf16.mxu0 %v3808
    %4013 = vmatpush1.bf16.msra.mxu0 %v3807
    %4014 = vmatprep.subr.bf16.mxu0 %v3806
    %4015 = vmatpush1.bf16.msra.mxu0 %v3805
    %4016 = vmatprep.subr.bf16.mxu0 %v3804
    %4017 = vmatpush1.bf16.msra.mxu0 %v3803
    %4018 = vmatprep.subr.bf16.mxu0 %v3802
    %4019 = vmatpush1.bf16.msra.mxu0 %v3801
    %4020 = vmatprep.subr.bf16.mxu0 %v3832
    %4021 = vmatpush2.bf16.msra.mxu0 %v3831
    %4022 = vmatprep.subr.bf16.mxu0 %v3830
    %4023 = vmatpush2.bf16.msra.mxu0 %v3829
    %4024 = vmatprep.subr.bf16.mxu0 %v3828
    %4025 = vmatpush2.bf16.msra.mxu0 %v3827
    %4026 = vmatprep.subr.bf16.mxu0 %v3826
    %4027 = vmatpush2.bf16.msra.mxu0 %v3825
    %4028 = vmatprep.subr.bf16.mxu0 %v3824
    %4029 = vmatpush2.bf16.msra.mxu0 %v3823
    %4030 = vmatprep.subr.bf16.mxu0 %v3822
    %4031 = vmatpush2.bf16.msra.mxu0 %v3821
    %4032 = vmatprep.subr.bf16.mxu0 %v3820
    %4033 = vmatpush2.bf16.msra.mxu0 %v3819
    %4034 = vmatprep.subr.bf16.mxu0 %v3818
    %4035 = vmatpush2.bf16.msra.mxu0 %v3817
    %4036 = vmatprep.mubr.bf16.mxu0 %v3472
    %4037 = vmatmul.mubr.bf16.gmra.mxu0 %v3471
    %v4038 = vpop.f32.mrf.mxu0
    %v4039 = vadd.f32 %v3996, %v4038
    %v4040 = vpop.f32.mrf.mxu0
    %v4041 = vadd.f32 %v3998, %v4040
    %v4042 = vpop.f32.mrf.mxu0
    %v4043 = vadd.f32 %v4000, %v4042
    %v4044 = vpop.f32.mrf.mxu0
    %v4045 = vadd.f32 %v4002, %v4044
    %4046 = vdwg.mxu0
    %4047 = vmatprep.subr.bf16.mxu0 %v3848
    %4048 = vmatpush1.bf16.msra.mxu0 %v3847
    %4049 = vmatprep.subr.bf16.mxu0 %v3846
    %4050 = vmatpush1.bf16.msra.mxu0 %v3845
    %4051 = vmatprep.subr.bf16.mxu0 %v3844
    %4052 = vmatpush1.bf16.msra.mxu0 %v3843
    %4053 = vmatprep.subr.bf16.mxu0 %v3842
    %4054 = vmatpush1.bf16.msra.mxu0 %v3841
    %4055 = vmatprep.subr.bf16.mxu0 %v3840
    %4056 = vmatpush1.bf16.msra.mxu0 %v3839
    %4057 = vmatprep.subr.bf16.mxu0 %v3838
    %4058 = vmatpush1.bf16.msra.mxu0 %v3837
    %4059 = vmatprep.subr.bf16.mxu0 %v3836
    %4060 = vmatpush1.bf16.msra.mxu0 %v3835
    %4061 = vmatprep.subr.bf16.mxu0 %v3834
    %4062 = vmatpush1.bf16.msra.mxu0 %v3833
    %4063 = vmatprep.subr.bf16.mxu0 %v3864
    %4064 = vmatpush2.bf16.msra.mxu0 %v3863
    %4065 = vmatprep.subr.bf16.mxu0 %v3862
    %4066 = vmatpush2.bf16.msra.mxu0 %v3861
    %4067 = vmatprep.subr.bf16.mxu0 %v3860
    %4068 = vmatpush2.bf16.msra.mxu0 %v3859
    %4069 = vmatprep.subr.bf16.mxu0 %v3858
    %4070 = vmatpush2.bf16.msra.mxu0 %v3857
    %4071 = vmatprep.subr.bf16.mxu0 %v3856
    %4072 = vmatpush2.bf16.msra.mxu0 %v3855
    %4073 = vmatprep.subr.bf16.mxu0 %v3854
    %4074 = vmatpush2.bf16.msra.mxu0 %v3853
    %4075 = vmatprep.subr.bf16.mxu0 %v3852
    %4076 = vmatpush2.bf16.msra.mxu0 %v3851
    %4077 = vmatprep.subr.bf16.mxu0 %v3850
    %4078 = vmatpush2.bf16.msra.mxu0 %v3849
    %4079 = vmatprep.mubr.bf16.mxu0 %v3474
    %4080 = vmatmul.mubr.bf16.gmra.mxu0 %v3473
    %v4081 = vpop.f32.mrf.mxu0
    %v4082 = vadd.f32 %v4039, %v4081
    %v4083 = vpop.f32.mrf.mxu0
    %v4084 = vadd.f32 %v4041, %v4083
    %v4085 = vpop.f32.mrf.mxu0
    %v4086 = vadd.f32 %v4043, %v4085
    %v4087 = vpop.f32.mrf.mxu0
    %v4088 = vadd.f32 %v4045, %v4087
    %4089 = vdwg.mxu0
    %v4090 = vadd.f32 %v3311, %v4082
    %v4091 = vadd.f32 %v3312, %v4084
    %v4092 = vadd.f32 %v3313, %v4086
    %v4093 = vadd.f32 %v3314, %v4088
    %v4094 = vld [vmem:[#allocation5] sm:$0x3]
    %v4096 = vlaneseq
    %v4097 = vshrl.u32 %v4096, 7
    %v4098 = vsub.s32 0, %v4097
    %v4099 = vrot.slane %v4094, %v4098
    %v4100 = vlaneseq
    %v4101 = vshrl.u32 %v4100, 7
    %v4102 = vsub.s32 1, %v4101
    %v4103 = vrot.slane %v4094, %v4102
    %v4106 = vadd.f32 %v4090, %v4099
    %v4107 = vadd.f32 %v4091, %v4103
    %v4108 = vadd.f32 %v4092, %v4099
    %v4109 = vadd.f32 %v4093, %v4103
    %v4110 = vmul.f32 %v4106, 0.5
    %v4111 = vmul.f32 %v4107, 0.5
    %v4112 = vmul.f32 %v4108, 0.5
    %v4113 = vmul.f32 %v4109, 0.5
    %v4114 = vmul.f32 %v4106, 0.044715
    %v4115 = vmul.f32 %v4107, 0.044715
    %v4116 = vmul.f32 %v4108, 0.044715
    %v4117 = vmul.f32 %v4109, 0.044715
    %v4118 = vmul.f32 %v4114, %v4106
    %v4119 = vmul.f32 %v4115, %v4107
    %v4120 = vmul.f32 %v4116, %v4108
    %v4121 = vmul.f32 %v4117, %v4109
    %v4122 = vmul.f32 %v4118, %v4106
    %v4123 = vmul.f32 %v4119, %v4107
    %v4124 = vmul.f32 %v4120, %v4108
    %v4125 = vmul.f32 %v4121, %v4109
    %v4126 = vadd.f32 %v4106, %v4122
    %v4127 = vadd.f32 %v4107, %v4123
    %v4128 = vadd.f32 %v4108, %v4124
    %v4129 = vadd.f32 %v4109, %v4125
    %v4130 = vmul.f32 %v4126, 0.7978846
    %v4131 = vmul.f32 %v4127, 0.7978846
    %v4132 = vmul.f32 %v4128, 0.7978846
    %v4133 = vmul.f32 %v4129, 0.7978846
    %v4134 = vtanh.pop %v4130
    %v4135 = vtanh.pop %v4131
    %v4136 = vtanh.pop %v4132
    %v4137 = vtanh.pop %v4133
    %v4138 = vadd.f32 %v4134, 1.0
    %v4139 = vadd.f32 %v4135, 1.0
    %v4140 = vadd.f32 %v4136, 1.0
    %v4141 = vadd.f32 %v4137, 1.0
    %v4142 = vmul.f32 %v4110, %v4138
    %v4143 = vmul.f32 %v4111, %v4139
    %v4144 = vmul.f32 %v4112, %v4140
    %v4145 = vmul.f32 %v4113, %v4141
    %v4150 = vcombine.low %v4142, %v4143
    %v4151 = vcombine.high %v4142, %v4143
    %v4153 = vunpack.c.l.s4 1983009808
    %v4154 = vunpack.c.0.s8 %v4153
    %v4155 = vlaneseq
    %v4156 = vshrl.u32 %v4155, 7
    %v4157 = vsub.s32 %v4154, %v4156
    %v4158 = vrot.slane %v4150, %v4157
    %v4160 = vunpack.c.l.s4 1983009808
    %v4161 = vunpack.c.0.s8 %v4160
    %v4162 = vlaneseq
    %v4163 = vshrl.u32 %v4162, 7
    %v4164 = vsub.s32 %v4161, %v4163
    %v4165 = vrot.slane %v4151, %v4164
    %v4166 = vcombine.high %v4158, %v4158
    %v4167 = vcombine.high %v4165, %v4165
    %v4168 = vcombine.low %v4144, %v4145
    %v4169 = vcombine.high %v4144, %v4145
    %v4171 = vunpack.c.l.s4 1983009808
    %v4172 = vunpack.c.0.s8 %v4171
    %v4173 = vlaneseq
    %v4174 = vshrl.u32 %v4173, 7
    %v4175 = vsub.s32 %v4172, %v4174
    %v4176 = vrot.slane %v4168, %v4175
    %v4178 = vunpack.c.l.s4 1983009808
    %v4179 = vunpack.c.0.s8 %v4178
    %v4180 = vlaneseq
    %v4181 = vshrl.u32 %v4180, 7
    %v4182 = vsub.s32 %v4179, %v4181
    %v4183 = vrot.slane %v4169, %v4182
    %v4184 = vcombine.high %v4176, %v4176
    %v4185 = vcombine.high %v4183, %v4183
    %v4194 = vrot.slane %v4158, 7
    %v4195 = vrot.slane %v4194, 2
    %v4196 = vrot.slane %v4166, 7
    %v4197 = vrot.slane %v4196, 2
    %v4198 = vrot.slane %v4165, 7
    %v4199 = vrot.slane %v4198, 2
    %v4200 = vrot.slane %v4167, 7
    %v4201 = vrot.slane %v4200, 2
    %v4202 = vrot.slane %v4176, 7
    %v4203 = vrot.slane %v4202, 2
    %v4204 = vrot.slane %v4184, 7
    %v4205 = vrot.slane %v4204, 2
    %v4206 = vrot.slane %v4183, 7
    %v4207 = vrot.slane %v4206, 2
    %v4208 = vrot.slane %v4185, 7
    %v4209 = vrot.slane %v4208, 2
    %v4218 = vmax.f32 %v4158, %v4195
    %v4219 = vmax.f32 %v4166, %v4197
    %v4220 = vmax.f32 %v4165, %v4199
    %v4221 = vmax.f32 %v4167, %v4201
    %v4222 = vmax.f32 %v4176, %v4203
    %v4223 = vmax.f32 %v4184, %v4205
    %v4224 = vmax.f32 %v4183, %v4207
    %v4225 = vmax.f32 %v4185, %v4209
    %v4234 = vrot.slane %v4218, 2
    %v4235 = vrot.slane %v4219, 2
    %v4236 = vrot.slane %v4220, 2
    %v4237 = vrot.slane %v4221, 2
    %v4238 = vrot.slane %v4222, 2
    %v4239 = vrot.slane %v4223, 2
    %v4240 = vrot.slane %v4224, 2
    %v4241 = vrot.slane %v4225, 2
    %v4250 = vmax.f32 %v4218, %v4234
    %v4251 = vmax.f32 %v4219, %v4235
    %v4252 = vmax.f32 %v4220, %v4236
    %v4253 = vmax.f32 %v4221, %v4237
    %v4254 = vmax.f32 %v4222, %v4238
    %v4255 = vmax.f32 %v4223, %v4239
    %v4256 = vmax.f32 %v4224, %v4240
    %v4257 = vmax.f32 %v4225, %v4241
    %v4266 = vlaneseq
    %v4267 = vshrl.u32 %v4266, 7
    %v4268 = vsub.s32 0, %v4267
    %v4269 = vrot.slane %v4250, %v4268
    %v4270 = vlaneseq
    %v4271 = vshrl.u32 %v4270, 7
    %v4272 = vsub.s32 0, %v4271
    %v4273 = vrot.slane %v4251, %v4272
    %v4274 = vlaneseq
    %v4275 = vshrl.u32 %v4274, 7
    %v4276 = vsub.s32 0, %v4275
    %v4277 = vrot.slane %v4252, %v4276
    %v4278 = vlaneseq
    %v4279 = vshrl.u32 %v4278, 7
    %v4280 = vsub.s32 0, %v4279
    %v4281 = vrot.slane %v4253, %v4280
    %v4282 = vlaneseq
    %v4283 = vshrl.u32 %v4282, 7
    %v4284 = vsub.s32 0, %v4283
    %v4285 = vrot.slane %v4254, %v4284
    %v4286 = vlaneseq
    %v4287 = vshrl.u32 %v4286, 7
    %v4288 = vsub.s32 0, %v4287
    %v4289 = vrot.slane %v4255, %v4288
    %v4290 = vlaneseq
    %v4291 = vshrl.u32 %v4290, 7
    %v4292 = vsub.s32 0, %v4291
    %v4293 = vrot.slane %v4256, %v4292
    %v4294 = vlaneseq
    %v4295 = vshrl.u32 %v4294, 7
    %v4296 = vsub.s32 0, %v4295
    %v4297 = vrot.slane %v4257, %v4296
    %vm4298 = vcmask 1041409
    %v4299 = vsel %vm4298, %v4273, %v4269
    %vm4300 = vcmask 1042434
    %v4301 = vsel %vm4300, %v4277, %v4299
    %vm4302 = vcmask 1043459
    %v4303 = vsel %vm4302, %v4281, %v4301
    %v4304 = vsel %vm4298, %v4289, %v4285
    %v4305 = vsel %vm4300, %v4293, %v4304
    %v4306 = vsel %vm4302, %v4297, %v4305
    %4309 = vst [vmem:[%s3] sm:$0xf] %v4303
    %4310 = vst [vmem:[%s3 + $0x4] sm:$0xf] %v4306
    // Predicated region
    $region22: #{_lambda_.5} parent=1 // pred_check
      _
    $region23: #{_lambda_.5} parent=1 // pred_check_branch
      %4312 = sbr.rel (0) target = $region25
    $region24: #{_lambda_.5} parent=1 // pred_region
      _
    $region25: #{_lambda_.5} parent=1 // pred_fallthru
      _
    // Predicated region
    $region26: #{_lambda_.5} parent=1 // pred_check
      _
    $region27: #{_lambda_.5} parent=1 // pred_check_branch
      %4314 = sbr.rel (0) target = $region29
    $region28: #{_lambda_.5} parent=1 // pred_region
      _
    $region29: #{_lambda_.5} parent=1 // pred_fallthru
      _
    %4315 = vsyncpa [#allocation4], 1
    %4316 = vsyncpa [#allocation6], 1

</llo_original>
